<compile_context>
chip_gen: v7x
topology: tpu7x:2x2x1
jax: 0.10.0
libtpu: 0.0.40
codegen_flags: <defaults>
</compile_context>

<pallas_src>
import functools
import math

import jax
import jax.numpy as jnp
from jax.experimental import pallas as pl
from jax.experimental.pallas import tpu as pltpu

VMEM_LIMIT = 48 * 1024 * 1024   # < 64 MiB physical on v7x, fine on v5e/v6e
_TILE_BYTE_CAP = 20 * 1024 * 1024


def _pick_row_tile(extent, limit, bytes_per_row, byte_cap=_TILE_BYTE_CAP, min_blocks=1):
    """Largest divisor of `extent` <= limit whose per-step bytes fit the cap,
    preferring choices that leave >= min_blocks grid blocks (v7x 2-TC sharding)."""
    cands = [d for d in range(1, max(1, min(limit, extent)) + 1)
             if extent % d == 0 and d * bytes_per_row <= byte_cap]
    if not cands:
        return 1
    good = [d for d in cands if (extent // d) >= min_blocks]
    return max(good) if good else max(cands)


def _largest_divisor_mult8(val, limit):
    limit = max(1, min(limit, val))
    for d in range(limit, 0, -1):
        if val % d == 0 and (d % 8 == 0 or d == val):
            return d
    return 1


# ----------------------------------------------------------------------------
# 3x3 conv + folded BN + ReLU  (TH output rows / step, single 9-tap matmul)
# ----------------------------------------------------------------------------
def _conv3x3_kernel(x_ref, h0_ref, h1_ref, w_ref, b_ref, o_ref, *,
                    th, wo, wp, cin, cout, stride):
    # x_ref : (1, th*stride, Wp, Cin) bf16 main slab
    # h0/h1 : (1, 1, Wp, Cin)         bf16 halo rows just below the slab
    # w_ref : (9*Cin, Cout) bf16 (BN scale folded),  b_ref: (1, Cout) f32
    xa = jnp.concatenate([x_ref[...], h0_ref[...], h1_ref[...]], axis=1)
    xa = xa.reshape(th * stride + 2, wp, cin)

    taps = []
    if stride == 1:
        for kh in range(3):
            for kw in range(3):
                taps.append(xa[kh:kh + th, kw:kw + wo, :])
    else:  # stride == 2: columns were pre-deinterleaved to [even | odd] halves
        half = wp // 2
        xv = xa.reshape(th + 1, 2, wp, cin)           # split leading (row) dim
        for kh in range(3):
            rows = xv[kh // 2: kh // 2 + th, kh % 2]  # (th, wp, cin)
            for kw in range(3):
                c0 = (kw % 2) * half + kw // 2
                taps.append(rows[:, c0:c0 + wo, :])

    cols = jnp.concatenate(taps, axis=-1).reshape(th * wo, 9 * cin)   # im2col in VMEM
    acc = jnp.dot(cols, w_ref[...], preferred_element_type=jnp.float32)
    y = jnp.maximum(acc + b_ref[...], 0.0)
    o_ref[...] = y.reshape(1, th, wo, cout).astype(o_ref.dtype)


def conv3x3_bn_relu(x, w, scale, bias, stride):
    """pad(1) + Conv2d(3x3, stride, bias=False) + BN(eval) + ReLU.  NHWC in/out.

    x: (N,H,W,Cin)  w: (Cout,Cin,3,3)  scale/bias: (Cout,)
    """
    n, h, wdim, cin = x.shape
    cout = w.shape[0]
    s = int(stride)
    if s not in (1, 2):
        raise NotImplementedError("conv3x3 stride must be 1 or 2")  # TODO(synk)
    ho = (h - 1) // s + 1
    wo = (wdim - 1) // s + 1

    # ZeroPad2d(1) plus slack so halo rows / even-odd split never go OOB
    # (extra rows/cols are zero and never feed a valid output).
    wp = wdim + 2
    if s == 2:
        wp = max(wp, 2 * (wo + 1))
        if wp % 2:
            wp += 1
    hp = max(h + 2, ho * s + 2)
    xp = jnp.pad(x.astype(jnp.bfloat16),
                 ((0, 0), (1, hp - h - 1), (1, wp - wdim - 1), (0, 0)))
    if s == 2:
        # Even/odd column de-interleave fused with the pad (one XLA pass);
        # the kernel then only needs contiguous column slices.
        xp = jnp.concatenate([xp[:, :, 0::2, :], xp[:, :, 1::2, :]], axis=2)
    # TODO(synk): the pad is still one extra HBM pass per layer; it could be
    # folded into the previous layer's output write.

    # (Cout,Cin,3,3) -> (3,3,Cin,Cout) with BN scale folded -> (9*Cin, Cout)
    wk = (jnp.transpose(w, (2, 3, 1, 0)) * scale[None, None, None, :])
    wk = wk.reshape(9 * cin, cout).astype(jnp.bfloat16)
    b2 = bias.reshape(1, cout).astype(jnp.float32)

    bytes_per_row = (4 * s * wp * cin          # slab bf16, double buffered
                     + 2 * wo * 9 * cin        # im2col (VMEM value)
                     + 8 * wo * cout)          # f32 acc + bf16 out (dbl buf)
    th = _pick_row_tile(ho, 32, bytes_per_row,
                        min_blocks=2 if n < 2 else 1)
    th_in = th * s

    return pl.pallas_call(
        functools.partial(_conv3x3_kernel, th=th, wo=wo, wp=wp,
                          cin=cin, cout=cout, stride=s),
        out_shape=jax.ShapeDtypeStruct((n, ho, wo, cout), jnp.bfloat16),
        grid=(n, ho // th),
        in_specs=[
            pl.BlockSpec((1, th_in, wp, cin), lambda ni, hi: (ni, hi, 0, 0)),
            pl.BlockSpec((1, 1, wp, cin),
                         lambda ni, hi: (ni, (hi + 1) * th_in, 0, 0)),
            pl.BlockSpec((1, 1, wp, cin),
                         lambda ni, hi: (ni, (hi + 1) * th_in + 1, 0, 0)),
            pl.BlockSpec((9 * cin, cout), lambda ni, hi: (0, 0)),
            pl.BlockSpec((1, cout), lambda ni, hi: (0, 0)),
        ],
        out_specs=pl.BlockSpec((1, th, wo, cout), lambda ni, hi: (ni, hi, 0, 0)),
        compiler_params=pltpu.CompilerParams(
            dimension_semantics=("parallel", "parallel"),
            vmem_limit_bytes=VMEM_LIMIT),
        cost_estimate=pl.CostEstimate(
            flops=2 * n * ho * wo * 9 * cin * cout,
            transcendentals=0,
            bytes_accessed=(n * hp * wp * cin * 2 + 9 * cin * cout * 2
                            + n * ho * wo * cout * 2)),
    )(xp, xp, xp, wk, b2)


# ----------------------------------------------------------------------------
# ConvTranspose2d(kernel=stride, stride=stride) + folded BN + ReLU
# (output written phase-separated; NHWC view is a free bitcast reshape)
# ----------------------------------------------------------------------------
def _deconv_kernel(x_ref, w_ref, b_ref, o_ref, *, th, w, cin, cout, s):
    x2 = x_ref[...].reshape(th * w, cin)          # bf16
    wv = w_ref[...]                               # (s, Cin, s*Cout) bf16
    bv = b_ref[...]                               # (1, s*Cout) f32
    rows = []
    for dh in range(s):
        y = jnp.dot(x2, wv[dh], preferred_element_type=jnp.float32)
        y = jnp.maximum(y + bv, 0.0)
        rows.append(y.reshape(th, w, s * cout))   # split of leading dim only
    out = jnp.stack(rows, axis=1)                 # (th, s, w, s*cout)
    o_ref[...] = out.reshape(1, th, s, w, s * cout).astype(o_ref.dtype)


def deconv_bn_relu(x, w, scale, bias, stride):
    """ConvTranspose2d(kernel=stride, stride=stride, bias=False) + BN + ReLU.

    x: (N,H,W,Cin)  w: (Cin,Cout,s,s)  scale/bias: (Cout,)   NHWC in/out.
    """
    n, h, wdim, cin = x.shape
    cout = w.shape[1]
    s = int(stride)

    # (Cin,Cout,s,s) -> (dh, Cin, dw, Cout) with BN scale folded -> (s, Cin, s*Cout)
    wk = (jnp.transpose(w, (2, 0, 3, 1)) * scale[None, None, None, :])
    wk = wk.reshape(s, cin, s * cout).astype(jnp.bfloat16)
    bt = jnp.tile(bias, s).reshape(1, s * cout).astype(jnp.float32)

    bytes_per_row = 4 * wdim * cin + 10 * s * s * wdim * cout
    th = _pick_row_tile(h, 32, bytes_per_row,
                        min_blocks=2 if n < 2 else 1)

    out = pl.pallas_call(
        functools.partial(_deconv_kernel, th=th, w=wdim, cin=cin, cout=cout, s=s),
        out_shape=jax.ShapeDtypeStruct((n, h, s, wdim, s * cout), jnp.bfloat16),
        grid=(n, h // th),
        in_specs=[
            pl.BlockSpec((1, th, wdim, cin), lambda ni, hi: (ni, hi, 0, 0)),
            pl.BlockSpec((s, cin, s * cout), lambda ni, hi: (0, 0, 0)),
            pl.BlockSpec((1, s * cout), lambda ni, hi: (0, 0)),
        ],
        out_specs=pl.BlockSpec((1, th, s, wdim, s * cout),
                               lambda ni, hi: (ni, hi, 0, 0, 0)),
        compiler_params=pltpu.CompilerParams(
            dimension_semantics=("parallel", "parallel"),
            vmem_limit_bytes=VMEM_LIMIT),
        cost_estimate=pl.CostEstimate(
            flops=2 * n * h * wdim * cin * s * s * cout,
            transcendentals=0,
            bytes_accessed=(n * h * wdim * cin * 2 + s * cin * s * cout * 2
                            + n * h * s * wdim * s * cout * 2)),
    )(x.astype(jnp.bfloat16), wk, bt)
    # (N,H,s,W,s*Cout) -> (N,H*s,W*s,Cout): adjacent-dim merges -> free bitcast.
    return out.reshape(n, h * s, wdim * s, cout)


# ----------------------------------------------------------------------------
# Fused AnchorHeadSingle: K-split sum over per-level ups, three out_specs
# ----------------------------------------------------------------------------
def _head_kernel(*refs, n_levels, n_cls, n_box, n_dir):
    x_refs = refs[:n_levels]
    w_refs = refs[n_levels:2 * n_levels]
    b_ref = refs[2 * n_levels]
    o_cls, o_box, o_dir = refs[2 * n_levels + 1:]
    acc = None
    for xr, wr in zip(x_refs, w_refs):
        part = jnp.dot(xr[...], wr[...], preferred_element_type=jnp.float32)
        acc = part if acc is None else acc + part
    y = acc + b_ref[...]
    o_cls[...] = y[:, :n_cls]
    o_box[...] = y[:, n_cls:n_cls + n_box]
    o_dir[...] = y[:, n_cls + n_box:n_cls + n_box + n_dir]


def fused_head(ups, params):
    n, h, wdim, _ = ups[0].shape
    m = n * h * wdim
    chans = [int(u.shape[-1]) for u in ups]
    n_cls = int(params["conv_cls_w"].shape[0])
    n_box = int(params["conv_box_w"].shape[0])
    n_dir = int(params["conv_dir_w"].shape[0])
    ntot = n_cls + n_box + n_dir

    cls_w = params["conv_cls_w"].reshape(n_cls, -1)
    box_w = params["conv_box_w"].reshape(n_box, -1)
    dir_w = params["conv_dir_w"].reshape(n_dir, -1)
    b_all = jnp.concatenate([params["conv_cls_b"], params["conv_box_b"],
                             params["conv_dir_b"]]).reshape(1, ntot).astype(jnp.float32)

    x2d, w_slabs, off = [], [], 0
    for u, ci in zip(ups, chans):
        wi = jnp.concatenate([cls_w[:, off:off + ci],
                              box_w[:, off:off + ci],
                              dir_w[:, off:off + ci]], axis=0).T       # (Ci, Ntot)
        w_slabs.append(wi.astype(jnp.bfloat16))
        x2d.append(u.reshape(m, ci).astype(jnp.bfloat16))               # free bitcast
        off += ci

    tm = _largest_divisor_mult8(m, 2048)
    if tm % 8 != 0 and tm != m:
        tm = m                     # tiny-input fallback: single block
    if m // tm < 2:                # keep >=2 parallel blocks when possible (v7x)
        for d in range(m // 2, 7, -1):
            if m % d == 0 and d % 8 == 0:
                tm = d
                break

    grid = (m // tm,)
    in_specs = ([pl.BlockSpec((tm, ci), lambda i: (i, 0)) for ci in chans]
                + [pl.BlockSpec((ci, ntot), lambda i: (0, 0)) for ci in chans]
                + [pl.BlockSpec((1, ntot), lambda i: (0, 0))])
    out_specs = (pl.BlockSpec((tm, n_cls), lambda i: (i, 0)),
                 pl.BlockSpec((tm, n_box), lambda i: (i, 0)),
                 pl.BlockSpec((tm, n_dir), lambda i: (i, 0)))
    out_shape = (jax.ShapeDtypeStruct((m, n_cls), jnp.float32),
                 jax.ShapeDtypeStruct((m, n_box), jnp.float32),
                 jax.ShapeDtypeStruct((m, n_dir), jnp.float32))

    cls2, box2, dir2 = pl.pallas_call(
        functools.partial(_head_kernel, n_levels=len(ups),
                          n_cls=n_cls, n_box=n_box, n_dir=n_dir),
        out_shape=out_shape, grid=grid,
        in_specs=in_specs, out_specs=out_specs,
        compiler_params=pltpu.CompilerParams(
            dimension_semantics=("parallel",),
            vmem_limit_bytes=VMEM_LIMIT),
        cost_estimate=pl.CostEstimate(
            flops=2 * m * sum(chans) * ntot,
            transcendentals=0,
            bytes_accessed=(m * sum(chans) * 2 + sum(chans) * ntot * 2
                            + m * ntot * 4)),
    )(*x2d, *w_slabs, b_all)

    return (cls2.reshape(n, h, wdim, n_cls),
            box2.reshape(n, h, wdim, n_box),
            dir2.reshape(n, h, wdim, n_dir))


# ----------------------------------------------------------------------------
# Deterministic parameter construction
# ----------------------------------------------------------------------------
def make_params(key, cfg):
    in_ch = cfg["NUM_BEV_FEATURES"]
    layer_nums = cfg["LAYER_NUMS"]
    layer_strides = cfg["LAYER_STRIDES"]
    num_filters = cfg["NUM_FILTERS"]
    up_strides = cfg["UPSAMPLE_STRIDES"]
    num_up_filters = cfg["NUM_UPSAMPLE_FILTERS"]
    eps = 1e-3

    def bn_fold(c):
        # eval mode, running_mean=0, running_var=1, gamma=1, beta=0
        scale = jnp.full((c,), 1.0 / math.sqrt(1.0 + eps), jnp.float32)
        bias = jnp.zeros((c,), jnp.float32)
        return scale, bias

    keys = iter(jax.random.split(key, 64))
    params = {"blocks": [], "deblocks": []}
    c_in_list = [in_ch, *num_filters[:-1]]
    for lvl in range(len(layer_nums)):
        layers = []
        cin, cout = c_in_list[lvl], num_filters[lvl]
        w = 0.05 * jax.random.normal(next(keys), (cout, cin, 3, 3), jnp.float32)
        s, b = bn_fold(cout)
        layers.append(dict(w=w, scale=s, bias=b, stride=layer_strides[lvl]))
        for _ in range(layer_nums[lvl]):
            w = 0.05 * jax.random.normal(next(keys), (cout, cout, 3, 3), jnp.float32)
            s, b = bn_fold(cout)
            layers.append(dict(w=w, scale=s, bias=b, stride=1))
        params["blocks"].append(layers)

        us = up_strides[lvl]
        ucout = num_up_filters[lvl]
        wd = 0.05 * jax.random.normal(next(keys), (cout, ucout, us, us), jnp.float32)
        s, b = bn_fold(ucout)
        params["deblocks"].append(dict(w=wd, scale=s, bias=b, stride=us))

    c_in = sum(num_up_filters)
    num_class = cfg["NUM_CLASS"]
    num_anchors = cfg["NUM_ANCHORS_PER_LOC"]
    code_size = cfg["CODE_SIZE"]
    num_dir_bins = cfg["NUM_DIR_BINS"]
    pi = 0.01

    params["conv_cls_w"] = 0.05 * jax.random.normal(
        next(keys), (num_anchors * num_class, c_in, 1, 1), jnp.float32)
    params["conv_cls_b"] = jnp.full((num_anchors * num_class,),
                                    -math.log((1 - pi) / pi), jnp.float32)
    params["conv_box_w"] = 0.001 * jax.random.normal(
        next(keys), (num_anchors * code_size, c_in, 1, 1), jnp.float32)
    params["conv_box_b"] = jnp.zeros((num_anchors * code_size,), jnp.float32)
    params["conv_dir_w"] = 0.05 * jax.random.normal(
        next(keys), (num_anchors * num_dir_bins, c_in, 1, 1), jnp.float32)
    params["conv_dir_b"] = jnp.zeros((num_anchors * num_dir_bins,), jnp.float32)
    return params


# ----------------------------------------------------------------------------
# RPN forward
# ----------------------------------------------------------------------------
def rpn_forward(spatial_features_nchw, params):
    # NCHW -> NHWC, cast to bf16 once at the kernel boundary.
    x = jnp.transpose(spatial_features_nchw, (0, 2, 3, 1)).astype(jnp.bfloat16)

    # ---- BaseBEVBackbone (non-residual) ----
    ups = []
    for lvl, layers in enumerate(params["blocks"]):
        for lp in layers:
            x = conv3x3_bn_relu(x, lp["w"], lp["scale"], lp["bias"], lp["stride"])
        dp = params["deblocks"][lvl]
        ups.append(deconv_bn_relu(x, dp["w"], dp["scale"], dp["bias"], dp["stride"]))

    # ---- AnchorHeadSingle (NHWC == permute(0,2,3,1)); K-split replaces concat ----
    cls_preds, box_preds, dir_cls_preds = fused_head(ups, params)

    # Reproduces the module's dict ('cls_preds_normalized' holds dir preds, as in
    # the reference forward).
    return {
        "batch_cls_preds": cls_preds,
        "batch_box_preds": box_preds,
        "cls_preds_normalized": dir_cls_preds,
    }


# ----------------------------------------------------------------------------
if __name__ == "__main__":
    # Small synthetic config consistent with the module structure.
    cfg = dict(
        NUM_BEV_FEATURES=4,
        LAYER_NUMS=[1, 1],
        LAYER_STRIDES=[1, 2],
        NUM_FILTERS=[8, 16],
        UPSAMPLE_STRIDES=[1, 2],
        NUM_UPSAMPLE_FILTERS=[8, 8],
        NUM_CLASS=3,
        NUM_ANCHORS_PER_LOC=2,
        CODE_SIZE=7,
        NUM_DIR_BINS=2,
    )

    key = jax.random.PRNGKey(0)
    k_in, k_par = jax.random.split(key)
    params = make_params(k_par, cfg)

    # PyTorch-style NCHW input: (batch=2, C=4, H=16, W=16)
    x = jax.random.normal(k_in, (2, 4, 16, 16), jnp.float32)

    out = jax.jit(lambda a: rpn_forward(a, params))(x)
    out = jax.block_until_ready(out)

    assert out["batch_cls_preds"].shape == (2, 16, 16, 6)
    assert out["batch_box_preds"].shape == (2, 16, 16, 14)
    assert out["cls_preds_normalized"].shape == (2, 16, 16, 4)
    assert all(jnp.isfinite(v).all() for v in out.values())
    print("KERNEL_OK")
</pallas_src>

<mosaic_0001>
module attributes {stable_mosaic.version = 11 : i64} {
  func.func @_conv3x3_kernel(%arg0: i32, %arg1: i32, %arg2: memref<1x16x18x4xbf16, #tpu.memory_space<vmem>>, %arg3: memref<1x1x18x4xbf16, #tpu.memory_space<vmem>>, %arg4: memref<1x1x18x4xbf16, #tpu.memory_space<vmem>>, %arg5: memref<36x8xbf16, #tpu.memory_space<vmem>>, %arg6: memref<1x8xf32, #tpu.memory_space<vmem>>, %arg7: memref<1x16x16x8xbf16, #tpu.memory_space<vmem>>) attributes {dimension_semantics = [#tpu.dimension_semantics<parallel>, #tpu.dimension_semantics<parallel>], iteration_bounds = array<i64: 2, 1>, scalar_prefetch = 0 : i64, scratch_operands = 0 : i64, tpu.core_type = #tpu.core_type<tc>, window_params = [{transform_indices = @transform_0, window_bounds = array<i64: 1, 16, 18, 4>}, {transform_indices = @transform_1, window_bounds = array<i64: 1, 1, 18, 4>}, {transform_indices = @transform_2, window_bounds = array<i64: 1, 1, 18, 4>}, {pipeline_mode = #tpu.pipeline_mode<synchronous>, transform_indices = @transform_3, window_bounds = array<i64: 36, 8>}, {pipeline_mode = #tpu.pipeline_mode<synchronous>, transform_indices = @transform_4, window_bounds = array<i64: 1, 8>}, {transform_indices = @transform_5, window_bounds = array<i64: 1, 16, 16, 8>}]} {
    %c0 = arith.constant 0 : index
    %c0_0 = arith.constant 0 : index
    %c0_1 = arith.constant 0 : index
    %c0_2 = arith.constant 0 : index
    %0 = vector.load %arg2[%c0, %c0_0, %c0_1, %c0_2] : memref<1x16x18x4xbf16, #tpu.memory_space<vmem>>, vector<1x16x18x4xbf16>
    %c0_3 = arith.constant 0 : index
    %c0_4 = arith.constant 0 : index
    %c0_5 = arith.constant 0 : index
    %c0_6 = arith.constant 0 : index
    %1 = vector.load %arg3[%c0_3, %c0_4, %c0_5, %c0_6] : memref<1x1x18x4xbf16, #tpu.memory_space<vmem>>, vector<1x1x18x4xbf16>
    %c0_7 = arith.constant 0 : index
    %c0_8 = arith.constant 0 : index
    %c0_9 = arith.constant 0 : index
    %c0_10 = arith.constant 0 : index
    %2 = vector.load %arg4[%c0_7, %c0_8, %c0_9, %c0_10] : memref<1x1x18x4xbf16, #tpu.memory_space<vmem>>, vector<1x1x18x4xbf16>
    %3 = tpu.concatenate %0, %1, %2 in 1 : vector<1x16x18x4xbf16>, vector<1x1x18x4xbf16>, vector<1x1x18x4xbf16> -> vector<1x18x18x4xbf16>
    %4 = vector.shape_cast %3 : vector<1x18x18x4xbf16> to vector<18x18x4xbf16>
    %5 = vector.extract_strided_slice %4 {offsets = [0, 0, 0], sizes = [16, 16, 4], strides = [1, 1, 1]} : vector<18x18x4xbf16> to vector<16x16x4xbf16>
    %6 = vector.extract_strided_slice %4 {offsets = [0, 1, 0], sizes = [16, 16, 4], strides = [1, 1, 1]} : vector<18x18x4xbf16> to vector<16x16x4xbf16>
    %7 = vector.extract_strided_slice %4 {offsets = [0, 2, 0], sizes = [16, 16, 4], strides = [1, 1, 1]} : vector<18x18x4xbf16> to vector<16x16x4xbf16>
    %8 = vector.extract_strided_slice %4 {offsets = [1, 0, 0], sizes = [16, 16, 4], strides = [1, 1, 1]} : vector<18x18x4xbf16> to vector<16x16x4xbf16>
    %9 = vector.extract_strided_slice %4 {offsets = [1, 1, 0], sizes = [16, 16, 4], strides = [1, 1, 1]} : vector<18x18x4xbf16> to vector<16x16x4xbf16>
    %10 = vector.extract_strided_slice %4 {offsets = [1, 2, 0], sizes = [16, 16, 4], strides = [1, 1, 1]} : vector<18x18x4xbf16> to vector<16x16x4xbf16>
    %11 = vector.extract_strided_slice %4 {offsets = [2, 0, 0], sizes = [16, 16, 4], strides = [1, 1, 1]} : vector<18x18x4xbf16> to vector<16x16x4xbf16>
    %12 = vector.extract_strided_slice %4 {offsets = [2, 1, 0], sizes = [16, 16, 4], strides = [1, 1, 1]} : vector<18x18x4xbf16> to vector<16x16x4xbf16>
    %13 = vector.extract_strided_slice %4 {offsets = [2, 2, 0], sizes = [16, 16, 4], strides = [1, 1, 1]} : vector<18x18x4xbf16> to vector<16x16x4xbf16>
    %14 = tpu.concatenate %5, %6, %7, %8, %9, %10, %11, %12, %13 in 2 : vector<16x16x4xbf16>, vector<16x16x4xbf16>, vector<16x16x4xbf16>, vector<16x16x4xbf16>, vector<16x16x4xbf16>, vector<16x16x4xbf16>, vector<16x16x4xbf16>, vector<16x16x4xbf16>, vector<16x16x4xbf16> -> vector<16x16x36xbf16>
    %15 = vector.shape_cast %14 : vector<16x16x36xbf16> to vector<256x36xbf16>
    %c0_11 = arith.constant 0 : index
    %c0_12 = arith.constant 0 : index
    %16 = vector.load %arg5[%c0_11, %c0_12] : memref<36x8xbf16, #tpu.memory_space<vmem>>, vector<36x8xbf16>
    %cst = arith.constant dense<0.000000e+00> : vector<256x8xf32>
    %17 = tpu.matmul %15, %16, %cst {dimension_numbers = #tpu.dot_dimension_numbers<[1], [0], [0], [1], [0, 0, 1, 1], [], []>} : vector<256x36xbf16>, vector<36x8xbf16>, vector<256x8xf32> -> vector<256x8xf32>
    %c0_13 = arith.constant 0 : index
    %c0_14 = arith.constant 0 : index
    %18 = vector.load %arg6[%c0_13, %c0_14] : memref<1x8xf32, #tpu.memory_space<vmem>>, vector<1x8xf32>
    %19 = vector.broadcast %18 : vector<1x8xf32> to vector<256x8xf32>
    %20 = arith.addf %17, %19 : vector<256x8xf32>
    %cst_15 = arith.constant 0.000000e+00 : f32
    %21 = vector.broadcast %cst_15 : f32 to vector<256x8xf32>
    %22 = arith.maximumf %20, %21 : vector<256x8xf32>
    %23 = vector.shape_cast %22 : vector<256x8xf32> to vector<1x16x16x8xf32>
    %24 = arith.truncf %23 : vector<1x16x16x8xf32> to vector<1x16x16x8xbf16>
    %c0_16 = arith.constant 0 : index
    %c0_17 = arith.constant 0 : index
    %c0_18 = arith.constant 0 : index
    %c0_19 = arith.constant 0 : index
    %25 = vector.load %arg7[%c0_16, %c0_17, %c0_18, %c0_19] : memref<1x16x16x8xbf16, #tpu.memory_space<vmem>>, vector<1x16x16x8xbf16>
    tpu.vector_store %arg7[%c0_16, %c0_17, %c0_18, %c0_19], %24 {strides = array<i32>} : memref<1x16x16x8xbf16, #tpu.memory_space<vmem>>, vector<1x16x16x8xbf16>,
    return
  }
  func.func @transform_0(%arg0: i32, %arg1: i32) -> (i32, i32, i32, i32) {
    %c0_i32 = arith.constant 0 : i32
    %c0_i32_0 = arith.constant 0 : i32
    %c0_i32_1 = arith.constant 0 : i32
    return %arg0, %arg1, %c0_i32, %c0_i32_0 : i32, i32, i32, i32
  }
  func.func @transform_1(%arg0: i32, %arg1: i32) -> (i32, i32, i32, i32) {
    %c1_i32 = arith.constant 1 : i32
    %0 = arith.addi %arg1, %c1_i32 : i32
    %c16_i32 = arith.constant 16 : i32
    %1 = arith.muli %0, %c16_i32 : i32
    %c0_i32 = arith.constant 0 : i32
    %c0_i32_0 = arith.constant 0 : i32
    %c0_i32_1 = arith.constant 0 : i32
    return %arg0, %1, %c0_i32, %c0_i32_0 : i32, i32, i32, i32
  }
  func.func @transform_2(%arg0: i32, %arg1: i32) -> (i32, i32, i32, i32) {
    %c1_i32 = arith.constant 1 : i32
    %0 = arith.addi %arg1, %c1_i32 : i32
    %c16_i32 = arith.constant 16 : i32
    %1 = arith.muli %0, %c16_i32 : i32
    %c1_i32_0 = arith.constant 1 : i32
    %2 = arith.addi %1, %c1_i32_0 : i32
    %c0_i32 = arith.constant 0 : i32
    %c0_i32_1 = arith.constant 0 : i32
    %c0_i32_2 = arith.constant 0 : i32
    return %arg0, %2, %c0_i32, %c0_i32_1 : i32, i32, i32, i32
  }
  func.func @transform_3(%arg0: i32, %arg1: i32) -> (i32, i32) {
    %c0_i32 = arith.constant 0 : i32
    %c0_i32_0 = arith.constant 0 : i32
    %c0_i32_1 = arith.constant 0 : i32
    return %c0_i32, %c0_i32_0 : i32, i32
  }
  func.func @transform_4(%arg0: i32, %arg1: i32) -> (i32, i32) {
    %c0_i32 = arith.constant 0 : i32
    %c0_i32_0 = arith.constant 0 : i32
    %c0_i32_1 = arith.constant 0 : i32
    return %c0_i32, %c0_i32_0 : i32, i32
  }
  func.func @transform_5(%arg0: i32, %arg1: i32) -> (i32, i32, i32, i32) {
    %c0_i32 = arith.constant 0 : i32
    %c0_i32_0 = arith.constant 0 : i32
    %c0_i32_1 = arith.constant 0 : i32
    return %arg0, %arg1, %c0_i32, %c0_i32_0 : i32, i32, i32, i32
  }
}

module attributes {stable_mosaic.version = 11 : i64} {
  func.func @_conv3x3_kernel(%arg0: i32, %arg1: i32, %arg2: memref<1x16x18x8xbf16, #tpu.memory_space<vmem>>, %arg3: memref<1x1x18x8xbf16, #tpu.memory_space<vmem>>, %arg4: memref<1x1x18x8xbf16, #tpu.memory_space<vmem>>, %arg5: memref<72x8xbf16, #tpu.memory_space<vmem>>, %arg6: memref<1x8xf32, #tpu.memory_space<vmem>>, %arg7: memref<1x16x16x8xbf16, #tpu.memory_space<vmem>>) attributes {dimension_semantics = [#tpu.dimension_semantics<parallel>, #tpu.dimension_semantics<parallel>], iteration_bounds = array<i64: 2, 1>, scalar_prefetch = 0 : i64, scratch_operands = 0 : i64, tpu.core_type = #tpu.core_type<tc>, window_params = [{transform_indices = @transform_0, window_bounds = array<i64: 1, 16, 18, 8>}, {transform_indices = @transform_1, window_bounds = array<i64: 1, 1, 18, 8>}, {transform_indices = @transform_2, window_bounds = array<i64: 1, 1, 18, 8>}, {pipeline_mode = #tpu.pipeline_mode<synchronous>, transform_indices = @transform_3, window_bounds = array<i64: 72, 8>}, {pipeline_mode = #tpu.pipeline_mode<synchronous>, transform_indices = @transform_4, window_bounds = array<i64: 1, 8>}, {transform_indices = @transform_5, window_bounds = array<i64: 1, 16, 16, 8>}]} {
    %c0 = arith.constant 0 : index
    %c0_0 = arith.constant 0 : index
    %c0_1 = arith.constant 0 : index
    %c0_2 = arith.constant 0 : index
    %0 = vector.load %arg2[%c0, %c0_0, %c0_1, %c0_2] : memref<1x16x18x8xbf16, #tpu.memory_space<vmem>>, vector<1x16x18x8xbf16>
    %c0_3 = arith.constant 0 : index
    %c0_4 = arith.constant 0 : index
    %c0_5 = arith.constant 0 : index
    %c0_6 = arith.constant 0 : index
    %1 = vector.load %arg3[%c0_3, %c0_4, %c0_5, %c0_6] : memref<1x1x18x8xbf16, #tpu.memory_space<vmem>>, vector<1x1x18x8xbf16>
    %c0_7 = arith.constant 0 : index
    %c0_8 = arith.constant 0 : index
    %c0_9 = arith.constant 0 : index
    %c0_10 = arith.constant 0 : index
    %2 = vector.load %arg4[%c0_7, %c0_8, %c0_9, %c0_10] : memref<1x1x18x8xbf16, #tpu.memory_space<vmem>>, vector<1x1x18x8xbf16>
    %3 = tpu.concatenate %0, %1, %2 in 1 : vector<1x16x18x8xbf16>, vector<1x1x18x8xbf16>, vector<1x1x18x8xbf16> -> vector<1x18x18x8xbf16>
    %4 = vector.shape_cast %3 : vector<1x18x18x8xbf16> to vector<18x18x8xbf16>
    %5 = vector.extract_strided_slice %4 {offsets = [0, 0, 0], sizes = [16, 16, 8], strides = [1, 1, 1]} : vector<18x18x8xbf16> to vector<16x16x8xbf16>
    %6 = vector.extract_strided_slice %4 {offsets = [0, 1, 0], sizes = [16, 16, 8], strides = [1, 1, 1]} : vector<18x18x8xbf16> to vector<16x16x8xbf16>
    %7 = vector.extract_strided_slice %4 {offsets = [0, 2, 0], sizes = [16, 16, 8], strides = [1, 1, 1]} : vector<18x18x8xbf16> to vector<16x16x8xbf16>
    %8 = vector.extract_strided_slice %4 {offsets = [1, 0, 0], sizes = [16, 16, 8], strides = [1, 1, 1]} : vector<18x18x8xbf16> to vector<16x16x8xbf16>
    %9 = vector.extract_strided_slice %4 {offsets = [1, 1, 0], sizes = [16, 16, 8], strides = [1, 1, 1]} : vector<18x18x8xbf16> to vector<16x16x8xbf16>
    %10 = vector.extract_strided_slice %4 {offsets = [1, 2, 0], sizes = [16, 16, 8], strides = [1, 1, 1]} : vector<18x18x8xbf16> to vector<16x16x8xbf16>
    %11 = vector.extract_strided_slice %4 {offsets = [2, 0, 0], sizes = [16, 16, 8], strides = [1, 1, 1]} : vector<18x18x8xbf16> to vector<16x16x8xbf16>
    %12 = vector.extract_strided_slice %4 {offsets = [2, 1, 0], sizes = [16, 16, 8], strides = [1, 1, 1]} : vector<18x18x8xbf16> to vector<16x16x8xbf16>
    %13 = vector.extract_strided_slice %4 {offsets = [2, 2, 0], sizes = [16, 16, 8], strides = [1, 1, 1]} : vector<18x18x8xbf16> to vector<16x16x8xbf16>
    %14 = tpu.concatenate %5, %6, %7, %8, %9, %10, %11, %12, %13 in 2 : vector<16x16x8xbf16>, vector<16x16x8xbf16>, vector<16x16x8xbf16>, vector<16x16x8xbf16>, vector<16x16x8xbf16>, vector<16x16x8xbf16>, vector<16x16x8xbf16>, vector<16x16x8xbf16>, vector<16x16x8xbf16> -> vector<16x16x72xbf16>
    %15 = vector.shape_cast %14 : vector<16x16x72xbf16> to vector<256x72xbf16>
    %c0_11 = arith.constant 0 : index
    %c0_12 = arith.constant 0 : index
    %16 = vector.load %arg5[%c0_11, %c0_12] : memref<72x8xbf16, #tpu.memory_space<vmem>>, vector<72x8xbf16>
    %cst = arith.constant dense<0.000000e+00> : vector<256x8xf32>
    %17 = tpu.matmul %15, %16, %cst {dimension_numbers = #tpu.dot_dimension_numbers<[1], [0], [0], [1], [0, 0, 1, 1], [], []>} : vector<256x72xbf16>, vector<72x8xbf16>, vector<256x8xf32> -> vector<256x8xf32>
    %c0_13 = arith.constant 0 : index
    %c0_14 = arith.constant 0 : index
    %18 = vector.load %arg6[%c0_13, %c0_14] : memref<1x8xf32, #tpu.memory_space<vmem>>, vector<1x8xf32>
    %19 = vector.broadcast %18 : vector<1x8xf32> to vector<256x8xf32>
    %20 = arith.addf %17, %19 : vector<256x8xf32>
    %cst_15 = arith.constant 0.000000e+00 : f32
    %21 = vector.broadcast %cst_15 : f32 to vector<256x8xf32>
    %22 = arith.maximumf %20, %21 : vector<256x8xf32>
    %23 = vector.shape_cast %22 : vector<256x8xf32> to vector<1x16x16x8xf32>
    %24 = arith.truncf %23 : vector<1x16x16x8xf32> to vector<1x16x16x8xbf16>
    %c0_16 = arith.constant 0 : index
    %c0_17 = arith.constant 0 : index
    %c0_18 = arith.constant 0 : index
    %c0_19 = arith.constant 0 : index
    %25 = vector.load %arg7[%c0_16, %c0_17, %c0_18, %c0_19] : memref<1x16x16x8xbf16, #tpu.memory_space<vmem>>, vector<1x16x16x8xbf16>
    tpu.vector_store %arg7[%c0_16, %c0_17, %c0_18, %c0_19], %24 {strides = array<i32>} : memref<1x16x16x8xbf16, #tpu.memory_space<vmem>>, vector<1x16x16x8xbf16>,
    return
  }
  func.func @transform_0(%arg0: i32, %arg1: i32) -> (i32, i32, i32, i32) {
    %c0_i32 = arith.constant 0 : i32
    %c0_i32_0 = arith.constant 0 : i32
    %c0_i32_1 = arith.constant 0 : i32
    return %arg0, %arg1, %c0_i32, %c0_i32_0 : i32, i32, i32, i32
  }
  func.func @transform_1(%arg0: i32, %arg1: i32) -> (i32, i32, i32, i32) {
    %c1_i32 = arith.constant 1 : i32
    %0 = arith.addi %arg1, %c1_i32 : i32
    %c16_i32 = arith.constant 16 : i32
    %1 = arith.muli %0, %c16_i32 : i32
    %c0_i32 = arith.constant 0 : i32
    %c0_i32_0 = arith.constant 0 : i32
    %c0_i32_1 = arith.constant 0 : i32
    return %arg0, %1, %c0_i32, %c0_i32_0 : i32, i32, i32, i32
  }
  func.func @transform_2(%arg0: i32, %arg1: i32) -> (i32, i32, i32, i32) {
    %c1_i32 = arith.constant 1 : i32
    %0 = arith.addi %arg1, %c1_i32 : i32
    %c16_i32 = arith.constant 16 : i32
    %1 = arith.muli %0, %c16_i32 : i32
    %c1_i32_0 = arith.constant 1 : i32
    %2 = arith.addi %1, %c1_i32_0 : i32
    %c0_i32 = arith.constant 0 : i32
    %c0_i32_1 = arith.constant 0 : i32
    %c0_i32_2 = arith.constant 0 : i32
    return %arg0, %2, %c0_i32, %c0_i32_1 : i32, i32, i32, i32
  }
  func.func @transform_3(%arg0: i32, %arg1: i32) -> (i32, i32) {
    %c0_i32 = arith.constant 0 : i32
    %c0_i32_0 = arith.constant 0 : i32
    %c0_i32_1 = arith.constant 0 : i32
    return %c0_i32, %c0_i32_0 : i32, i32
  }
  func.func @transform_4(%arg0: i32, %arg1: i32) -> (i32, i32) {
    %c0_i32 = arith.constant 0 : i32
    %c0_i32_0 = arith.constant 0 : i32
    %c0_i32_1 = arith.constant 0 : i32
    return %c0_i32, %c0_i32_0 : i32, i32
  }
  func.func @transform_5(%arg0: i32, %arg1: i32) -> (i32, i32, i32, i32) {
    %c0_i32 = arith.constant 0 : i32
    %c0_i32_0 = arith.constant 0 : i32
    %c0_i32_1 = arith.constant 0 : i32
    return %arg0, %arg1, %c0_i32, %c0_i32_0 : i32, i32, i32, i32
  }
}

module attributes {stable_mosaic.version = 11 : i64} {
  func.func @_deconv_kernel(%arg0: i32, %arg1: i32, %arg2: memref<1x16x16x8xbf16, #tpu.memory_space<vmem>>, %arg3: memref<1x8x8xbf16, #tpu.memory_space<vmem>>, %arg4: memref<1x8xf32, #tpu.memory_space<vmem>>, %arg5: memref<1x16x1x16x8xbf16, #tpu.memory_space<vmem>>) attributes {dimension_semantics = [#tpu.dimension_semantics<parallel>, #tpu.dimension_semantics<parallel>], iteration_bounds = array<i64: 2, 1>, scalar_prefetch = 0 : i64, scratch_operands = 0 : i64, tpu.core_type = #tpu.core_type<tc>, window_params = [{transform_indices = @transform_0, window_bounds = array<i64: 1, 16, 16, 8>}, {pipeline_mode = #tpu.pipeline_mode<synchronous>, transform_indices = @transform_1, window_bounds = array<i64: 1, 8, 8>}, {pipeline_mode = #tpu.pipeline_mode<synchronous>, transform_indices = @transform_2, window_bounds = array<i64: 1, 8>}, {transform_indices = @transform_3, window_bounds = array<i64: 1, 16, 1, 16, 8>}]} {
    %c0 = arith.constant 0 : index
    %c0_0 = arith.constant 0 : index
    %c0_1 = arith.constant 0 : index
    %c0_2 = arith.constant 0 : index
    %0 = vector.load %arg2[%c0, %c0_0, %c0_1, %c0_2] : memref<1x16x16x8xbf16, #tpu.memory_space<vmem>>, vector<1x16x16x8xbf16>
    %1 = vector.shape_cast %0 : vector<1x16x16x8xbf16> to vector<256x8xbf16>
    %c0_3 = arith.constant 0 : index
    %c0_4 = arith.constant 0 : index
    %c0_5 = arith.constant 0 : index
    %2 = vector.load %arg3[%c0_3, %c0_4, %c0_5] : memref<1x8x8xbf16, #tpu.memory_space<vmem>>, vector<1x8x8xbf16>
    %c0_6 = arith.constant 0 : index
    %c0_7 = arith.constant 0 : index
    %3 = vector.load %arg4[%c0_6, %c0_7] : memref<1x8xf32, #tpu.memory_space<vmem>>, vector<1x8xf32>
    %4 = vector.shape_cast %2 : vector<1x8x8xbf16> to vector<8x8xbf16>
    %cst = arith.constant dense<0.000000e+00> : vector<256x8xf32>
    %5 = tpu.matmul %1, %4, %cst {dimension_numbers = #tpu.dot_dimension_numbers<[1], [0], [0], [1], [0, 0, 1, 1], [], []>} : vector<256x8xbf16>, vector<8x8xbf16>, vector<256x8xf32> -> vector<256x8xf32>
    %6 = vector.broadcast %3 : vector<1x8xf32> to vector<256x8xf32>
    %7 = arith.addf %5, %6 : vector<256x8xf32>
    %cst_8 = arith.constant 0.000000e+00 : f32
    %8 = vector.broadcast %cst_8 : f32 to vector<256x8xf32>
    %9 = arith.maximumf %7, %8 : vector<256x8xf32>
    %10 = vector.shape_cast %9 : vector<256x8xf32> to vector<16x16x8xf32>
    %11 = vector.shape_cast %10 : vector<16x16x8xf32> to vector<16x1x16x8xf32>
    %12 = vector.shape_cast %11 : vector<16x1x16x8xf32> to vector<1x16x1x16x8xf32>
    %13 = arith.truncf %12 : vector<1x16x1x16x8xf32> to vector<1x16x1x16x8xbf16>
    %c0_9 = arith.constant 0 : index
    %c0_10 = arith.constant 0 : index
    %c0_11 = arith.constant 0 : index
    %c0_12 = arith.constant 0 : index
    %c0_13 = arith.constant 0 : index
    %14 = vector.load %arg5[%c0_9, %c0_10, %c0_11, %c0_12, %c0_13] : memref<1x16x1x16x8xbf16, #tpu.memory_space<vmem>>, vector<1x16x1x16x8xbf16>
    tpu.vector_store %arg5[%c0_9, %c0_10, %c0_11, %c0_12, %c0_13], %13 {strides = array<i32>} : memref<1x16x1x16x8xbf16, #tpu.memory_space<vmem>>, vector<1x16x1x16x8xbf16>,
    return
  }
  func.func @transform_0(%arg0: i32, %arg1: i32) -> (i32, i32, i32, i32) {
    %c0_i32 = arith.constant 0 : i32
    %c0_i32_0 = arith.constant 0 : i32
    %c0_i32_1 = arith.constant 0 : i32
    return %arg0, %arg1, %c0_i32, %c0_i32_0 : i32, i32, i32, i32
  }
  func.func @transform_1(%arg0: i32, %arg1: i32) -> (i32, i32, i32) {
    %c0_i32 = arith.constant 0 : i32
    %c0_i32_0 = arith.constant 0 : i32
    %c0_i32_1 = arith.constant 0 : i32
    %c0_i32_2 = arith.constant 0 : i32
    return %c0_i32, %c0_i32_0, %c0_i32_1 : i32, i32, i32
  }
  func.func @transform_2(%arg0: i32, %arg1: i32) -> (i32, i32) {
    %c0_i32 = arith.constant 0 : i32
    %c0_i32_0 = arith.constant 0 : i32
    %c0_i32_1 = arith.constant 0 : i32
    return %c0_i32, %c0_i32_0 : i32, i32
  }
  func.func @transform_3(%arg0: i32, %arg1: i32) -> (i32, i32, i32, i32, i32) {
    %c0_i32 = arith.constant 0 : i32
    %c0_i32_0 = arith.constant 0 : i32
    %c0_i32_1 = arith.constant 0 : i32
    %c0_i32_2 = arith.constant 0 : i32
    return %arg0, %arg1, %c0_i32, %c0_i32_0, %c0_i32_1 : i32, i32, i32, i32, i32
  }
}

module attributes {stable_mosaic.version = 11 : i64} {
  func.func @_conv3x3_kernel(%arg0: i32, %arg1: i32, %arg2: memref<1x16x18x8xbf16, #tpu.memory_space<vmem>>, %arg3: memref<1x1x18x8xbf16, #tpu.memory_space<vmem>>, %arg4: memref<1x1x18x8xbf16, #tpu.memory_space<vmem>>, %arg5: memref<72x16xbf16, #tpu.memory_space<vmem>>, %arg6: memref<1x16xf32, #tpu.memory_space<vmem>>, %arg7: memref<1x8x8x16xbf16, #tpu.memory_space<vmem>>) attributes {dimension_semantics = [#tpu.dimension_semantics<parallel>, #tpu.dimension_semantics<parallel>], iteration_bounds = array<i64: 2, 1>, scalar_prefetch = 0 : i64, scratch_operands = 0 : i64, tpu.core_type = #tpu.core_type<tc>, window_params = [{transform_indices = @transform_0, window_bounds = array<i64: 1, 16, 18, 8>}, {transform_indices = @transform_1, window_bounds = array<i64: 1, 1, 18, 8>}, {transform_indices = @transform_2, window_bounds = array<i64: 1, 1, 18, 8>}, {pipeline_mode = #tpu.pipeline_mode<synchronous>, transform_indices = @transform_3, window_bounds = array<i64: 72, 16>}, {pipeline_mode = #tpu.pipeline_mode<synchronous>, transform_indices = @transform_4, window_bounds = array<i64: 1, 16>}, {transform_indices = @transform_5, window_bounds = array<i64: 1, 8, 8, 16>}]} {
    %c0 = arith.constant 0 : index
    %c0_0 = arith.constant 0 : index
    %c0_1 = arith.constant 0 : index
    %c0_2 = arith.constant 0 : index
    %0 = vector.load %arg2[%c0, %c0_0, %c0_1, %c0_2] : memref<1x16x18x8xbf16, #tpu.memory_space<vmem>>, vector<1x16x18x8xbf16>
    %c0_3 = arith.constant 0 : index
    %c0_4 = arith.constant 0 : index
    %c0_5 = arith.constant 0 : index
    %c0_6 = arith.constant 0 : index
    %1 = vector.load %arg3[%c0_3, %c0_4, %c0_5, %c0_6] : memref<1x1x18x8xbf16, #tpu.memory_space<vmem>>, vector<1x1x18x8xbf16>
    %c0_7 = arith.constant 0 : index
    %c0_8 = arith.constant 0 : index
    %c0_9 = arith.constant 0 : index
    %c0_10 = arith.constant 0 : index
    %2 = vector.load %arg4[%c0_7, %c0_8, %c0_9, %c0_10] : memref<1x1x18x8xbf16, #tpu.memory_space<vmem>>, vector<1x1x18x8xbf16>
    %3 = tpu.concatenate %0, %1, %2 in 1 : vector<1x16x18x8xbf16>, vector<1x1x18x8xbf16>, vector<1x1x18x8xbf16> -> vector<1x18x18x8xbf16>
    %4 = vector.shape_cast %3 : vector<1x18x18x8xbf16> to vector<18x18x8xbf16>
    %5 = vector.shape_cast %4 : vector<18x18x8xbf16> to vector<9x2x18x8xbf16>
    %6 = vector.extract_strided_slice %5 {offsets = [0, 0, 0, 0], sizes = [8, 1, 18, 8], strides = [1, 1, 1, 1]} : vector<9x2x18x8xbf16> to vector<8x1x18x8xbf16>
    %7 = vector.shape_cast %6 : vector<8x1x18x8xbf16> to vector<8x18x8xbf16>
    %8 = vector.extract_strided_slice %7 {offsets = [0, 0, 0], sizes = [8, 8, 8], strides = [1, 1, 1]} : vector<8x18x8xbf16> to vector<8x8x8xbf16>
    %9 = vector.extract_strided_slice %7 {offsets = [0, 9, 0], sizes = [8, 8, 8], strides = [1, 1, 1]} : vector<8x18x8xbf16> to vector<8x8x8xbf16>
    %10 = vector.extract_strided_slice %7 {offsets = [0, 1, 0], sizes = [8, 8, 8], strides = [1, 1, 1]} : vector<8x18x8xbf16> to vector<8x8x8xbf16>
    %11 = vector.extract_strided_slice %5 {offsets = [0, 1, 0, 0], sizes = [8, 1, 18, 8], strides = [1, 1, 1, 1]} : vector<9x2x18x8xbf16> to vector<8x1x18x8xbf16>
    %12 = vector.shape_cast %11 : vector<8x1x18x8xbf16> to vector<8x18x8xbf16>
    %13 = vector.extract_strided_slice %12 {offsets = [0, 0, 0], sizes = [8, 8, 8], strides = [1, 1, 1]} : vector<8x18x8xbf16> to vector<8x8x8xbf16>
    %14 = vector.extract_strided_slice %12 {offsets = [0, 9, 0], sizes = [8, 8, 8], strides = [1, 1, 1]} : vector<8x18x8xbf16> to vector<8x8x8xbf16>
    %15 = vector.extract_strided_slice %12 {offsets = [0, 1, 0], sizes = [8, 8, 8], strides = [1, 1, 1]} : vector<8x18x8xbf16> to vector<8x8x8xbf16>
    %16 = vector.extract_strided_slice %5 {offsets = [1, 0, 0, 0], sizes = [8, 1, 18, 8], strides = [1, 1, 1, 1]} : vector<9x2x18x8xbf16> to vector<8x1x18x8xbf16>
    %17 = vector.shape_cast %16 : vector<8x1x18x8xbf16> to vector<8x18x8xbf16>
    %18 = vector.extract_strided_slice %17 {offsets = [0, 0, 0], sizes = [8, 8, 8], strides = [1, 1, 1]} : vector<8x18x8xbf16> to vector<8x8x8xbf16>
    %19 = vector.extract_strided_slice %17 {offsets = [0, 9, 0], sizes = [8, 8, 8], strides = [1, 1, 1]} : vector<8x18x8xbf16> to vector<8x8x8xbf16>
    %20 = vector.extract_strided_slice %17 {offsets = [0, 1, 0], sizes = [8, 8, 8], strides = [1, 1, 1]} : vector<8x18x8xbf16> to vector<8x8x8xbf16>
    %21 = tpu.concatenate %8, %9, %10, %13, %14, %15, %18, %19, %20 in 2 : vector<8x8x8xbf16>, vector<8x8x8xbf16>, vector<8x8x8xbf16>, vector<8x8x8xbf16>, vector<8x8x8xbf16>, vector<8x8x8xbf16>, vector<8x8x8xbf16>, vector<8x8x8xbf16>, vector<8x8x8xbf16> -> vector<8x8x72xbf16>
    %22 = vector.shape_cast %21 : vector<8x8x72xbf16> to vector<64x72xbf16>
    %c0_11 = arith.constant 0 : index
    %c0_12 = arith.constant 0 : index
    %23 = vector.load %arg5[%c0_11, %c0_12] : memref<72x16xbf16, #tpu.memory_space<vmem>>, vector<72x16xbf16>
    %cst = arith.constant dense<0.000000e+00> : vector<64x16xf32>
    %24 = tpu.matmul %22, %23, %cst {dimension_numbers = #tpu.dot_dimension_numbers<[1], [0], [0], [1], [0, 0, 1, 1], [], []>} : vector<64x72xbf16>, vector<72x16xbf16>, vector<64x16xf32> -> vector<64x16xf32>
    %c0_13 = arith.constant 0 : index
    %c0_14 = arith.constant 0 : index
    %25 = vector.load %arg6[%c0_13, %c0_14] : memref<1x16xf32, #tpu.memory_space<vmem>>, vector<1x16xf32>
    %26 = vector.broadcast %25 : vector<1x16xf32> to vector<64x16xf32>
    %27 = arith.addf %24, %26 : vector<64x16xf32>
    %cst_15 = arith.constant 0.000000e+00 : f32
    %28 = vector.broadcast %cst_15 : f32 to vector<64x16xf32>
    %29 = arith.maximumf %27, %28 : vector<64x16xf32>
    %30 = vector.shape_cast %29 : vector<64x16xf32> to vector<1x8x8x16xf32>
    %31 = arith.truncf %30 : vector<1x8x8x16xf32> to vector<1x8x8x16xbf16>
    %c0_16 = arith.constant 0 : index
    %c0_17 = arith.constant 0 : index
    %c0_18 = arith.constant 0 : index
    %c0_19 = arith.constant 0 : index
    %32 = vector.load %arg7[%c0_16, %c0_17, %c0_18, %c0_19] : memref<1x8x8x16xbf16, #tpu.memory_space<vmem>>, vector<1x8x8x16xbf16>
    tpu.vector_store %arg7[%c0_16, %c0_17, %c0_18, %c0_19], %31 {strides = array<i32>} : memref<1x8x8x16xbf16, #tpu.memory_space<vmem>>, vector<1x8x8x16xbf16>,
    return
  }
  func.func @transform_0(%arg0: i32, %arg1: i32) -> (i32, i32, i32, i32) {
    %c0_i32 = arith.constant 0 : i32
    %c0_i32_0 = arith.constant 0 : i32
    %c0_i32_1 = arith.constant 0 : i32
    return %arg0, %arg1, %c0_i32, %c0_i32_0 : i32, i32, i32, i32
  }
  func.func @transform_1(%arg0: i32, %arg1: i32) -> (i32, i32, i32, i32) {
    %c1_i32 = arith.constant 1 : i32
    %0 = arith.addi %arg1, %c1_i32 : i32
    %c16_i32 = arith.constant 16 : i32
    %1 = arith.muli %0, %c16_i32 : i32
    %c0_i32 = arith.constant 0 : i32
    %c0_i32_0 = arith.constant 0 : i32
    %c0_i32_1 = arith.constant 0 : i32
    return %arg0, %1, %c0_i32, %c0_i32_0 : i32, i32, i32, i32
  }
  func.func @transform_2(%arg0: i32, %arg1: i32) -> (i32, i32, i32, i32) {
    %c1_i32 = arith.constant 1 : i32
    %0 = arith.addi %arg1, %c1_i32 : i32
    %c16_i32 = arith.constant 16 : i32
    %1 = arith.muli %0, %c16_i32 : i32
    %c1_i32_0 = arith.constant 1 : i32
    %2 = arith.addi %1, %c1_i32_0 : i32
    %c0_i32 = arith.constant 0 : i32
    %c0_i32_1 = arith.constant 0 : i32
    %c0_i32_2 = arith.constant 0 : i32
    return %arg0, %2, %c0_i32, %c0_i32_1 : i32, i32, i32, i32
  }
  func.func @transform_3(%arg0: i32, %arg1: i32) -> (i32, i32) {
    %c0_i32 = arith.constant 0 : i32
    %c0_i32_0 = arith.constant 0 : i32
    %c0_i32_1 = arith.constant 0 : i32
    return %c0_i32, %c0_i32_0 : i32, i32
  }
  func.func @transform_4(%arg0: i32, %arg1: i32) -> (i32, i32) {
    %c0_i32 = arith.constant 0 : i32
    %c0_i32_0 = arith.constant 0 : i32
    %c0_i32_1 = arith.constant 0 : i32
    return %c0_i32, %c0_i32_0 : i32, i32
  }
  func.func @transform_5(%arg0: i32, %arg1: i32) -> (i32, i32, i32, i32) {
    %c0_i32 = arith.constant 0 : i32
    %c0_i32_0 = arith.constant 0 : i32
    %c0_i32_1 = arith.constant 0 : i32
    return %arg0, %arg1, %c0_i32, %c0_i32_0 : i32, i32, i32, i32
  }
}

module attributes {stable_mosaic.version = 11 : i64} {
  func.func @_conv3x3_kernel(%arg0: i32, %arg1: i32, %arg2: memref<1x8x10x16xbf16, #tpu.memory_space<vmem>>, %arg3: memref<1x1x10x16xbf16, #tpu.memory_space<vmem>>, %arg4: memref<1x1x10x16xbf16, #tpu.memory_space<vmem>>, %arg5: memref<144x16xbf16, #tpu.memory_space<vmem>>, %arg6: memref<1x16xf32, #tpu.memory_space<vmem>>, %arg7: memref<1x8x8x16xbf16, #tpu.memory_space<vmem>>) attributes {dimension_semantics = [#tpu.dimension_semantics<parallel>, #tpu.dimension_semantics<parallel>], iteration_bounds = array<i64: 2, 1>, scalar_prefetch = 0 : i64, scratch_operands = 0 : i64, tpu.core_type = #tpu.core_type<tc>, window_params = [{transform_indices = @transform_0, window_bounds = array<i64: 1, 8, 10, 16>}, {transform_indices = @transform_1, window_bounds = array<i64: 1, 1, 10, 16>}, {transform_indices = @transform_2, window_bounds = array<i64: 1, 1, 10, 16>}, {pipeline_mode = #tpu.pipeline_mode<synchronous>, transform_indices = @transform_3, window_bounds = array<i64: 144, 16>}, {pipeline_mode = #tpu.pipeline_mode<synchronous>, transform_indices = @transform_4, window_bounds = array<i64: 1, 16>}, {transform_indices = @transform_5, window_bounds = array<i64: 1, 8, 8, 16>}]} {
    %c0 = arith.constant 0 : index
    %c0_0 = arith.constant 0 : index
    %c0_1 = arith.constant 0 : index
    %c0_2 = arith.constant 0 : index
    %0 = vector.load %arg2[%c0, %c0_0, %c0_1, %c0_2] : memref<1x8x10x16xbf16, #tpu.memory_space<vmem>>, vector<1x8x10x16xbf16>
    %c0_3 = arith.constant 0 : index
    %c0_4 = arith.constant 0 : index
    %c0_5 = arith.constant 0 : index
    %c0_6 = arith.constant 0 : index
    %1 = vector.load %arg3[%c0_3, %c0_4, %c0_5, %c0_6] : memref<1x1x10x16xbf16, #tpu.memory_space<vmem>>, vector<1x1x10x16xbf16>
    %c0_7 = arith.constant 0 : index
    %c0_8 = arith.constant 0 : index
    %c0_9 = arith.constant 0 : index
    %c0_10 = arith.constant 0 : index
    %2 = vector.load %arg4[%c0_7, %c0_8, %c0_9, %c0_10] : memref<1x1x10x16xbf16, #tpu.memory_space<vmem>>, vector<1x1x10x16xbf16>
    %3 = tpu.concatenate %0, %1, %2 in 1 : vector<1x8x10x16xbf16>, vector<1x1x10x16xbf16>, vector<1x1x10x16xbf16> -> vector<1x10x10x16xbf16>
    %4 = vector.shape_cast %3 : vector<1x10x10x16xbf16> to vector<10x10x16xbf16>
    %5 = vector.extract_strided_slice %4 {offsets = [0, 0, 0], sizes = [8, 8, 16], strides = [1, 1, 1]} : vector<10x10x16xbf16> to vector<8x8x16xbf16>
    %6 = vector.extract_strided_slice %4 {offsets = [0, 1, 0], sizes = [8, 8, 16], strides = [1, 1, 1]} : vector<10x10x16xbf16> to vector<8x8x16xbf16>
    %7 = vector.extract_strided_slice %4 {offsets = [0, 2, 0], sizes = [8, 8, 16], strides = [1, 1, 1]} : vector<10x10x16xbf16> to vector<8x8x16xbf16>
    %8 = vector.extract_strided_slice %4 {offsets = [1, 0, 0], sizes = [8, 8, 16], strides = [1, 1, 1]} : vector<10x10x16xbf16> to vector<8x8x16xbf16>
    %9 = vector.extract_strided_slice %4 {offsets = [1, 1, 0], sizes = [8, 8, 16], strides = [1, 1, 1]} : vector<10x10x16xbf16> to vector<8x8x16xbf16>
    %10 = vector.extract_strided_slice %4 {offsets = [1, 2, 0], sizes = [8, 8, 16], strides = [1, 1, 1]} : vector<10x10x16xbf16> to vector<8x8x16xbf16>
    %11 = vector.extract_strided_slice %4 {offsets = [2, 0, 0], sizes = [8, 8, 16], strides = [1, 1, 1]} : vector<10x10x16xbf16> to vector<8x8x16xbf16>
    %12 = vector.extract_strided_slice %4 {offsets = [2, 1, 0], sizes = [8, 8, 16], strides = [1, 1, 1]} : vector<10x10x16xbf16> to vector<8x8x16xbf16>
    %13 = vector.extract_strided_slice %4 {offsets = [2, 2, 0], sizes = [8, 8, 16], strides = [1, 1, 1]} : vector<10x10x16xbf16> to vector<8x8x16xbf16>
    %14 = tpu.concatenate %5, %6, %7, %8, %9, %10, %11, %12, %13 in 2 : vector<8x8x16xbf16>, vector<8x8x16xbf16>, vector<8x8x16xbf16>, vector<8x8x16xbf16>, vector<8x8x16xbf16>, vector<8x8x16xbf16>, vector<8x8x16xbf16>, vector<8x8x16xbf16>, vector<8x8x16xbf16> -> vector<8x8x144xbf16>
    %15 = vector.shape_cast %14 : vector<8x8x144xbf16> to vector<64x144xbf16>
    %c0_11 = arith.constant 0 : index
    %c0_12 = arith.constant 0 : index
    %16 = vector.load %arg5[%c0_11, %c0_12] : memref<144x16xbf16, #tpu.memory_space<vmem>>, vector<144x16xbf16>
    %cst = arith.constant dense<0.000000e+00> : vector<64x16xf32>
    %17 = tpu.matmul %15, %16, %cst {dimension_numbers = #tpu.dot_dimension_numbers<[1], [0], [0], [1], [0, 0, 1, 1], [], []>} : vector<64x144xbf16>, vector<144x16xbf16>, vector<64x16xf32> -> vector<64x16xf32>
    %c0_13 = arith.constant 0 : index
    %c0_14 = arith.constant 0 : index
    %18 = vector.load %arg6[%c0_13, %c0_14] : memref<1x16xf32, #tpu.memory_space<vmem>>, vector<1x16xf32>
    %19 = vector.broadcast %18 : vector<1x16xf32> to vector<64x16xf32>
    %20 = arith.addf %17, %19 : vector<64x16xf32>
    %cst_15 = arith.constant 0.000000e+00 : f32
    %21 = vector.broadcast %cst_15 : f32 to vector<64x16xf32>
    %22 = arith.maximumf %20, %21 : vector<64x16xf32>
    %23 = vector.shape_cast %22 : vector<64x16xf32> to vector<1x8x8x16xf32>
    %24 = arith.truncf %23 : vector<1x8x8x16xf32> to vector<1x8x8x16xbf16>
    %c0_16 = arith.constant 0 : index
    %c0_17 = arith.constant 0 : index
    %c0_18 = arith.constant 0 : index
    %c0_19 = arith.constant 0 : index
    %25 = vector.load %arg7[%c0_16, %c0_17, %c0_18, %c0_19] : memref<1x8x8x16xbf16, #tpu.memory_space<vmem>>, vector<1x8x8x16xbf16>
    tpu.vector_store %arg7[%c0_16, %c0_17, %c0_18, %c0_19], %24 {strides = array<i32>} : memref<1x8x8x16xbf16, #tpu.memory_space<vmem>>, vector<1x8x8x16xbf16>,
    return
  }
  func.func @transform_0(%arg0: i32, %arg1: i32) -> (i32, i32, i32, i32) {
    %c0_i32 = arith.constant 0 : i32
    %c0_i32_0 = arith.constant 0 : i32
    %c0_i32_1 = arith.constant 0 : i32
    return %arg0, %arg1, %c0_i32, %c0_i32_0 : i32, i32, i32, i32
  }
  func.func @transform_1(%arg0: i32, %arg1: i32) -> (i32, i32, i32, i32) {
    %c1_i32 = arith.constant 1 : i32
    %0 = arith.addi %arg1, %c1_i32 : i32
    %c8_i32 = arith.constant 8 : i32
    %1 = arith.muli %0, %c8_i32 : i32
    %c0_i32 = arith.constant 0 : i32
    %c0_i32_0 = arith.constant 0 : i32
    %c0_i32_1 = arith.constant 0 : i32
    return %arg0, %1, %c0_i32, %c0_i32_0 : i32, i32, i32, i32
  }
  func.func @transform_2(%arg0: i32, %arg1: i32) -> (i32, i32, i32, i32) {
    %c1_i32 = arith.constant 1 : i32
    %0 = arith.addi %arg1, %c1_i32 : i32
    %c8_i32 = arith.constant 8 : i32
    %1 = arith.muli %0, %c8_i32 : i32
    %c1_i32_0 = arith.constant 1 : i32
    %2 = arith.addi %1, %c1_i32_0 : i32
    %c0_i32 = arith.constant 0 : i32
    %c0_i32_1 = arith.constant 0 : i32
    %c0_i32_2 = arith.constant 0 : i32
    return %arg0, %2, %c0_i32, %c0_i32_1 : i32, i32, i32, i32
  }
  func.func @transform_3(%arg0: i32, %arg1: i32) -> (i32, i32) {
    %c0_i32 = arith.constant 0 : i32
    %c0_i32_0 = arith.constant 0 : i32
    %c0_i32_1 = arith.constant 0 : i32
    return %c0_i32, %c0_i32_0 : i32, i32
  }
  func.func @transform_4(%arg0: i32, %arg1: i32) -> (i32, i32) {
    %c0_i32 = arith.constant 0 : i32
    %c0_i32_0 = arith.constant 0 : i32
    %c0_i32_1 = arith.constant 0 : i32
    return %c0_i32, %c0_i32_0 : i32, i32
  }
  func.func @transform_5(%arg0: i32, %arg1: i32) -> (i32, i32, i32, i32) {
    %c0_i32 = arith.constant 0 : i32
    %c0_i32_0 = arith.constant 0 : i32
    %c0_i32_1 = arith.constant 0 : i32
    return %arg0, %arg1, %c0_i32, %c0_i32_0 : i32, i32, i32, i32
  }
}

module attributes {stable_mosaic.version = 11 : i64} {
  func.func @_deconv_kernel(%arg0: i32, %arg1: i32, %arg2: memref<1x8x8x16xbf16, #tpu.memory_space<vmem>>, %arg3: memref<2x16x16xbf16, #tpu.memory_space<vmem>>, %arg4: memref<1x16xf32, #tpu.memory_space<vmem>>, %arg5: memref<1x8x2x8x16xbf16, #tpu.memory_space<vmem>>) attributes {dimension_semantics = [#tpu.dimension_semantics<parallel>, #tpu.dimension_semantics<parallel>], iteration_bounds = array<i64: 2, 1>, scalar_prefetch = 0 : i64, scratch_operands = 0 : i64, tpu.core_type = #tpu.core_type<tc>, window_params = [{transform_indices = @transform_0, window_bounds = array<i64: 1, 8, 8, 16>}, {pipeline_mode = #tpu.pipeline_mode<synchronous>, transform_indices = @transform_1, window_bounds = array<i64: 2, 16, 16>}, {pipeline_mode = #tpu.pipeline_mode<synchronous>, transform_indices = @transform_2, window_bounds = array<i64: 1, 16>}, {transform_indices = @transform_3, window_bounds = array<i64: 1, 8, 2, 8, 16>}]} {
    %c0 = arith.constant 0 : index
    %c0_0 = arith.constant 0 : index
    %c0_1 = arith.constant 0 : index
    %c0_2 = arith.constant 0 : index
    %0 = vector.load %arg2[%c0, %c0_0, %c0_1, %c0_2] : memref<1x8x8x16xbf16, #tpu.memory_space<vmem>>, vector<1x8x8x16xbf16>
    %1 = vector.shape_cast %0 : vector<1x8x8x16xbf16> to vector<64x16xbf16>
    %c0_3 = arith.constant 0 : index
    %c0_4 = arith.constant 0 : index
    %c0_5 = arith.constant 0 : index
    %2 = vector.load %arg3[%c0_3, %c0_4, %c0_5] : memref<2x16x16xbf16, #tpu.memory_space<vmem>>, vector<2x16x16xbf16>
    %c0_6 = arith.constant 0 : index
    %c0_7 = arith.constant 0 : index
    %3 = vector.load %arg4[%c0_6, %c0_7] : memref<1x16xf32, #tpu.memory_space<vmem>>, vector<1x16xf32>
    %4 = vector.extract_strided_slice %2 {offsets = [0, 0, 0], sizes = [1, 16, 16], strides = [1, 1, 1]} : vector<2x16x16xbf16> to vector<1x16x16xbf16>
    %5 = vector.shape_cast %4 : vector<1x16x16xbf16> to vector<16x16xbf16>
    %cst = arith.constant dense<0.000000e+00> : vector<64x16xf32>
    %6 = tpu.matmul %1, %5, %cst {dimension_numbers = #tpu.dot_dimension_numbers<[1], [0], [0], [1], [0, 0, 1, 1], [], []>} : vector<64x16xbf16>, vector<16x16xbf16>, vector<64x16xf32> -> vector<64x16xf32>
    %7 = vector.broadcast %3 : vector<1x16xf32> to vector<64x16xf32>
    %8 = arith.addf %6, %7 : vector<64x16xf32>
    %cst_8 = arith.constant 0.000000e+00 : f32
    %9 = vector.broadcast %cst_8 : f32 to vector<64x16xf32>
    %10 = arith.maximumf %8, %9 : vector<64x16xf32>
    %11 = vector.shape_cast %10 : vector<64x16xf32> to vector<8x8x16xf32>
    %12 = vector.extract_strided_slice %2 {offsets = [1, 0, 0], sizes = [1, 16, 16], strides = [1, 1, 1]} : vector<2x16x16xbf16> to vector<1x16x16xbf16>
    %13 = vector.shape_cast %12 : vector<1x16x16xbf16> to vector<16x16xbf16>
    %cst_9 = arith.constant dense<0.000000e+00> : vector<64x16xf32>
    %14 = tpu.matmul %1, %13, %cst_9 {dimension_numbers = #tpu.dot_dimension_numbers<[1], [0], [0], [1], [0, 0, 1, 1], [], []>} : vector<64x16xbf16>, vector<16x16xbf16>, vector<64x16xf32> -> vector<64x16xf32>
    %15 = vector.broadcast %3 : vector<1x16xf32> to vector<64x16xf32>
    %16 = arith.addf %14, %15 : vector<64x16xf32>
    %cst_10 = arith.constant 0.000000e+00 : f32
    %17 = vector.broadcast %cst_10 : f32 to vector<64x16xf32>
    %18 = arith.maximumf %16, %17 : vector<64x16xf32>
    %19 = vector.shape_cast %18 : vector<64x16xf32> to vector<8x8x16xf32>
    %20 = vector.shape_cast %11 : vector<8x8x16xf32> to vector<8x1x8x16xf32>
    %21 = vector.shape_cast %19 : vector<8x8x16xf32> to vector<8x1x8x16xf32>
    %22 = tpu.concatenate %20, %21 in 1 : vector<8x1x8x16xf32>, vector<8x1x8x16xf32> -> vector<8x2x8x16xf32>
    %23 = vector.shape_cast %22 : vector<8x2x8x16xf32> to vector<1x8x2x8x16xf32>
    %24 = arith.truncf %23 : vector<1x8x2x8x16xf32> to vector<1x8x2x8x16xbf16>
    %c0_11 = arith.constant 0 : index
    %c0_12 = arith.constant 0 : index
    %c0_13 = arith.constant 0 : index
    %c0_14 = arith.constant 0 : index
    %c0_15 = arith.constant 0 : index
    %25 = vector.load %arg5[%c0_11, %c0_12, %c0_13, %c0_14, %c0_15] : memref<1x8x2x8x16xbf16, #tpu.memory_space<vmem>>, vector<1x8x2x8x16xbf16>
    tpu.vector_store %arg5[%c0_11, %c0_12, %c0_13, %c0_14, %c0_15], %24 {strides = array<i32>} : memref<1x8x2x8x16xbf16, #tpu.memory_space<vmem>>, vector<1x8x2x8x16xbf16>,
    return
  }
  func.func @transform_0(%arg0: i32, %arg1: i32) -> (i32, i32, i32, i32) {
    %c0_i32 = arith.constant 0 : i32
    %c0_i32_0 = arith.constant 0 : i32
    %c0_i32_1 = arith.constant 0 : i32
    return %arg0, %arg1, %c0_i32, %c0_i32_0 : i32, i32, i32, i32
  }
  func.func @transform_1(%arg0: i32, %arg1: i32) -> (i32, i32, i32) {
    %c0_i32 = arith.constant 0 : i32
    %c0_i32_0 = arith.constant 0 : i32
    %c0_i32_1 = arith.constant 0 : i32
    %c0_i32_2 = arith.constant 0 : i32
    return %c0_i32, %c0_i32_0, %c0_i32_1 : i32, i32, i32
  }
  func.func @transform_2(%arg0: i32, %arg1: i32) -> (i32, i32) {
    %c0_i32 = arith.constant 0 : i32
    %c0_i32_0 = arith.constant 0 : i32
    %c0_i32_1 = arith.constant 0 : i32
    return %c0_i32, %c0_i32_0 : i32, i32
  }
  func.func @transform_3(%arg0: i32, %arg1: i32) -> (i32, i32, i32, i32, i32) {
    %c0_i32 = arith.constant 0 : i32
    %c0_i32_0 = arith.constant 0 : i32
    %c0_i32_1 = arith.constant 0 : i32
    %c0_i32_2 = arith.constant 0 : i32
    return %arg0, %arg1, %c0_i32, %c0_i32_0, %c0_i32_1 : i32, i32, i32, i32, i32
  }
}

module attributes {stable_mosaic.version = 11 : i64} {
  func.func @_head_kernel(%arg0: i32, %arg1: memref<256x8xbf16, #tpu.memory_space<vmem>>, %arg2: memref<256x8xbf16, #tpu.memory_space<vmem>>, %arg3: memref<8x24xbf16, #tpu.memory_space<vmem>>, %arg4: memref<8x24xbf16, #tpu.memory_space<vmem>>, %arg5: memref<1x24xf32, #tpu.memory_space<vmem>>, %arg6: memref<256x6xf32, #tpu.memory_space<vmem>>, %arg7: memref<256x14xf32, #tpu.memory_space<vmem>>, %arg8: memref<256x4xf32, #tpu.memory_space<vmem>>) attributes {dimension_semantics = [#tpu.dimension_semantics<parallel>], iteration_bounds = array<i64: 2>, scalar_prefetch = 0 : i64, scratch_operands = 0 : i64, tpu.core_type = #tpu.core_type<tc>, window_params = [{transform_indices = @transform_0, window_bounds = array<i64: 256, 8>}, {transform_indices = @transform_1, window_bounds = array<i64: 256, 8>}, {pipeline_mode = #tpu.pipeline_mode<synchronous>, transform_indices = @transform_2, window_bounds = array<i64: 8, 24>}, {pipeline_mode = #tpu.pipeline_mode<synchronous>, transform_indices = @transform_3, window_bounds = array<i64: 8, 24>}, {pipeline_mode = #tpu.pipeline_mode<synchronous>, transform_indices = @transform_4, window_bounds = array<i64: 1, 24>}, {transform_indices = @transform_5, window_bounds = array<i64: 256, 6>}, {transform_indices = @transform_6, window_bounds = array<i64: 256, 14>}, {transform_indices = @transform_7, window_bounds = array<i64: 256, 4>}]} {
    %c0 = arith.constant 0 : index
    %c0_0 = arith.constant 0 : index
    %0 = vector.load %arg1[%c0, %c0_0] : memref<256x8xbf16, #tpu.memory_space<vmem>>, vector<256x8xbf16>
    %c0_1 = arith.constant 0 : index
    %c0_2 = arith.constant 0 : index
    %1 = vector.load %arg3[%c0_1, %c0_2] : memref<8x24xbf16, #tpu.memory_space<vmem>>, vector<8x24xbf16>
    %cst = arith.constant dense<0.000000e+00> : vector<256x24xf32>
    %2 = tpu.matmul %0, %1, %cst {dimension_numbers = #tpu.dot_dimension_numbers<[1], [0], [0], [1], [0, 0, 1, 1], [], []>} : vector<256x8xbf16>, vector<8x24xbf16>, vector<256x24xf32> -> vector<256x24xf32>
    %c0_3 = arith.constant 0 : index
    %c0_4 = arith.constant 0 : index
    %3 = vector.load %arg2[%c0_3, %c0_4] : memref<256x8xbf16, #tpu.memory_space<vmem>>, vector<256x8xbf16>
    %c0_5 = arith.constant 0 : index
    %c0_6 = arith.constant 0 : index
    %4 = vector.load %arg4[%c0_5, %c0_6] : memref<8x24xbf16, #tpu.memory_space<vmem>>, vector<8x24xbf16>
    %cst_7 = arith.constant dense<0.000000e+00> : vector<256x24xf32>
    %5 = tpu.matmul %3, %4, %cst_7 {dimension_numbers = #tpu.dot_dimension_numbers<[1], [0], [0], [1], [0, 0, 1, 1], [], []>} : vector<256x8xbf16>, vector<8x24xbf16>, vector<256x24xf32> -> vector<256x24xf32>
    %6 = arith.addf %2, %5 : vector<256x24xf32>
    %c0_8 = arith.constant 0 : index
    %c0_9 = arith.constant 0 : index
    %7 = vector.load %arg5[%c0_8, %c0_9] : memref<1x24xf32, #tpu.memory_space<vmem>>, vector<1x24xf32>
    %8 = vector.broadcast %7 : vector<1x24xf32> to vector<256x24xf32>
    %9 = arith.addf %6, %8 : vector<256x24xf32>
    %10 = vector.extract_strided_slice %9 {offsets = [0, 0], sizes = [256, 6], strides = [1, 1]} : vector<256x24xf32> to vector<256x6xf32>
    %c0_10 = arith.constant 0 : index
    %c0_11 = arith.constant 0 : index
    %11 = vector.load %arg6[%c0_10, %c0_11] : memref<256x6xf32, #tpu.memory_space<vmem>>, vector<256x6xf32>
    tpu.vector_store %arg6[%c0_10, %c0_11], %10 {strides = array<i32>} : memref<256x6xf32, #tpu.memory_space<vmem>>, vector<256x6xf32>,
    %12 = vector.extract_strided_slice %9 {offsets = [0, 6], sizes = [256, 14], strides = [1, 1]} : vector<256x24xf32> to vector<256x14xf32>
    %c0_12 = arith.constant 0 : index
    %c0_13 = arith.constant 0 : index
    %13 = vector.load %arg7[%c0_12, %c0_13] : memref<256x14xf32, #tpu.memory_space<vmem>>, vector<256x14xf32>
    tpu.vector_store %arg7[%c0_12, %c0_13], %12 {strides = array<i32>} : memref<256x14xf32, #tpu.memory_space<vmem>>, vector<256x14xf32>,
    %14 = vector.extract_strided_slice %9 {offsets = [0, 20], sizes = [256, 4], strides = [1, 1]} : vector<256x24xf32> to vector<256x4xf32>
    %c0_14 = arith.constant 0 : index
    %c0_15 = arith.constant 0 : index
    %15 = vector.load %arg8[%c0_14, %c0_15] : memref<256x4xf32, #tpu.memory_space<vmem>>, vector<256x4xf32>
    tpu.vector_store %arg8[%c0_14, %c0_15], %14 {strides = array<i32>} : memref<256x4xf32, #tpu.memory_space<vmem>>, vector<256x4xf32>,
    return
  }
  func.func @transform_0(%arg0: i32) -> (i32, i32) {
    %c0_i32 = arith.constant 0 : i32
    %c0_i32_0 = arith.constant 0 : i32
    return %arg0, %c0_i32 : i32, i32
  }
  func.func @transform_1(%arg0: i32) -> (i32, i32) {
    %c0_i32 = arith.constant 0 : i32
    %c0_i32_0 = arith.constant 0 : i32
    return %arg0, %c0_i32 : i32, i32
  }
  func.func @transform_2(%arg0: i32) -> (i32, i32) {
    %c0_i32 = arith.constant 0 : i32
    %c0_i32_0 = arith.constant 0 : i32
    %c0_i32_1 = arith.constant 0 : i32
    return %c0_i32, %c0_i32_0 : i32, i32
  }
  func.func @transform_3(%arg0: i32) -> (i32, i32) {
    %c0_i32 = arith.constant 0 : i32
    %c0_i32_0 = arith.constant 0 : i32
    %c0_i32_1 = arith.constant 0 : i32
    return %c0_i32, %c0_i32_0 : i32, i32
  }
  func.func @transform_4(%arg0: i32) -> (i32, i32) {
    %c0_i32 = arith.constant 0 : i32
    %c0_i32_0 = arith.constant 0 : i32
    %c0_i32_1 = arith.constant 0 : i32
    return %c0_i32, %c0_i32_0 : i32, i32
  }
  func.func @transform_5(%arg0: i32) -> (i32, i32) {
    %c0_i32 = arith.constant 0 : i32
    %c0_i32_0 = arith.constant 0 : i32
    return %arg0, %c0_i32 : i32, i32
  }
  func.func @transform_6(%arg0: i32) -> (i32, i32) {
    %c0_i32 = arith.constant 0 : i32
    %c0_i32_0 = arith.constant 0 : i32
    return %arg0, %c0_i32 : i32, i32
  }
  func.func @transform_7(%arg0: i32) -> (i32, i32) {
    %c0_i32 = arith.constant 0 : i32
    %c0_i32_0 = arith.constant 0 : i32
    return %arg0, %c0_i32 : i32, i32
  }
}

</mosaic_0001>

<llo_original>
// kernel: _lambda_.9
$region0: #{_lambda_.9}
  #allocation0 [shape = 'u32[]', space=smem, size = 0x4, offset = 0x4, fixed_abs, tag = 'smem constant byte address 0x4 - core index']
  #allocation1 [shape = 'u32[144,128]{1,0:T(1,128)}', space=vmem, size = 0x12000, scoped, tag = 'internal scratch']
  %s0 = inlined_call_operand.vmem [shape: bf16[2,16,16,8], index: 0, kind: input, shape index: {}]
  %s1 = inlined_call_operand.vmem [shape: bf16[1,8,8], index: 1, kind: input, shape index: {}]
  %s2 = inlined_call_operand.vmem [shape: f32[1,8], index: 2, kind: input, shape index: {}]
  %s3 = inlined_call_operand.vmem [shape: bf16[2,16,1,16,8], index: 3, kind: output, shape index: {}]
  %s4 = sld [smem:[#allocation0]]
  $region45: #{_lambda_.9} parent=0
    _
  %s6 = ssub.s32 1, %s4
  %s7 = scalar_select 0, %s6, %s4
  loop: start=0, step=1, limit=4
  $region2: #{_lambda_.9} parent=0 // loop_pre_header
    _
  $region3: #{_lambda_.9} parent=0 // loop_header
    %s9 = sphi 0, %s13
    %p10 = scmp.ge.s32.totalorder %s9, 4
    %s16 = sphi 0, %s28
    %s17 = sphi 0, %s24
    %s18 = sphi 0, %s16
    %s19 = sphi 0, %s17
    %s20 = sphi 0, %s18
    %s21 = sphi 0, %s19
    %s33 = sphi 0, %s35
    %s36 = sphi 0, %s33
    %s37 = sphi 0, %s36
    %s53 = sphi 0, %s37
    %s57 = sphi 0, %s57
    %s59 = sphi 0, %s57
    %s60 = sphi 0, %s59
    %s74 = sphi 0, %s60
    %s78 = sphi 0, %s78
    %s80 = sphi 0, %s78
    %s81 = sphi 0, %s80
    %s95 = sphi 0, %s81
    %s103 = sphi 0, %s105
    %s106 = sphi 0, %s103
    %s107 = sphi 0, %s106
    %s123 = sphi 0, %s107
  $region4: #{_lambda_.9} parent=0 // loop_header_branch
    %12 = sbr.rel (%p10) target = $region8
  $region5: #{_lambda_.9} parent=0 // loop_body
    %s14 = ssub.s32 %s9, 1
    %s15 = ssub.s32 %s9, 2
    %s22 = sadd.s32 1, %s17
    %p23 = scmp.ge.s32.totalorder %s22, 1
    %s24 = scalar_select %p23, 0, %s22
    %s25 = sadd.s32 1, %s16
    %s26 = scalar_select %p23, %s25, %s16
    %p27 = scmp.ge.s32.totalorder %s26, 2
    %s28 = scalar_select %p27, 0, %s26
    %s29 = ssub.s32 %s16, %s28
    %s30 = ssub.s32 %s17, %s24
    %s31 = sor.u32 %s29, %s30
    %p32 = scmp.eq.s32.totalorder %s31, 0
    %s34 = sadd.s32 %s33, 1
    %s35 = scalar_select %p32, %s33, %s34
    %p38 = pneg %p32
    %p39 = scmp.eq.s32.totalorder %s9, 1
    %p40 = por %p38, %p39
    %p41 = scmp.ne.s32.totalorder %s33, %s36
    %p42 = scmp.eq.s32.totalorder %s9, 0
    %p43 = por %p41, %p42
    %p44 = scmp.ne.s32.totalorder %s33, %s36
    %p45 = scmp.eq.s32.totalorder %s14, 1
    %p46 = por %p44, %p45
    %p47 = scmp.ne.s32.totalorder %s36, %s37
    %p48 = scmp.eq.s32.totalorder %s14, 0
    %p49 = por %p47, %p48
    %p50 = scmp.ne.s32.totalorder %s36, %s37
    %p51 = scmp.eq.s32.totalorder %s15, 1
    %p52 = por %p50, %p51
    %p54 = scmp.ne.s32.totalorder %s37, %s53
    %p55 = scmp.eq.s32.totalorder %s15, 0
    %p56 = por %p54, %p55
    %s58 = sadd.s32 %s57, 1
    %p61 = scmp.eq.s32.totalorder %s9, 1
    %p62 = scmp.ne.s32.totalorder %s57, %s59
    %p63 = scmp.eq.s32.totalorder %s9, 0
    %p64 = por %p62, %p63
    %p65 = scmp.ne.s32.totalorder %s57, %s59
    %p66 = scmp.eq.s32.totalorder %s14, 1
    %p67 = por %p65, %p66
    %p68 = scmp.ne.s32.totalorder %s59, %s60
    %p69 = scmp.eq.s32.totalorder %s14, 0
    %p70 = por %p68, %p69
    %p71 = scmp.ne.s32.totalorder %s59, %s60
    %p72 = scmp.eq.s32.totalorder %s15, 1
    %p73 = por %p71, %p72
    %p75 = scmp.ne.s32.totalorder %s60, %s74
    %p76 = scmp.eq.s32.totalorder %s15, 0
    %p77 = por %p75, %p76
    %s79 = sadd.s32 %s78, 1
    %p82 = scmp.eq.s32.totalorder %s9, 1
    %p83 = scmp.ne.s32.totalorder %s78, %s80
    %p84 = scmp.eq.s32.totalorder %s9, 0
    %p85 = por %p83, %p84
    %p86 = scmp.ne.s32.totalorder %s78, %s80
    %p87 = scmp.eq.s32.totalorder %s14, 1
    %p88 = por %p86, %p87
    %p89 = scmp.ne.s32.totalorder %s80, %s81
    %p90 = scmp.eq.s32.totalorder %s14, 0
    %p91 = por %p89, %p90
    %p92 = scmp.ne.s32.totalorder %s80, %s81
    %p93 = scmp.eq.s32.totalorder %s15, 1
    %p94 = por %p92, %p93
    %p96 = scmp.ne.s32.totalorder %s81, %s95
    %p97 = scmp.eq.s32.totalorder %s15, 0
    %p98 = por %p96, %p97
    %s99 = ssub.s32 %s16, %s28
    %s100 = ssub.s32 %s17, %s24
    %s101 = sor.u32 %s99, %s100
    %p102 = scmp.eq.s32.totalorder %s101, 0
    %s104 = sadd.s32 %s103, 1
    %s105 = scalar_select %p102, %s103, %s104
    %p108 = pneg %p102
    %p109 = scmp.eq.s32.totalorder %s9, 1
    %p110 = por %p108, %p109
    %p111 = scmp.ne.s32.totalorder %s103, %s106
    %p112 = scmp.eq.s32.totalorder %s9, 0
    %p113 = por %p111, %p112
    %p114 = scmp.ne.s32.totalorder %s103, %s106
    %p115 = scmp.eq.s32.totalorder %s14, 1
    %p116 = por %p114, %p115
    %p117 = scmp.ne.s32.totalorder %s106, %s107
    %p118 = scmp.eq.s32.totalorder %s14, 0
    %p119 = por %p117, %p118
    %p120 = scmp.ne.s32.totalorder %s106, %s107
    %p121 = scmp.eq.s32.totalorder %s15, 1
    %p122 = por %p120, %p121
    %p124 = scmp.ne.s32.totalorder %s107, %s123
    %p125 = scmp.eq.s32.totalorder %s15, 0
    %p126 = por %p124, %p125
    %p127 = scmp.le.s32.totalorder 1, %s9
    %p128 = scmp.lt.s32.totalorder %s9, 3
    %p129 = pnand %p127, %p128
    %p130 = pneg %p129
    // Predicated region
    $region9: #{_lambda_.9} parent=5 // pred_check
      _
    $region10: #{_lambda_.9} parent=5 // pred_check_branch
      %132 = sbr.rel (%p129) target = $region12
    $region11: #{_lambda_.9} parent=5 // pred_region
      %s133 = ssub.s32 %s9, 1
      // Predicated region
      $region13: #{_lambda_.9} parent=11 // pred_check
        %p134 = pneg %p70
      $region14: #{_lambda_.9} parent=11 // pred_check_branch
        %136 = sbr.rel (%p134) target = $region16
      $region15: #{_lambda_.9} parent=11 // pred_region
        _
      $region16: #{_lambda_.9} parent=11 // pred_fallthru
        _
      // Predicated region
      $region17: #{_lambda_.9} parent=11 // pred_check
        %p137 = pneg %p91
      $region18: #{_lambda_.9} parent=11 // pred_check_branch
        %139 = sbr.rel (%p137) target = $region20
      $region19: #{_lambda_.9} parent=11 // pred_region
        _
      $region20: #{_lambda_.9} parent=11 // pred_fallthru
        _
    $region12: #{_lambda_.9} parent=5 // pred_fallthru
      _
    %p140 = scmp.lt.s32.totalorder %s9, 2
    // Predicated region
    $region21: #{_lambda_.9} parent=5 // pred_check
      %p141 = pneg %p140
    $region22: #{_lambda_.9} parent=5 // pred_check_branch
      %143 = sbr.rel (%p141) target = $region24
    $region23: #{_lambda_.9} parent=5 // pred_region
      // Predicated region
      $region25: #{_lambda_.9} parent=23 // pred_check
        %p144 = pneg %p43
      $region26: #{_lambda_.9} parent=23 // pred_check_branch
        %146 = sbr.rel (%p144) target = $region28
      $region27: #{_lambda_.9} parent=23 // pred_region
        %s147 = smul.u32 16, %s17
        %p148 = scmp.lt.s32.totalorder %s16, 1
        %s149 = scalar_select %p148, %s16, 1
        %p150 = scmp.lt.s32.totalorder %s147, 15
        %s151 = scalar_select %p150, %s147, 15
        %s152 = smul.addr %s151, 2
        %s153 = smul.addr %s149, 32
        %s154 = sadd.s32 %s152, %s153
        %s155 = smul.addr %s154, 4
        %s156 = scalar_lea.vmem %s0, %s155
        %s157 = smul.u32 16, %s17
      $region28: #{_lambda_.9} parent=23 // pred_fallthru
        _
    $region24: #{_lambda_.9} parent=5 // pred_fallthru
      _
    %p158 = scmp.le.s32.totalorder 1, %s9
    %p159 = scmp.lt.s32.totalorder %s9, 3
    %p160 = pnand %p158, %p159
    %p161 = pneg %p160
    // Predicated region
    $region29: #{_lambda_.9} parent=5 // pred_check
      _
    $region30: #{_lambda_.9} parent=5 // pred_check_branch
      %163 = sbr.rel (%p160) target = $region32
    $region31: #{_lambda_.9} parent=5 // pred_region
      %s164 = ssub.s32 %s9, 1
      %s165 = smul.u32 16, %s19
      %p166 = scmp.lt.s32.totalorder %s18, 1
      %s167 = scalar_select %p166, %s18, 1
      %p168 = scmp.lt.s32.totalorder %s165, 15
      %s169 = scalar_select %p168, %s165, 15
      %s170 = smul.addr %s169, 2
      %s171 = smul.addr %s167, 32
      %s172 = sadd.s32 %s170, %s171
      %s173 = smul.addr %s172, 4
      %s174 = scalar_lea.vmem %s0, %s173
      %p175 = pneg %p49
      %p176 = pneg %p46
      %p177 = pneg %p70
      %p178 = pneg %p67
      %p179 = pneg %p91
      %p180 = pneg %p88
      %p181 = pneg %p119
      %p182 = pneg %p116
      %s183 = smul.u32 16, %s19
      %p184 = scmp.lt.s32.totalorder %s18, 1
      %s185 = scalar_select %p184, %s18, 1
      %p186 = scmp.lt.s32.totalorder %s183, 15
      %s187 = scalar_select %p186, %s183, 15
      %s188 = smul.addr %s187, 2
      %s189 = smul.addr %s185, 32
      %s190 = sadd.s32 %s188, %s189
      %s191 = smul.addr %s190, 4
      %s192 = scalar_lea.vmem %s3, %s191
      %s193 = smul.u32 16, %s19
      %p194 = scmp.lt.s32.totalorder %s18, 1
      %s195 = scalar_select %p194, %s18, 1
      %p196 = scmp.lt.s32.totalorder %s193, 15
      %s197 = scalar_select %p196, %s193, 15
      %s198 = smul.addr %s197, 2
      %s199 = smul.addr %s195, 32
      %s200 = sadd.s32 %s198, %s199
      %s201 = smul.addr %s200, 4
      %s202 = scalar_lea.vmem %s0, %s201
      %s203 = smul.u32 16, %s19
      %s204 = smul.u32 16, %s19
      %p205 = scmp.lt.s32.totalorder %s18, 1
      %s206 = scalar_select %p205, %s18, 1
      %p207 = scmp.lt.s32.totalorder %s204, 15
      %s208 = scalar_select %p207, %s204, 15
      %s209 = smul.addr %s208, 2
      %s210 = smul.addr %s206, 32
      %s211 = sadd.s32 %s209, %s210
      %s212 = smul.addr %s211, 4
      %s213 = scalar_lea.vmem %s3, %s212
      %s214 = smul.u32 16, %s19
      %v216 = vld [vmem:[%s202] sm:$0xf]
      %v217 = vld [vmem:[%s202 + $0x4] sm:$0xf]
      %v218 = vld [vmem:[%s202 + $0x8] sm:$0xf]
      %v219 = vld [vmem:[%s202 + $0xc] sm:$0xf]
      %v220 = vld [vmem:[%s202 + $0x10] sm:$0xf]
      %v221 = vld [vmem:[%s202 + $0x14] sm:$0xf]
      %v222 = vld [vmem:[%s202 + $0x18] sm:$0xf]
      %v223 = vld [vmem:[%s202 + $0x1c] sm:$0xf]
      %v224 = vld [vmem:[%s202 + $0x20] sm:$0xf]
      %v225 = vld [vmem:[%s202 + $0x24] sm:$0xf]
      %v226 = vld [vmem:[%s202 + $0x28] sm:$0xf]
      %v227 = vld [vmem:[%s202 + $0x2c] sm:$0xf]
      %v228 = vld [vmem:[%s202 + $0x30] sm:$0xf]
      %v229 = vld [vmem:[%s202 + $0x34] sm:$0xf]
      %v230 = vld [vmem:[%s202 + $0x38] sm:$0xf]
      %v231 = vld [vmem:[%s202 + $0x3c] sm:$0xf]
      %v232 = vld [vmem:[%s202 + $0x40] sm:$0xf]
      %v233 = vld [vmem:[%s202 + $0x44] sm:$0xf]
      %v234 = vld [vmem:[%s202 + $0x48] sm:$0xf]
      %v235 = vld [vmem:[%s202 + $0x4c] sm:$0xf]
      %v236 = vld [vmem:[%s202 + $0x50] sm:$0xf]
      %v237 = vld [vmem:[%s202 + $0x54] sm:$0xf]
      %v238 = vld [vmem:[%s202 + $0x58] sm:$0xf]
      %v239 = vld [vmem:[%s202 + $0x5c] sm:$0xf]
      %v240 = vld [vmem:[%s202 + $0x60] sm:$0xf]
      %v241 = vld [vmem:[%s202 + $0x64] sm:$0xf]
      %v242 = vld [vmem:[%s202 + $0x68] sm:$0xf]
      %v243 = vld [vmem:[%s202 + $0x6c] sm:$0xf]
      %v244 = vld [vmem:[%s202 + $0x70] sm:$0xf]
      %v245 = vld [vmem:[%s202 + $0x74] sm:$0xf]
      %v246 = vld [vmem:[%s202 + $0x78] sm:$0xf]
      %v247 = vld [vmem:[%s202 + $0x7c] sm:$0xf]
      %v248 = vld [vmem:[%s1] sm:$0xf]
      %v249 = vld [vmem:[%s2] sm:$0x1]
      %v251 = vlaneseq
      %v252 = vshrl.u32 %v251, 7
      %v253 = vsub.s32 0, %v252
      %v254 = vrot.slane %v249, %v253
      %v288 = vunpack.c.l.b16 %v216
      %v289 = vunpack.c.l.b16 %v217
      %v290 = vunpack.c.l.b16 %v218
      %v291 = vunpack.c.l.b16 %v219
      %v292 = vunpack.c.l.b16 %v220
      %v293 = vunpack.c.l.b16 %v221
      %v294 = vunpack.c.l.b16 %v222
      %v295 = vunpack.c.l.b16 %v223
      %v296 = vunpack.c.l.b16 %v224
      %v297 = vunpack.c.l.b16 %v225
      %v298 = vunpack.c.l.b16 %v226
      %v299 = vunpack.c.l.b16 %v227
      %v300 = vunpack.c.l.b16 %v228
      %v301 = vunpack.c.l.b16 %v229
      %v302 = vunpack.c.l.b16 %v230
      %v303 = vunpack.c.l.b16 %v231
      %v304 = vunpack.c.l.b16 %v232
      %v305 = vunpack.c.l.b16 %v233
      %v306 = vunpack.c.l.b16 %v234
      %v307 = vunpack.c.l.b16 %v235
      %v308 = vunpack.c.l.b16 %v236
      %v309 = vunpack.c.l.b16 %v237
      %v310 = vunpack.c.l.b16 %v238
      %v311 = vunpack.c.l.b16 %v239
      %v312 = vunpack.c.l.b16 %v240
      %v313 = vunpack.c.l.b16 %v241
      %v314 = vunpack.c.l.b16 %v242
      %v315 = vunpack.c.l.b16 %v243
      %v316 = vunpack.c.l.b16 %v244
      %v317 = vunpack.c.l.b16 %v245
      %v318 = vunpack.c.l.b16 %v246
      %v319 = vunpack.c.l.b16 %v247
      %v320 = vpack.c.b16 %v289, %v288
      %v321 = vpack.c.b16 %v291, %v290
      %v322 = vpack.c.b16 %v293, %v292
      %v323 = vpack.c.b16 %v295, %v294
      %v324 = vpack.c.b16 %v297, %v296
      %v325 = vpack.c.b16 %v299, %v298
      %v326 = vpack.c.b16 %v301, %v300
      %v327 = vpack.c.b16 %v303, %v302
      %v328 = vpack.c.b16 %v305, %v304
      %v329 = vpack.c.b16 %v307, %v306
      %v330 = vpack.c.b16 %v309, %v308
      %v331 = vpack.c.b16 %v311, %v310
      %v332 = vpack.c.b16 %v313, %v312
      %v333 = vpack.c.b16 %v315, %v314
      %v334 = vpack.c.b16 %v317, %v316
      %v335 = vpack.c.b16 %v319, %v318
      %vm336 = vcmask 64512
      %v338 = vsel %vm336, %v320, 0
      %v341 = vsel %vm336, %v321, 0
      %v344 = vsel %vm336, %v322, 0
      %v347 = vsel %vm336, %v323, 0
      %v350 = vsel %vm336, %v324, 0
      %v353 = vsel %vm336, %v325, 0
      %v356 = vsel %vm336, %v326, 0
      %v359 = vsel %vm336, %v327, 0
      %v362 = vsel %vm336, %v328, 0
      %v365 = vsel %vm336, %v329, 0
      %v368 = vsel %vm336, %v330, 0
      %v371 = vsel %vm336, %v331, 0
      %v374 = vsel %vm336, %v332, 0
      %v377 = vsel %vm336, %v333, 0
      %v380 = vsel %vm336, %v334, 0
      %v383 = vsel %vm336, %v335, 0
      %vm385 = vcmask 1043456
      %v387 = vsel %vm385, %v248, 0
      %389 = vmatprep.subr.bf16.mxu0 0
      %390 = vmatpush1.bf16.msra.mxu0 %v387
      %391 = vmatprep.subr.bf16.mxu0 0
      %392 = vmatpush1.bf16.msra.mxu0 0
      %393 = vmatprep.subr.bf16.mxu0 0
      %394 = vmatpush1.bf16.msra.mxu0 0
      %395 = vmatprep.subr.bf16.mxu0 0
      %396 = vmatpush1.bf16.msra.mxu0 0
      %397 = vmatprep.subr.bf16.mxu0 0
      %398 = vmatpush1.bf16.msra.mxu0 0
      %399 = vmatprep.subr.bf16.mxu0 0
      %400 = vmatpush1.bf16.msra.mxu0 0
      %401 = vmatprep.subr.bf16.mxu0 0
      %402 = vmatpush1.bf16.msra.mxu0 0
      %403 = vmatprep.subr.bf16.mxu0 0
      %404 = vmatpush1.bf16.msra.mxu0 0
      %405 = vmatprep.subr.bf16.mxu0 0
      %406 = vmatpush1.bf16.msra.mxu0 0
      %407 = vmatprep.subr.bf16.mxu0 0
      %408 = vmatpush1.bf16.msra.mxu0 0
      %409 = vmatprep.subr.bf16.mxu0 0
      %410 = vmatpush1.bf16.msra.mxu0 0
      %411 = vmatprep.subr.bf16.mxu0 0
      %412 = vmatpush1.bf16.msra.mxu0 0
      %413 = vmatprep.subr.bf16.mxu0 0
      %414 = vmatpush1.bf16.msra.mxu0 0
      %415 = vmatprep.subr.bf16.mxu0 0
      %416 = vmatpush1.bf16.msra.mxu0 0
      %417 = vmatprep.subr.bf16.mxu0 0
      %418 = vmatpush1.bf16.msra.mxu0 0
      %419 = vmatprep.subr.bf16.mxu0 0
      %420 = vmatpush1.bf16.msra.mxu0 0
      %421 = vmatprep.mubr.bf16.mxu0 0
      %422 = vmatmul.mubr.bf16.gmra.mrb[0].mxu0 %v338
      %v423 = vpop.f32.mrb[0].mxu0
      %v424 = vadd.f32 %v254, %v423
      %v425 = vpop.f32.mrb[0].mxu0
      %v426 = vpop.f32.mrb[0].mxu0
      %v427 = vadd.f32 %v254, %v426
      %v428 = vpop.f32.mrb[0].mxu0
      %429 = vmatprep.mubr.bf16.mxu0 0
      %430 = vmatmul.mubr.bf16.gmra.mrb[0].mxu0 %v341
      %v431 = vpop.f32.mrb[0].mxu0
      %v432 = vadd.f32 %v254, %v431
      %v433 = vpop.f32.mrb[0].mxu0
      %v434 = vpop.f32.mrb[0].mxu0
      %v435 = vadd.f32 %v254, %v434
      %v436 = vpop.f32.mrb[0].mxu0
      %437 = vmatprep.mubr.bf16.mxu0 0
      %438 = vmatmul.mubr.bf16.gmra.mrb[0].mxu0 %v344
      %v439 = vpop.f32.mrb[0].mxu0
      %v440 = vadd.f32 %v254, %v439
      %v441 = vpop.f32.mrb[0].mxu0
      %v442 = vpop.f32.mrb[0].mxu0
      %v443 = vadd.f32 %v254, %v442
      %v444 = vpop.f32.mrb[0].mxu0
      %445 = vmatprep.mubr.bf16.mxu0 0
      %446 = vmatmul.mubr.bf16.gmra.mrb[0].mxu0 %v347
      %v447 = vpop.f32.mrb[0].mxu0
      %v448 = vadd.f32 %v254, %v447
      %v449 = vpop.f32.mrb[0].mxu0
      %v450 = vpop.f32.mrb[0].mxu0
      %v451 = vadd.f32 %v254, %v450
      %v452 = vpop.f32.mrb[0].mxu0
      %453 = vmatprep.mubr.bf16.mxu0 0
      %454 = vmatmul.mubr.bf16.gmra.mrb[0].mxu0 %v350
      %v455 = vpop.f32.mrb[0].mxu0
      %v456 = vadd.f32 %v254, %v455
      %v457 = vpop.f32.mrb[0].mxu0
      %v458 = vpop.f32.mrb[0].mxu0
      %v459 = vadd.f32 %v254, %v458
      %v460 = vpop.f32.mrb[0].mxu0
      %461 = vmatprep.mubr.bf16.mxu0 0
      %462 = vmatmul.mubr.bf16.gmra.mrb[0].mxu0 %v353
      %v463 = vpop.f32.mrb[0].mxu0
      %v464 = vadd.f32 %v254, %v463
      %v465 = vpop.f32.mrb[0].mxu0
      %v466 = vpop.f32.mrb[0].mxu0
      %v467 = vadd.f32 %v254, %v466
      %v468 = vpop.f32.mrb[0].mxu0
      %469 = vmatprep.mubr.bf16.mxu0 0
      %470 = vmatmul.mubr.bf16.gmra.mrb[0].mxu0 %v356
      %v471 = vpop.f32.mrb[0].mxu0
      %v472 = vadd.f32 %v254, %v471
      %v473 = vpop.f32.mrb[0].mxu0
      %v474 = vpop.f32.mrb[0].mxu0
      %v475 = vadd.f32 %v254, %v474
      %v476 = vpop.f32.mrb[0].mxu0
      %477 = vmatprep.mubr.bf16.mxu0 0
      %478 = vmatmul.mubr.bf16.gmra.mrb[0].mxu0 %v359
      %v479 = vpop.f32.mrb[0].mxu0
      %v480 = vadd.f32 %v254, %v479
      %v481 = vpop.f32.mrb[0].mxu0
      %v482 = vpop.f32.mrb[0].mxu0
      %v483 = vadd.f32 %v254, %v482
      %v484 = vpop.f32.mrb[0].mxu0
      %485 = vmatprep.mubr.bf16.mxu0 0
      %486 = vmatmul.mubr.bf16.gmra.mrb[0].mxu0 %v362
      %v487 = vpop.f32.mrb[0].mxu0
      %v488 = vadd.f32 %v254, %v487
      %v489 = vpop.f32.mrb[0].mxu0
      %v490 = vpop.f32.mrb[0].mxu0
      %v491 = vadd.f32 %v254, %v490
      %v492 = vpop.f32.mrb[0].mxu0
      %493 = vmatprep.mubr.bf16.mxu0 0
      %494 = vmatmul.mubr.bf16.gmra.mrb[0].mxu0 %v365
      %v495 = vpop.f32.mrb[0].mxu0
      %v496 = vadd.f32 %v254, %v495
      %v497 = vpop.f32.mrb[0].mxu0
      %v498 = vpop.f32.mrb[0].mxu0
      %v499 = vadd.f32 %v254, %v498
      %v500 = vpop.f32.mrb[0].mxu0
      %501 = vmatprep.mubr.bf16.mxu0 0
      %502 = vmatmul.mubr.bf16.gmra.mrb[0].mxu0 %v368
      %v503 = vpop.f32.mrb[0].mxu0
      %v504 = vadd.f32 %v254, %v503
      %v505 = vpop.f32.mrb[0].mxu0
      %v506 = vpop.f32.mrb[0].mxu0
      %v507 = vadd.f32 %v254, %v506
      %v508 = vpop.f32.mrb[0].mxu0
      %509 = vmatprep.mubr.bf16.mxu0 0
      %510 = vmatmul.mubr.bf16.gmra.mrb[0].mxu0 %v371
      %v511 = vpop.f32.mrb[0].mxu0
      %v512 = vadd.f32 %v254, %v511
      %v513 = vpop.f32.mrb[0].mxu0
      %v514 = vpop.f32.mrb[0].mxu0
      %v515 = vadd.f32 %v254, %v514
      %v516 = vpop.f32.mrb[0].mxu0
      %517 = vmatprep.mubr.bf16.mxu0 0
      %518 = vmatmul.mubr.bf16.gmra.mrb[0].mxu0 %v374
      %v519 = vpop.f32.mrb[0].mxu0
      %v520 = vadd.f32 %v254, %v519
      %v521 = vpop.f32.mrb[0].mxu0
      %v522 = vpop.f32.mrb[0].mxu0
      %v523 = vadd.f32 %v254, %v522
      %v524 = vpop.f32.mrb[0].mxu0
      %525 = vmatprep.mubr.bf16.mxu0 0
      %526 = vmatmul.mubr.bf16.gmra.mrb[0].mxu0 %v377
      %v527 = vpop.f32.mrb[0].mxu0
      %v528 = vadd.f32 %v254, %v527
      %v529 = vpop.f32.mrb[0].mxu0
      %v530 = vpop.f32.mrb[0].mxu0
      %v531 = vadd.f32 %v254, %v530
      %v532 = vpop.f32.mrb[0].mxu0
      %533 = vmatprep.mubr.bf16.mxu0 0
      %534 = vmatmul.mubr.bf16.gmra.mrb[0].mxu0 %v380
      %v535 = vpop.f32.mrb[0].mxu0
      %v536 = vadd.f32 %v254, %v535
      %v537 = vpop.f32.mrb[0].mxu0
      %v538 = vpop.f32.mrb[0].mxu0
      %v539 = vadd.f32 %v254, %v538
      %v540 = vpop.f32.mrb[0].mxu0
      %541 = vmatprep.mubr.bf16.mxu0 0
      %542 = vmatmul.mubr.bf16.gmra.mrb[0].mxu0 %v383
      %v543 = vpop.f32.mrb[0].mxu0
      %v544 = vadd.f32 %v254, %v543
      %v545 = vpop.f32.mrb[0].mxu0
      %v546 = vpop.f32.mrb[0].mxu0
      %v547 = vadd.f32 %v254, %v546
      %v548 = vpop.f32.mrb[0].mxu0
      %549 = vdwg.mxu0
      %v550 = vmax.f32 %v424, 0.0
      %v551 = vmax.f32 %v427, 0.0
      %v552 = vmax.f32 %v432, 0.0
      %v553 = vmax.f32 %v435, 0.0
      %v554 = vmax.f32 %v440, 0.0
      %v555 = vmax.f32 %v443, 0.0
      %v556 = vmax.f32 %v448, 0.0
      %v557 = vmax.f32 %v451, 0.0
      %v558 = vmax.f32 %v456, 0.0
      %v559 = vmax.f32 %v459, 0.0
      %v560 = vmax.f32 %v464, 0.0
      %v561 = vmax.f32 %v467, 0.0
      %v562 = vmax.f32 %v472, 0.0
      %v563 = vmax.f32 %v475, 0.0
      %v564 = vmax.f32 %v480, 0.0
      %v565 = vmax.f32 %v483, 0.0
      %v566 = vmax.f32 %v488, 0.0
      %v567 = vmax.f32 %v491, 0.0
      %v568 = vmax.f32 %v496, 0.0
      %v569 = vmax.f32 %v499, 0.0
      %v570 = vmax.f32 %v504, 0.0
      %v571 = vmax.f32 %v507, 0.0
      %v572 = vmax.f32 %v512, 0.0
      %v573 = vmax.f32 %v515, 0.0
      %v574 = vmax.f32 %v520, 0.0
      %v575 = vmax.f32 %v523, 0.0
      %v576 = vmax.f32 %v528, 0.0
      %v577 = vmax.f32 %v531, 0.0
      %v578 = vmax.f32 %v536, 0.0
      %v579 = vmax.f32 %v539, 0.0
      %v580 = vmax.f32 %v544, 0.0
      %v581 = vmax.f32 %v547, 0.0
      %v582 = vpack.c.bf16 %v551, %v550
      %v583 = vpack.c.bf16 %v553, %v552
      %v584 = vpack.c.bf16 %v555, %v554
      %v585 = vpack.c.bf16 %v557, %v556
      %v586 = vpack.c.bf16 %v559, %v558
      %v587 = vpack.c.bf16 %v561, %v560
      %v588 = vpack.c.bf16 %v563, %v562
      %v589 = vpack.c.bf16 %v565, %v564
      %v590 = vpack.c.bf16 %v567, %v566
      %v591 = vpack.c.bf16 %v569, %v568
      %v592 = vpack.c.bf16 %v571, %v570
      %v593 = vpack.c.bf16 %v573, %v572
      %v594 = vpack.c.bf16 %v575, %v574
      %v595 = vpack.c.bf16 %v577, %v576
      %v596 = vpack.c.bf16 %v579, %v578
      %v597 = vpack.c.bf16 %v581, %v580
      %v614 = vunpack.c.l.b16 %v582
      %v615 = vunpack.c.h.b16 %v582
      %v616 = vunpack.c.l.b16 %v583
      %v617 = vunpack.c.h.b16 %v583
      %v618 = vunpack.c.l.b16 %v584
      %v619 = vunpack.c.h.b16 %v584
      %v620 = vunpack.c.l.b16 %v585
      %v621 = vunpack.c.h.b16 %v585
      %v622 = vunpack.c.l.b16 %v586
      %v623 = vunpack.c.h.b16 %v586
      %v624 = vunpack.c.l.b16 %v587
      %v625 = vunpack.c.h.b16 %v587
      %v626 = vunpack.c.l.b16 %v588
      %v627 = vunpack.c.h.b16 %v588
      %v628 = vunpack.c.l.b16 %v589
      %v629 = vunpack.c.h.b16 %v589
      %v630 = vunpack.c.l.b16 %v590
      %v631 = vunpack.c.h.b16 %v590
      %v632 = vunpack.c.l.b16 %v591
      %v633 = vunpack.c.h.b16 %v591
      %v634 = vunpack.c.l.b16 %v592
      %v635 = vunpack.c.h.b16 %v592
      %v636 = vunpack.c.l.b16 %v593
      %v637 = vunpack.c.h.b16 %v593
      %v638 = vunpack.c.l.b16 %v594
      %v639 = vunpack.c.h.b16 %v594
      %v640 = vunpack.c.l.b16 %v595
      %v641 = vunpack.c.h.b16 %v595
      %v642 = vunpack.c.l.b16 %v596
      %v643 = vunpack.c.h.b16 %v596
      %v644 = vunpack.c.l.b16 %v597
      %v645 = vunpack.c.h.b16 %v597
      %v646 = vpack.c.b16 %v614, %v614
      %v647 = vpack.c.b16 %v615, %v615
      %v648 = vpack.c.b16 %v616, %v616
      %v649 = vpack.c.b16 %v617, %v617
      %v650 = vpack.c.b16 %v618, %v618
      %v651 = vpack.c.b16 %v619, %v619
      %v652 = vpack.c.b16 %v620, %v620
      %v653 = vpack.c.b16 %v621, %v621
      %v654 = vpack.c.b16 %v622, %v622
      %v655 = vpack.c.b16 %v623, %v623
      %v656 = vpack.c.b16 %v624, %v624
      %v657 = vpack.c.b16 %v625, %v625
      %v658 = vpack.c.b16 %v626, %v626
      %v659 = vpack.c.b16 %v627, %v627
      %v660 = vpack.c.b16 %v628, %v628
      %v661 = vpack.c.b16 %v629, %v629
      %v662 = vpack.c.b16 %v630, %v630
      %v663 = vpack.c.b16 %v631, %v631
      %v664 = vpack.c.b16 %v632, %v632
      %v665 = vpack.c.b16 %v633, %v633
      %v666 = vpack.c.b16 %v634, %v634
      %v667 = vpack.c.b16 %v635, %v635
      %v668 = vpack.c.b16 %v636, %v636
      %v669 = vpack.c.b16 %v637, %v637
      %v670 = vpack.c.b16 %v638, %v638
      %v671 = vpack.c.b16 %v639, %v639
      %v672 = vpack.c.b16 %v640, %v640
      %v673 = vpack.c.b16 %v641, %v641
      %v674 = vpack.c.b16 %v642, %v642
      %v675 = vpack.c.b16 %v643, %v643
      %v676 = vpack.c.b16 %v644, %v644
      %v677 = vpack.c.b16 %v645, %v645
      %vm710 = vcmask 60416
      %711 = vst.msk [vmem:[%s213] sm:$0xf] %vm710, %v646
      %712 = vst.msk [vmem:[%s213 + $0x4] sm:$0xf] %vm710, %v647
      %713 = vst.msk [vmem:[%s213 + $0x8] sm:$0xf] %vm710, %v648
      %714 = vst.msk [vmem:[%s213 + $0xc] sm:$0xf] %vm710, %v649
      %715 = vst.msk [vmem:[%s213 + $0x10] sm:$0xf] %vm710, %v650
      %716 = vst.msk [vmem:[%s213 + $0x14] sm:$0xf] %vm710, %v651
      %717 = vst.msk [vmem:[%s213 + $0x18] sm:$0xf] %vm710, %v652
      %718 = vst.msk [vmem:[%s213 + $0x1c] sm:$0xf] %vm710, %v653
      %719 = vst.msk [vmem:[%s213 + $0x20] sm:$0xf] %vm710, %v654
      %720 = vst.msk [vmem:[%s213 + $0x24] sm:$0xf] %vm710, %v655
      %721 = vst.msk [vmem:[%s213 + $0x28] sm:$0xf] %vm710, %v656
      %722 = vst.msk [vmem:[%s213 + $0x2c] sm:$0xf] %vm710, %v657
      %723 = vst.msk [vmem:[%s213 + $0x30] sm:$0xf] %vm710, %v658
      %724 = vst.msk [vmem:[%s213 + $0x34] sm:$0xf] %vm710, %v659
      %725 = vst.msk [vmem:[%s213 + $0x38] sm:$0xf] %vm710, %v660
      %726 = vst.msk [vmem:[%s213 + $0x3c] sm:$0xf] %vm710, %v661
      %727 = vst.msk [vmem:[%s213 + $0x40] sm:$0xf] %vm710, %v662
      %728 = vst.msk [vmem:[%s213 + $0x44] sm:$0xf] %vm710, %v663
      %729 = vst.msk [vmem:[%s213 + $0x48] sm:$0xf] %vm710, %v664
      %730 = vst.msk [vmem:[%s213 + $0x4c] sm:$0xf] %vm710, %v665
      %731 = vst.msk [vmem:[%s213 + $0x50] sm:$0xf] %vm710, %v666
      %732 = vst.msk [vmem:[%s213 + $0x54] sm:$0xf] %vm710, %v667
      %733 = vst.msk [vmem:[%s213 + $0x58] sm:$0xf] %vm710, %v668
      %734 = vst.msk [vmem:[%s213 + $0x5c] sm:$0xf] %vm710, %v669
      %735 = vst.msk [vmem:[%s213 + $0x60] sm:$0xf] %vm710, %v670
      %736 = vst.msk [vmem:[%s213 + $0x64] sm:$0xf] %vm710, %v671
      %737 = vst.msk [vmem:[%s213 + $0x68] sm:$0xf] %vm710, %v672
      %738 = vst.msk [vmem:[%s213 + $0x6c] sm:$0xf] %vm710, %v673
      %739 = vst.msk [vmem:[%s213 + $0x70] sm:$0xf] %vm710, %v674
      %740 = vst.msk [vmem:[%s213 + $0x74] sm:$0xf] %vm710, %v675
      %741 = vst.msk [vmem:[%s213 + $0x78] sm:$0xf] %vm710, %v676
      %742 = vst.msk [vmem:[%s213 + $0x7c] sm:$0xf] %vm710, %v677
      %s743 = smul.u32 16, %s19
      %p744 = scmp.lt.s32.totalorder %s18, 1
      %s745 = scalar_select %p744, %s18, 1
      %p746 = scmp.lt.s32.totalorder %s743, 15
      %s747 = scalar_select %p746, %s743, 15
      %s748 = smul.addr %s747, 2
      %s749 = smul.addr %s745, 32
      %s750 = sadd.s32 %s748, %s749
      %s751 = smul.addr %s750, 4
      %s752 = scalar_lea.vmem %s3, %s751
      // Predicated region
      $region33: #{_lambda_.9} parent=31 // pred_check
        %p753 = pneg %p116
      $region34: #{_lambda_.9} parent=31 // pred_check_branch
        %755 = sbr.rel (%p753) target = $region36
      $region35: #{_lambda_.9} parent=31 // pred_region
        %s756 = smul.u32 16, %s19
      $region36: #{_lambda_.9} parent=31 // pred_fallthru
        _
    $region32: #{_lambda_.9} parent=5 // pred_fallthru
      _
    %p757 = scmp.le.s32.totalorder 2, %s9
    // Predicated region
    $region37: #{_lambda_.9} parent=5 // pred_check
      %p758 = pneg %p757
    $region38: #{_lambda_.9} parent=5 // pred_check_branch
      %760 = sbr.rel (%p758) target = $region40
    $region39: #{_lambda_.9} parent=5 // pred_region
      %s761 = ssub.s32 %s9, 2
      // Predicated region
      $region41: #{_lambda_.9} parent=39 // pred_check
        %p762 = pneg %p122
      $region42: #{_lambda_.9} parent=39 // pred_check_branch
        %764 = sbr.rel (%p762) target = $region44
      $region43: #{_lambda_.9} parent=39 // pred_region
        %s765 = smul.u32 16, %s21
        %p766 = scmp.lt.s32.totalorder %s20, 1
        %s767 = scalar_select %p766, %s20, 1
        %p768 = scmp.lt.s32.totalorder %s765, 15
        %s769 = scalar_select %p768, %s765, 15
        %s770 = smul.addr %s769, 2
        %s771 = smul.addr %s767, 32
        %s772 = sadd.s32 %s770, %s771
        %s773 = smul.addr %s772, 4
        %s774 = scalar_lea.vmem %s3, %s773
      $region44: #{_lambda_.9} parent=39 // pred_fallthru
        _
    $region40: #{_lambda_.9} parent=5 // pred_fallthru
      _
  $region6: #{_lambda_.9} parent=0 // loop_footer
    %s13 = sadd.s32 1, %s9
  $region7: #{_lambda_.9} parent=0 // loop_footer_branch
    %8 = sbr.rel target = $region3
  $region8: #{_lambda_.9} parent=0 // loop_exit
    _

// kernel: _lambda_.7
$region0: #{_lambda_.7}
  #allocation0 [shape = 'u32[]', space=smem, size = 0x4, offset = 0x4, fixed_abs, tag = 'smem constant byte address 0x4 - core index']
  #allocation1 [shape = 'u32[144,128]{1,0:T(1,128)}', space=vmem, size = 0x12000, scoped, tag = 'internal scratch']
  %s0 = inlined_call_operand.vmem [shape: bf16[2,18,18,4], index: 0, kind: input, shape index: {}, may-alias: {0,1,2}]
  %s1 = inlined_call_operand.vmem [shape: bf16[2,18,18,4], index: 1, kind: input, shape index: {}, may-alias: {0,1,2}]
  %s2 = inlined_call_operand.vmem [shape: bf16[2,18,18,4], index: 2, kind: input, shape index: {}, may-alias: {0,1,2}]
  %s3 = inlined_call_operand.vmem [shape: bf16[36,8], index: 3, kind: input, shape index: {}]
  %s4 = inlined_call_operand.vmem [shape: f32[1,8], index: 4, kind: input, shape index: {}]
  %s5 = inlined_call_operand.vmem [shape: bf16[2,16,16,8], index: 5, kind: output, shape index: {}]
  %s6 = sld [smem:[#allocation0]]
  $region53: #{_lambda_.7} parent=0
    _
  %s8 = ssub.s32 1, %s6
  %s9 = scalar_select 0, %s8, %s6
  loop: start=0, step=1, limit=4
  $region2: #{_lambda_.7} parent=0 // loop_pre_header
    _
  $region3: #{_lambda_.7} parent=0 // loop_header
    %s11 = sphi 0, %s15
    %p12 = scmp.ge.s32.totalorder %s11, 4
    %s18 = sphi 0, %s30
    %s19 = sphi 0, %s26
    %s20 = sphi 0, %s18
    %s21 = sphi 0, %s19
    %s22 = sphi 0, %s20
    %s23 = sphi 0, %s21
    %s35 = sphi 0, %s37
    %s38 = sphi 0, %s35
    %s39 = sphi 0, %s38
    %s55 = sphi 0, %s39
    %s67 = sphi 0, %s69
    %s70 = sphi 0, %s67
    %s71 = sphi 0, %s70
    %s87 = sphi 0, %s71
    %s101 = sphi 0, %s103
    %s104 = sphi 0, %s101
    %s105 = sphi 0, %s104
    %s121 = sphi 0, %s105
    %s125 = sphi 0, %s125
    %s127 = sphi 0, %s125
    %s128 = sphi 0, %s127
    %s142 = sphi 0, %s128
    %s146 = sphi 0, %s146
    %s148 = sphi 0, %s146
    %s149 = sphi 0, %s148
    %s163 = sphi 0, %s149
    %s171 = sphi 0, %s173
    %s174 = sphi 0, %s171
    %s175 = sphi 0, %s174
    %s191 = sphi 0, %s175
  $region4: #{_lambda_.7} parent=0 // loop_header_branch
    %14 = sbr.rel (%p12) target = $region8
  $region5: #{_lambda_.7} parent=0 // loop_body
    %s16 = ssub.s32 %s11, 1
    %s17 = ssub.s32 %s11, 2
    %s24 = sadd.s32 1, %s19
    %p25 = scmp.ge.s32.totalorder %s24, 1
    %s26 = scalar_select %p25, 0, %s24
    %s27 = sadd.s32 1, %s18
    %s28 = scalar_select %p25, %s27, %s18
    %p29 = scmp.ge.s32.totalorder %s28, 2
    %s30 = scalar_select %p29, 0, %s28
    %s31 = ssub.s32 %s18, %s30
    %s32 = ssub.s32 %s19, %s26
    %s33 = sor.u32 %s31, %s32
    %p34 = scmp.eq.s32.totalorder %s33, 0
    %s36 = sadd.s32 %s35, 1
    %s37 = scalar_select %p34, %s35, %s36
    %p40 = pneg %p34
    %p41 = scmp.eq.s32.totalorder %s11, 1
    %p42 = por %p40, %p41
    %p43 = scmp.ne.s32.totalorder %s35, %s38
    %p44 = scmp.eq.s32.totalorder %s11, 0
    %p45 = por %p43, %p44
    %p46 = scmp.ne.s32.totalorder %s35, %s38
    %p47 = scmp.eq.s32.totalorder %s16, 1
    %p48 = por %p46, %p47
    %p49 = scmp.ne.s32.totalorder %s38, %s39
    %p50 = scmp.eq.s32.totalorder %s16, 0
    %p51 = por %p49, %p50
    %p52 = scmp.ne.s32.totalorder %s38, %s39
    %p53 = scmp.eq.s32.totalorder %s17, 1
    %p54 = por %p52, %p53
    %p56 = scmp.ne.s32.totalorder %s39, %s55
    %p57 = scmp.eq.s32.totalorder %s17, 0
    %p58 = por %p56, %p57
    %s59 = sadd.s32 %s19, 1
    %s60 = smul.u32 %s59, 16
    %s61 = sadd.s32 %s26, 1
    %s62 = smul.u32 %s61, 16
    %s63 = ssub.s32 %s18, %s30
    %s64 = ssub.s32 %s60, %s62
    %s65 = sor.u32 %s63, %s64
    %p66 = scmp.eq.s32.totalorder %s65, 0
    %s68 = sadd.s32 %s67, 1
    %s69 = scalar_select %p66, %s67, %s68
    %p72 = pneg %p66
    %p73 = scmp.eq.s32.totalorder %s11, 1
    %p74 = por %p72, %p73
    %p75 = scmp.ne.s32.totalorder %s67, %s70
    %p76 = scmp.eq.s32.totalorder %s11, 0
    %p77 = por %p75, %p76
    %p78 = scmp.ne.s32.totalorder %s67, %s70
    %p79 = scmp.eq.s32.totalorder %s16, 1
    %p80 = por %p78, %p79
    %p81 = scmp.ne.s32.totalorder %s70, %s71
    %p82 = scmp.eq.s32.totalorder %s16, 0
    %p83 = por %p81, %p82
    %p84 = scmp.ne.s32.totalorder %s70, %s71
    %p85 = scmp.eq.s32.totalorder %s17, 1
    %p86 = por %p84, %p85
    %p88 = scmp.ne.s32.totalorder %s71, %s87
    %p89 = scmp.eq.s32.totalorder %s17, 0
    %p90 = por %p88, %p89
    %s91 = sadd.s32 %s19, 1
    %s92 = smul.u32 %s91, 16
    %s93 = sadd.s32 %s92, 1
    %s94 = sadd.s32 %s26, 1
    %s95 = smul.u32 %s94, 16
    %s96 = sadd.s32 %s95, 1
    %s97 = ssub.s32 %s18, %s30
    %s98 = ssub.s32 %s93, %s96
    %s99 = sor.u32 %s97, %s98
    %p100 = scmp.eq.s32.totalorder %s99, 0
    %s102 = sadd.s32 %s101, 1
    %s103 = scalar_select %p100, %s101, %s102
    %p106 = pneg %p100
    %p107 = scmp.eq.s32.totalorder %s11, 1
    %p108 = por %p106, %p107
    %p109 = scmp.ne.s32.totalorder %s101, %s104
    %p110 = scmp.eq.s32.totalorder %s11, 0
    %p111 = por %p109, %p110
    %p112 = scmp.ne.s32.totalorder %s101, %s104
    %p113 = scmp.eq.s32.totalorder %s16, 1
    %p114 = por %p112, %p113
    %p115 = scmp.ne.s32.totalorder %s104, %s105
    %p116 = scmp.eq.s32.totalorder %s16, 0
    %p117 = por %p115, %p116
    %p118 = scmp.ne.s32.totalorder %s104, %s105
    %p119 = scmp.eq.s32.totalorder %s17, 1
    %p120 = por %p118, %p119
    %p122 = scmp.ne.s32.totalorder %s105, %s121
    %p123 = scmp.eq.s32.totalorder %s17, 0
    %p124 = por %p122, %p123
    %s126 = sadd.s32 %s125, 1
    %p129 = scmp.eq.s32.totalorder %s11, 1
    %p130 = scmp.ne.s32.totalorder %s125, %s127
    %p131 = scmp.eq.s32.totalorder %s11, 0
    %p132 = por %p130, %p131
    %p133 = scmp.ne.s32.totalorder %s125, %s127
    %p134 = scmp.eq.s32.totalorder %s16, 1
    %p135 = por %p133, %p134
    %p136 = scmp.ne.s32.totalorder %s127, %s128
    %p137 = scmp.eq.s32.totalorder %s16, 0
    %p138 = por %p136, %p137
    %p139 = scmp.ne.s32.totalorder %s127, %s128
    %p140 = scmp.eq.s32.totalorder %s17, 1
    %p141 = por %p139, %p140
    %p143 = scmp.ne.s32.totalorder %s128, %s142
    %p144 = scmp.eq.s32.totalorder %s17, 0
    %p145 = por %p143, %p144
    %s147 = sadd.s32 %s146, 1
    %p150 = scmp.eq.s32.totalorder %s11, 1
    %p151 = scmp.ne.s32.totalorder %s146, %s148
    %p152 = scmp.eq.s32.totalorder %s11, 0
    %p153 = por %p151, %p152
    %p154 = scmp.ne.s32.totalorder %s146, %s148
    %p155 = scmp.eq.s32.totalorder %s16, 1
    %p156 = por %p154, %p155
    %p157 = scmp.ne.s32.totalorder %s148, %s149
    %p158 = scmp.eq.s32.totalorder %s16, 0
    %p159 = por %p157, %p158
    %p160 = scmp.ne.s32.totalorder %s148, %s149
    %p161 = scmp.eq.s32.totalorder %s17, 1
    %p162 = por %p160, %p161
    %p164 = scmp.ne.s32.totalorder %s149, %s163
    %p165 = scmp.eq.s32.totalorder %s17, 0
    %p166 = por %p164, %p165
    %s167 = ssub.s32 %s18, %s30
    %s168 = ssub.s32 %s19, %s26
    %s169 = sor.u32 %s167, %s168
    %p170 = scmp.eq.s32.totalorder %s169, 0
    %s172 = sadd.s32 %s171, 1
    %s173 = scalar_select %p170, %s171, %s172
    %p176 = pneg %p170
    %p177 = scmp.eq.s32.totalorder %s11, 1
    %p178 = por %p176, %p177
    %p179 = scmp.ne.s32.totalorder %s171, %s174
    %p180 = scmp.eq.s32.totalorder %s11, 0
    %p181 = por %p179, %p180
    %p182 = scmp.ne.s32.totalorder %s171, %s174
    %p183 = scmp.eq.s32.totalorder %s16, 1
    %p184 = por %p182, %p183
    %p185 = scmp.ne.s32.totalorder %s174, %s175
    %p186 = scmp.eq.s32.totalorder %s16, 0
    %p187 = por %p185, %p186
    %p188 = scmp.ne.s32.totalorder %s174, %s175
    %p189 = scmp.eq.s32.totalorder %s17, 1
    %p190 = por %p188, %p189
    %p192 = scmp.ne.s32.totalorder %s175, %s191
    %p193 = scmp.eq.s32.totalorder %s17, 0
    %p194 = por %p192, %p193
    %p195 = scmp.le.s32.totalorder 1, %s11
    %p196 = scmp.lt.s32.totalorder %s11, 3
    %p197 = pnand %p195, %p196
    %p198 = pneg %p197
    // Predicated region
    $region9: #{_lambda_.7} parent=5 // pred_check
      _
    $region10: #{_lambda_.7} parent=5 // pred_check_branch
      %200 = sbr.rel (%p197) target = $region12
    $region11: #{_lambda_.7} parent=5 // pred_region
      %s201 = ssub.s32 %s11, 1
      // Predicated region
      $region13: #{_lambda_.7} parent=11 // pred_check
        %p202 = pneg %p138
      $region14: #{_lambda_.7} parent=11 // pred_check_branch
        %204 = sbr.rel (%p202) target = $region16
      $region15: #{_lambda_.7} parent=11 // pred_region
        _
      $region16: #{_lambda_.7} parent=11 // pred_fallthru
        _
      // Predicated region
      $region17: #{_lambda_.7} parent=11 // pred_check
        %p205 = pneg %p159
      $region18: #{_lambda_.7} parent=11 // pred_check_branch
        %207 = sbr.rel (%p205) target = $region20
      $region19: #{_lambda_.7} parent=11 // pred_region
        _
      $region20: #{_lambda_.7} parent=11 // pred_fallthru
        _
    $region12: #{_lambda_.7} parent=5 // pred_fallthru
      _
    %p208 = scmp.lt.s32.totalorder %s11, 2
    // Predicated region
    $region21: #{_lambda_.7} parent=5 // pred_check
      %p209 = pneg %p208
    $region22: #{_lambda_.7} parent=5 // pred_check_branch
      %211 = sbr.rel (%p209) target = $region24
    $region23: #{_lambda_.7} parent=5 // pred_region
      // Predicated region
      $region25: #{_lambda_.7} parent=23 // pred_check
        %p212 = pneg %p45
      $region26: #{_lambda_.7} parent=23 // pred_check_branch
        %214 = sbr.rel (%p212) target = $region28
      $region27: #{_lambda_.7} parent=23 // pred_region
        %s215 = smul.u32 16, %s19
        %s216 = ssub.s32 18, %s215
        %p217 = scmp.lt.s32.totalorder %s216, 16
        %s218 = scalar_select %p217, %s216, 16
        %s219 = smul.u32 64, %s218
        %s220 = smul.u32 %s219, 3
        %p221 = scmp.lt.s32.totalorder %s18, 1
        %s222 = scalar_select %p221, %s18, 1
        %p223 = scmp.lt.s32.totalorder %s215, 17
        %s224 = scalar_select %p223, %s215, 17
        %s225 = smul.addr %s224, 3
        %s226 = smul.addr %s222, 54
        %s227 = sadd.s32 %s225, %s226
        %s228 = smul.addr %s227, 4
        %s229 = scalar_lea.vmem %s0, %s228
        %s230 = smul.u32 16, %s19
        %s231 = ssub.s32 18, %s230
        %p232 = scmp.lt.s32.totalorder %s231, 16
        %s233 = scalar_select %p232, %s231, 16
        %s234 = smul.u32 64, %s233
        %s235 = smul.u32 %s234, 3
      $region28: #{_lambda_.7} parent=23 // pred_fallthru
        _
      // Predicated region
      $region29: #{_lambda_.7} parent=23 // pred_check
        %p236 = pneg %p77
      $region30: #{_lambda_.7} parent=23 // pred_check_branch
        %238 = sbr.rel (%p236) target = $region32
      $region31: #{_lambda_.7} parent=23 // pred_region
        %s239 = sadd.s32 %s19, 1
        %s240 = smul.u32 %s239, 16
        %p241 = scmp.lt.s32.totalorder %s18, 1
        %s242 = scalar_select %p241, %s18, 1
        %p243 = scmp.lt.s32.totalorder %s240, 17
        %s244 = scalar_select %p243, %s240, 17
        %s245 = smul.addr %s244, 3
        %s246 = smul.addr %s242, 54
        %s247 = sadd.s32 %s245, %s246
        %s248 = smul.addr %s247, 4
        %s249 = scalar_lea.vmem %s1, %s248
        %s250 = sadd.s32 %s19, 1
        %s251 = smul.u32 %s250, 16
      $region32: #{_lambda_.7} parent=23 // pred_fallthru
        _
      // Predicated region
      $region33: #{_lambda_.7} parent=23 // pred_check
        %p252 = pneg %p111
      $region34: #{_lambda_.7} parent=23 // pred_check_branch
        %254 = sbr.rel (%p252) target = $region36
      $region35: #{_lambda_.7} parent=23 // pred_region
        %s255 = sadd.s32 %s19, 1
        %s256 = smul.u32 %s255, 16
        %s257 = sadd.s32 %s256, 1
        %p258 = scmp.lt.s32.totalorder %s18, 1
        %s259 = scalar_select %p258, %s18, 1
        %p260 = scmp.lt.s32.totalorder %s257, 17
        %s261 = scalar_select %p260, %s257, 17
        %s262 = smul.addr %s261, 3
        %s263 = smul.addr %s259, 54
        %s264 = sadd.s32 %s262, %s263
        %s265 = smul.addr %s264, 4
        %s266 = scalar_lea.vmem %s2, %s265
        %s267 = sadd.s32 %s19, 1
        %s268 = smul.u32 %s267, 16
        %s269 = sadd.s32 %s268, 1
      $region36: #{_lambda_.7} parent=23 // pred_fallthru
        _
    $region24: #{_lambda_.7} parent=5 // pred_fallthru
      _
    %p270 = scmp.le.s32.totalorder 1, %s11
    %p271 = scmp.lt.s32.totalorder %s11, 3
    %p272 = pnand %p270, %p271
    %p273 = pneg %p272
    // Predicated region
    $region37: #{_lambda_.7} parent=5 // pred_check
      _
    $region38: #{_lambda_.7} parent=5 // pred_check_branch
      %275 = sbr.rel (%p272) target = $region40
    $region39: #{_lambda_.7} parent=5 // pred_region
      %s276 = ssub.s32 %s11, 1
      %s277 = smul.u32 16, %s21
      %s278 = ssub.s32 18, %s277
      %p279 = scmp.lt.s32.totalorder %s278, 16
      %s280 = scalar_select %p279, %s278, 16
      %s281 = smul.u32 64, %s280
      %s282 = smul.u32 %s281, 3
      %p283 = scmp.lt.s32.totalorder %s20, 1
      %s284 = scalar_select %p283, %s20, 1
      %p285 = scmp.lt.s32.totalorder %s277, 17
      %s286 = scalar_select %p285, %s277, 17
      %s287 = smul.addr %s286, 3
      %s288 = smul.addr %s284, 54
      %s289 = sadd.s32 %s287, %s288
      %s290 = smul.addr %s289, 4
      %s291 = scalar_lea.vmem %s0, %s290
      %p292 = pneg %p51
      %p293 = pneg %p48
      %s294 = sadd.s32 %s21, 1
      %s295 = smul.u32 %s294, 16
      %p296 = scmp.lt.s32.totalorder %s20, 1
      %s297 = scalar_select %p296, %s20, 1
      %p298 = scmp.lt.s32.totalorder %s295, 17
      %s299 = scalar_select %p298, %s295, 17
      %s300 = smul.addr %s299, 3
      %s301 = smul.addr %s297, 54
      %s302 = sadd.s32 %s300, %s301
      %s303 = smul.addr %s302, 4
      %s304 = scalar_lea.vmem %s1, %s303
      %p305 = pneg %p83
      %p306 = pneg %p80
      %s307 = sadd.s32 %s21, 1
      %s308 = smul.u32 %s307, 16
      %s309 = sadd.s32 %s308, 1
      %p310 = scmp.lt.s32.totalorder %s20, 1
      %s311 = scalar_select %p310, %s20, 1
      %p312 = scmp.lt.s32.totalorder %s309, 17
      %s313 = scalar_select %p312, %s309, 17
      %s314 = smul.addr %s313, 3
      %s315 = smul.addr %s311, 54
      %s316 = sadd.s32 %s314, %s315
      %s317 = smul.addr %s316, 4
      %s318 = scalar_lea.vmem %s2, %s317
      %p319 = pneg %p117
      %p320 = pneg %p114
      %p321 = pneg %p138
      %p322 = pneg %p135
      %p323 = pneg %p159
      %p324 = pneg %p156
      %p325 = pneg %p187
      %p326 = pneg %p184
      %s327 = smul.u32 16, %s21
      %p328 = scmp.lt.s32.totalorder %s20, 1
      %s329 = scalar_select %p328, %s20, 1
      %p330 = scmp.lt.s32.totalorder %s327, 15
      %s331 = scalar_select %p330, %s327, 15
      %s332 = smul.addr %s331, 2
      %s333 = smul.addr %s329, 32
      %s334 = sadd.s32 %s332, %s333
      %s335 = smul.addr %s334, 4
      %s336 = scalar_lea.vmem %s5, %s335
      %s337 = smul.u32 16, %s21
      %s338 = ssub.s32 18, %s337
      %p339 = scmp.lt.s32.totalorder %s338, 16
      %s340 = scalar_select %p339, %s338, 16
      %s341 = smul.u32 64, %s340
      %s342 = smul.u32 %s341, 3
      %p343 = scmp.lt.s32.totalorder %s20, 1
      %s344 = scalar_select %p343, %s20, 1
      %p345 = scmp.lt.s32.totalorder %s337, 17
      %s346 = scalar_select %p345, %s337, 17
      %s347 = smul.addr %s346, 3
      %s348 = smul.addr %s344, 54
      %s349 = sadd.s32 %s347, %s348
      %s350 = smul.addr %s349, 4
      %s351 = scalar_lea.vmem %s0, %s350
      %s352 = smul.u32 16, %s21
      %s353 = ssub.s32 18, %s352
      %p354 = scmp.lt.s32.totalorder %s353, 16
      %s355 = scalar_select %p354, %s353, 16
      %s356 = smul.u32 64, %s355
      %s357 = smul.u32 %s356, 3
      %s358 = sadd.s32 %s21, 1
      %s359 = smul.u32 %s358, 16
      %p360 = scmp.lt.s32.totalorder %s20, 1
      %s361 = scalar_select %p360, %s20, 1
      %p362 = scmp.lt.s32.totalorder %s359, 17
      %s363 = scalar_select %p362, %s359, 17
      %s364 = smul.addr %s363, 3
      %s365 = smul.addr %s361, 54
      %s366 = sadd.s32 %s364, %s365
      %s367 = smul.addr %s366, 4
      %s368 = scalar_lea.vmem %s1, %s367
      %s369 = sadd.s32 %s21, 1
      %s370 = smul.u32 %s369, 16
      %s371 = sadd.s32 %s21, 1
      %s372 = smul.u32 %s371, 16
      %s373 = sadd.s32 %s372, 1
      %p374 = scmp.lt.s32.totalorder %s20, 1
      %s375 = scalar_select %p374, %s20, 1
      %p376 = scmp.lt.s32.totalorder %s373, 17
      %s377 = scalar_select %p376, %s373, 17
      %s378 = smul.addr %s377, 3
      %s379 = smul.addr %s375, 54
      %s380 = sadd.s32 %s378, %s379
      %s381 = smul.addr %s380, 4
      %s382 = scalar_lea.vmem %s2, %s381
      %s383 = sadd.s32 %s21, 1
      %s384 = smul.u32 %s383, 16
      %s385 = sadd.s32 %s384, 1
      %s386 = smul.u32 16, %s21
      %p387 = scmp.lt.s32.totalorder %s20, 1
      %s388 = scalar_select %p387, %s20, 1
      %p389 = scmp.lt.s32.totalorder %s386, 15
      %s390 = scalar_select %p389, %s386, 15
      %s391 = smul.addr %s390, 2
      %s392 = smul.addr %s388, 32
      %s393 = sadd.s32 %s391, %s392
      %s394 = smul.addr %s393, 4
      %s395 = scalar_lea.vmem %s5, %s394
      %s396 = smul.u32 16, %s21
      %v398 = vld [vmem:[%s351] sm:$0xf]
      %v399 = vld [vmem:[%s351 + $0x4] sm:$0xf]
      %v400 = vld [vmem:[%s351 + $0x8] sm:$0x1]
      %v401 = vld [vmem:[%s351 + $0xc] sm:$0xf]
      %v402 = vld [vmem:[%s351 + $0x10] sm:$0xf]
      %v403 = vld [vmem:[%s351 + $0x14] sm:$0x1]
      %v404 = vld [vmem:[%s351 + $0x18] sm:$0xf]
      %v405 = vld [vmem:[%s351 + $0x1c] sm:$0xf]
      %v406 = vld [vmem:[%s351 + $0x20] sm:$0x1]
      %v407 = vld [vmem:[%s351 + $0x24] sm:$0xf]
      %v408 = vld [vmem:[%s351 + $0x28] sm:$0xf]
      %v409 = vld [vmem:[%s351 + $0x2c] sm:$0x1]
      %v410 = vld [vmem:[%s351 + $0x30] sm:$0xf]
      %v411 = vld [vmem:[%s351 + $0x34] sm:$0xf]
      %v412 = vld [vmem:[%s351 + $0x38] sm:$0x1]
      %v413 = vld [vmem:[%s351 + $0x3c] sm:$0xf]
      %v414 = vld [vmem:[%s351 + $0x40] sm:$0xf]
      %v415 = vld [vmem:[%s351 + $0x44] sm:$0x1]
      %v416 = vld [vmem:[%s351 + $0x48] sm:$0xf]
      %v417 = vld [vmem:[%s351 + $0x4c] sm:$0xf]
      %v418 = vld [vmem:[%s351 + $0x50] sm:$0x1]
      %v419 = vld [vmem:[%s351 + $0x54] sm:$0xf]
      %v420 = vld [vmem:[%s351 + $0x58] sm:$0xf]
      %v421 = vld [vmem:[%s351 + $0x5c] sm:$0x1]
      %v422 = vld [vmem:[%s351 + $0x60] sm:$0xf]
      %v423 = vld [vmem:[%s351 + $0x64] sm:$0xf]
      %v424 = vld [vmem:[%s351 + $0x68] sm:$0x1]
      %v425 = vld [vmem:[%s351 + $0x6c] sm:$0xf]
      %v426 = vld [vmem:[%s351 + $0x70] sm:$0xf]
      %v427 = vld [vmem:[%s351 + $0x74] sm:$0x1]
      %v428 = vld [vmem:[%s351 + $0x78] sm:$0xf]
      %v429 = vld [vmem:[%s351 + $0x7c] sm:$0xf]
      %v430 = vld [vmem:[%s351 + $0x80] sm:$0x1]
      %v431 = vld [vmem:[%s351 + $0x84] sm:$0xf]
      %v432 = vld [vmem:[%s351 + $0x88] sm:$0xf]
      %v433 = vld [vmem:[%s351 + $0x8c] sm:$0x1]
      %v434 = vld [vmem:[%s351 + $0x90] sm:$0xf]
      %v435 = vld [vmem:[%s351 + $0x94] sm:$0xf]
      %v436 = vld [vmem:[%s351 + $0x98] sm:$0x1]
      %v437 = vld [vmem:[%s351 + $0x9c] sm:$0xf]
      %v438 = vld [vmem:[%s351 + $0xa0] sm:$0xf]
      %v439 = vld [vmem:[%s351 + $0xa4] sm:$0x1]
      %v440 = vld [vmem:[%s351 + $0xa8] sm:$0xf]
      %v441 = vld [vmem:[%s351 + $0xac] sm:$0xf]
      %v442 = vld [vmem:[%s351 + $0xb0] sm:$0x1]
      %v443 = vld [vmem:[%s351 + $0xb4] sm:$0xf]
      %v444 = vld [vmem:[%s351 + $0xb8] sm:$0xf]
      %v445 = vld [vmem:[%s351 + $0xbc] sm:$0x1]
      %v446 = vld [vmem:[%s368] sm:$0xf]
      %v447 = vld [vmem:[%s368 + $0x4] sm:$0xf]
      %v448 = vld [vmem:[%s368 + $0x8] sm:$0x1]
      %v449 = vld [vmem:[%s382] sm:$0xf]
      %v450 = vld [vmem:[%s382 + $0x4] sm:$0xf]
      %v451 = vld [vmem:[%s382 + $0x8] sm:$0x1]
      %v484 = vunpack.c.l.b16 %v398
      %v485 = vunpack.c.l.b16 %v399
      %v486 = vunpack.c.l.b16 %v401
      %v487 = vunpack.c.l.b16 %v402
      %v488 = vunpack.c.l.b16 %v404
      %v489 = vunpack.c.l.b16 %v405
      %v490 = vunpack.c.l.b16 %v407
      %v491 = vunpack.c.l.b16 %v408
      %v492 = vunpack.c.l.b16 %v410
      %v493 = vunpack.c.l.b16 %v411
      %v494 = vunpack.c.l.b16 %v413
      %v495 = vunpack.c.l.b16 %v414
      %v496 = vunpack.c.l.b16 %v416
      %v497 = vunpack.c.l.b16 %v417
      %v498 = vunpack.c.l.b16 %v419
      %v499 = vunpack.c.l.b16 %v420
      %v500 = vunpack.c.l.b16 %v422
      %v501 = vunpack.c.l.b16 %v423
      %v502 = vunpack.c.l.b16 %v425
      %v503 = vunpack.c.l.b16 %v426
      %v504 = vunpack.c.l.b16 %v428
      %v505 = vunpack.c.l.b16 %v429
      %v506 = vunpack.c.l.b16 %v431
      %v507 = vunpack.c.l.b16 %v432
      %v508 = vunpack.c.l.b16 %v434
      %v509 = vunpack.c.l.b16 %v435
      %v510 = vunpack.c.l.b16 %v437
      %v511 = vunpack.c.l.b16 %v438
      %v512 = vunpack.c.l.b16 %v440
      %v513 = vunpack.c.l.b16 %v441
      %v514 = vunpack.c.l.b16 %v443
      %v515 = vunpack.c.l.b16 %v444
      %v516 = vpack.c.b16 %v485, %v484
      %v517 = vpack.c.b16 %v487, %v486
      %v518 = vpack.c.b16 %v489, %v488
      %v519 = vpack.c.b16 %v491, %v490
      %v520 = vpack.c.b16 %v493, %v492
      %v521 = vpack.c.b16 %v495, %v494
      %v522 = vpack.c.b16 %v497, %v496
      %v523 = vpack.c.b16 %v499, %v498
      %v524 = vpack.c.b16 %v501, %v500
      %v525 = vpack.c.b16 %v503, %v502
      %v526 = vpack.c.b16 %v505, %v504
      %v527 = vpack.c.b16 %v507, %v506
      %v528 = vpack.c.b16 %v509, %v508
      %v529 = vpack.c.b16 %v511, %v510
      %v530 = vpack.c.b16 %v513, %v512
      %v531 = vpack.c.b16 %v515, %v514
      %v548 = vunpack.c.l.b16 %v400
      %v549 = vunpack.c.l.b16 %v403
      %v550 = vunpack.c.l.b16 %v406
      %v551 = vunpack.c.l.b16 %v409
      %v552 = vunpack.c.l.b16 %v412
      %v553 = vunpack.c.l.b16 %v415
      %v554 = vunpack.c.l.b16 %v418
      %v555 = vunpack.c.l.b16 %v421
      %v556 = vunpack.c.l.b16 %v424
      %v557 = vunpack.c.l.b16 %v427
      %v558 = vunpack.c.l.b16 %v430
      %v559 = vunpack.c.l.b16 %v433
      %v560 = vunpack.c.l.b16 %v436
      %v561 = vunpack.c.l.b16 %v439
      %v562 = vunpack.c.l.b16 %v442
      %v563 = vunpack.c.l.b16 %v445
      %v564 = vpack.c.b16 %v548, %v548
      %v565 = vpack.c.b16 %v549, %v549
      %v566 = vpack.c.b16 %v550, %v550
      %v567 = vpack.c.b16 %v551, %v551
      %v568 = vpack.c.b16 %v552, %v552
      %v569 = vpack.c.b16 %v553, %v553
      %v570 = vpack.c.b16 %v554, %v554
      %v571 = vpack.c.b16 %v555, %v555
      %v572 = vpack.c.b16 %v556, %v556
      %v573 = vpack.c.b16 %v557, %v557
      %v574 = vpack.c.b16 %v558, %v558
      %v575 = vpack.c.b16 %v559, %v559
      %v576 = vpack.c.b16 %v560, %v560
      %v577 = vpack.c.b16 %v561, %v561
      %v578 = vpack.c.b16 %v562, %v562
      %v579 = vpack.c.b16 %v563, %v563
      %vm580 = vsmask.f32 7424
      %v582 = vshrl.u32 %v516, 16
      %v584 = vshll.u32 %v516, 16
      %v586 = vrot.slane %v584, 1
      %v587 = vor.u32 %v582, %v586
      %v589 = vshll.u32 %v564, 16
      %v591 = vrot.slane %v589, 1
      %v592 = vsel %vm580, %v587, %v591
      %v594 = vshrl.u32 %v517, 16
      %v596 = vshll.u32 %v517, 16
      %v598 = vrot.slane %v596, 1
      %v599 = vor.u32 %v594, %v598
      %v601 = vshll.u32 %v565, 16
      %v603 = vrot.slane %v601, 1
      %v604 = vsel %vm580, %v599, %v603
      %v606 = vshrl.u32 %v518, 16
      %v608 = vshll.u32 %v518, 16
      %v610 = vrot.slane %v608, 1
      %v611 = vor.u32 %v606, %v610
      %v613 = vshll.u32 %v566, 16
      %v615 = vrot.slane %v613, 1
      %v616 = vsel %vm580, %v611, %v615
      %v618 = vshrl.u32 %v519, 16
      %v620 = vshll.u32 %v519, 16
      %v622 = vrot.slane %v620, 1
      %v623 = vor.u32 %v618, %v622
      %v625 = vshll.u32 %v567, 16
      %v627 = vrot.slane %v625, 1
      %v628 = vsel %vm580, %v623, %v627
      %v630 = vshrl.u32 %v520, 16
      %v632 = vshll.u32 %v520, 16
      %v634 = vrot.slane %v632, 1
      %v635 = vor.u32 %v630, %v634
      %v637 = vshll.u32 %v568, 16
      %v639 = vrot.slane %v637, 1
      %v640 = vsel %vm580, %v635, %v639
      %v642 = vshrl.u32 %v521, 16
      %v644 = vshll.u32 %v521, 16
      %v646 = vrot.slane %v644, 1
      %v647 = vor.u32 %v642, %v646
      %v649 = vshll.u32 %v569, 16
      %v651 = vrot.slane %v649, 1
      %v652 = vsel %vm580, %v647, %v651
      %v654 = vshrl.u32 %v522, 16
      %v656 = vshll.u32 %v522, 16
      %v658 = vrot.slane %v656, 1
      %v659 = vor.u32 %v654, %v658
      %v661 = vshll.u32 %v570, 16
      %v663 = vrot.slane %v661, 1
      %v664 = vsel %vm580, %v659, %v663
      %v666 = vshrl.u32 %v523, 16
      %v668 = vshll.u32 %v523, 16
      %v670 = vrot.slane %v668, 1
      %v671 = vor.u32 %v666, %v670
      %v673 = vshll.u32 %v571, 16
      %v675 = vrot.slane %v673, 1
      %v676 = vsel %vm580, %v671, %v675
      %v678 = vshrl.u32 %v524, 16
      %v680 = vshll.u32 %v524, 16
      %v682 = vrot.slane %v680, 1
      %v683 = vor.u32 %v678, %v682
      %v685 = vshll.u32 %v572, 16
      %v687 = vrot.slane %v685, 1
      %v688 = vsel %vm580, %v683, %v687
      %v690 = vshrl.u32 %v525, 16
      %v692 = vshll.u32 %v525, 16
      %v694 = vrot.slane %v692, 1
      %v695 = vor.u32 %v690, %v694
      %v697 = vshll.u32 %v573, 16
      %v699 = vrot.slane %v697, 1
      %v700 = vsel %vm580, %v695, %v699
      %v702 = vshrl.u32 %v526, 16
      %v704 = vshll.u32 %v526, 16
      %v706 = vrot.slane %v704, 1
      %v707 = vor.u32 %v702, %v706
      %v709 = vshll.u32 %v574, 16
      %v711 = vrot.slane %v709, 1
      %v712 = vsel %vm580, %v707, %v711
      %v714 = vshrl.u32 %v527, 16
      %v716 = vshll.u32 %v527, 16
      %v718 = vrot.slane %v716, 1
      %v719 = vor.u32 %v714, %v718
      %v721 = vshll.u32 %v575, 16
      %v723 = vrot.slane %v721, 1
      %v724 = vsel %vm580, %v719, %v723
      %v726 = vshrl.u32 %v528, 16
      %v728 = vshll.u32 %v528, 16
      %v730 = vrot.slane %v728, 1
      %v731 = vor.u32 %v726, %v730
      %v733 = vshll.u32 %v576, 16
      %v735 = vrot.slane %v733, 1
      %v736 = vsel %vm580, %v731, %v735
      %v738 = vshrl.u32 %v529, 16
      %v740 = vshll.u32 %v529, 16
      %v742 = vrot.slane %v740, 1
      %v743 = vor.u32 %v738, %v742
      %v745 = vshll.u32 %v577, 16
      %v747 = vrot.slane %v745, 1
      %v748 = vsel %vm580, %v743, %v747
      %v750 = vshrl.u32 %v530, 16
      %v752 = vshll.u32 %v530, 16
      %v754 = vrot.slane %v752, 1
      %v755 = vor.u32 %v750, %v754
      %v757 = vshll.u32 %v578, 16
      %v759 = vrot.slane %v757, 1
      %v760 = vsel %vm580, %v755, %v759
      %v762 = vshrl.u32 %v531, 16
      %v764 = vshll.u32 %v531, 16
      %v766 = vrot.slane %v764, 1
      %v767 = vor.u32 %v762, %v766
      %v769 = vshll.u32 %v579, 16
      %v771 = vrot.slane %v769, 1
      %v772 = vsel %vm580, %v767, %v771
      %773 = vrot.lane.b32.xlu0 %v592, 4
      %v774 = vpop.permute.xlu0 %773
      %775 = vrot.lane.b32.xlu0 %v604, 4
      %v776 = vpop.permute.xlu0 %775
      %777 = vrot.lane.b32.xlu0 %v616, 4
      %v778 = vpop.permute.xlu0 %777
      %779 = vrot.lane.b32.xlu0 %v628, 4
      %v780 = vpop.permute.xlu0 %779
      %781 = vrot.lane.b32.xlu0 %v640, 4
      %v782 = vpop.permute.xlu0 %781
      %783 = vrot.lane.b32.xlu0 %v652, 4
      %v784 = vpop.permute.xlu0 %783
      %785 = vrot.lane.b32.xlu0 %v664, 4
      %v786 = vpop.permute.xlu0 %785
      %787 = vrot.lane.b32.xlu0 %v676, 4
      %v788 = vpop.permute.xlu0 %787
      %789 = vrot.lane.b32.xlu0 %v688, 4
      %v790 = vpop.permute.xlu0 %789
      %791 = vrot.lane.b32.xlu0 %v700, 4
      %v792 = vpop.permute.xlu0 %791
      %793 = vrot.lane.b32.xlu0 %v712, 4
      %v794 = vpop.permute.xlu0 %793
      %795 = vrot.lane.b32.xlu0 %v724, 4
      %v796 = vpop.permute.xlu0 %795
      %797 = vrot.lane.b32.xlu0 %v736, 4
      %v798 = vpop.permute.xlu0 %797
      %799 = vrot.lane.b32.xlu0 %v748, 4
      %v800 = vpop.permute.xlu0 %799
      %801 = vrot.lane.b32.xlu0 %v760, 4
      %v802 = vpop.permute.xlu0 %801
      %803 = vrot.lane.b32.xlu0 %v772, 4
      %v804 = vpop.permute.xlu0 %803
      %vm805 = vcmask 1046528
      %v806 = vrot.slane %v516, 1
      %v807 = vrot.slane %v564, 1
      %v808 = vsel %vm805, %v806, %v807
      %v809 = vrot.slane %v517, 1
      %v810 = vrot.slane %v565, 1
      %v811 = vsel %vm805, %v809, %v810
      %v812 = vrot.slane %v518, 1
      %v813 = vrot.slane %v566, 1
      %v814 = vsel %vm805, %v812, %v813
      %v815 = vrot.slane %v519, 1
      %v816 = vrot.slane %v567, 1
      %v817 = vsel %vm805, %v815, %v816
      %v818 = vrot.slane %v520, 1
      %v819 = vrot.slane %v568, 1
      %v820 = vsel %vm805, %v818, %v819
      %v821 = vrot.slane %v521, 1
      %v822 = vrot.slane %v569, 1
      %v823 = vsel %vm805, %v821, %v822
      %v824 = vrot.slane %v522, 1
      %v825 = vrot.slane %v570, 1
      %v826 = vsel %vm805, %v824, %v825
      %v827 = vrot.slane %v523, 1
      %v828 = vrot.slane %v571, 1
      %v829 = vsel %vm805, %v827, %v828
      %v830 = vrot.slane %v524, 1
      %v831 = vrot.slane %v572, 1
      %v832 = vsel %vm805, %v830, %v831
      %v833 = vrot.slane %v525, 1
      %v834 = vrot.slane %v573, 1
      %v835 = vsel %vm805, %v833, %v834
      %v836 = vrot.slane %v526, 1
      %v837 = vrot.slane %v574, 1
      %v838 = vsel %vm805, %v836, %v837
      %v839 = vrot.slane %v527, 1
      %v840 = vrot.slane %v575, 1
      %v841 = vsel %vm805, %v839, %v840
      %v842 = vrot.slane %v528, 1
      %v843 = vrot.slane %v576, 1
      %v844 = vsel %vm805, %v842, %v843
      %v845 = vrot.slane %v529, 1
      %v846 = vrot.slane %v577, 1
      %v847 = vsel %vm805, %v845, %v846
      %v848 = vrot.slane %v530, 1
      %v849 = vrot.slane %v578, 1
      %v850 = vsel %vm805, %v848, %v849
      %v851 = vrot.slane %v531, 1
      %v852 = vrot.slane %v579, 1
      %v853 = vsel %vm805, %v851, %v852
      %854 = vrot.lane.b32.xlu0 %v808, 8
      %v855 = vpop.permute.xlu0 %854
      %856 = vrot.lane.b32.xlu0 %v811, 8
      %v857 = vpop.permute.xlu0 %856
      %858 = vrot.lane.b32.xlu0 %v814, 8
      %v859 = vpop.permute.xlu0 %858
      %860 = vrot.lane.b32.xlu0 %v817, 8
      %v861 = vpop.permute.xlu0 %860
      %862 = vrot.lane.b32.xlu0 %v820, 8
      %v863 = vpop.permute.xlu0 %862
      %864 = vrot.lane.b32.xlu0 %v823, 8
      %v865 = vpop.permute.xlu0 %864
      %866 = vrot.lane.b32.xlu0 %v826, 8
      %v867 = vpop.permute.xlu0 %866
      %868 = vrot.lane.b32.xlu0 %v829, 8
      %v869 = vpop.permute.xlu0 %868
      %870 = vrot.lane.b32.xlu0 %v832, 8
      %v871 = vpop.permute.xlu0 %870
      %872 = vrot.lane.b32.xlu0 %v835, 8
      %v873 = vpop.permute.xlu0 %872
      %874 = vrot.lane.b32.xlu0 %v838, 8
      %v875 = vpop.permute.xlu0 %874
      %876 = vrot.lane.b32.xlu0 %v841, 8
      %v877 = vpop.permute.xlu0 %876
      %878 = vrot.lane.b32.xlu0 %v844, 8
      %v879 = vpop.permute.xlu0 %878
      %880 = vrot.lane.b32.xlu0 %v847, 8
      %v881 = vpop.permute.xlu0 %880
      %882 = vrot.lane.b32.xlu0 %v850, 8
      %v883 = vpop.permute.xlu0 %882
      %884 = vrot.lane.b32.xlu0 %v853, 8
      %v885 = vpop.permute.xlu0 %884
      %v888 = vunpack.c.l.b16 %v446
      %v889 = vunpack.c.l.b16 %v447
      %v890 = vpack.c.b16 %v889, %v888
      %891 = vrot.lane.b32.xlu0 %v517, 12
      %v892 = vpop.permute.xlu0 %891
      %893 = vrot.lane.b32.xlu0 %v518, 12
      %v894 = vpop.permute.xlu0 %893
      %895 = vrot.lane.b32.xlu0 %v519, 12
      %v896 = vpop.permute.xlu0 %895
      %897 = vrot.lane.b32.xlu0 %v520, 12
      %v898 = vpop.permute.xlu0 %897
      %899 = vrot.lane.b32.xlu0 %v521, 12
      %v900 = vpop.permute.xlu0 %899
      %901 = vrot.lane.b32.xlu0 %v522, 12
      %v902 = vpop.permute.xlu0 %901
      %903 = vrot.lane.b32.xlu0 %v523, 12
      %v904 = vpop.permute.xlu0 %903
      %905 = vrot.lane.b32.xlu0 %v524, 12
      %v906 = vpop.permute.xlu0 %905
      %907 = vrot.lane.b32.xlu0 %v525, 12
      %v908 = vpop.permute.xlu0 %907
      %909 = vrot.lane.b32.xlu0 %v526, 12
      %v910 = vpop.permute.xlu0 %909
      %911 = vrot.lane.b32.xlu0 %v527, 12
      %v912 = vpop.permute.xlu0 %911
      %913 = vrot.lane.b32.xlu0 %v528, 12
      %v914 = vpop.permute.xlu0 %913
      %915 = vrot.lane.b32.xlu0 %v529, 12
      %v916 = vpop.permute.xlu0 %915
      %917 = vrot.lane.b32.xlu0 %v530, 12
      %v918 = vpop.permute.xlu0 %917
      %919 = vrot.lane.b32.xlu0 %v531, 12
      %v920 = vpop.permute.xlu0 %919
      %921 = vrot.lane.b32.xlu0 %v890, 12
      %v922 = vpop.permute.xlu0 %921
      %v924 = vunpack.c.l.b16 %v448
      %v925 = vpack.c.b16 %v924, %v924
      %v927 = vshrl.u32 %v890, 16
      %v929 = vshll.u32 %v890, 16
      %v931 = vrot.slane %v929, 1
      %v932 = vor.u32 %v927, %v931
      %v934 = vshll.u32 %v925, 16
      %v936 = vrot.slane %v934, 1
      %v937 = vsel %vm580, %v932, %v936
      %938 = vrot.lane.b32.xlu0 %v604, 16
      %v939 = vpop.permute.xlu0 %938
      %940 = vrot.lane.b32.xlu0 %v616, 16
      %v941 = vpop.permute.xlu0 %940
      %942 = vrot.lane.b32.xlu0 %v628, 16
      %v943 = vpop.permute.xlu0 %942
      %944 = vrot.lane.b32.xlu0 %v640, 16
      %v945 = vpop.permute.xlu0 %944
      %946 = vrot.lane.b32.xlu0 %v652, 16
      %v947 = vpop.permute.xlu0 %946
      %948 = vrot.lane.b32.xlu0 %v664, 16
      %v949 = vpop.permute.xlu0 %948
      %950 = vrot.lane.b32.xlu0 %v676, 16
      %v951 = vpop.permute.xlu0 %950
      %952 = vrot.lane.b32.xlu0 %v688, 16
      %v953 = vpop.permute.xlu0 %952
      %954 = vrot.lane.b32.xlu0 %v700, 16
      %v955 = vpop.permute.xlu0 %954
      %956 = vrot.lane.b32.xlu0 %v712, 16
      %v957 = vpop.permute.xlu0 %956
      %958 = vrot.lane.b32.xlu0 %v724, 16
      %v959 = vpop.permute.xlu0 %958
      %960 = vrot.lane.b32.xlu0 %v736, 16
      %v961 = vpop.permute.xlu0 %960
      %962 = vrot.lane.b32.xlu0 %v748, 16
      %v963 = vpop.permute.xlu0 %962
      %964 = vrot.lane.b32.xlu0 %v760, 16
      %v965 = vpop.permute.xlu0 %964
      %966 = vrot.lane.b32.xlu0 %v772, 16
      %v967 = vpop.permute.xlu0 %966
      %968 = vrot.lane.b32.xlu0 %v937, 16
      %v969 = vpop.permute.xlu0 %968
      %v970 = vrot.slane %v890, 1
      %v971 = vrot.slane %v925, 1
      %v972 = vsel %vm805, %v970, %v971
      %973 = vrot.lane.b32.xlu0 %v811, 20
      %v974 = vpop.permute.xlu0 %973
      %975 = vrot.lane.b32.xlu0 %v814, 20
      %v976 = vpop.permute.xlu0 %975
      %977 = vrot.lane.b32.xlu0 %v817, 20
      %v978 = vpop.permute.xlu0 %977
      %979 = vrot.lane.b32.xlu0 %v820, 20
      %v980 = vpop.permute.xlu0 %979
      %981 = vrot.lane.b32.xlu0 %v823, 20
      %v982 = vpop.permute.xlu0 %981
      %983 = vrot.lane.b32.xlu0 %v826, 20
      %v984 = vpop.permute.xlu0 %983
      %985 = vrot.lane.b32.xlu0 %v829, 20
      %v986 = vpop.permute.xlu0 %985
      %987 = vrot.lane.b32.xlu0 %v832, 20
      %v988 = vpop.permute.xlu0 %987
      %989 = vrot.lane.b32.xlu0 %v835, 20
      %v990 = vpop.permute.xlu0 %989
      %991 = vrot.lane.b32.xlu0 %v838, 20
      %v992 = vpop.permute.xlu0 %991
      %993 = vrot.lane.b32.xlu0 %v841, 20
      %v994 = vpop.permute.xlu0 %993
      %995 = vrot.lane.b32.xlu0 %v844, 20
      %v996 = vpop.permute.xlu0 %995
      %997 = vrot.lane.b32.xlu0 %v847, 20
      %v998 = vpop.permute.xlu0 %997
      %999 = vrot.lane.b32.xlu0 %v850, 20
      %v1000 = vpop.permute.xlu0 %999
      %1001 = vrot.lane.b32.xlu0 %v853, 20
      %v1002 = vpop.permute.xlu0 %1001
      %1003 = vrot.lane.b32.xlu0 %v972, 20
      %v1004 = vpop.permute.xlu0 %1003
      %v1007 = vunpack.c.l.b16 %v449
      %v1008 = vunpack.c.l.b16 %v450
      %v1009 = vpack.c.b16 %v1008, %v1007
      %1010 = vrot.lane.b32.xlu0 %v518, 24
      %v1011 = vpop.permute.xlu0 %1010
      %1012 = vrot.lane.b32.xlu0 %v519, 24
      %v1013 = vpop.permute.xlu0 %1012
      %1014 = vrot.lane.b32.xlu0 %v520, 24
      %v1015 = vpop.permute.xlu0 %1014
      %1016 = vrot.lane.b32.xlu0 %v521, 24
      %v1017 = vpop.permute.xlu0 %1016
      %1018 = vrot.lane.b32.xlu0 %v522, 24
      %v1019 = vpop.permute.xlu0 %1018
      %1020 = vrot.lane.b32.xlu0 %v523, 24
      %v1021 = vpop.permute.xlu0 %1020
      %1022 = vrot.lane.b32.xlu0 %v524, 24
      %v1023 = vpop.permute.xlu0 %1022
      %1024 = vrot.lane.b32.xlu0 %v525, 24
      %v1025 = vpop.permute.xlu0 %1024
      %1026 = vrot.lane.b32.xlu0 %v526, 24
      %v1027 = vpop.permute.xlu0 %1026
      %1028 = vrot.lane.b32.xlu0 %v527, 24
      %v1029 = vpop.permute.xlu0 %1028
      %1030 = vrot.lane.b32.xlu0 %v528, 24
      %v1031 = vpop.permute.xlu0 %1030
      %1032 = vrot.lane.b32.xlu0 %v529, 24
      %v1033 = vpop.permute.xlu0 %1032
      %1034 = vrot.lane.b32.xlu0 %v530, 24
      %v1035 = vpop.permute.xlu0 %1034
      %1036 = vrot.lane.b32.xlu0 %v531, 24
      %v1037 = vpop.permute.xlu0 %1036
      %1038 = vrot.lane.b32.xlu0 %v890, 24
      %v1039 = vpop.permute.xlu0 %1038
      %1040 = vrot.lane.b32.xlu0 %v1009, 24
      %v1041 = vpop.permute.xlu0 %1040
      %v1043 = vunpack.c.l.b16 %v451
      %v1044 = vpack.c.b16 %v1043, %v1043
      %v1046 = vshrl.u32 %v1009, 16
      %v1048 = vshll.u32 %v1009, 16
      %v1050 = vrot.slane %v1048, 1
      %v1051 = vor.u32 %v1046, %v1050
      %v1053 = vshll.u32 %v1044, 16
      %v1055 = vrot.slane %v1053, 1
      %v1056 = vsel %vm580, %v1051, %v1055
      %1057 = vrot.lane.b32.xlu0 %v616, 28
      %v1058 = vpop.permute.xlu0 %1057
      %1059 = vrot.lane.b32.xlu0 %v628, 28
      %v1060 = vpop.permute.xlu0 %1059
      %1061 = vrot.lane.b32.xlu0 %v640, 28
      %v1062 = vpop.permute.xlu0 %1061
      %1063 = vrot.lane.b32.xlu0 %v652, 28
      %v1064 = vpop.permute.xlu0 %1063
      %1065 = vrot.lane.b32.xlu0 %v664, 28
      %v1066 = vpop.permute.xlu0 %1065
      %1067 = vrot.lane.b32.xlu0 %v676, 28
      %v1068 = vpop.permute.xlu0 %1067
      %1069 = vrot.lane.b32.xlu0 %v688, 28
      %v1070 = vpop.permute.xlu0 %1069
      %1071 = vrot.lane.b32.xlu0 %v700, 28
      %v1072 = vpop.permute.xlu0 %1071
      %1073 = vrot.lane.b32.xlu0 %v712, 28
      %v1074 = vpop.permute.xlu0 %1073
      %1075 = vrot.lane.b32.xlu0 %v724, 28
      %v1076 = vpop.permute.xlu0 %1075
      %1077 = vrot.lane.b32.xlu0 %v736, 28
      %v1078 = vpop.permute.xlu0 %1077
      %1079 = vrot.lane.b32.xlu0 %v748, 28
      %v1080 = vpop.permute.xlu0 %1079
      %1081 = vrot.lane.b32.xlu0 %v760, 28
      %v1082 = vpop.permute.xlu0 %1081
      %1083 = vrot.lane.b32.xlu0 %v772, 28
      %v1084 = vpop.permute.xlu0 %1083
      %1085 = vrot.lane.b32.xlu0 %v937, 28
      %v1086 = vpop.permute.xlu0 %1085
      %1087 = vrot.lane.b32.xlu0 %v1056, 28
      %v1088 = vpop.permute.xlu0 %1087
      %v1089 = vrot.slane %v1009, 1
      %v1090 = vrot.slane %v1044, 1
      %v1091 = vsel %vm805, %v1089, %v1090
      %1092 = vrot.lane.b32.xlu0 %v814, 32
      %v1093 = vpop.permute.xlu0 %1092
      %1094 = vrot.lane.b32.xlu0 %v817, 32
      %v1095 = vpop.permute.xlu0 %1094
      %1096 = vrot.lane.b32.xlu0 %v820, 32
      %v1097 = vpop.permute.xlu0 %1096
      %1098 = vrot.lane.b32.xlu0 %v823, 32
      %v1099 = vpop.permute.xlu0 %1098
      %1100 = vrot.lane.b32.xlu0 %v826, 32
      %v1101 = vpop.permute.xlu0 %1100
      %1102 = vrot.lane.b32.xlu0 %v829, 32
      %v1103 = vpop.permute.xlu0 %1102
      %1104 = vrot.lane.b32.xlu0 %v832, 32
      %v1105 = vpop.permute.xlu0 %1104
      %1106 = vrot.lane.b32.xlu0 %v835, 32
      %v1107 = vpop.permute.xlu0 %1106
      %1108 = vrot.lane.b32.xlu0 %v838, 32
      %v1109 = vpop.permute.xlu0 %1108
      %1110 = vrot.lane.b32.xlu0 %v841, 32
      %v1111 = vpop.permute.xlu0 %1110
      %1112 = vrot.lane.b32.xlu0 %v844, 32
      %v1113 = vpop.permute.xlu0 %1112
      %1114 = vrot.lane.b32.xlu0 %v847, 32
      %v1115 = vpop.permute.xlu0 %1114
      %1116 = vrot.lane.b32.xlu0 %v850, 32
      %v1117 = vpop.permute.xlu0 %1116
      %1118 = vrot.lane.b32.xlu0 %v853, 32
      %v1119 = vpop.permute.xlu0 %1118
      %1120 = vrot.lane.b32.xlu0 %v972, 32
      %v1121 = vpop.permute.xlu0 %1120
      %1122 = vrot.lane.b32.xlu0 %v1091, 32
      %v1123 = vpop.permute.xlu0 %1122
      %vm1124 = vcmask 31744
      %v1126 = vsel %vm1124, %v516, %v774
      %v1128 = vsel %vm1124, %v517, %v776
      %v1130 = vsel %vm1124, %v518, %v778
      %v1132 = vsel %vm1124, %v519, %v780
      %v1134 = vsel %vm1124, %v520, %v782
      %v1136 = vsel %vm1124, %v521, %v784
      %v1138 = vsel %vm1124, %v522, %v786
      %v1140 = vsel %vm1124, %v523, %v788
      %v1142 = vsel %vm1124, %v524, %v790
      %v1144 = vsel %vm1124, %v525, %v792
      %v1146 = vsel %vm1124, %v526, %v794
      %v1148 = vsel %vm1124, %v527, %v796
      %v1150 = vsel %vm1124, %v528, %v798
      %v1152 = vsel %vm1124, %v529, %v800
      %v1154 = vsel %vm1124, %v530, %v802
      %v1156 = vsel %vm1124, %v531, %v804
      %vm1157 = vcmask 64512
      %v1159 = vsel %vm1157, %v1126, %v855
      %v1161 = vsel %vm1157, %v1128, %v857
      %v1163 = vsel %vm1157, %v1130, %v859
      %v1165 = vsel %vm1157, %v1132, %v861
      %v1167 = vsel %vm1157, %v1134, %v863
      %v1169 = vsel %vm1157, %v1136, %v865
      %v1171 = vsel %vm1157, %v1138, %v867
      %v1173 = vsel %vm1157, %v1140, %v869
      %v1175 = vsel %vm1157, %v1142, %v871
      %v1177 = vsel %vm1157, %v1144, %v873
      %v1179 = vsel %vm1157, %v1146, %v875
      %v1181 = vsel %vm1157, %v1148, %v877
      %v1183 = vsel %vm1157, %v1150, %v879
      %v1185 = vsel %vm1157, %v1152, %v881
      %v1187 = vsel %vm1157, %v1154, %v883
      %v1189 = vsel %vm1157, %v1156, %v885
      %vm1190 = vcmask 97280
      %v1192 = vsel %vm1190, %v1159, %v892
      %v1194 = vsel %vm1190, %v1161, %v894
      %v1196 = vsel %vm1190, %v1163, %v896
      %v1198 = vsel %vm1190, %v1165, %v898
      %v1200 = vsel %vm1190, %v1167, %v900
      %v1202 = vsel %vm1190, %v1169, %v902
      %v1204 = vsel %vm1190, %v1171, %v904
      %v1206 = vsel %vm1190, %v1173, %v906
      %v1208 = vsel %vm1190, %v1175, %v908
      %v1210 = vsel %vm1190, %v1177, %v910
      %v1212 = vsel %vm1190, %v1179, %v912
      %v1214 = vsel %vm1190, %v1181, %v914
      %v1216 = vsel %vm1190, %v1183, %v916
      %v1218 = vsel %vm1190, %v1185, %v918
      %v1220 = vsel %vm1190, %v1187, %v920
      %v1222 = vsel %vm1190, %v1189, %v922
      %vm1223 = vcmask 130048
      %v1225 = vsel %vm1223, %v1192, %v939
      %v1227 = vsel %vm1223, %v1194, %v941
      %v1229 = vsel %vm1223, %v1196, %v943
      %v1231 = vsel %vm1223, %v1198, %v945
      %v1233 = vsel %vm1223, %v1200, %v947
      %v1235 = vsel %vm1223, %v1202, %v949
      %v1237 = vsel %vm1223, %v1204, %v951
      %v1239 = vsel %vm1223, %v1206, %v953
      %v1241 = vsel %vm1223, %v1208, %v955
      %v1243 = vsel %vm1223, %v1210, %v957
      %v1245 = vsel %vm1223, %v1212, %v959
      %v1247 = vsel %vm1223, %v1214, %v961
      %v1249 = vsel %vm1223, %v1216, %v963
      %v1251 = vsel %vm1223, %v1218, %v965
      %v1253 = vsel %vm1223, %v1220, %v967
      %v1255 = vsel %vm1223, %v1222, %v969
      %vm1256 = vcmask 162816
      %v1258 = vsel %vm1256, %v1225, %v974
      %v1260 = vsel %vm1256, %v1227, %v976
      %v1262 = vsel %vm1256, %v1229, %v978
      %v1264 = vsel %vm1256, %v1231, %v980
      %v1266 = vsel %vm1256, %v1233, %v982
      %v1268 = vsel %vm1256, %v1235, %v984
      %v1270 = vsel %vm1256, %v1237, %v986
      %v1272 = vsel %vm1256, %v1239, %v988
      %v1274 = vsel %vm1256, %v1241, %v990
      %v1276 = vsel %vm1256, %v1243, %v992
      %v1278 = vsel %vm1256, %v1245, %v994
      %v1280 = vsel %vm1256, %v1247, %v996
      %v1282 = vsel %vm1256, %v1249, %v998
      %v1284 = vsel %vm1256, %v1251, %v1000
      %v1286 = vsel %vm1256, %v1253, %v1002
      %v1288 = vsel %vm1256, %v1255, %v1004
      %vm1289 = vcmask 195584
      %v1291 = vsel %vm1289, %v1258, %v1011
      %v1293 = vsel %vm1289, %v1260, %v1013
      %v1295 = vsel %vm1289, %v1262, %v1015
      %v1297 = vsel %vm1289, %v1264, %v1017
      %v1299 = vsel %vm1289, %v1266, %v1019
      %v1301 = vsel %vm1289, %v1268, %v1021
      %v1303 = vsel %vm1289, %v1270, %v1023
      %v1305 = vsel %vm1289, %v1272, %v1025
      %v1307 = vsel %vm1289, %v1274, %v1027
      %v1309 = vsel %vm1289, %v1276, %v1029
      %v1311 = vsel %vm1289, %v1278, %v1031
      %v1313 = vsel %vm1289, %v1280, %v1033
      %v1315 = vsel %vm1289, %v1282, %v1035
      %v1317 = vsel %vm1289, %v1284, %v1037
      %v1319 = vsel %vm1289, %v1286, %v1039
      %v1321 = vsel %vm1289, %v1288, %v1041
      %vm1322 = vcmask 228352
      %v1324 = vsel %vm1322, %v1291, %v1058
      %v1326 = vsel %vm1322, %v1293, %v1060
      %v1328 = vsel %vm1322, %v1295, %v1062
      %v1330 = vsel %vm1322, %v1297, %v1064
      %v1332 = vsel %vm1322, %v1299, %v1066
      %v1334 = vsel %vm1322, %v1301, %v1068
      %v1336 = vsel %vm1322, %v1303, %v1070
      %v1338 = vsel %vm1322, %v1305, %v1072
      %v1340 = vsel %vm1322, %v1307, %v1074
      %v1342 = vsel %vm1322, %v1309, %v1076
      %v1344 = vsel %vm1322, %v1311, %v1078
      %v1346 = vsel %vm1322, %v1313, %v1080
      %v1348 = vsel %vm1322, %v1315, %v1082
      %v1350 = vsel %vm1322, %v1317, %v1084
      %v1352 = vsel %vm1322, %v1319, %v1086
      %v1354 = vsel %vm1322, %v1321, %v1088
      %vm1355 = vcmask 261120
      %v1357 = vsel %vm1355, %v1324, %v1093
      %v1359 = vsel %vm1355, %v1326, %v1095
      %v1361 = vsel %vm1355, %v1328, %v1097
      %v1363 = vsel %vm1355, %v1330, %v1099
      %v1365 = vsel %vm1355, %v1332, %v1101
      %v1367 = vsel %vm1355, %v1334, %v1103
      %v1369 = vsel %vm1355, %v1336, %v1105
      %v1371 = vsel %vm1355, %v1338, %v1107
      %v1373 = vsel %vm1355, %v1340, %v1109
      %v1375 = vsel %vm1355, %v1342, %v1111
      %v1377 = vsel %vm1355, %v1344, %v1113
      %v1379 = vsel %vm1355, %v1346, %v1115
      %v1381 = vsel %vm1355, %v1348, %v1117
      %v1383 = vsel %vm1355, %v1350, %v1119
      %v1385 = vsel %vm1355, %v1352, %v1121
      %v1387 = vsel %vm1355, %v1354, %v1123
      %v1388 = vld [vmem:[%s3] sm:$0xf]
      %v1389 = vld [vmem:[%s3 + $0x4] sm:$0xf]
      %v1390 = vld [vmem:[%s3 + $0x8] sm:$0xf]
      %v1391 = vld [vmem:[%s3 + $0xc] sm:$0xf]
      %v1392 = vld [vmem:[%s3 + $0x10] sm:$0x3]
      %v1393 = vld [vmem:[%s4] sm:$0x1]
      %v1395 = vlaneseq
      %v1396 = vshrl.u32 %v1395, 7
      %v1397 = vsub.s32 0, %v1396
      %v1398 = vrot.slane %v1393, %v1397
      %v1405 = vunpack.c.l.b16 %v1388
      %v1406 = vunpack.c.l.b16 %v1389
      %v1407 = vunpack.c.l.b16 %v1390
      %v1408 = vunpack.c.l.b16 %v1391
      %v1409 = vunpack.c.l.b16 %v1392
      %v1410 = vpack.c.b16 %v1406, %v1405
      %v1411 = vpack.c.b16 %v1408, %v1407
      %v1412 = vpack.c.b16 %v1409, %v1409
      %vm1415 = vcmask 293888
      %v1416 = vsel %vm1415, %v1357, 0
      %v1418 = vsel %vm1415, %v1359, 0
      %v1420 = vsel %vm1415, %v1361, 0
      %v1422 = vsel %vm1415, %v1363, 0
      %v1424 = vsel %vm1415, %v1365, 0
      %v1426 = vsel %vm1415, %v1367, 0
      %v1428 = vsel %vm1415, %v1369, 0
      %v1430 = vsel %vm1415, %v1371, 0
      %v1432 = vsel %vm1415, %v1373, 0
      %v1434 = vsel %vm1415, %v1375, 0
      %v1436 = vsel %vm1415, %v1377, 0
      %v1438 = vsel %vm1415, %v1379, 0
      %v1440 = vsel %vm1415, %v1381, 0
      %v1442 = vsel %vm1415, %v1383, 0
      %v1444 = vsel %vm1415, %v1385, 0
      %v1446 = vsel %vm1415, %v1387, 0
      %vm1448 = vcmask 1041408
      %v1450 = vsel %vm1448, %v1412, 0
      %1452 = vmatprep.subr.bf16.mxu0 0
      %1453 = vmatpush1.bf16.msra.mxu0 %v1410
      %1454 = vmatprep.subr.bf16.mxu0 0
      %1455 = vmatpush1.bf16.msra.mxu0 %v1411
      %1456 = vmatprep.subr.bf16.mxu0 0
      %1457 = vmatpush1.bf16.msra.mxu0 %v1450
      %1458 = vmatprep.subr.bf16.mxu0 0
      %1459 = vmatpush1.bf16.msra.mxu0 0
      %1460 = vmatprep.subr.bf16.mxu0 0
      %1461 = vmatpush1.bf16.msra.mxu0 0
      %1462 = vmatprep.subr.bf16.mxu0 0
      %1463 = vmatpush1.bf16.msra.mxu0 0
      %1464 = vmatprep.subr.bf16.mxu0 0
      %1465 = vmatpush1.bf16.msra.mxu0 0
      %1466 = vmatprep.subr.bf16.mxu0 0
      %1467 = vmatpush1.bf16.msra.mxu0 0
      %1468 = vmatprep.subr.bf16.mxu0 0
      %1469 = vmatpush1.bf16.msra.mxu0 0
      %1470 = vmatprep.subr.bf16.mxu0 0
      %1471 = vmatpush1.bf16.msra.mxu0 0
      %1472 = vmatprep.subr.bf16.mxu0 0
      %1473 = vmatpush1.bf16.msra.mxu0 0
      %1474 = vmatprep.subr.bf16.mxu0 0
      %1475 = vmatpush1.bf16.msra.mxu0 0
      %1476 = vmatprep.subr.bf16.mxu0 0
      %1477 = vmatpush1.bf16.msra.mxu0 0
      %1478 = vmatprep.subr.bf16.mxu0 0
      %1479 = vmatpush1.bf16.msra.mxu0 0
      %1480 = vmatprep.subr.bf16.mxu0 0
      %1481 = vmatpush1.bf16.msra.mxu0 0
      %1482 = vmatprep.subr.bf16.mxu0 0
      %1483 = vmatpush1.bf16.msra.mxu0 0
      %1484 = vmatprep.mubr.bf16.mxu0 0
      %1485 = vmatmul.mubr.bf16.gmra.mrb[0].mxu0 %v1416
      %v1486 = vpop.f32.mrb[0].mxu0
      %v1487 = vadd.f32 %v1398, %v1486
      %v1488 = vpop.f32.mrb[0].mxu0
      %v1489 = vpop.f32.mrb[0].mxu0
      %v1490 = vadd.f32 %v1398, %v1489
      %v1491 = vpop.f32.mrb[0].mxu0
      %1492 = vmatprep.mubr.bf16.mxu0 0
      %1493 = vmatmul.mubr.bf16.gmra.mrb[0].mxu0 %v1418
      %v1494 = vpop.f32.mrb[0].mxu0
      %v1495 = vadd.f32 %v1398, %v1494
      %v1496 = vpop.f32.mrb[0].mxu0
      %v1497 = vpop.f32.mrb[0].mxu0
      %v1498 = vadd.f32 %v1398, %v1497
      %v1499 = vpop.f32.mrb[0].mxu0
      %1500 = vmatprep.mubr.bf16.mxu0 0
      %1501 = vmatmul.mubr.bf16.gmra.mrb[0].mxu0 %v1420
      %v1502 = vpop.f32.mrb[0].mxu0
      %v1503 = vadd.f32 %v1398, %v1502
      %v1504 = vpop.f32.mrb[0].mxu0
      %v1505 = vpop.f32.mrb[0].mxu0
      %v1506 = vadd.f32 %v1398, %v1505
      %v1507 = vpop.f32.mrb[0].mxu0
      %1508 = vmatprep.mubr.bf16.mxu0 0
      %1509 = vmatmul.mubr.bf16.gmra.mrb[0].mxu0 %v1422
      %v1510 = vpop.f32.mrb[0].mxu0
      %v1511 = vadd.f32 %v1398, %v1510
      %v1512 = vpop.f32.mrb[0].mxu0
      %v1513 = vpop.f32.mrb[0].mxu0
      %v1514 = vadd.f32 %v1398, %v1513
      %v1515 = vpop.f32.mrb[0].mxu0
      %1516 = vmatprep.mubr.bf16.mxu0 0
      %1517 = vmatmul.mubr.bf16.gmra.mrb[0].mxu0 %v1424
      %v1518 = vpop.f32.mrb[0].mxu0
      %v1519 = vadd.f32 %v1398, %v1518
      %v1520 = vpop.f32.mrb[0].mxu0
      %v1521 = vpop.f32.mrb[0].mxu0
      %v1522 = vadd.f32 %v1398, %v1521
      %v1523 = vpop.f32.mrb[0].mxu0
      %1524 = vmatprep.mubr.bf16.mxu0 0
      %1525 = vmatmul.mubr.bf16.gmra.mrb[0].mxu0 %v1426
      %v1526 = vpop.f32.mrb[0].mxu0
      %v1527 = vadd.f32 %v1398, %v1526
      %v1528 = vpop.f32.mrb[0].mxu0
      %v1529 = vpop.f32.mrb[0].mxu0
      %v1530 = vadd.f32 %v1398, %v1529
      %v1531 = vpop.f32.mrb[0].mxu0
      %1532 = vmatprep.mubr.bf16.mxu0 0
      %1533 = vmatmul.mubr.bf16.gmra.mrb[0].mxu0 %v1428
      %v1534 = vpop.f32.mrb[0].mxu0
      %v1535 = vadd.f32 %v1398, %v1534
      %v1536 = vpop.f32.mrb[0].mxu0
      %v1537 = vpop.f32.mrb[0].mxu0
      %v1538 = vadd.f32 %v1398, %v1537
      %v1539 = vpop.f32.mrb[0].mxu0
      %1540 = vmatprep.mubr.bf16.mxu0 0
      %1541 = vmatmul.mubr.bf16.gmra.mrb[0].mxu0 %v1430
      %v1542 = vpop.f32.mrb[0].mxu0
      %v1543 = vadd.f32 %v1398, %v1542
      %v1544 = vpop.f32.mrb[0].mxu0
      %v1545 = vpop.f32.mrb[0].mxu0
      %v1546 = vadd.f32 %v1398, %v1545
      %v1547 = vpop.f32.mrb[0].mxu0
      %1548 = vmatprep.mubr.bf16.mxu0 0
      %1549 = vmatmul.mubr.bf16.gmra.mrb[0].mxu0 %v1432
      %v1550 = vpop.f32.mrb[0].mxu0
      %v1551 = vadd.f32 %v1398, %v1550
      %v1552 = vpop.f32.mrb[0].mxu0
      %v1553 = vpop.f32.mrb[0].mxu0
      %v1554 = vadd.f32 %v1398, %v1553
      %v1555 = vpop.f32.mrb[0].mxu0
      %1556 = vmatprep.mubr.bf16.mxu0 0
      %1557 = vmatmul.mubr.bf16.gmra.mrb[0].mxu0 %v1434
      %v1558 = vpop.f32.mrb[0].mxu0
      %v1559 = vadd.f32 %v1398, %v1558
      %v1560 = vpop.f32.mrb[0].mxu0
      %v1561 = vpop.f32.mrb[0].mxu0
      %v1562 = vadd.f32 %v1398, %v1561
      %v1563 = vpop.f32.mrb[0].mxu0
      %1564 = vmatprep.mubr.bf16.mxu0 0
      %1565 = vmatmul.mubr.bf16.gmra.mrb[0].mxu0 %v1436
      %v1566 = vpop.f32.mrb[0].mxu0
      %v1567 = vadd.f32 %v1398, %v1566
      %v1568 = vpop.f32.mrb[0].mxu0
      %v1569 = vpop.f32.mrb[0].mxu0
      %v1570 = vadd.f32 %v1398, %v1569
      %v1571 = vpop.f32.mrb[0].mxu0
      %1572 = vmatprep.mubr.bf16.mxu0 0
      %1573 = vmatmul.mubr.bf16.gmra.mrb[0].mxu0 %v1438
      %v1574 = vpop.f32.mrb[0].mxu0
      %v1575 = vadd.f32 %v1398, %v1574
      %v1576 = vpop.f32.mrb[0].mxu0
      %v1577 = vpop.f32.mrb[0].mxu0
      %v1578 = vadd.f32 %v1398, %v1577
      %v1579 = vpop.f32.mrb[0].mxu0
      %1580 = vmatprep.mubr.bf16.mxu0 0
      %1581 = vmatmul.mubr.bf16.gmra.mrb[0].mxu0 %v1440
      %v1582 = vpop.f32.mrb[0].mxu0
      %v1583 = vadd.f32 %v1398, %v1582
      %v1584 = vpop.f32.mrb[0].mxu0
      %v1585 = vpop.f32.mrb[0].mxu0
      %v1586 = vadd.f32 %v1398, %v1585
      %v1587 = vpop.f32.mrb[0].mxu0
      %1588 = vmatprep.mubr.bf16.mxu0 0
      %1589 = vmatmul.mubr.bf16.gmra.mrb[0].mxu0 %v1442
      %v1590 = vpop.f32.mrb[0].mxu0
      %v1591 = vadd.f32 %v1398, %v1590
      %v1592 = vpop.f32.mrb[0].mxu0
      %v1593 = vpop.f32.mrb[0].mxu0
      %v1594 = vadd.f32 %v1398, %v1593
      %v1595 = vpop.f32.mrb[0].mxu0
      %1596 = vmatprep.mubr.bf16.mxu0 0
      %1597 = vmatmul.mubr.bf16.gmra.mrb[0].mxu0 %v1444
      %v1598 = vpop.f32.mrb[0].mxu0
      %v1599 = vadd.f32 %v1398, %v1598
      %v1600 = vpop.f32.mrb[0].mxu0
      %v1601 = vpop.f32.mrb[0].mxu0
      %v1602 = vadd.f32 %v1398, %v1601
      %v1603 = vpop.f32.mrb[0].mxu0
      %1604 = vmatprep.mubr.bf16.mxu0 0
      %1605 = vmatmul.mubr.bf16.gmra.mrb[0].mxu0 %v1446
      %v1606 = vpop.f32.mrb[0].mxu0
      %v1607 = vadd.f32 %v1398, %v1606
      %v1608 = vpop.f32.mrb[0].mxu0
      %v1609 = vpop.f32.mrb[0].mxu0
      %v1610 = vadd.f32 %v1398, %v1609
      %v1611 = vpop.f32.mrb[0].mxu0
      %1612 = vdwg.mxu0
      %v1613 = vmax.f32 %v1487, 0.0
      %v1614 = vmax.f32 %v1490, 0.0
      %v1615 = vmax.f32 %v1495, 0.0
      %v1616 = vmax.f32 %v1498, 0.0
      %v1617 = vmax.f32 %v1503, 0.0
      %v1618 = vmax.f32 %v1506, 0.0
      %v1619 = vmax.f32 %v1511, 0.0
      %v1620 = vmax.f32 %v1514, 0.0
      %v1621 = vmax.f32 %v1519, 0.0
      %v1622 = vmax.f32 %v1522, 0.0
      %v1623 = vmax.f32 %v1527, 0.0
      %v1624 = vmax.f32 %v1530, 0.0
      %v1625 = vmax.f32 %v1535, 0.0
      %v1626 = vmax.f32 %v1538, 0.0
      %v1627 = vmax.f32 %v1543, 0.0
      %v1628 = vmax.f32 %v1546, 0.0
      %v1629 = vmax.f32 %v1551, 0.0
      %v1630 = vmax.f32 %v1554, 0.0
      %v1631 = vmax.f32 %v1559, 0.0
      %v1632 = vmax.f32 %v1562, 0.0
      %v1633 = vmax.f32 %v1567, 0.0
      %v1634 = vmax.f32 %v1570, 0.0
      %v1635 = vmax.f32 %v1575, 0.0
      %v1636 = vmax.f32 %v1578, 0.0
      %v1637 = vmax.f32 %v1583, 0.0
      %v1638 = vmax.f32 %v1586, 0.0
      %v1639 = vmax.f32 %v1591, 0.0
      %v1640 = vmax.f32 %v1594, 0.0
      %v1641 = vmax.f32 %v1599, 0.0
      %v1642 = vmax.f32 %v1602, 0.0
      %v1643 = vmax.f32 %v1607, 0.0
      %v1644 = vmax.f32 %v1610, 0.0
      %v1645 = vpack.c.bf16 %v1614, %v1613
      %v1646 = vpack.c.bf16 %v1616, %v1615
      %v1647 = vpack.c.bf16 %v1618, %v1617
      %v1648 = vpack.c.bf16 %v1620, %v1619
      %v1649 = vpack.c.bf16 %v1622, %v1621
      %v1650 = vpack.c.bf16 %v1624, %v1623
      %v1651 = vpack.c.bf16 %v1626, %v1625
      %v1652 = vpack.c.bf16 %v1628, %v1627
      %v1653 = vpack.c.bf16 %v1630, %v1629
      %v1654 = vpack.c.bf16 %v1632, %v1631
      %v1655 = vpack.c.bf16 %v1634, %v1633
      %v1656 = vpack.c.bf16 %v1636, %v1635
      %v1657 = vpack.c.bf16 %v1638, %v1637
      %v1658 = vpack.c.bf16 %v1640, %v1639
      %v1659 = vpack.c.bf16 %v1642, %v1641
      %v1660 = vpack.c.bf16 %v1644, %v1643
      %v1677 = vunpack.c.l.b16 %v1645
      %v1678 = vunpack.c.h.b16 %v1645
      %v1679 = vunpack.c.l.b16 %v1646
      %v1680 = vunpack.c.h.b16 %v1646
      %v1681 = vunpack.c.l.b16 %v1647
      %v1682 = vunpack.c.h.b16 %v1647
      %v1683 = vunpack.c.l.b16 %v1648
      %v1684 = vunpack.c.h.b16 %v1648
      %v1685 = vunpack.c.l.b16 %v1649
      %v1686 = vunpack.c.h.b16 %v1649
      %v1687 = vunpack.c.l.b16 %v1650
      %v1688 = vunpack.c.h.b16 %v1650
      %v1689 = vunpack.c.l.b16 %v1651
      %v1690 = vunpack.c.h.b16 %v1651
      %v1691 = vunpack.c.l.b16 %v1652
      %v1692 = vunpack.c.h.b16 %v1652
      %v1693 = vunpack.c.l.b16 %v1653
      %v1694 = vunpack.c.h.b16 %v1653
      %v1695 = vunpack.c.l.b16 %v1654
      %v1696 = vunpack.c.h.b16 %v1654
      %v1697 = vunpack.c.l.b16 %v1655
      %v1698 = vunpack.c.h.b16 %v1655
      %v1699 = vunpack.c.l.b16 %v1656
      %v1700 = vunpack.c.h.b16 %v1656
      %v1701 = vunpack.c.l.b16 %v1657
      %v1702 = vunpack.c.h.b16 %v1657
      %v1703 = vunpack.c.l.b16 %v1658
      %v1704 = vunpack.c.h.b16 %v1658
      %v1705 = vunpack.c.l.b16 %v1659
      %v1706 = vunpack.c.h.b16 %v1659
      %v1707 = vunpack.c.l.b16 %v1660
      %v1708 = vunpack.c.h.b16 %v1660
      %v1709 = vpack.c.b16 %v1677, %v1677
      %v1710 = vpack.c.b16 %v1678, %v1678
      %v1711 = vpack.c.b16 %v1679, %v1679
      %v1712 = vpack.c.b16 %v1680, %v1680
      %v1713 = vpack.c.b16 %v1681, %v1681
      %v1714 = vpack.c.b16 %v1682, %v1682
      %v1715 = vpack.c.b16 %v1683, %v1683
      %v1716 = vpack.c.b16 %v1684, %v1684
      %v1717 = vpack.c.b16 %v1685, %v1685
      %v1718 = vpack.c.b16 %v1686, %v1686
      %v1719 = vpack.c.b16 %v1687, %v1687
      %v1720 = vpack.c.b16 %v1688, %v1688
      %v1721 = vpack.c.b16 %v1689, %v1689
      %v1722 = vpack.c.b16 %v1690, %v1690
      %v1723 = vpack.c.b16 %v1691, %v1691
      %v1724 = vpack.c.b16 %v1692, %v1692
      %v1725 = vpack.c.b16 %v1693, %v1693
      %v1726 = vpack.c.b16 %v1694, %v1694
      %v1727 = vpack.c.b16 %v1695, %v1695
      %v1728 = vpack.c.b16 %v1696, %v1696
      %v1729 = vpack.c.b16 %v1697, %v1697
      %v1730 = vpack.c.b16 %v1698, %v1698
      %v1731 = vpack.c.b16 %v1699, %v1699
      %v1732 = vpack.c.b16 %v1700, %v1700
      %v1733 = vpack.c.b16 %v1701, %v1701
      %v1734 = vpack.c.b16 %v1702, %v1702
      %v1735 = vpack.c.b16 %v1703, %v1703
      %v1736 = vpack.c.b16 %v1704, %v1704
      %v1737 = vpack.c.b16 %v1705, %v1705
      %v1738 = vpack.c.b16 %v1706, %v1706
      %v1739 = vpack.c.b16 %v1707, %v1707
      %v1740 = vpack.c.b16 %v1708, %v1708
      %vm1773 = vcmask 60416
      %1774 = vst.msk [vmem:[%s395] sm:$0xf] %vm1773, %v1709
      %1775 = vst.msk [vmem:[%s395 + $0x4] sm:$0xf] %vm1773, %v1710
      %1776 = vst.msk [vmem:[%s395 + $0x8] sm:$0xf] %vm1773, %v1711
      %1777 = vst.msk [vmem:[%s395 + $0xc] sm:$0xf] %vm1773, %v1712
      %1778 = vst.msk [vmem:[%s395 + $0x10] sm:$0xf] %vm1773, %v1713
      %1779 = vst.msk [vmem:[%s395 + $0x14] sm:$0xf] %vm1773, %v1714
      %1780 = vst.msk [vmem:[%s395 + $0x18] sm:$0xf] %vm1773, %v1715
      %1781 = vst.msk [vmem:[%s395 + $0x1c] sm:$0xf] %vm1773, %v1716
      %1782 = vst.msk [vmem:[%s395 + $0x20] sm:$0xf] %vm1773, %v1717
      %1783 = vst.msk [vmem:[%s395 + $0x24] sm:$0xf] %vm1773, %v1718
      %1784 = vst.msk [vmem:[%s395 + $0x28] sm:$0xf] %vm1773, %v1719
      %1785 = vst.msk [vmem:[%s395 + $0x2c] sm:$0xf] %vm1773, %v1720
      %1786 = vst.msk [vmem:[%s395 + $0x30] sm:$0xf] %vm1773, %v1721
      %1787 = vst.msk [vmem:[%s395 + $0x34] sm:$0xf] %vm1773, %v1722
      %1788 = vst.msk [vmem:[%s395 + $0x38] sm:$0xf] %vm1773, %v1723
      %1789 = vst.msk [vmem:[%s395 + $0x3c] sm:$0xf] %vm1773, %v1724
      %1790 = vst.msk [vmem:[%s395 + $0x40] sm:$0xf] %vm1773, %v1725
      %1791 = vst.msk [vmem:[%s395 + $0x44] sm:$0xf] %vm1773, %v1726
      %1792 = vst.msk [vmem:[%s395 + $0x48] sm:$0xf] %vm1773, %v1727
      %1793 = vst.msk [vmem:[%s395 + $0x4c] sm:$0xf] %vm1773, %v1728
      %1794 = vst.msk [vmem:[%s395 + $0x50] sm:$0xf] %vm1773, %v1729
      %1795 = vst.msk [vmem:[%s395 + $0x54] sm:$0xf] %vm1773, %v1730
      %1796 = vst.msk [vmem:[%s395 + $0x58] sm:$0xf] %vm1773, %v1731
      %1797 = vst.msk [vmem:[%s395 + $0x5c] sm:$0xf] %vm1773, %v1732
      %1798 = vst.msk [vmem:[%s395 + $0x60] sm:$0xf] %vm1773, %v1733
      %1799 = vst.msk [vmem:[%s395 + $0x64] sm:$0xf] %vm1773, %v1734
      %1800 = vst.msk [vmem:[%s395 + $0x68] sm:$0xf] %vm1773, %v1735
      %1801 = vst.msk [vmem:[%s395 + $0x6c] sm:$0xf] %vm1773, %v1736
      %1802 = vst.msk [vmem:[%s395 + $0x70] sm:$0xf] %vm1773, %v1737
      %1803 = vst.msk [vmem:[%s395 + $0x74] sm:$0xf] %vm1773, %v1738
      %1804 = vst.msk [vmem:[%s395 + $0x78] sm:$0xf] %vm1773, %v1739
      %1805 = vst.msk [vmem:[%s395 + $0x7c] sm:$0xf] %vm1773, %v1740
      %s1806 = smul.u32 16, %s21
      %p1807 = scmp.lt.s32.totalorder %s20, 1
      %s1808 = scalar_select %p1807, %s20, 1
      %p1809 = scmp.lt.s32.totalorder %s1806, 15
      %s1810 = scalar_select %p1809, %s1806, 15
      %s1811 = smul.addr %s1810, 2
      %s1812 = smul.addr %s1808, 32
      %s1813 = sadd.s32 %s1811, %s1812
      %s1814 = smul.addr %s1813, 4
      %s1815 = scalar_lea.vmem %s5, %s1814
      // Predicated region
      $region41: #{_lambda_.7} parent=39 // pred_check
        %p1816 = pneg %p184
      $region42: #{_lambda_.7} parent=39 // pred_check_branch
        %1818 = sbr.rel (%p1816) target = $region44
      $region43: #{_lambda_.7} parent=39 // pred_region
        %s1819 = smul.u32 16, %s21
      $region44: #{_lambda_.7} parent=39 // pred_fallthru
        _
    $region40: #{_lambda_.7} parent=5 // pred_fallthru
      _
    %p1820 = scmp.le.s32.totalorder 2, %s11
    // Predicated region
    $region45: #{_lambda_.7} parent=5 // pred_check
      %p1821 = pneg %p1820
    $region46: #{_lambda_.7} parent=5 // pred_check_branch
      %1823 = sbr.rel (%p1821) target = $region48
    $region47: #{_lambda_.7} parent=5 // pred_region
      %s1824 = ssub.s32 %s11, 2
      // Predicated region
      $region49: #{_lambda_.7} parent=47 // pred_check
        %p1825 = pneg %p190
      $region50: #{_lambda_.7} parent=47 // pred_check_branch
        %1827 = sbr.rel (%p1825) target = $region52
      $region51: #{_lambda_.7} parent=47 // pred_region
        %s1828 = smul.u32 16, %s23
        %p1829 = scmp.lt.s32.totalorder %s22, 1
        %s1830 = scalar_select %p1829, %s22, 1
        %p1831 = scmp.lt.s32.totalorder %s1828, 15
        %s1832 = scalar_select %p1831, %s1828, 15
        %s1833 = smul.addr %s1832, 2
        %s1834 = smul.addr %s1830, 32
        %s1835 = sadd.s32 %s1833, %s1834
        %s1836 = smul.addr %s1835, 4
        %s1837 = scalar_lea.vmem %s5, %s1836
      $region52: #{_lambda_.7} parent=47 // pred_fallthru
        _
    $region48: #{_lambda_.7} parent=5 // pred_fallthru
      _
  $region6: #{_lambda_.7} parent=0 // loop_footer
    %s15 = sadd.s32 1, %s11
  $region7: #{_lambda_.7} parent=0 // loop_footer_branch
    %10 = sbr.rel target = $region3
  $region8: #{_lambda_.7} parent=0 // loop_exit
    _

// kernel: _lambda_.8
$region0: #{_lambda_.8}
  #allocation0 [shape = 'u32[]', space=smem, size = 0x4, offset = 0x4, fixed_abs, tag = 'smem constant byte address 0x4 - core index']
  #allocation1 [shape = 'u32[144,128]{1,0:T(1,128)}', space=vmem, size = 0x12000, scoped, tag = 'internal scratch']
  %s0 = inlined_call_operand.vmem [shape: bf16[2,18,18,8], index: 0, kind: input, shape index: {}, may-alias: {0,1,2}]
  %s1 = inlined_call_operand.vmem [shape: bf16[2,18,18,8], index: 1, kind: input, shape index: {}, may-alias: {0,1,2}]
  %s2 = inlined_call_operand.vmem [shape: bf16[2,18,18,8], index: 2, kind: input, shape index: {}, may-alias: {0,1,2}]
  %s3 = inlined_call_operand.vmem [shape: bf16[72,8], index: 3, kind: input, shape index: {}]
  %s4 = inlined_call_operand.vmem [shape: f32[1,8], index: 4, kind: input, shape index: {}]
  %s5 = inlined_call_operand.vmem [shape: bf16[2,16,16,8], index: 5, kind: output, shape index: {}]
  %s6 = sld [smem:[#allocation0]]
  $region53: #{_lambda_.8} parent=0
    _
  %s8 = ssub.s32 1, %s6
  %s9 = scalar_select 0, %s8, %s6
  loop: start=0, step=1, limit=4
  $region2: #{_lambda_.8} parent=0 // loop_pre_header
    _
  $region3: #{_lambda_.8} parent=0 // loop_header
    %s11 = sphi 0, %s15
    %p12 = scmp.ge.s32.totalorder %s11, 4
    %s18 = sphi 0, %s30
    %s19 = sphi 0, %s26
    %s20 = sphi 0, %s18
    %s21 = sphi 0, %s19
    %s22 = sphi 0, %s20
    %s23 = sphi 0, %s21
    %s35 = sphi 0, %s37
    %s38 = sphi 0, %s35
    %s39 = sphi 0, %s38
    %s55 = sphi 0, %s39
    %s67 = sphi 0, %s69
    %s70 = sphi 0, %s67
    %s71 = sphi 0, %s70
    %s87 = sphi 0, %s71
    %s101 = sphi 0, %s103
    %s104 = sphi 0, %s101
    %s105 = sphi 0, %s104
    %s121 = sphi 0, %s105
    %s125 = sphi 0, %s125
    %s127 = sphi 0, %s125
    %s128 = sphi 0, %s127
    %s142 = sphi 0, %s128
    %s146 = sphi 0, %s146
    %s148 = sphi 0, %s146
    %s149 = sphi 0, %s148
    %s163 = sphi 0, %s149
    %s171 = sphi 0, %s173
    %s174 = sphi 0, %s171
    %s175 = sphi 0, %s174
    %s191 = sphi 0, %s175
  $region4: #{_lambda_.8} parent=0 // loop_header_branch
    %14 = sbr.rel (%p12) target = $region8
  $region5: #{_lambda_.8} parent=0 // loop_body
    %s16 = ssub.s32 %s11, 1
    %s17 = ssub.s32 %s11, 2
    %s24 = sadd.s32 1, %s19
    %p25 = scmp.ge.s32.totalorder %s24, 1
    %s26 = scalar_select %p25, 0, %s24
    %s27 = sadd.s32 1, %s18
    %s28 = scalar_select %p25, %s27, %s18
    %p29 = scmp.ge.s32.totalorder %s28, 2
    %s30 = scalar_select %p29, 0, %s28
    %s31 = ssub.s32 %s18, %s30
    %s32 = ssub.s32 %s19, %s26
    %s33 = sor.u32 %s31, %s32
    %p34 = scmp.eq.s32.totalorder %s33, 0
    %s36 = sadd.s32 %s35, 1
    %s37 = scalar_select %p34, %s35, %s36
    %p40 = pneg %p34
    %p41 = scmp.eq.s32.totalorder %s11, 1
    %p42 = por %p40, %p41
    %p43 = scmp.ne.s32.totalorder %s35, %s38
    %p44 = scmp.eq.s32.totalorder %s11, 0
    %p45 = por %p43, %p44
    %p46 = scmp.ne.s32.totalorder %s35, %s38
    %p47 = scmp.eq.s32.totalorder %s16, 1
    %p48 = por %p46, %p47
    %p49 = scmp.ne.s32.totalorder %s38, %s39
    %p50 = scmp.eq.s32.totalorder %s16, 0
    %p51 = por %p49, %p50
    %p52 = scmp.ne.s32.totalorder %s38, %s39
    %p53 = scmp.eq.s32.totalorder %s17, 1
    %p54 = por %p52, %p53
    %p56 = scmp.ne.s32.totalorder %s39, %s55
    %p57 = scmp.eq.s32.totalorder %s17, 0
    %p58 = por %p56, %p57
    %s59 = sadd.s32 %s19, 1
    %s60 = smul.u32 %s59, 16
    %s61 = sadd.s32 %s26, 1
    %s62 = smul.u32 %s61, 16
    %s63 = ssub.s32 %s18, %s30
    %s64 = ssub.s32 %s60, %s62
    %s65 = sor.u32 %s63, %s64
    %p66 = scmp.eq.s32.totalorder %s65, 0
    %s68 = sadd.s32 %s67, 1
    %s69 = scalar_select %p66, %s67, %s68
    %p72 = pneg %p66
    %p73 = scmp.eq.s32.totalorder %s11, 1
    %p74 = por %p72, %p73
    %p75 = scmp.ne.s32.totalorder %s67, %s70
    %p76 = scmp.eq.s32.totalorder %s11, 0
    %p77 = por %p75, %p76
    %p78 = scmp.ne.s32.totalorder %s67, %s70
    %p79 = scmp.eq.s32.totalorder %s16, 1
    %p80 = por %p78, %p79
    %p81 = scmp.ne.s32.totalorder %s70, %s71
    %p82 = scmp.eq.s32.totalorder %s16, 0
    %p83 = por %p81, %p82
    %p84 = scmp.ne.s32.totalorder %s70, %s71
    %p85 = scmp.eq.s32.totalorder %s17, 1
    %p86 = por %p84, %p85
    %p88 = scmp.ne.s32.totalorder %s71, %s87
    %p89 = scmp.eq.s32.totalorder %s17, 0
    %p90 = por %p88, %p89
    %s91 = sadd.s32 %s19, 1
    %s92 = smul.u32 %s91, 16
    %s93 = sadd.s32 %s92, 1
    %s94 = sadd.s32 %s26, 1
    %s95 = smul.u32 %s94, 16
    %s96 = sadd.s32 %s95, 1
    %s97 = ssub.s32 %s18, %s30
    %s98 = ssub.s32 %s93, %s96
    %s99 = sor.u32 %s97, %s98
    %p100 = scmp.eq.s32.totalorder %s99, 0
    %s102 = sadd.s32 %s101, 1
    %s103 = scalar_select %p100, %s101, %s102
    %p106 = pneg %p100
    %p107 = scmp.eq.s32.totalorder %s11, 1
    %p108 = por %p106, %p107
    %p109 = scmp.ne.s32.totalorder %s101, %s104
    %p110 = scmp.eq.s32.totalorder %s11, 0
    %p111 = por %p109, %p110
    %p112 = scmp.ne.s32.totalorder %s101, %s104
    %p113 = scmp.eq.s32.totalorder %s16, 1
    %p114 = por %p112, %p113
    %p115 = scmp.ne.s32.totalorder %s104, %s105
    %p116 = scmp.eq.s32.totalorder %s16, 0
    %p117 = por %p115, %p116
    %p118 = scmp.ne.s32.totalorder %s104, %s105
    %p119 = scmp.eq.s32.totalorder %s17, 1
    %p120 = por %p118, %p119
    %p122 = scmp.ne.s32.totalorder %s105, %s121
    %p123 = scmp.eq.s32.totalorder %s17, 0
    %p124 = por %p122, %p123
    %s126 = sadd.s32 %s125, 1
    %p129 = scmp.eq.s32.totalorder %s11, 1
    %p130 = scmp.ne.s32.totalorder %s125, %s127
    %p131 = scmp.eq.s32.totalorder %s11, 0
    %p132 = por %p130, %p131
    %p133 = scmp.ne.s32.totalorder %s125, %s127
    %p134 = scmp.eq.s32.totalorder %s16, 1
    %p135 = por %p133, %p134
    %p136 = scmp.ne.s32.totalorder %s127, %s128
    %p137 = scmp.eq.s32.totalorder %s16, 0
    %p138 = por %p136, %p137
    %p139 = scmp.ne.s32.totalorder %s127, %s128
    %p140 = scmp.eq.s32.totalorder %s17, 1
    %p141 = por %p139, %p140
    %p143 = scmp.ne.s32.totalorder %s128, %s142
    %p144 = scmp.eq.s32.totalorder %s17, 0
    %p145 = por %p143, %p144
    %s147 = sadd.s32 %s146, 1
    %p150 = scmp.eq.s32.totalorder %s11, 1
    %p151 = scmp.ne.s32.totalorder %s146, %s148
    %p152 = scmp.eq.s32.totalorder %s11, 0
    %p153 = por %p151, %p152
    %p154 = scmp.ne.s32.totalorder %s146, %s148
    %p155 = scmp.eq.s32.totalorder %s16, 1
    %p156 = por %p154, %p155
    %p157 = scmp.ne.s32.totalorder %s148, %s149
    %p158 = scmp.eq.s32.totalorder %s16, 0
    %p159 = por %p157, %p158
    %p160 = scmp.ne.s32.totalorder %s148, %s149
    %p161 = scmp.eq.s32.totalorder %s17, 1
    %p162 = por %p160, %p161
    %p164 = scmp.ne.s32.totalorder %s149, %s163
    %p165 = scmp.eq.s32.totalorder %s17, 0
    %p166 = por %p164, %p165
    %s167 = ssub.s32 %s18, %s30
    %s168 = ssub.s32 %s19, %s26
    %s169 = sor.u32 %s167, %s168
    %p170 = scmp.eq.s32.totalorder %s169, 0
    %s172 = sadd.s32 %s171, 1
    %s173 = scalar_select %p170, %s171, %s172
    %p176 = pneg %p170
    %p177 = scmp.eq.s32.totalorder %s11, 1
    %p178 = por %p176, %p177
    %p179 = scmp.ne.s32.totalorder %s171, %s174
    %p180 = scmp.eq.s32.totalorder %s11, 0
    %p181 = por %p179, %p180
    %p182 = scmp.ne.s32.totalorder %s171, %s174
    %p183 = scmp.eq.s32.totalorder %s16, 1
    %p184 = por %p182, %p183
    %p185 = scmp.ne.s32.totalorder %s174, %s175
    %p186 = scmp.eq.s32.totalorder %s16, 0
    %p187 = por %p185, %p186
    %p188 = scmp.ne.s32.totalorder %s174, %s175
    %p189 = scmp.eq.s32.totalorder %s17, 1
    %p190 = por %p188, %p189
    %p192 = scmp.ne.s32.totalorder %s175, %s191
    %p193 = scmp.eq.s32.totalorder %s17, 0
    %p194 = por %p192, %p193
    %p195 = scmp.le.s32.totalorder 1, %s11
    %p196 = scmp.lt.s32.totalorder %s11, 3
    %p197 = pnand %p195, %p196
    %p198 = pneg %p197
    // Predicated region
    $region9: #{_lambda_.8} parent=5 // pred_check
      _
    $region10: #{_lambda_.8} parent=5 // pred_check_branch
      %200 = sbr.rel (%p197) target = $region12
    $region11: #{_lambda_.8} parent=5 // pred_region
      %s201 = ssub.s32 %s11, 1
      // Predicated region
      $region13: #{_lambda_.8} parent=11 // pred_check
        %p202 = pneg %p138
      $region14: #{_lambda_.8} parent=11 // pred_check_branch
        %204 = sbr.rel (%p202) target = $region16
      $region15: #{_lambda_.8} parent=11 // pred_region
        _
      $region16: #{_lambda_.8} parent=11 // pred_fallthru
        _
      // Predicated region
      $region17: #{_lambda_.8} parent=11 // pred_check
        %p205 = pneg %p159
      $region18: #{_lambda_.8} parent=11 // pred_check_branch
        %207 = sbr.rel (%p205) target = $region20
      $region19: #{_lambda_.8} parent=11 // pred_region
        _
      $region20: #{_lambda_.8} parent=11 // pred_fallthru
        _
    $region12: #{_lambda_.8} parent=5 // pred_fallthru
      _
    %p208 = scmp.lt.s32.totalorder %s11, 2
    // Predicated region
    $region21: #{_lambda_.8} parent=5 // pred_check
      %p209 = pneg %p208
    $region22: #{_lambda_.8} parent=5 // pred_check_branch
      %211 = sbr.rel (%p209) target = $region24
    $region23: #{_lambda_.8} parent=5 // pred_region
      // Predicated region
      $region25: #{_lambda_.8} parent=23 // pred_check
        %p212 = pneg %p45
      $region26: #{_lambda_.8} parent=23 // pred_check_branch
        %214 = sbr.rel (%p212) target = $region28
      $region27: #{_lambda_.8} parent=23 // pred_region
        %s215 = smul.u32 16, %s19
        %s216 = ssub.s32 18, %s215
        %p217 = scmp.lt.s32.totalorder %s216, 16
        %s218 = scalar_select %p217, %s216, 16
        %s219 = smul.u32 64, %s218
        %s220 = smul.u32 %s219, 3
        %p221 = scmp.lt.s32.totalorder %s18, 1
        %s222 = scalar_select %p221, %s18, 1
        %p223 = scmp.lt.s32.totalorder %s215, 17
        %s224 = scalar_select %p223, %s215, 17
        %s225 = smul.addr %s224, 3
        %s226 = smul.addr %s222, 54
        %s227 = sadd.s32 %s225, %s226
        %s228 = smul.addr %s227, 4
        %s229 = scalar_lea.vmem %s0, %s228
        %s230 = smul.u32 16, %s19
        %s231 = ssub.s32 18, %s230
        %p232 = scmp.lt.s32.totalorder %s231, 16
        %s233 = scalar_select %p232, %s231, 16
        %s234 = smul.u32 64, %s233
        %s235 = smul.u32 %s234, 3
      $region28: #{_lambda_.8} parent=23 // pred_fallthru
        _
      // Predicated region
      $region29: #{_lambda_.8} parent=23 // pred_check
        %p236 = pneg %p77
      $region30: #{_lambda_.8} parent=23 // pred_check_branch
        %238 = sbr.rel (%p236) target = $region32
      $region31: #{_lambda_.8} parent=23 // pred_region
        %s239 = sadd.s32 %s19, 1
        %s240 = smul.u32 %s239, 16
        %p241 = scmp.lt.s32.totalorder %s18, 1
        %s242 = scalar_select %p241, %s18, 1
        %p243 = scmp.lt.s32.totalorder %s240, 17
        %s244 = scalar_select %p243, %s240, 17
        %s245 = smul.addr %s244, 3
        %s246 = smul.addr %s242, 54
        %s247 = sadd.s32 %s245, %s246
        %s248 = smul.addr %s247, 4
        %s249 = scalar_lea.vmem %s1, %s248
        %s250 = sadd.s32 %s19, 1
        %s251 = smul.u32 %s250, 16
      $region32: #{_lambda_.8} parent=23 // pred_fallthru
        _
      // Predicated region
      $region33: #{_lambda_.8} parent=23 // pred_check
        %p252 = pneg %p111
      $region34: #{_lambda_.8} parent=23 // pred_check_branch
        %254 = sbr.rel (%p252) target = $region36
      $region35: #{_lambda_.8} parent=23 // pred_region
        %s255 = sadd.s32 %s19, 1
        %s256 = smul.u32 %s255, 16
        %s257 = sadd.s32 %s256, 1
        %p258 = scmp.lt.s32.totalorder %s18, 1
        %s259 = scalar_select %p258, %s18, 1
        %p260 = scmp.lt.s32.totalorder %s257, 17
        %s261 = scalar_select %p260, %s257, 17
        %s262 = smul.addr %s261, 3
        %s263 = smul.addr %s259, 54
        %s264 = sadd.s32 %s262, %s263
        %s265 = smul.addr %s264, 4
        %s266 = scalar_lea.vmem %s2, %s265
        %s267 = sadd.s32 %s19, 1
        %s268 = smul.u32 %s267, 16
        %s269 = sadd.s32 %s268, 1
      $region36: #{_lambda_.8} parent=23 // pred_fallthru
        _
    $region24: #{_lambda_.8} parent=5 // pred_fallthru
      _
    %p270 = scmp.le.s32.totalorder 1, %s11
    %p271 = scmp.lt.s32.totalorder %s11, 3
    %p272 = pnand %p270, %p271
    %p273 = pneg %p272
    // Predicated region
    $region37: #{_lambda_.8} parent=5 // pred_check
      _
    $region38: #{_lambda_.8} parent=5 // pred_check_branch
      %275 = sbr.rel (%p272) target = $region40
    $region39: #{_lambda_.8} parent=5 // pred_region
      %s276 = ssub.s32 %s11, 1
      %s277 = smul.u32 16, %s21
      %s278 = ssub.s32 18, %s277
      %p279 = scmp.lt.s32.totalorder %s278, 16
      %s280 = scalar_select %p279, %s278, 16
      %s281 = smul.u32 64, %s280
      %s282 = smul.u32 %s281, 3
      %p283 = scmp.lt.s32.totalorder %s20, 1
      %s284 = scalar_select %p283, %s20, 1
      %p285 = scmp.lt.s32.totalorder %s277, 17
      %s286 = scalar_select %p285, %s277, 17
      %s287 = smul.addr %s286, 3
      %s288 = smul.addr %s284, 54
      %s289 = sadd.s32 %s287, %s288
      %s290 = smul.addr %s289, 4
      %s291 = scalar_lea.vmem %s0, %s290
      %p292 = pneg %p51
      %p293 = pneg %p48
      %s294 = sadd.s32 %s21, 1
      %s295 = smul.u32 %s294, 16
      %p296 = scmp.lt.s32.totalorder %s20, 1
      %s297 = scalar_select %p296, %s20, 1
      %p298 = scmp.lt.s32.totalorder %s295, 17
      %s299 = scalar_select %p298, %s295, 17
      %s300 = smul.addr %s299, 3
      %s301 = smul.addr %s297, 54
      %s302 = sadd.s32 %s300, %s301
      %s303 = smul.addr %s302, 4
      %s304 = scalar_lea.vmem %s1, %s303
      %p305 = pneg %p83
      %p306 = pneg %p80
      %s307 = sadd.s32 %s21, 1
      %s308 = smul.u32 %s307, 16
      %s309 = sadd.s32 %s308, 1
      %p310 = scmp.lt.s32.totalorder %s20, 1
      %s311 = scalar_select %p310, %s20, 1
      %p312 = scmp.lt.s32.totalorder %s309, 17
      %s313 = scalar_select %p312, %s309, 17
      %s314 = smul.addr %s313, 3
      %s315 = smul.addr %s311, 54
      %s316 = sadd.s32 %s314, %s315
      %s317 = smul.addr %s316, 4
      %s318 = scalar_lea.vmem %s2, %s317
      %p319 = pneg %p117
      %p320 = pneg %p114
      %p321 = pneg %p138
      %p322 = pneg %p135
      %p323 = pneg %p159
      %p324 = pneg %p156
      %p325 = pneg %p187
      %p326 = pneg %p184
      %s327 = smul.u32 16, %s21
      %p328 = scmp.lt.s32.totalorder %s20, 1
      %s329 = scalar_select %p328, %s20, 1
      %p330 = scmp.lt.s32.totalorder %s327, 15
      %s331 = scalar_select %p330, %s327, 15
      %s332 = smul.addr %s331, 2
      %s333 = smul.addr %s329, 32
      %s334 = sadd.s32 %s332, %s333
      %s335 = smul.addr %s334, 4
      %s336 = scalar_lea.vmem %s5, %s335
      %s337 = smul.u32 16, %s21
      %s338 = ssub.s32 18, %s337
      %p339 = scmp.lt.s32.totalorder %s338, 16
      %s340 = scalar_select %p339, %s338, 16
      %s341 = smul.u32 64, %s340
      %s342 = smul.u32 %s341, 3
      %p343 = scmp.lt.s32.totalorder %s20, 1
      %s344 = scalar_select %p343, %s20, 1
      %p345 = scmp.lt.s32.totalorder %s337, 17
      %s346 = scalar_select %p345, %s337, 17
      %s347 = smul.addr %s346, 3
      %s348 = smul.addr %s344, 54
      %s349 = sadd.s32 %s347, %s348
      %s350 = smul.addr %s349, 4
      %s351 = scalar_lea.vmem %s0, %s350
      %s352 = smul.u32 16, %s21
      %s353 = ssub.s32 18, %s352
      %p354 = scmp.lt.s32.totalorder %s353, 16
      %s355 = scalar_select %p354, %s353, 16
      %s356 = smul.u32 64, %s355
      %s357 = smul.u32 %s356, 3
      %s358 = sadd.s32 %s21, 1
      %s359 = smul.u32 %s358, 16
      %p360 = scmp.lt.s32.totalorder %s20, 1
      %s361 = scalar_select %p360, %s20, 1
      %p362 = scmp.lt.s32.totalorder %s359, 17
      %s363 = scalar_select %p362, %s359, 17
      %s364 = smul.addr %s363, 3
      %s365 = smul.addr %s361, 54
      %s366 = sadd.s32 %s364, %s365
      %s367 = smul.addr %s366, 4
      %s368 = scalar_lea.vmem %s1, %s367
      %s369 = sadd.s32 %s21, 1
      %s370 = smul.u32 %s369, 16
      %s371 = sadd.s32 %s21, 1
      %s372 = smul.u32 %s371, 16
      %s373 = sadd.s32 %s372, 1
      %p374 = scmp.lt.s32.totalorder %s20, 1
      %s375 = scalar_select %p374, %s20, 1
      %p376 = scmp.lt.s32.totalorder %s373, 17
      %s377 = scalar_select %p376, %s373, 17
      %s378 = smul.addr %s377, 3
      %s379 = smul.addr %s375, 54
      %s380 = sadd.s32 %s378, %s379
      %s381 = smul.addr %s380, 4
      %s382 = scalar_lea.vmem %s2, %s381
      %s383 = sadd.s32 %s21, 1
      %s384 = smul.u32 %s383, 16
      %s385 = sadd.s32 %s384, 1
      %s386 = smul.u32 16, %s21
      %p387 = scmp.lt.s32.totalorder %s20, 1
      %s388 = scalar_select %p387, %s20, 1
      %p389 = scmp.lt.s32.totalorder %s386, 15
      %s390 = scalar_select %p389, %s386, 15
      %s391 = smul.addr %s390, 2
      %s392 = smul.addr %s388, 32
      %s393 = sadd.s32 %s391, %s392
      %s394 = smul.addr %s393, 4
      %s395 = scalar_lea.vmem %s5, %s394
      %s396 = smul.u32 16, %s21
      %v398 = vld [vmem:[%s351] sm:$0xf]
      %v399 = vld [vmem:[%s351 + $0x4] sm:$0xf]
      %v400 = vld [vmem:[%s351 + $0x8] sm:$0x1]
      %v401 = vld [vmem:[%s351 + $0xc] sm:$0xf]
      %v402 = vld [vmem:[%s351 + $0x10] sm:$0xf]
      %v403 = vld [vmem:[%s351 + $0x14] sm:$0x1]
      %v404 = vld [vmem:[%s351 + $0x18] sm:$0xf]
      %v405 = vld [vmem:[%s351 + $0x1c] sm:$0xf]
      %v406 = vld [vmem:[%s351 + $0x20] sm:$0x1]
      %v407 = vld [vmem:[%s351 + $0x24] sm:$0xf]
      %v408 = vld [vmem:[%s351 + $0x28] sm:$0xf]
      %v409 = vld [vmem:[%s351 + $0x2c] sm:$0x1]
      %v410 = vld [vmem:[%s351 + $0x30] sm:$0xf]
      %v411 = vld [vmem:[%s351 + $0x34] sm:$0xf]
      %v412 = vld [vmem:[%s351 + $0x38] sm:$0x1]
      %v413 = vld [vmem:[%s351 + $0x3c] sm:$0xf]
      %v414 = vld [vmem:[%s351 + $0x40] sm:$0xf]
      %v415 = vld [vmem:[%s351 + $0x44] sm:$0x1]
      %v416 = vld [vmem:[%s351 + $0x48] sm:$0xf]
      %v417 = vld [vmem:[%s351 + $0x4c] sm:$0xf]
      %v418 = vld [vmem:[%s351 + $0x50] sm:$0x1]
      %v419 = vld [vmem:[%s351 + $0x54] sm:$0xf]
      %v420 = vld [vmem:[%s351 + $0x58] sm:$0xf]
      %v421 = vld [vmem:[%s351 + $0x5c] sm:$0x1]
      %v422 = vld [vmem:[%s351 + $0x60] sm:$0xf]
      %v423 = vld [vmem:[%s351 + $0x64] sm:$0xf]
      %v424 = vld [vmem:[%s351 + $0x68] sm:$0x1]
      %v425 = vld [vmem:[%s351 + $0x6c] sm:$0xf]
      %v426 = vld [vmem:[%s351 + $0x70] sm:$0xf]
      %v427 = vld [vmem:[%s351 + $0x74] sm:$0x1]
      %v428 = vld [vmem:[%s351 + $0x78] sm:$0xf]
      %v429 = vld [vmem:[%s351 + $0x7c] sm:$0xf]
      %v430 = vld [vmem:[%s351 + $0x80] sm:$0x1]
      %v431 = vld [vmem:[%s351 + $0x84] sm:$0xf]
      %v432 = vld [vmem:[%s351 + $0x88] sm:$0xf]
      %v433 = vld [vmem:[%s351 + $0x8c] sm:$0x1]
      %v434 = vld [vmem:[%s351 + $0x90] sm:$0xf]
      %v435 = vld [vmem:[%s351 + $0x94] sm:$0xf]
      %v436 = vld [vmem:[%s351 + $0x98] sm:$0x1]
      %v437 = vld [vmem:[%s351 + $0x9c] sm:$0xf]
      %v438 = vld [vmem:[%s351 + $0xa0] sm:$0xf]
      %v439 = vld [vmem:[%s351 + $0xa4] sm:$0x1]
      %v440 = vld [vmem:[%s351 + $0xa8] sm:$0xf]
      %v441 = vld [vmem:[%s351 + $0xac] sm:$0xf]
      %v442 = vld [vmem:[%s351 + $0xb0] sm:$0x1]
      %v443 = vld [vmem:[%s351 + $0xb4] sm:$0xf]
      %v444 = vld [vmem:[%s351 + $0xb8] sm:$0xf]
      %v445 = vld [vmem:[%s351 + $0xbc] sm:$0x1]
      %v446 = vld [vmem:[%s368] sm:$0xf]
      %v447 = vld [vmem:[%s368 + $0x4] sm:$0xf]
      %v448 = vld [vmem:[%s368 + $0x8] sm:$0x1]
      %v449 = vld [vmem:[%s382] sm:$0xf]
      %v450 = vld [vmem:[%s382 + $0x4] sm:$0xf]
      %v451 = vld [vmem:[%s382 + $0x8] sm:$0x1]
      %v484 = vunpack.c.l.b16 %v398
      %v485 = vunpack.c.l.b16 %v399
      %v486 = vunpack.c.l.b16 %v401
      %v487 = vunpack.c.l.b16 %v402
      %v488 = vunpack.c.l.b16 %v404
      %v489 = vunpack.c.l.b16 %v405
      %v490 = vunpack.c.l.b16 %v407
      %v491 = vunpack.c.l.b16 %v408
      %v492 = vunpack.c.l.b16 %v410
      %v493 = vunpack.c.l.b16 %v411
      %v494 = vunpack.c.l.b16 %v413
      %v495 = vunpack.c.l.b16 %v414
      %v496 = vunpack.c.l.b16 %v416
      %v497 = vunpack.c.l.b16 %v417
      %v498 = vunpack.c.l.b16 %v419
      %v499 = vunpack.c.l.b16 %v420
      %v500 = vunpack.c.l.b16 %v422
      %v501 = vunpack.c.l.b16 %v423
      %v502 = vunpack.c.l.b16 %v425
      %v503 = vunpack.c.l.b16 %v426
      %v504 = vunpack.c.l.b16 %v428
      %v505 = vunpack.c.l.b16 %v429
      %v506 = vunpack.c.l.b16 %v431
      %v507 = vunpack.c.l.b16 %v432
      %v508 = vunpack.c.l.b16 %v434
      %v509 = vunpack.c.l.b16 %v435
      %v510 = vunpack.c.l.b16 %v437
      %v511 = vunpack.c.l.b16 %v438
      %v512 = vunpack.c.l.b16 %v440
      %v513 = vunpack.c.l.b16 %v441
      %v514 = vunpack.c.l.b16 %v443
      %v515 = vunpack.c.l.b16 %v444
      %v516 = vpack.c.b16 %v485, %v484
      %v517 = vpack.c.b16 %v487, %v486
      %v518 = vpack.c.b16 %v489, %v488
      %v519 = vpack.c.b16 %v491, %v490
      %v520 = vpack.c.b16 %v493, %v492
      %v521 = vpack.c.b16 %v495, %v494
      %v522 = vpack.c.b16 %v497, %v496
      %v523 = vpack.c.b16 %v499, %v498
      %v524 = vpack.c.b16 %v501, %v500
      %v525 = vpack.c.b16 %v503, %v502
      %v526 = vpack.c.b16 %v505, %v504
      %v527 = vpack.c.b16 %v507, %v506
      %v528 = vpack.c.b16 %v509, %v508
      %v529 = vpack.c.b16 %v511, %v510
      %v530 = vpack.c.b16 %v513, %v512
      %v531 = vpack.c.b16 %v515, %v514
      %v548 = vunpack.c.l.b16 %v400
      %v549 = vunpack.c.l.b16 %v403
      %v550 = vunpack.c.l.b16 %v406
      %v551 = vunpack.c.l.b16 %v409
      %v552 = vunpack.c.l.b16 %v412
      %v553 = vunpack.c.l.b16 %v415
      %v554 = vunpack.c.l.b16 %v418
      %v555 = vunpack.c.l.b16 %v421
      %v556 = vunpack.c.l.b16 %v424
      %v557 = vunpack.c.l.b16 %v427
      %v558 = vunpack.c.l.b16 %v430
      %v559 = vunpack.c.l.b16 %v433
      %v560 = vunpack.c.l.b16 %v436
      %v561 = vunpack.c.l.b16 %v439
      %v562 = vunpack.c.l.b16 %v442
      %v563 = vunpack.c.l.b16 %v445
      %v564 = vpack.c.b16 %v548, %v548
      %v565 = vpack.c.b16 %v549, %v549
      %v566 = vpack.c.b16 %v550, %v550
      %v567 = vpack.c.b16 %v551, %v551
      %v568 = vpack.c.b16 %v552, %v552
      %v569 = vpack.c.b16 %v553, %v553
      %v570 = vpack.c.b16 %v554, %v554
      %v571 = vpack.c.b16 %v555, %v555
      %v572 = vpack.c.b16 %v556, %v556
      %v573 = vpack.c.b16 %v557, %v557
      %v574 = vpack.c.b16 %v558, %v558
      %v575 = vpack.c.b16 %v559, %v559
      %v576 = vpack.c.b16 %v560, %v560
      %v577 = vpack.c.b16 %v561, %v561
      %v578 = vpack.c.b16 %v562, %v562
      %v579 = vpack.c.b16 %v563, %v563
      %vm580 = vsmask.f32 7424
      %v582 = vshrl.u32 %v516, 16
      %v584 = vshll.u32 %v516, 16
      %v586 = vrot.slane %v584, 1
      %v587 = vor.u32 %v582, %v586
      %v589 = vshll.u32 %v564, 16
      %v591 = vrot.slane %v589, 1
      %v592 = vsel %vm580, %v587, %v591
      %v594 = vshrl.u32 %v517, 16
      %v596 = vshll.u32 %v517, 16
      %v598 = vrot.slane %v596, 1
      %v599 = vor.u32 %v594, %v598
      %v601 = vshll.u32 %v565, 16
      %v603 = vrot.slane %v601, 1
      %v604 = vsel %vm580, %v599, %v603
      %v606 = vshrl.u32 %v518, 16
      %v608 = vshll.u32 %v518, 16
      %v610 = vrot.slane %v608, 1
      %v611 = vor.u32 %v606, %v610
      %v613 = vshll.u32 %v566, 16
      %v615 = vrot.slane %v613, 1
      %v616 = vsel %vm580, %v611, %v615
      %v618 = vshrl.u32 %v519, 16
      %v620 = vshll.u32 %v519, 16
      %v622 = vrot.slane %v620, 1
      %v623 = vor.u32 %v618, %v622
      %v625 = vshll.u32 %v567, 16
      %v627 = vrot.slane %v625, 1
      %v628 = vsel %vm580, %v623, %v627
      %v630 = vshrl.u32 %v520, 16
      %v632 = vshll.u32 %v520, 16
      %v634 = vrot.slane %v632, 1
      %v635 = vor.u32 %v630, %v634
      %v637 = vshll.u32 %v568, 16
      %v639 = vrot.slane %v637, 1
      %v640 = vsel %vm580, %v635, %v639
      %v642 = vshrl.u32 %v521, 16
      %v644 = vshll.u32 %v521, 16
      %v646 = vrot.slane %v644, 1
      %v647 = vor.u32 %v642, %v646
      %v649 = vshll.u32 %v569, 16
      %v651 = vrot.slane %v649, 1
      %v652 = vsel %vm580, %v647, %v651
      %v654 = vshrl.u32 %v522, 16
      %v656 = vshll.u32 %v522, 16
      %v658 = vrot.slane %v656, 1
      %v659 = vor.u32 %v654, %v658
      %v661 = vshll.u32 %v570, 16
      %v663 = vrot.slane %v661, 1
      %v664 = vsel %vm580, %v659, %v663
      %v666 = vshrl.u32 %v523, 16
      %v668 = vshll.u32 %v523, 16
      %v670 = vrot.slane %v668, 1
      %v671 = vor.u32 %v666, %v670
      %v673 = vshll.u32 %v571, 16
      %v675 = vrot.slane %v673, 1
      %v676 = vsel %vm580, %v671, %v675
      %v678 = vshrl.u32 %v524, 16
      %v680 = vshll.u32 %v524, 16
      %v682 = vrot.slane %v680, 1
      %v683 = vor.u32 %v678, %v682
      %v685 = vshll.u32 %v572, 16
      %v687 = vrot.slane %v685, 1
      %v688 = vsel %vm580, %v683, %v687
      %v690 = vshrl.u32 %v525, 16
      %v692 = vshll.u32 %v525, 16
      %v694 = vrot.slane %v692, 1
      %v695 = vor.u32 %v690, %v694
      %v697 = vshll.u32 %v573, 16
      %v699 = vrot.slane %v697, 1
      %v700 = vsel %vm580, %v695, %v699
      %v702 = vshrl.u32 %v526, 16
      %v704 = vshll.u32 %v526, 16
      %v706 = vrot.slane %v704, 1
      %v707 = vor.u32 %v702, %v706
      %v709 = vshll.u32 %v574, 16
      %v711 = vrot.slane %v709, 1
      %v712 = vsel %vm580, %v707, %v711
      %v714 = vshrl.u32 %v527, 16
      %v716 = vshll.u32 %v527, 16
      %v718 = vrot.slane %v716, 1
      %v719 = vor.u32 %v714, %v718
      %v721 = vshll.u32 %v575, 16
      %v723 = vrot.slane %v721, 1
      %v724 = vsel %vm580, %v719, %v723
      %v726 = vshrl.u32 %v528, 16
      %v728 = vshll.u32 %v528, 16
      %v730 = vrot.slane %v728, 1
      %v731 = vor.u32 %v726, %v730
      %v733 = vshll.u32 %v576, 16
      %v735 = vrot.slane %v733, 1
      %v736 = vsel %vm580, %v731, %v735
      %v738 = vshrl.u32 %v529, 16
      %v740 = vshll.u32 %v529, 16
      %v742 = vrot.slane %v740, 1
      %v743 = vor.u32 %v738, %v742
      %v745 = vshll.u32 %v577, 16
      %v747 = vrot.slane %v745, 1
      %v748 = vsel %vm580, %v743, %v747
      %v750 = vshrl.u32 %v530, 16
      %v752 = vshll.u32 %v530, 16
      %v754 = vrot.slane %v752, 1
      %v755 = vor.u32 %v750, %v754
      %v757 = vshll.u32 %v578, 16
      %v759 = vrot.slane %v757, 1
      %v760 = vsel %vm580, %v755, %v759
      %v762 = vshrl.u32 %v531, 16
      %v764 = vshll.u32 %v531, 16
      %v766 = vrot.slane %v764, 1
      %v767 = vor.u32 %v762, %v766
      %v769 = vshll.u32 %v579, 16
      %v771 = vrot.slane %v769, 1
      %v772 = vsel %vm580, %v767, %v771
      %773 = vrot.lane.b32.xlu0 %v592, 8
      %v774 = vpop.permute.xlu0 %773
      %775 = vrot.lane.b32.xlu0 %v604, 8
      %v776 = vpop.permute.xlu0 %775
      %777 = vrot.lane.b32.xlu0 %v616, 8
      %v778 = vpop.permute.xlu0 %777
      %779 = vrot.lane.b32.xlu0 %v628, 8
      %v780 = vpop.permute.xlu0 %779
      %781 = vrot.lane.b32.xlu0 %v640, 8
      %v782 = vpop.permute.xlu0 %781
      %783 = vrot.lane.b32.xlu0 %v652, 8
      %v784 = vpop.permute.xlu0 %783
      %785 = vrot.lane.b32.xlu0 %v664, 8
      %v786 = vpop.permute.xlu0 %785
      %787 = vrot.lane.b32.xlu0 %v676, 8
      %v788 = vpop.permute.xlu0 %787
      %789 = vrot.lane.b32.xlu0 %v688, 8
      %v790 = vpop.permute.xlu0 %789
      %791 = vrot.lane.b32.xlu0 %v700, 8
      %v792 = vpop.permute.xlu0 %791
      %793 = vrot.lane.b32.xlu0 %v712, 8
      %v794 = vpop.permute.xlu0 %793
      %795 = vrot.lane.b32.xlu0 %v724, 8
      %v796 = vpop.permute.xlu0 %795
      %797 = vrot.lane.b32.xlu0 %v736, 8
      %v798 = vpop.permute.xlu0 %797
      %799 = vrot.lane.b32.xlu0 %v748, 8
      %v800 = vpop.permute.xlu0 %799
      %801 = vrot.lane.b32.xlu0 %v760, 8
      %v802 = vpop.permute.xlu0 %801
      %803 = vrot.lane.b32.xlu0 %v772, 8
      %v804 = vpop.permute.xlu0 %803
      %vm805 = vcmask 1046528
      %v806 = vrot.slane %v516, 1
      %v807 = vrot.slane %v564, 1
      %v808 = vsel %vm805, %v806, %v807
      %v809 = vrot.slane %v517, 1
      %v810 = vrot.slane %v565, 1
      %v811 = vsel %vm805, %v809, %v810
      %v812 = vrot.slane %v518, 1
      %v813 = vrot.slane %v566, 1
      %v814 = vsel %vm805, %v812, %v813
      %v815 = vrot.slane %v519, 1
      %v816 = vrot.slane %v567, 1
      %v817 = vsel %vm805, %v815, %v816
      %v818 = vrot.slane %v520, 1
      %v819 = vrot.slane %v568, 1
      %v820 = vsel %vm805, %v818, %v819
      %v821 = vrot.slane %v521, 1
      %v822 = vrot.slane %v569, 1
      %v823 = vsel %vm805, %v821, %v822
      %v824 = vrot.slane %v522, 1
      %v825 = vrot.slane %v570, 1
      %v826 = vsel %vm805, %v824, %v825
      %v827 = vrot.slane %v523, 1
      %v828 = vrot.slane %v571, 1
      %v829 = vsel %vm805, %v827, %v828
      %v830 = vrot.slane %v524, 1
      %v831 = vrot.slane %v572, 1
      %v832 = vsel %vm805, %v830, %v831
      %v833 = vrot.slane %v525, 1
      %v834 = vrot.slane %v573, 1
      %v835 = vsel %vm805, %v833, %v834
      %v836 = vrot.slane %v526, 1
      %v837 = vrot.slane %v574, 1
      %v838 = vsel %vm805, %v836, %v837
      %v839 = vrot.slane %v527, 1
      %v840 = vrot.slane %v575, 1
      %v841 = vsel %vm805, %v839, %v840
      %v842 = vrot.slane %v528, 1
      %v843 = vrot.slane %v576, 1
      %v844 = vsel %vm805, %v842, %v843
      %v845 = vrot.slane %v529, 1
      %v846 = vrot.slane %v577, 1
      %v847 = vsel %vm805, %v845, %v846
      %v848 = vrot.slane %v530, 1
      %v849 = vrot.slane %v578, 1
      %v850 = vsel %vm805, %v848, %v849
      %v851 = vrot.slane %v531, 1
      %v852 = vrot.slane %v579, 1
      %v853 = vsel %vm805, %v851, %v852
      %854 = vrot.lane.b32.xlu0 %v808, 16
      %v855 = vpop.permute.xlu0 %854
      %856 = vrot.lane.b32.xlu0 %v811, 16
      %v857 = vpop.permute.xlu0 %856
      %858 = vrot.lane.b32.xlu0 %v814, 16
      %v859 = vpop.permute.xlu0 %858
      %860 = vrot.lane.b32.xlu0 %v817, 16
      %v861 = vpop.permute.xlu0 %860
      %862 = vrot.lane.b32.xlu0 %v820, 16
      %v863 = vpop.permute.xlu0 %862
      %864 = vrot.lane.b32.xlu0 %v823, 16
      %v865 = vpop.permute.xlu0 %864
      %866 = vrot.lane.b32.xlu0 %v826, 16
      %v867 = vpop.permute.xlu0 %866
      %868 = vrot.lane.b32.xlu0 %v829, 16
      %v869 = vpop.permute.xlu0 %868
      %870 = vrot.lane.b32.xlu0 %v832, 16
      %v871 = vpop.permute.xlu0 %870
      %872 = vrot.lane.b32.xlu0 %v835, 16
      %v873 = vpop.permute.xlu0 %872
      %874 = vrot.lane.b32.xlu0 %v838, 16
      %v875 = vpop.permute.xlu0 %874
      %876 = vrot.lane.b32.xlu0 %v841, 16
      %v877 = vpop.permute.xlu0 %876
      %878 = vrot.lane.b32.xlu0 %v844, 16
      %v879 = vpop.permute.xlu0 %878
      %880 = vrot.lane.b32.xlu0 %v847, 16
      %v881 = vpop.permute.xlu0 %880
      %882 = vrot.lane.b32.xlu0 %v850, 16
      %v883 = vpop.permute.xlu0 %882
      %884 = vrot.lane.b32.xlu0 %v853, 16
      %v885 = vpop.permute.xlu0 %884
      %v888 = vunpack.c.l.b16 %v446
      %v889 = vunpack.c.l.b16 %v447
      %v890 = vpack.c.b16 %v889, %v888
      %891 = vrot.lane.b32.xlu0 %v517, 24
      %v892 = vpop.permute.xlu0 %891
      %893 = vrot.lane.b32.xlu0 %v518, 24
      %v894 = vpop.permute.xlu0 %893
      %895 = vrot.lane.b32.xlu0 %v519, 24
      %v896 = vpop.permute.xlu0 %895
      %897 = vrot.lane.b32.xlu0 %v520, 24
      %v898 = vpop.permute.xlu0 %897
      %899 = vrot.lane.b32.xlu0 %v521, 24
      %v900 = vpop.permute.xlu0 %899
      %901 = vrot.lane.b32.xlu0 %v522, 24
      %v902 = vpop.permute.xlu0 %901
      %903 = vrot.lane.b32.xlu0 %v523, 24
      %v904 = vpop.permute.xlu0 %903
      %905 = vrot.lane.b32.xlu0 %v524, 24
      %v906 = vpop.permute.xlu0 %905
      %907 = vrot.lane.b32.xlu0 %v525, 24
      %v908 = vpop.permute.xlu0 %907
      %909 = vrot.lane.b32.xlu0 %v526, 24
      %v910 = vpop.permute.xlu0 %909
      %911 = vrot.lane.b32.xlu0 %v527, 24
      %v912 = vpop.permute.xlu0 %911
      %913 = vrot.lane.b32.xlu0 %v528, 24
      %v914 = vpop.permute.xlu0 %913
      %915 = vrot.lane.b32.xlu0 %v529, 24
      %v916 = vpop.permute.xlu0 %915
      %917 = vrot.lane.b32.xlu0 %v530, 24
      %v918 = vpop.permute.xlu0 %917
      %919 = vrot.lane.b32.xlu0 %v531, 24
      %v920 = vpop.permute.xlu0 %919
      %921 = vrot.lane.b32.xlu0 %v890, 24
      %v922 = vpop.permute.xlu0 %921
      %v924 = vunpack.c.l.b16 %v448
      %v925 = vpack.c.b16 %v924, %v924
      %v927 = vshrl.u32 %v890, 16
      %v929 = vshll.u32 %v890, 16
      %v931 = vrot.slane %v929, 1
      %v932 = vor.u32 %v927, %v931
      %v934 = vshll.u32 %v925, 16
      %v936 = vrot.slane %v934, 1
      %v937 = vsel %vm580, %v932, %v936
      %938 = vrot.lane.b32.xlu0 %v604, 32
      %v939 = vpop.permute.xlu0 %938
      %940 = vrot.lane.b32.xlu0 %v616, 32
      %v941 = vpop.permute.xlu0 %940
      %942 = vrot.lane.b32.xlu0 %v628, 32
      %v943 = vpop.permute.xlu0 %942
      %944 = vrot.lane.b32.xlu0 %v640, 32
      %v945 = vpop.permute.xlu0 %944
      %946 = vrot.lane.b32.xlu0 %v652, 32
      %v947 = vpop.permute.xlu0 %946
      %948 = vrot.lane.b32.xlu0 %v664, 32
      %v949 = vpop.permute.xlu0 %948
      %950 = vrot.lane.b32.xlu0 %v676, 32
      %v951 = vpop.permute.xlu0 %950
      %952 = vrot.lane.b32.xlu0 %v688, 32
      %v953 = vpop.permute.xlu0 %952
      %954 = vrot.lane.b32.xlu0 %v700, 32
      %v955 = vpop.permute.xlu0 %954
      %956 = vrot.lane.b32.xlu0 %v712, 32
      %v957 = vpop.permute.xlu0 %956
      %958 = vrot.lane.b32.xlu0 %v724, 32
      %v959 = vpop.permute.xlu0 %958
      %960 = vrot.lane.b32.xlu0 %v736, 32
      %v961 = vpop.permute.xlu0 %960
      %962 = vrot.lane.b32.xlu0 %v748, 32
      %v963 = vpop.permute.xlu0 %962
      %964 = vrot.lane.b32.xlu0 %v760, 32
      %v965 = vpop.permute.xlu0 %964
      %966 = vrot.lane.b32.xlu0 %v772, 32
      %v967 = vpop.permute.xlu0 %966
      %968 = vrot.lane.b32.xlu0 %v937, 32
      %v969 = vpop.permute.xlu0 %968
      %v970 = vrot.slane %v890, 1
      %v971 = vrot.slane %v925, 1
      %v972 = vsel %vm805, %v970, %v971
      %973 = vrot.lane.b32.xlu0 %v811, 40
      %v974 = vpop.permute.xlu0 %973
      %975 = vrot.lane.b32.xlu0 %v814, 40
      %v976 = vpop.permute.xlu0 %975
      %977 = vrot.lane.b32.xlu0 %v817, 40
      %v978 = vpop.permute.xlu0 %977
      %979 = vrot.lane.b32.xlu0 %v820, 40
      %v980 = vpop.permute.xlu0 %979
      %981 = vrot.lane.b32.xlu0 %v823, 40
      %v982 = vpop.permute.xlu0 %981
      %983 = vrot.lane.b32.xlu0 %v826, 40
      %v984 = vpop.permute.xlu0 %983
      %985 = vrot.lane.b32.xlu0 %v829, 40
      %v986 = vpop.permute.xlu0 %985
      %987 = vrot.lane.b32.xlu0 %v832, 40
      %v988 = vpop.permute.xlu0 %987
      %989 = vrot.lane.b32.xlu0 %v835, 40
      %v990 = vpop.permute.xlu0 %989
      %991 = vrot.lane.b32.xlu0 %v838, 40
      %v992 = vpop.permute.xlu0 %991
      %993 = vrot.lane.b32.xlu0 %v841, 40
      %v994 = vpop.permute.xlu0 %993
      %995 = vrot.lane.b32.xlu0 %v844, 40
      %v996 = vpop.permute.xlu0 %995
      %997 = vrot.lane.b32.xlu0 %v847, 40
      %v998 = vpop.permute.xlu0 %997
      %999 = vrot.lane.b32.xlu0 %v850, 40
      %v1000 = vpop.permute.xlu0 %999
      %1001 = vrot.lane.b32.xlu0 %v853, 40
      %v1002 = vpop.permute.xlu0 %1001
      %1003 = vrot.lane.b32.xlu0 %v972, 40
      %v1004 = vpop.permute.xlu0 %1003
      %v1007 = vunpack.c.l.b16 %v449
      %v1008 = vunpack.c.l.b16 %v450
      %v1009 = vpack.c.b16 %v1008, %v1007
      %1010 = vrot.lane.b32.xlu0 %v518, 48
      %v1011 = vpop.permute.xlu0 %1010
      %1012 = vrot.lane.b32.xlu0 %v519, 48
      %v1013 = vpop.permute.xlu0 %1012
      %1014 = vrot.lane.b32.xlu0 %v520, 48
      %v1015 = vpop.permute.xlu0 %1014
      %1016 = vrot.lane.b32.xlu0 %v521, 48
      %v1017 = vpop.permute.xlu0 %1016
      %1018 = vrot.lane.b32.xlu0 %v522, 48
      %v1019 = vpop.permute.xlu0 %1018
      %1020 = vrot.lane.b32.xlu0 %v523, 48
      %v1021 = vpop.permute.xlu0 %1020
      %1022 = vrot.lane.b32.xlu0 %v524, 48
      %v1023 = vpop.permute.xlu0 %1022
      %1024 = vrot.lane.b32.xlu0 %v525, 48
      %v1025 = vpop.permute.xlu0 %1024
      %1026 = vrot.lane.b32.xlu0 %v526, 48
      %v1027 = vpop.permute.xlu0 %1026
      %1028 = vrot.lane.b32.xlu0 %v527, 48
      %v1029 = vpop.permute.xlu0 %1028
      %1030 = vrot.lane.b32.xlu0 %v528, 48
      %v1031 = vpop.permute.xlu0 %1030
      %1032 = vrot.lane.b32.xlu0 %v529, 48
      %v1033 = vpop.permute.xlu0 %1032
      %1034 = vrot.lane.b32.xlu0 %v530, 48
      %v1035 = vpop.permute.xlu0 %1034
      %1036 = vrot.lane.b32.xlu0 %v531, 48
      %v1037 = vpop.permute.xlu0 %1036
      %1038 = vrot.lane.b32.xlu0 %v890, 48
      %v1039 = vpop.permute.xlu0 %1038
      %1040 = vrot.lane.b32.xlu0 %v1009, 48
      %v1041 = vpop.permute.xlu0 %1040
      %v1043 = vunpack.c.l.b16 %v451
      %v1044 = vpack.c.b16 %v1043, %v1043
      %v1046 = vshrl.u32 %v1009, 16
      %v1048 = vshll.u32 %v1009, 16
      %v1050 = vrot.slane %v1048, 1
      %v1051 = vor.u32 %v1046, %v1050
      %v1053 = vshll.u32 %v1044, 16
      %v1055 = vrot.slane %v1053, 1
      %v1056 = vsel %vm580, %v1051, %v1055
      %1057 = vrot.lane.b32.xlu0 %v616, 56
      %v1058 = vpop.permute.xlu0 %1057
      %1059 = vrot.lane.b32.xlu0 %v628, 56
      %v1060 = vpop.permute.xlu0 %1059
      %1061 = vrot.lane.b32.xlu0 %v640, 56
      %v1062 = vpop.permute.xlu0 %1061
      %1063 = vrot.lane.b32.xlu0 %v652, 56
      %v1064 = vpop.permute.xlu0 %1063
      %1065 = vrot.lane.b32.xlu0 %v664, 56
      %v1066 = vpop.permute.xlu0 %1065
      %1067 = vrot.lane.b32.xlu0 %v676, 56
      %v1068 = vpop.permute.xlu0 %1067
      %1069 = vrot.lane.b32.xlu0 %v688, 56
      %v1070 = vpop.permute.xlu0 %1069
      %1071 = vrot.lane.b32.xlu0 %v700, 56
      %v1072 = vpop.permute.xlu0 %1071
      %1073 = vrot.lane.b32.xlu0 %v712, 56
      %v1074 = vpop.permute.xlu0 %1073
      %1075 = vrot.lane.b32.xlu0 %v724, 56
      %v1076 = vpop.permute.xlu0 %1075
      %1077 = vrot.lane.b32.xlu0 %v736, 56
      %v1078 = vpop.permute.xlu0 %1077
      %1079 = vrot.lane.b32.xlu0 %v748, 56
      %v1080 = vpop.permute.xlu0 %1079
      %1081 = vrot.lane.b32.xlu0 %v760, 56
      %v1082 = vpop.permute.xlu0 %1081
      %1083 = vrot.lane.b32.xlu0 %v772, 56
      %v1084 = vpop.permute.xlu0 %1083
      %1085 = vrot.lane.b32.xlu0 %v937, 56
      %v1086 = vpop.permute.xlu0 %1085
      %1087 = vrot.lane.b32.xlu0 %v1056, 56
      %v1088 = vpop.permute.xlu0 %1087
      %v1089 = vrot.slane %v1009, 1
      %v1090 = vrot.slane %v1044, 1
      %v1091 = vsel %vm805, %v1089, %v1090
      %1092 = vrot.lane.b32.xlu0 %v814, 64
      %v1093 = vpop.permute.xlu0 %1092
      %1094 = vrot.lane.b32.xlu0 %v817, 64
      %v1095 = vpop.permute.xlu0 %1094
      %1096 = vrot.lane.b32.xlu0 %v820, 64
      %v1097 = vpop.permute.xlu0 %1096
      %1098 = vrot.lane.b32.xlu0 %v823, 64
      %v1099 = vpop.permute.xlu0 %1098
      %1100 = vrot.lane.b32.xlu0 %v826, 64
      %v1101 = vpop.permute.xlu0 %1100
      %1102 = vrot.lane.b32.xlu0 %v829, 64
      %v1103 = vpop.permute.xlu0 %1102
      %1104 = vrot.lane.b32.xlu0 %v832, 64
      %v1105 = vpop.permute.xlu0 %1104
      %1106 = vrot.lane.b32.xlu0 %v835, 64
      %v1107 = vpop.permute.xlu0 %1106
      %1108 = vrot.lane.b32.xlu0 %v838, 64
      %v1109 = vpop.permute.xlu0 %1108
      %1110 = vrot.lane.b32.xlu0 %v841, 64
      %v1111 = vpop.permute.xlu0 %1110
      %1112 = vrot.lane.b32.xlu0 %v844, 64
      %v1113 = vpop.permute.xlu0 %1112
      %1114 = vrot.lane.b32.xlu0 %v847, 64
      %v1115 = vpop.permute.xlu0 %1114
      %1116 = vrot.lane.b32.xlu0 %v850, 64
      %v1117 = vpop.permute.xlu0 %1116
      %1118 = vrot.lane.b32.xlu0 %v853, 64
      %v1119 = vpop.permute.xlu0 %1118
      %1120 = vrot.lane.b32.xlu0 %v972, 64
      %v1121 = vpop.permute.xlu0 %1120
      %1122 = vrot.lane.b32.xlu0 %v1091, 64
      %v1123 = vpop.permute.xlu0 %1122
      %vm1124 = vcmask 64512
      %v1126 = vsel %vm1124, %v516, %v774
      %v1128 = vsel %vm1124, %v517, %v776
      %v1130 = vsel %vm1124, %v518, %v778
      %v1132 = vsel %vm1124, %v519, %v780
      %v1134 = vsel %vm1124, %v520, %v782
      %v1136 = vsel %vm1124, %v521, %v784
      %v1138 = vsel %vm1124, %v522, %v786
      %v1140 = vsel %vm1124, %v523, %v788
      %v1142 = vsel %vm1124, %v524, %v790
      %v1144 = vsel %vm1124, %v525, %v792
      %v1146 = vsel %vm1124, %v526, %v794
      %v1148 = vsel %vm1124, %v527, %v796
      %v1150 = vsel %vm1124, %v528, %v798
      %v1152 = vsel %vm1124, %v529, %v800
      %v1154 = vsel %vm1124, %v530, %v802
      %v1156 = vsel %vm1124, %v531, %v804
      %vm1157 = vcmask 130048
      %v1159 = vsel %vm1157, %v1126, %v855
      %v1161 = vsel %vm1157, %v1128, %v857
      %v1163 = vsel %vm1157, %v1130, %v859
      %v1165 = vsel %vm1157, %v1132, %v861
      %v1167 = vsel %vm1157, %v1134, %v863
      %v1169 = vsel %vm1157, %v1136, %v865
      %v1171 = vsel %vm1157, %v1138, %v867
      %v1173 = vsel %vm1157, %v1140, %v869
      %v1175 = vsel %vm1157, %v1142, %v871
      %v1177 = vsel %vm1157, %v1144, %v873
      %v1179 = vsel %vm1157, %v1146, %v875
      %v1181 = vsel %vm1157, %v1148, %v877
      %v1183 = vsel %vm1157, %v1150, %v879
      %v1185 = vsel %vm1157, %v1152, %v881
      %v1187 = vsel %vm1157, %v1154, %v883
      %v1189 = vsel %vm1157, %v1156, %v885
      %vm1190 = vcmask 195584
      %v1192 = vsel %vm1190, %v1159, %v892
      %v1194 = vsel %vm1190, %v1161, %v894
      %v1196 = vsel %vm1190, %v1163, %v896
      %v1198 = vsel %vm1190, %v1165, %v898
      %v1200 = vsel %vm1190, %v1167, %v900
      %v1202 = vsel %vm1190, %v1169, %v902
      %v1204 = vsel %vm1190, %v1171, %v904
      %v1206 = vsel %vm1190, %v1173, %v906
      %v1208 = vsel %vm1190, %v1175, %v908
      %v1210 = vsel %vm1190, %v1177, %v910
      %v1212 = vsel %vm1190, %v1179, %v912
      %v1214 = vsel %vm1190, %v1181, %v914
      %v1216 = vsel %vm1190, %v1183, %v916
      %v1218 = vsel %vm1190, %v1185, %v918
      %v1220 = vsel %vm1190, %v1187, %v920
      %v1222 = vsel %vm1190, %v1189, %v922
      %vm1223 = vcmask 261120
      %v1225 = vsel %vm1223, %v1192, %v939
      %v1227 = vsel %vm1223, %v1194, %v941
      %v1229 = vsel %vm1223, %v1196, %v943
      %v1231 = vsel %vm1223, %v1198, %v945
      %v1233 = vsel %vm1223, %v1200, %v947
      %v1235 = vsel %vm1223, %v1202, %v949
      %v1237 = vsel %vm1223, %v1204, %v951
      %v1239 = vsel %vm1223, %v1206, %v953
      %v1241 = vsel %vm1223, %v1208, %v955
      %v1243 = vsel %vm1223, %v1210, %v957
      %v1245 = vsel %vm1223, %v1212, %v959
      %v1247 = vsel %vm1223, %v1214, %v961
      %v1249 = vsel %vm1223, %v1216, %v963
      %v1251 = vsel %vm1223, %v1218, %v965
      %v1253 = vsel %vm1223, %v1220, %v967
      %v1255 = vsel %vm1223, %v1222, %v969
      %vm1256 = vcmask 326656
      %v1258 = vsel %vm1256, %v1225, %v974
      %v1260 = vsel %vm1256, %v1227, %v976
      %v1262 = vsel %vm1256, %v1229, %v978
      %v1264 = vsel %vm1256, %v1231, %v980
      %v1266 = vsel %vm1256, %v1233, %v982
      %v1268 = vsel %vm1256, %v1235, %v984
      %v1270 = vsel %vm1256, %v1237, %v986
      %v1272 = vsel %vm1256, %v1239, %v988
      %v1274 = vsel %vm1256, %v1241, %v990
      %v1276 = vsel %vm1256, %v1243, %v992
      %v1278 = vsel %vm1256, %v1245, %v994
      %v1280 = vsel %vm1256, %v1247, %v996
      %v1282 = vsel %vm1256, %v1249, %v998
      %v1284 = vsel %vm1256, %v1251, %v1000
      %v1286 = vsel %vm1256, %v1253, %v1002
      %v1288 = vsel %vm1256, %v1255, %v1004
      %vm1289 = vcmask 392192
      %v1291 = vsel %vm1289, %v1258, %v1011
      %v1293 = vsel %vm1289, %v1260, %v1013
      %v1295 = vsel %vm1289, %v1262, %v1015
      %v1297 = vsel %vm1289, %v1264, %v1017
      %v1299 = vsel %vm1289, %v1266, %v1019
      %v1301 = vsel %vm1289, %v1268, %v1021
      %v1303 = vsel %vm1289, %v1270, %v1023
      %v1305 = vsel %vm1289, %v1272, %v1025
      %v1307 = vsel %vm1289, %v1274, %v1027
      %v1309 = vsel %vm1289, %v1276, %v1029
      %v1311 = vsel %vm1289, %v1278, %v1031
      %v1313 = vsel %vm1289, %v1280, %v1033
      %v1315 = vsel %vm1289, %v1282, %v1035
      %v1317 = vsel %vm1289, %v1284, %v1037
      %v1319 = vsel %vm1289, %v1286, %v1039
      %v1321 = vsel %vm1289, %v1288, %v1041
      %vm1322 = vcmask 457728
      %v1324 = vsel %vm1322, %v1291, %v1058
      %v1326 = vsel %vm1322, %v1293, %v1060
      %v1328 = vsel %vm1322, %v1295, %v1062
      %v1330 = vsel %vm1322, %v1297, %v1064
      %v1332 = vsel %vm1322, %v1299, %v1066
      %v1334 = vsel %vm1322, %v1301, %v1068
      %v1336 = vsel %vm1322, %v1303, %v1070
      %v1338 = vsel %vm1322, %v1305, %v1072
      %v1340 = vsel %vm1322, %v1307, %v1074
      %v1342 = vsel %vm1322, %v1309, %v1076
      %v1344 = vsel %vm1322, %v1311, %v1078
      %v1346 = vsel %vm1322, %v1313, %v1080
      %v1348 = vsel %vm1322, %v1315, %v1082
      %v1350 = vsel %vm1322, %v1317, %v1084
      %v1352 = vsel %vm1322, %v1319, %v1086
      %v1354 = vsel %vm1322, %v1321, %v1088
      %vm1355 = vcmask 523264
      %v1357 = vsel %vm1355, %v1324, %v1093
      %v1359 = vsel %vm1355, %v1326, %v1095
      %v1361 = vsel %vm1355, %v1328, %v1097
      %v1363 = vsel %vm1355, %v1330, %v1099
      %v1365 = vsel %vm1355, %v1332, %v1101
      %v1367 = vsel %vm1355, %v1334, %v1103
      %v1369 = vsel %vm1355, %v1336, %v1105
      %v1371 = vsel %vm1355, %v1338, %v1107
      %v1373 = vsel %vm1355, %v1340, %v1109
      %v1375 = vsel %vm1355, %v1342, %v1111
      %v1377 = vsel %vm1355, %v1344, %v1113
      %v1379 = vsel %vm1355, %v1346, %v1115
      %v1381 = vsel %vm1355, %v1348, %v1117
      %v1383 = vsel %vm1355, %v1350, %v1119
      %v1385 = vsel %vm1355, %v1352, %v1121
      %v1387 = vsel %vm1355, %v1354, %v1123
      %v1388 = vld [vmem:[%s3] sm:$0xf]
      %v1389 = vld [vmem:[%s3 + $0x4] sm:$0xf]
      %v1390 = vld [vmem:[%s3 + $0x8] sm:$0xf]
      %v1391 = vld [vmem:[%s3 + $0xc] sm:$0xf]
      %v1392 = vld [vmem:[%s3 + $0x10] sm:$0xf]
      %v1393 = vld [vmem:[%s3 + $0x14] sm:$0xf]
      %v1394 = vld [vmem:[%s3 + $0x18] sm:$0xf]
      %v1395 = vld [vmem:[%s3 + $0x1c] sm:$0xf]
      %v1396 = vld [vmem:[%s3 + $0x20] sm:$0xf]
      %v1397 = vld [vmem:[%s4] sm:$0x1]
      %v1399 = vlaneseq
      %v1400 = vshrl.u32 %v1399, 7
      %v1401 = vsub.s32 0, %v1400
      %v1402 = vrot.slane %v1397, %v1401
      %v1413 = vunpack.c.l.b16 %v1388
      %v1414 = vunpack.c.l.b16 %v1389
      %v1415 = vunpack.c.l.b16 %v1390
      %v1416 = vunpack.c.l.b16 %v1391
      %v1417 = vunpack.c.l.b16 %v1392
      %v1418 = vunpack.c.l.b16 %v1393
      %v1419 = vunpack.c.l.b16 %v1394
      %v1420 = vunpack.c.l.b16 %v1395
      %v1421 = vunpack.c.l.b16 %v1396
      %v1422 = vpack.c.b16 %v1414, %v1413
      %v1423 = vpack.c.b16 %v1416, %v1415
      %v1424 = vpack.c.b16 %v1418, %v1417
      %v1425 = vpack.c.b16 %v1420, %v1419
      %v1426 = vpack.c.b16 %v1421, %v1421
      %vm1431 = vcmask 588800
      %v1432 = vsel %vm1431, %v1357, 0
      %v1434 = vsel %vm1431, %v1359, 0
      %v1436 = vsel %vm1431, %v1361, 0
      %v1438 = vsel %vm1431, %v1363, 0
      %v1440 = vsel %vm1431, %v1365, 0
      %v1442 = vsel %vm1431, %v1367, 0
      %v1444 = vsel %vm1431, %v1369, 0
      %v1446 = vsel %vm1431, %v1371, 0
      %v1448 = vsel %vm1431, %v1373, 0
      %v1450 = vsel %vm1431, %v1375, 0
      %v1452 = vsel %vm1431, %v1377, 0
      %v1454 = vsel %vm1431, %v1379, 0
      %v1456 = vsel %vm1431, %v1381, 0
      %v1458 = vsel %vm1431, %v1383, 0
      %v1460 = vsel %vm1431, %v1385, 0
      %v1462 = vsel %vm1431, %v1387, 0
      %vm1464 = vcmask 1043456
      %v1466 = vsel %vm1464, %v1426, 0
      %1468 = vmatprep.subr.bf16.mxu0 0
      %1469 = vmatpush1.bf16.msra.mxu0 %v1422
      %1470 = vmatprep.subr.bf16.mxu0 0
      %1471 = vmatpush1.bf16.msra.mxu0 %v1423
      %1472 = vmatprep.subr.bf16.mxu0 0
      %1473 = vmatpush1.bf16.msra.mxu0 %v1424
      %1474 = vmatprep.subr.bf16.mxu0 0
      %1475 = vmatpush1.bf16.msra.mxu0 %v1425
      %1476 = vmatprep.subr.bf16.mxu0 0
      %1477 = vmatpush1.bf16.msra.mxu0 %v1466
      %1478 = vmatprep.subr.bf16.mxu0 0
      %1479 = vmatpush1.bf16.msra.mxu0 0
      %1480 = vmatprep.subr.bf16.mxu0 0
      %1481 = vmatpush1.bf16.msra.mxu0 0
      %1482 = vmatprep.subr.bf16.mxu0 0
      %1483 = vmatpush1.bf16.msra.mxu0 0
      %1484 = vmatprep.subr.bf16.mxu0 0
      %1485 = vmatpush1.bf16.msra.mxu0 0
      %1486 = vmatprep.subr.bf16.mxu0 0
      %1487 = vmatpush1.bf16.msra.mxu0 0
      %1488 = vmatprep.subr.bf16.mxu0 0
      %1489 = vmatpush1.bf16.msra.mxu0 0
      %1490 = vmatprep.subr.bf16.mxu0 0
      %1491 = vmatpush1.bf16.msra.mxu0 0
      %1492 = vmatprep.subr.bf16.mxu0 0
      %1493 = vmatpush1.bf16.msra.mxu0 0
      %1494 = vmatprep.subr.bf16.mxu0 0
      %1495 = vmatpush1.bf16.msra.mxu0 0
      %1496 = vmatprep.subr.bf16.mxu0 0
      %1497 = vmatpush1.bf16.msra.mxu0 0
      %1498 = vmatprep.subr.bf16.mxu0 0
      %1499 = vmatpush1.bf16.msra.mxu0 0
      %1500 = vmatprep.mubr.bf16.mxu0 0
      %1501 = vmatmul.mubr.bf16.gmra.mrb[0].mxu0 %v1432
      %v1502 = vpop.f32.mrb[0].mxu0
      %v1503 = vadd.f32 %v1402, %v1502
      %v1504 = vpop.f32.mrb[0].mxu0
      %v1505 = vpop.f32.mrb[0].mxu0
      %v1506 = vadd.f32 %v1402, %v1505
      %v1507 = vpop.f32.mrb[0].mxu0
      %1508 = vmatprep.mubr.bf16.mxu0 0
      %1509 = vmatmul.mubr.bf16.gmra.mrb[0].mxu0 %v1434
      %v1510 = vpop.f32.mrb[0].mxu0
      %v1511 = vadd.f32 %v1402, %v1510
      %v1512 = vpop.f32.mrb[0].mxu0
      %v1513 = vpop.f32.mrb[0].mxu0
      %v1514 = vadd.f32 %v1402, %v1513
      %v1515 = vpop.f32.mrb[0].mxu0
      %1516 = vmatprep.mubr.bf16.mxu0 0
      %1517 = vmatmul.mubr.bf16.gmra.mrb[0].mxu0 %v1436
      %v1518 = vpop.f32.mrb[0].mxu0
      %v1519 = vadd.f32 %v1402, %v1518
      %v1520 = vpop.f32.mrb[0].mxu0
      %v1521 = vpop.f32.mrb[0].mxu0
      %v1522 = vadd.f32 %v1402, %v1521
      %v1523 = vpop.f32.mrb[0].mxu0
      %1524 = vmatprep.mubr.bf16.mxu0 0
      %1525 = vmatmul.mubr.bf16.gmra.mrb[0].mxu0 %v1438
      %v1526 = vpop.f32.mrb[0].mxu0
      %v1527 = vadd.f32 %v1402, %v1526
      %v1528 = vpop.f32.mrb[0].mxu0
      %v1529 = vpop.f32.mrb[0].mxu0
      %v1530 = vadd.f32 %v1402, %v1529
      %v1531 = vpop.f32.mrb[0].mxu0
      %1532 = vmatprep.mubr.bf16.mxu0 0
      %1533 = vmatmul.mubr.bf16.gmra.mrb[0].mxu0 %v1440
      %v1534 = vpop.f32.mrb[0].mxu0
      %v1535 = vadd.f32 %v1402, %v1534
      %v1536 = vpop.f32.mrb[0].mxu0
      %v1537 = vpop.f32.mrb[0].mxu0
      %v1538 = vadd.f32 %v1402, %v1537
      %v1539 = vpop.f32.mrb[0].mxu0
      %1540 = vmatprep.mubr.bf16.mxu0 0
      %1541 = vmatmul.mubr.bf16.gmra.mrb[0].mxu0 %v1442
      %v1542 = vpop.f32.mrb[0].mxu0
      %v1543 = vadd.f32 %v1402, %v1542
      %v1544 = vpop.f32.mrb[0].mxu0
      %v1545 = vpop.f32.mrb[0].mxu0
      %v1546 = vadd.f32 %v1402, %v1545
      %v1547 = vpop.f32.mrb[0].mxu0
      %1548 = vmatprep.mubr.bf16.mxu0 0
      %1549 = vmatmul.mubr.bf16.gmra.mrb[0].mxu0 %v1444
      %v1550 = vpop.f32.mrb[0].mxu0
      %v1551 = vadd.f32 %v1402, %v1550
      %v1552 = vpop.f32.mrb[0].mxu0
      %v1553 = vpop.f32.mrb[0].mxu0
      %v1554 = vadd.f32 %v1402, %v1553
      %v1555 = vpop.f32.mrb[0].mxu0
      %1556 = vmatprep.mubr.bf16.mxu0 0
      %1557 = vmatmul.mubr.bf16.gmra.mrb[0].mxu0 %v1446
      %v1558 = vpop.f32.mrb[0].mxu0
      %v1559 = vadd.f32 %v1402, %v1558
      %v1560 = vpop.f32.mrb[0].mxu0
      %v1561 = vpop.f32.mrb[0].mxu0
      %v1562 = vadd.f32 %v1402, %v1561
      %v1563 = vpop.f32.mrb[0].mxu0
      %1564 = vmatprep.mubr.bf16.mxu0 0
      %1565 = vmatmul.mubr.bf16.gmra.mrb[0].mxu0 %v1448
      %v1566 = vpop.f32.mrb[0].mxu0
      %v1567 = vadd.f32 %v1402, %v1566
      %v1568 = vpop.f32.mrb[0].mxu0
      %v1569 = vpop.f32.mrb[0].mxu0
      %v1570 = vadd.f32 %v1402, %v1569
      %v1571 = vpop.f32.mrb[0].mxu0
      %1572 = vmatprep.mubr.bf16.mxu0 0
      %1573 = vmatmul.mubr.bf16.gmra.mrb[0].mxu0 %v1450
      %v1574 = vpop.f32.mrb[0].mxu0
      %v1575 = vadd.f32 %v1402, %v1574
      %v1576 = vpop.f32.mrb[0].mxu0
      %v1577 = vpop.f32.mrb[0].mxu0
      %v1578 = vadd.f32 %v1402, %v1577
      %v1579 = vpop.f32.mrb[0].mxu0
      %1580 = vmatprep.mubr.bf16.mxu0 0
      %1581 = vmatmul.mubr.bf16.gmra.mrb[0].mxu0 %v1452
      %v1582 = vpop.f32.mrb[0].mxu0
      %v1583 = vadd.f32 %v1402, %v1582
      %v1584 = vpop.f32.mrb[0].mxu0
      %v1585 = vpop.f32.mrb[0].mxu0
      %v1586 = vadd.f32 %v1402, %v1585
      %v1587 = vpop.f32.mrb[0].mxu0
      %1588 = vmatprep.mubr.bf16.mxu0 0
      %1589 = vmatmul.mubr.bf16.gmra.mrb[0].mxu0 %v1454
      %v1590 = vpop.f32.mrb[0].mxu0
      %v1591 = vadd.f32 %v1402, %v1590
      %v1592 = vpop.f32.mrb[0].mxu0
      %v1593 = vpop.f32.mrb[0].mxu0
      %v1594 = vadd.f32 %v1402, %v1593
      %v1595 = vpop.f32.mrb[0].mxu0
      %1596 = vmatprep.mubr.bf16.mxu0 0
      %1597 = vmatmul.mubr.bf16.gmra.mrb[0].mxu0 %v1456
      %v1598 = vpop.f32.mrb[0].mxu0
      %v1599 = vadd.f32 %v1402, %v1598
      %v1600 = vpop.f32.mrb[0].mxu0
      %v1601 = vpop.f32.mrb[0].mxu0
      %v1602 = vadd.f32 %v1402, %v1601
      %v1603 = vpop.f32.mrb[0].mxu0
      %1604 = vmatprep.mubr.bf16.mxu0 0
      %1605 = vmatmul.mubr.bf16.gmra.mrb[0].mxu0 %v1458
      %v1606 = vpop.f32.mrb[0].mxu0
      %v1607 = vadd.f32 %v1402, %v1606
      %v1608 = vpop.f32.mrb[0].mxu0
      %v1609 = vpop.f32.mrb[0].mxu0
      %v1610 = vadd.f32 %v1402, %v1609
      %v1611 = vpop.f32.mrb[0].mxu0
      %1612 = vmatprep.mubr.bf16.mxu0 0
      %1613 = vmatmul.mubr.bf16.gmra.mrb[0].mxu0 %v1460
      %v1614 = vpop.f32.mrb[0].mxu0
      %v1615 = vadd.f32 %v1402, %v1614
      %v1616 = vpop.f32.mrb[0].mxu0
      %v1617 = vpop.f32.mrb[0].mxu0
      %v1618 = vadd.f32 %v1402, %v1617
      %v1619 = vpop.f32.mrb[0].mxu0
      %1620 = vmatprep.mubr.bf16.mxu0 0
      %1621 = vmatmul.mubr.bf16.gmra.mrb[0].mxu0 %v1462
      %v1622 = vpop.f32.mrb[0].mxu0
      %v1623 = vadd.f32 %v1402, %v1622
      %v1624 = vpop.f32.mrb[0].mxu0
      %v1625 = vpop.f32.mrb[0].mxu0
      %v1626 = vadd.f32 %v1402, %v1625
      %v1627 = vpop.f32.mrb[0].mxu0
      %1628 = vdwg.mxu0
      %v1629 = vmax.f32 %v1503, 0.0
      %v1630 = vmax.f32 %v1506, 0.0
      %v1631 = vmax.f32 %v1511, 0.0
      %v1632 = vmax.f32 %v1514, 0.0
      %v1633 = vmax.f32 %v1519, 0.0
      %v1634 = vmax.f32 %v1522, 0.0
      %v1635 = vmax.f32 %v1527, 0.0
      %v1636 = vmax.f32 %v1530, 0.0
      %v1637 = vmax.f32 %v1535, 0.0
      %v1638 = vmax.f32 %v1538, 0.0
      %v1639 = vmax.f32 %v1543, 0.0
      %v1640 = vmax.f32 %v1546, 0.0
      %v1641 = vmax.f32 %v1551, 0.0
      %v1642 = vmax.f32 %v1554, 0.0
      %v1643 = vmax.f32 %v1559, 0.0
      %v1644 = vmax.f32 %v1562, 0.0
      %v1645 = vmax.f32 %v1567, 0.0
      %v1646 = vmax.f32 %v1570, 0.0
      %v1647 = vmax.f32 %v1575, 0.0
      %v1648 = vmax.f32 %v1578, 0.0
      %v1649 = vmax.f32 %v1583, 0.0
      %v1650 = vmax.f32 %v1586, 0.0
      %v1651 = vmax.f32 %v1591, 0.0
      %v1652 = vmax.f32 %v1594, 0.0
      %v1653 = vmax.f32 %v1599, 0.0
      %v1654 = vmax.f32 %v1602, 0.0
      %v1655 = vmax.f32 %v1607, 0.0
      %v1656 = vmax.f32 %v1610, 0.0
      %v1657 = vmax.f32 %v1615, 0.0
      %v1658 = vmax.f32 %v1618, 0.0
      %v1659 = vmax.f32 %v1623, 0.0
      %v1660 = vmax.f32 %v1626, 0.0
      %v1661 = vpack.c.bf16 %v1630, %v1629
      %v1662 = vpack.c.bf16 %v1632, %v1631
      %v1663 = vpack.c.bf16 %v1634, %v1633
      %v1664 = vpack.c.bf16 %v1636, %v1635
      %v1665 = vpack.c.bf16 %v1638, %v1637
      %v1666 = vpack.c.bf16 %v1640, %v1639
      %v1667 = vpack.c.bf16 %v1642, %v1641
      %v1668 = vpack.c.bf16 %v1644, %v1643
      %v1669 = vpack.c.bf16 %v1646, %v1645
      %v1670 = vpack.c.bf16 %v1648, %v1647
      %v1671 = vpack.c.bf16 %v1650, %v1649
      %v1672 = vpack.c.bf16 %v1652, %v1651
      %v1673 = vpack.c.bf16 %v1654, %v1653
      %v1674 = vpack.c.bf16 %v1656, %v1655
      %v1675 = vpack.c.bf16 %v1658, %v1657
      %v1676 = vpack.c.bf16 %v1660, %v1659
      %v1693 = vunpack.c.l.b16 %v1661
      %v1694 = vunpack.c.h.b16 %v1661
      %v1695 = vunpack.c.l.b16 %v1662
      %v1696 = vunpack.c.h.b16 %v1662
      %v1697 = vunpack.c.l.b16 %v1663
      %v1698 = vunpack.c.h.b16 %v1663
      %v1699 = vunpack.c.l.b16 %v1664
      %v1700 = vunpack.c.h.b16 %v1664
      %v1701 = vunpack.c.l.b16 %v1665
      %v1702 = vunpack.c.h.b16 %v1665
      %v1703 = vunpack.c.l.b16 %v1666
      %v1704 = vunpack.c.h.b16 %v1666
      %v1705 = vunpack.c.l.b16 %v1667
      %v1706 = vunpack.c.h.b16 %v1667
      %v1707 = vunpack.c.l.b16 %v1668
      %v1708 = vunpack.c.h.b16 %v1668
      %v1709 = vunpack.c.l.b16 %v1669
      %v1710 = vunpack.c.h.b16 %v1669
      %v1711 = vunpack.c.l.b16 %v1670
      %v1712 = vunpack.c.h.b16 %v1670
      %v1713 = vunpack.c.l.b16 %v1671
      %v1714 = vunpack.c.h.b16 %v1671
      %v1715 = vunpack.c.l.b16 %v1672
      %v1716 = vunpack.c.h.b16 %v1672
      %v1717 = vunpack.c.l.b16 %v1673
      %v1718 = vunpack.c.h.b16 %v1673
      %v1719 = vunpack.c.l.b16 %v1674
      %v1720 = vunpack.c.h.b16 %v1674
      %v1721 = vunpack.c.l.b16 %v1675
      %v1722 = vunpack.c.h.b16 %v1675
      %v1723 = vunpack.c.l.b16 %v1676
      %v1724 = vunpack.c.h.b16 %v1676
      %v1725 = vpack.c.b16 %v1693, %v1693
      %v1726 = vpack.c.b16 %v1694, %v1694
      %v1727 = vpack.c.b16 %v1695, %v1695
      %v1728 = vpack.c.b16 %v1696, %v1696
      %v1729 = vpack.c.b16 %v1697, %v1697
      %v1730 = vpack.c.b16 %v1698, %v1698
      %v1731 = vpack.c.b16 %v1699, %v1699
      %v1732 = vpack.c.b16 %v1700, %v1700
      %v1733 = vpack.c.b16 %v1701, %v1701
      %v1734 = vpack.c.b16 %v1702, %v1702
      %v1735 = vpack.c.b16 %v1703, %v1703
      %v1736 = vpack.c.b16 %v1704, %v1704
      %v1737 = vpack.c.b16 %v1705, %v1705
      %v1738 = vpack.c.b16 %v1706, %v1706
      %v1739 = vpack.c.b16 %v1707, %v1707
      %v1740 = vpack.c.b16 %v1708, %v1708
      %v1741 = vpack.c.b16 %v1709, %v1709
      %v1742 = vpack.c.b16 %v1710, %v1710
      %v1743 = vpack.c.b16 %v1711, %v1711
      %v1744 = vpack.c.b16 %v1712, %v1712
      %v1745 = vpack.c.b16 %v1713, %v1713
      %v1746 = vpack.c.b16 %v1714, %v1714
      %v1747 = vpack.c.b16 %v1715, %v1715
      %v1748 = vpack.c.b16 %v1716, %v1716
      %v1749 = vpack.c.b16 %v1717, %v1717
      %v1750 = vpack.c.b16 %v1718, %v1718
      %v1751 = vpack.c.b16 %v1719, %v1719
      %v1752 = vpack.c.b16 %v1720, %v1720
      %v1753 = vpack.c.b16 %v1721, %v1721
      %v1754 = vpack.c.b16 %v1722, %v1722
      %v1755 = vpack.c.b16 %v1723, %v1723
      %v1756 = vpack.c.b16 %v1724, %v1724
      %vm1789 = vcmask 60416
      %1790 = vst.msk [vmem:[%s395] sm:$0xf] %vm1789, %v1725
      %1791 = vst.msk [vmem:[%s395 + $0x4] sm:$0xf] %vm1789, %v1726
      %1792 = vst.msk [vmem:[%s395 + $0x8] sm:$0xf] %vm1789, %v1727
      %1793 = vst.msk [vmem:[%s395 + $0xc] sm:$0xf] %vm1789, %v1728
      %1794 = vst.msk [vmem:[%s395 + $0x10] sm:$0xf] %vm1789, %v1729
      %1795 = vst.msk [vmem:[%s395 + $0x14] sm:$0xf] %vm1789, %v1730
      %1796 = vst.msk [vmem:[%s395 + $0x18] sm:$0xf] %vm1789, %v1731
      %1797 = vst.msk [vmem:[%s395 + $0x1c] sm:$0xf] %vm1789, %v1732
      %1798 = vst.msk [vmem:[%s395 + $0x20] sm:$0xf] %vm1789, %v1733
      %1799 = vst.msk [vmem:[%s395 + $0x24] sm:$0xf] %vm1789, %v1734
      %1800 = vst.msk [vmem:[%s395 + $0x28] sm:$0xf] %vm1789, %v1735
      %1801 = vst.msk [vmem:[%s395 + $0x2c] sm:$0xf] %vm1789, %v1736
      %1802 = vst.msk [vmem:[%s395 + $0x30] sm:$0xf] %vm1789, %v1737
      %1803 = vst.msk [vmem:[%s395 + $0x34] sm:$0xf] %vm1789, %v1738
      %1804 = vst.msk [vmem:[%s395 + $0x38] sm:$0xf] %vm1789, %v1739
      %1805 = vst.msk [vmem:[%s395 + $0x3c] sm:$0xf] %vm1789, %v1740
      %1806 = vst.msk [vmem:[%s395 + $0x40] sm:$0xf] %vm1789, %v1741
      %1807 = vst.msk [vmem:[%s395 + $0x44] sm:$0xf] %vm1789, %v1742
      %1808 = vst.msk [vmem:[%s395 + $0x48] sm:$0xf] %vm1789, %v1743
      %1809 = vst.msk [vmem:[%s395 + $0x4c] sm:$0xf] %vm1789, %v1744
      %1810 = vst.msk [vmem:[%s395 + $0x50] sm:$0xf] %vm1789, %v1745
      %1811 = vst.msk [vmem:[%s395 + $0x54] sm:$0xf] %vm1789, %v1746
      %1812 = vst.msk [vmem:[%s395 + $0x58] sm:$0xf] %vm1789, %v1747
      %1813 = vst.msk [vmem:[%s395 + $0x5c] sm:$0xf] %vm1789, %v1748
      %1814 = vst.msk [vmem:[%s395 + $0x60] sm:$0xf] %vm1789, %v1749
      %1815 = vst.msk [vmem:[%s395 + $0x64] sm:$0xf] %vm1789, %v1750
      %1816 = vst.msk [vmem:[%s395 + $0x68] sm:$0xf] %vm1789, %v1751
      %1817 = vst.msk [vmem:[%s395 + $0x6c] sm:$0xf] %vm1789, %v1752
      %1818 = vst.msk [vmem:[%s395 + $0x70] sm:$0xf] %vm1789, %v1753
      %1819 = vst.msk [vmem:[%s395 + $0x74] sm:$0xf] %vm1789, %v1754
      %1820 = vst.msk [vmem:[%s395 + $0x78] sm:$0xf] %vm1789, %v1755
      %1821 = vst.msk [vmem:[%s395 + $0x7c] sm:$0xf] %vm1789, %v1756
      %s1822 = smul.u32 16, %s21
      %p1823 = scmp.lt.s32.totalorder %s20, 1
      %s1824 = scalar_select %p1823, %s20, 1
      %p1825 = scmp.lt.s32.totalorder %s1822, 15
      %s1826 = scalar_select %p1825, %s1822, 15
      %s1827 = smul.addr %s1826, 2
      %s1828 = smul.addr %s1824, 32
      %s1829 = sadd.s32 %s1827, %s1828
      %s1830 = smul.addr %s1829, 4
      %s1831 = scalar_lea.vmem %s5, %s1830
      // Predicated region
      $region41: #{_lambda_.8} parent=39 // pred_check
        %p1832 = pneg %p184
      $region42: #{_lambda_.8} parent=39 // pred_check_branch
        %1834 = sbr.rel (%p1832) target = $region44
      $region43: #{_lambda_.8} parent=39 // pred_region
        %s1835 = smul.u32 16, %s21
      $region44: #{_lambda_.8} parent=39 // pred_fallthru
        _
    $region40: #{_lambda_.8} parent=5 // pred_fallthru
      _
    %p1836 = scmp.le.s32.totalorder 2, %s11
    // Predicated region
    $region45: #{_lambda_.8} parent=5 // pred_check
      %p1837 = pneg %p1836
    $region46: #{_lambda_.8} parent=5 // pred_check_branch
      %1839 = sbr.rel (%p1837) target = $region48
    $region47: #{_lambda_.8} parent=5 // pred_region
      %s1840 = ssub.s32 %s11, 2
      // Predicated region
      $region49: #{_lambda_.8} parent=47 // pred_check
        %p1841 = pneg %p190
      $region50: #{_lambda_.8} parent=47 // pred_check_branch
        %1843 = sbr.rel (%p1841) target = $region52
      $region51: #{_lambda_.8} parent=47 // pred_region
        %s1844 = smul.u32 16, %s23
        %p1845 = scmp.lt.s32.totalorder %s22, 1
        %s1846 = scalar_select %p1845, %s22, 1
        %p1847 = scmp.lt.s32.totalorder %s1844, 15
        %s1848 = scalar_select %p1847, %s1844, 15
        %s1849 = smul.addr %s1848, 2
        %s1850 = smul.addr %s1846, 32
        %s1851 = sadd.s32 %s1849, %s1850
        %s1852 = smul.addr %s1851, 4
        %s1853 = scalar_lea.vmem %s5, %s1852
      $region52: #{_lambda_.8} parent=47 // pred_fallthru
        _
    $region48: #{_lambda_.8} parent=5 // pred_fallthru
      _
  $region6: #{_lambda_.8} parent=0 // loop_footer
    %s15 = sadd.s32 1, %s11
  $region7: #{_lambda_.8} parent=0 // loop_footer_branch
    %10 = sbr.rel target = $region3
  $region8: #{_lambda_.8} parent=0 // loop_exit
    _

// kernel: _lambda_.10
$region0: #{_lambda_.10}
  #allocation0 [shape = 'u32[]', space=smem, size = 0x4, offset = 0x4, fixed_abs, tag = 'smem constant byte address 0x4 - core index']
  #allocation1 [shape = 'u32[144,128]{1,0:T(1,128)}', space=vmem, size = 0x12000, scoped, tag = 'internal scratch']
  %s0 = inlined_call_operand.vmem [shape: bf16[2,18,18,8], index: 0, kind: input, shape index: {}, may-alias: {0,1,2}]
  %s1 = inlined_call_operand.vmem [shape: bf16[2,18,18,8], index: 1, kind: input, shape index: {}, may-alias: {0,1,2}]
  %s2 = inlined_call_operand.vmem [shape: bf16[2,18,18,8], index: 2, kind: input, shape index: {}, may-alias: {0,1,2}]
  %s3 = inlined_call_operand.vmem [shape: bf16[72,16], index: 3, kind: input, shape index: {}]
  %s4 = inlined_call_operand.vmem [shape: f32[1,16], index: 4, kind: input, shape index: {}]
  %s5 = inlined_call_operand.vmem [shape: bf16[2,8,8,16], index: 5, kind: output, shape index: {}]
  %s6 = sld [smem:[#allocation0]]
  $region53: #{_lambda_.10} parent=0
    _
  %s8 = ssub.s32 1, %s6
  %s9 = scalar_select 0, %s8, %s6
  loop: start=0, step=1, limit=4
  $region2: #{_lambda_.10} parent=0 // loop_pre_header
    _
  $region3: #{_lambda_.10} parent=0 // loop_header
    %s11 = sphi 0, %s15
    %p12 = scmp.ge.s32.totalorder %s11, 4
    %s18 = sphi 0, %s30
    %s19 = sphi 0, %s26
    %s20 = sphi 0, %s18
    %s21 = sphi 0, %s19
    %s22 = sphi 0, %s20
    %s23 = sphi 0, %s21
    %s35 = sphi 0, %s37
    %s38 = sphi 0, %s35
    %s39 = sphi 0, %s38
    %s55 = sphi 0, %s39
    %s67 = sphi 0, %s69
    %s70 = sphi 0, %s67
    %s71 = sphi 0, %s70
    %s87 = sphi 0, %s71
    %s101 = sphi 0, %s103
    %s104 = sphi 0, %s101
    %s105 = sphi 0, %s104
    %s121 = sphi 0, %s105
    %s125 = sphi 0, %s125
    %s127 = sphi 0, %s125
    %s128 = sphi 0, %s127
    %s142 = sphi 0, %s128
    %s146 = sphi 0, %s146
    %s148 = sphi 0, %s146
    %s149 = sphi 0, %s148
    %s163 = sphi 0, %s149
    %s171 = sphi 0, %s173
    %s174 = sphi 0, %s171
    %s175 = sphi 0, %s174
    %s191 = sphi 0, %s175
  $region4: #{_lambda_.10} parent=0 // loop_header_branch
    %14 = sbr.rel (%p12) target = $region8
  $region5: #{_lambda_.10} parent=0 // loop_body
    %s16 = ssub.s32 %s11, 1
    %s17 = ssub.s32 %s11, 2
    %s24 = sadd.s32 1, %s19
    %p25 = scmp.ge.s32.totalorder %s24, 1
    %s26 = scalar_select %p25, 0, %s24
    %s27 = sadd.s32 1, %s18
    %s28 = scalar_select %p25, %s27, %s18
    %p29 = scmp.ge.s32.totalorder %s28, 2
    %s30 = scalar_select %p29, 0, %s28
    %s31 = ssub.s32 %s18, %s30
    %s32 = ssub.s32 %s19, %s26
    %s33 = sor.u32 %s31, %s32
    %p34 = scmp.eq.s32.totalorder %s33, 0
    %s36 = sadd.s32 %s35, 1
    %s37 = scalar_select %p34, %s35, %s36
    %p40 = pneg %p34
    %p41 = scmp.eq.s32.totalorder %s11, 1
    %p42 = por %p40, %p41
    %p43 = scmp.ne.s32.totalorder %s35, %s38
    %p44 = scmp.eq.s32.totalorder %s11, 0
    %p45 = por %p43, %p44
    %p46 = scmp.ne.s32.totalorder %s35, %s38
    %p47 = scmp.eq.s32.totalorder %s16, 1
    %p48 = por %p46, %p47
    %p49 = scmp.ne.s32.totalorder %s38, %s39
    %p50 = scmp.eq.s32.totalorder %s16, 0
    %p51 = por %p49, %p50
    %p52 = scmp.ne.s32.totalorder %s38, %s39
    %p53 = scmp.eq.s32.totalorder %s17, 1
    %p54 = por %p52, %p53
    %p56 = scmp.ne.s32.totalorder %s39, %s55
    %p57 = scmp.eq.s32.totalorder %s17, 0
    %p58 = por %p56, %p57
    %s59 = sadd.s32 %s19, 1
    %s60 = smul.u32 %s59, 16
    %s61 = sadd.s32 %s26, 1
    %s62 = smul.u32 %s61, 16
    %s63 = ssub.s32 %s18, %s30
    %s64 = ssub.s32 %s60, %s62
    %s65 = sor.u32 %s63, %s64
    %p66 = scmp.eq.s32.totalorder %s65, 0
    %s68 = sadd.s32 %s67, 1
    %s69 = scalar_select %p66, %s67, %s68
    %p72 = pneg %p66
    %p73 = scmp.eq.s32.totalorder %s11, 1
    %p74 = por %p72, %p73
    %p75 = scmp.ne.s32.totalorder %s67, %s70
    %p76 = scmp.eq.s32.totalorder %s11, 0
    %p77 = por %p75, %p76
    %p78 = scmp.ne.s32.totalorder %s67, %s70
    %p79 = scmp.eq.s32.totalorder %s16, 1
    %p80 = por %p78, %p79
    %p81 = scmp.ne.s32.totalorder %s70, %s71
    %p82 = scmp.eq.s32.totalorder %s16, 0
    %p83 = por %p81, %p82
    %p84 = scmp.ne.s32.totalorder %s70, %s71
    %p85 = scmp.eq.s32.totalorder %s17, 1
    %p86 = por %p84, %p85
    %p88 = scmp.ne.s32.totalorder %s71, %s87
    %p89 = scmp.eq.s32.totalorder %s17, 0
    %p90 = por %p88, %p89
    %s91 = sadd.s32 %s19, 1
    %s92 = smul.u32 %s91, 16
    %s93 = sadd.s32 %s92, 1
    %s94 = sadd.s32 %s26, 1
    %s95 = smul.u32 %s94, 16
    %s96 = sadd.s32 %s95, 1
    %s97 = ssub.s32 %s18, %s30
    %s98 = ssub.s32 %s93, %s96
    %s99 = sor.u32 %s97, %s98
    %p100 = scmp.eq.s32.totalorder %s99, 0
    %s102 = sadd.s32 %s101, 1
    %s103 = scalar_select %p100, %s101, %s102
    %p106 = pneg %p100
    %p107 = scmp.eq.s32.totalorder %s11, 1
    %p108 = por %p106, %p107
    %p109 = scmp.ne.s32.totalorder %s101, %s104
    %p110 = scmp.eq.s32.totalorder %s11, 0
    %p111 = por %p109, %p110
    %p112 = scmp.ne.s32.totalorder %s101, %s104
    %p113 = scmp.eq.s32.totalorder %s16, 1
    %p114 = por %p112, %p113
    %p115 = scmp.ne.s32.totalorder %s104, %s105
    %p116 = scmp.eq.s32.totalorder %s16, 0
    %p117 = por %p115, %p116
    %p118 = scmp.ne.s32.totalorder %s104, %s105
    %p119 = scmp.eq.s32.totalorder %s17, 1
    %p120 = por %p118, %p119
    %p122 = scmp.ne.s32.totalorder %s105, %s121
    %p123 = scmp.eq.s32.totalorder %s17, 0
    %p124 = por %p122, %p123
    %s126 = sadd.s32 %s125, 1
    %p129 = scmp.eq.s32.totalorder %s11, 1
    %p130 = scmp.ne.s32.totalorder %s125, %s127
    %p131 = scmp.eq.s32.totalorder %s11, 0
    %p132 = por %p130, %p131
    %p133 = scmp.ne.s32.totalorder %s125, %s127
    %p134 = scmp.eq.s32.totalorder %s16, 1
    %p135 = por %p133, %p134
    %p136 = scmp.ne.s32.totalorder %s127, %s128
    %p137 = scmp.eq.s32.totalorder %s16, 0
    %p138 = por %p136, %p137
    %p139 = scmp.ne.s32.totalorder %s127, %s128
    %p140 = scmp.eq.s32.totalorder %s17, 1
    %p141 = por %p139, %p140
    %p143 = scmp.ne.s32.totalorder %s128, %s142
    %p144 = scmp.eq.s32.totalorder %s17, 0
    %p145 = por %p143, %p144
    %s147 = sadd.s32 %s146, 1
    %p150 = scmp.eq.s32.totalorder %s11, 1
    %p151 = scmp.ne.s32.totalorder %s146, %s148
    %p152 = scmp.eq.s32.totalorder %s11, 0
    %p153 = por %p151, %p152
    %p154 = scmp.ne.s32.totalorder %s146, %s148
    %p155 = scmp.eq.s32.totalorder %s16, 1
    %p156 = por %p154, %p155
    %p157 = scmp.ne.s32.totalorder %s148, %s149
    %p158 = scmp.eq.s32.totalorder %s16, 0
    %p159 = por %p157, %p158
    %p160 = scmp.ne.s32.totalorder %s148, %s149
    %p161 = scmp.eq.s32.totalorder %s17, 1
    %p162 = por %p160, %p161
    %p164 = scmp.ne.s32.totalorder %s149, %s163
    %p165 = scmp.eq.s32.totalorder %s17, 0
    %p166 = por %p164, %p165
    %s167 = ssub.s32 %s18, %s30
    %s168 = ssub.s32 %s19, %s26
    %s169 = sor.u32 %s167, %s168
    %p170 = scmp.eq.s32.totalorder %s169, 0
    %s172 = sadd.s32 %s171, 1
    %s173 = scalar_select %p170, %s171, %s172
    %p176 = pneg %p170
    %p177 = scmp.eq.s32.totalorder %s11, 1
    %p178 = por %p176, %p177
    %p179 = scmp.ne.s32.totalorder %s171, %s174
    %p180 = scmp.eq.s32.totalorder %s11, 0
    %p181 = por %p179, %p180
    %p182 = scmp.ne.s32.totalorder %s171, %s174
    %p183 = scmp.eq.s32.totalorder %s16, 1
    %p184 = por %p182, %p183
    %p185 = scmp.ne.s32.totalorder %s174, %s175
    %p186 = scmp.eq.s32.totalorder %s16, 0
    %p187 = por %p185, %p186
    %p188 = scmp.ne.s32.totalorder %s174, %s175
    %p189 = scmp.eq.s32.totalorder %s17, 1
    %p190 = por %p188, %p189
    %p192 = scmp.ne.s32.totalorder %s175, %s191
    %p193 = scmp.eq.s32.totalorder %s17, 0
    %p194 = por %p192, %p193
    %p195 = scmp.le.s32.totalorder 1, %s11
    %p196 = scmp.lt.s32.totalorder %s11, 3
    %p197 = pnand %p195, %p196
    %p198 = pneg %p197
    // Predicated region
    $region9: #{_lambda_.10} parent=5 // pred_check
      _
    $region10: #{_lambda_.10} parent=5 // pred_check_branch
      %200 = sbr.rel (%p197) target = $region12
    $region11: #{_lambda_.10} parent=5 // pred_region
      %s201 = ssub.s32 %s11, 1
      // Predicated region
      $region13: #{_lambda_.10} parent=11 // pred_check
        %p202 = pneg %p138
      $region14: #{_lambda_.10} parent=11 // pred_check_branch
        %204 = sbr.rel (%p202) target = $region16
      $region15: #{_lambda_.10} parent=11 // pred_region
        _
      $region16: #{_lambda_.10} parent=11 // pred_fallthru
        _
      // Predicated region
      $region17: #{_lambda_.10} parent=11 // pred_check
        %p205 = pneg %p159
      $region18: #{_lambda_.10} parent=11 // pred_check_branch
        %207 = sbr.rel (%p205) target = $region20
      $region19: #{_lambda_.10} parent=11 // pred_region
        _
      $region20: #{_lambda_.10} parent=11 // pred_fallthru
        _
    $region12: #{_lambda_.10} parent=5 // pred_fallthru
      _
    %p208 = scmp.lt.s32.totalorder %s11, 2
    // Predicated region
    $region21: #{_lambda_.10} parent=5 // pred_check
      %p209 = pneg %p208
    $region22: #{_lambda_.10} parent=5 // pred_check_branch
      %211 = sbr.rel (%p209) target = $region24
    $region23: #{_lambda_.10} parent=5 // pred_region
      // Predicated region
      $region25: #{_lambda_.10} parent=23 // pred_check
        %p212 = pneg %p45
      $region26: #{_lambda_.10} parent=23 // pred_check_branch
        %214 = sbr.rel (%p212) target = $region28
      $region27: #{_lambda_.10} parent=23 // pred_region
        %s215 = smul.u32 16, %s19
        %s216 = ssub.s32 18, %s215
        %p217 = scmp.lt.s32.totalorder %s216, 16
        %s218 = scalar_select %p217, %s216, 16
        %s219 = smul.u32 64, %s218
        %s220 = smul.u32 %s219, 3
        %p221 = scmp.lt.s32.totalorder %s18, 1
        %s222 = scalar_select %p221, %s18, 1
        %p223 = scmp.lt.s32.totalorder %s215, 17
        %s224 = scalar_select %p223, %s215, 17
        %s225 = smul.addr %s224, 3
        %s226 = smul.addr %s222, 54
        %s227 = sadd.s32 %s225, %s226
        %s228 = smul.addr %s227, 4
        %s229 = scalar_lea.vmem %s0, %s228
        %s230 = smul.u32 16, %s19
        %s231 = ssub.s32 18, %s230
        %p232 = scmp.lt.s32.totalorder %s231, 16
        %s233 = scalar_select %p232, %s231, 16
        %s234 = smul.u32 64, %s233
        %s235 = smul.u32 %s234, 3
      $region28: #{_lambda_.10} parent=23 // pred_fallthru
        _
      // Predicated region
      $region29: #{_lambda_.10} parent=23 // pred_check
        %p236 = pneg %p77
      $region30: #{_lambda_.10} parent=23 // pred_check_branch
        %238 = sbr.rel (%p236) target = $region32
      $region31: #{_lambda_.10} parent=23 // pred_region
        %s239 = sadd.s32 %s19, 1
        %s240 = smul.u32 %s239, 16
        %p241 = scmp.lt.s32.totalorder %s18, 1
        %s242 = scalar_select %p241, %s18, 1
        %p243 = scmp.lt.s32.totalorder %s240, 17
        %s244 = scalar_select %p243, %s240, 17
        %s245 = smul.addr %s244, 3
        %s246 = smul.addr %s242, 54
        %s247 = sadd.s32 %s245, %s246
        %s248 = smul.addr %s247, 4
        %s249 = scalar_lea.vmem %s1, %s248
        %s250 = sadd.s32 %s19, 1
        %s251 = smul.u32 %s250, 16
      $region32: #{_lambda_.10} parent=23 // pred_fallthru
        _
      // Predicated region
      $region33: #{_lambda_.10} parent=23 // pred_check
        %p252 = pneg %p111
      $region34: #{_lambda_.10} parent=23 // pred_check_branch
        %254 = sbr.rel (%p252) target = $region36
      $region35: #{_lambda_.10} parent=23 // pred_region
        %s255 = sadd.s32 %s19, 1
        %s256 = smul.u32 %s255, 16
        %s257 = sadd.s32 %s256, 1
        %p258 = scmp.lt.s32.totalorder %s18, 1
        %s259 = scalar_select %p258, %s18, 1
        %p260 = scmp.lt.s32.totalorder %s257, 17
        %s261 = scalar_select %p260, %s257, 17
        %s262 = smul.addr %s261, 3
        %s263 = smul.addr %s259, 54
        %s264 = sadd.s32 %s262, %s263
        %s265 = smul.addr %s264, 4
        %s266 = scalar_lea.vmem %s2, %s265
        %s267 = sadd.s32 %s19, 1
        %s268 = smul.u32 %s267, 16
        %s269 = sadd.s32 %s268, 1
      $region36: #{_lambda_.10} parent=23 // pred_fallthru
        _
    $region24: #{_lambda_.10} parent=5 // pred_fallthru
      _
    %p270 = scmp.le.s32.totalorder 1, %s11
    %p271 = scmp.lt.s32.totalorder %s11, 3
    %p272 = pnand %p270, %p271
    %p273 = pneg %p272
    // Predicated region
    $region37: #{_lambda_.10} parent=5 // pred_check
      _
    $region38: #{_lambda_.10} parent=5 // pred_check_branch
      %275 = sbr.rel (%p272) target = $region40
    $region39: #{_lambda_.10} parent=5 // pred_region
      %s276 = ssub.s32 %s11, 1
      %s277 = smul.u32 16, %s21
      %s278 = ssub.s32 18, %s277
      %p279 = scmp.lt.s32.totalorder %s278, 16
      %s280 = scalar_select %p279, %s278, 16
      %s281 = smul.u32 64, %s280
      %s282 = smul.u32 %s281, 3
      %p283 = scmp.lt.s32.totalorder %s20, 1
      %s284 = scalar_select %p283, %s20, 1
      %p285 = scmp.lt.s32.totalorder %s277, 17
      %s286 = scalar_select %p285, %s277, 17
      %s287 = smul.addr %s286, 3
      %s288 = smul.addr %s284, 54
      %s289 = sadd.s32 %s287, %s288
      %s290 = smul.addr %s289, 4
      %s291 = scalar_lea.vmem %s0, %s290
      %p292 = pneg %p51
      %p293 = pneg %p48
      %s294 = sadd.s32 %s21, 1
      %s295 = smul.u32 %s294, 16
      %p296 = scmp.lt.s32.totalorder %s20, 1
      %s297 = scalar_select %p296, %s20, 1
      %p298 = scmp.lt.s32.totalorder %s295, 17
      %s299 = scalar_select %p298, %s295, 17
      %s300 = smul.addr %s299, 3
      %s301 = smul.addr %s297, 54
      %s302 = sadd.s32 %s300, %s301
      %s303 = smul.addr %s302, 4
      %s304 = scalar_lea.vmem %s1, %s303
      %p305 = pneg %p83
      %p306 = pneg %p80
      %s307 = sadd.s32 %s21, 1
      %s308 = smul.u32 %s307, 16
      %s309 = sadd.s32 %s308, 1
      %p310 = scmp.lt.s32.totalorder %s20, 1
      %s311 = scalar_select %p310, %s20, 1
      %p312 = scmp.lt.s32.totalorder %s309, 17
      %s313 = scalar_select %p312, %s309, 17
      %s314 = smul.addr %s313, 3
      %s315 = smul.addr %s311, 54
      %s316 = sadd.s32 %s314, %s315
      %s317 = smul.addr %s316, 4
      %s318 = scalar_lea.vmem %s2, %s317
      %p319 = pneg %p117
      %p320 = pneg %p114
      %p321 = pneg %p138
      %p322 = pneg %p135
      %p323 = pneg %p159
      %p324 = pneg %p156
      %p325 = pneg %p187
      %p326 = pneg %p184
      %s327 = smul.u32 8, %s21
      %p328 = scmp.lt.s32.totalorder %s20, 1
      %s329 = scalar_select %p328, %s20, 1
      %p330 = scmp.lt.s32.totalorder %s327, 7
      %s331 = scalar_select %p330, %s327, 7
      %s332 = smul.addr %s329, 8
      %s333 = sadd.s32 %s331, %s332
      %s334 = smul.addr %s333, 4
      %s335 = scalar_lea.vmem %s5, %s334
      %s336 = smul.u32 16, %s21
      %s337 = ssub.s32 18, %s336
      %p338 = scmp.lt.s32.totalorder %s337, 16
      %s339 = scalar_select %p338, %s337, 16
      %s340 = smul.u32 64, %s339
      %s341 = smul.u32 %s340, 3
      %p342 = scmp.lt.s32.totalorder %s20, 1
      %s343 = scalar_select %p342, %s20, 1
      %p344 = scmp.lt.s32.totalorder %s336, 17
      %s345 = scalar_select %p344, %s336, 17
      %s346 = smul.addr %s345, 3
      %s347 = smul.addr %s343, 54
      %s348 = sadd.s32 %s346, %s347
      %s349 = smul.addr %s348, 4
      %s350 = scalar_lea.vmem %s0, %s349
      %s351 = smul.u32 16, %s21
      %s352 = ssub.s32 18, %s351
      %p353 = scmp.lt.s32.totalorder %s352, 16
      %s354 = scalar_select %p353, %s352, 16
      %s355 = smul.u32 64, %s354
      %s356 = smul.u32 %s355, 3
      %s357 = sadd.s32 %s21, 1
      %s358 = smul.u32 %s357, 16
      %p359 = scmp.lt.s32.totalorder %s20, 1
      %s360 = scalar_select %p359, %s20, 1
      %p361 = scmp.lt.s32.totalorder %s358, 17
      %s362 = scalar_select %p361, %s358, 17
      %s363 = smul.addr %s362, 3
      %s364 = smul.addr %s360, 54
      %s365 = sadd.s32 %s363, %s364
      %s366 = smul.addr %s365, 4
      %s367 = scalar_lea.vmem %s1, %s366
      %s368 = sadd.s32 %s21, 1
      %s369 = smul.u32 %s368, 16
      %s370 = sadd.s32 %s21, 1
      %s371 = smul.u32 %s370, 16
      %s372 = sadd.s32 %s371, 1
      %p373 = scmp.lt.s32.totalorder %s20, 1
      %s374 = scalar_select %p373, %s20, 1
      %p375 = scmp.lt.s32.totalorder %s372, 17
      %s376 = scalar_select %p375, %s372, 17
      %s377 = smul.addr %s376, 3
      %s378 = smul.addr %s374, 54
      %s379 = sadd.s32 %s377, %s378
      %s380 = smul.addr %s379, 4
      %s381 = scalar_lea.vmem %s2, %s380
      %s382 = sadd.s32 %s21, 1
      %s383 = smul.u32 %s382, 16
      %s384 = sadd.s32 %s383, 1
      %s385 = smul.u32 8, %s21
      %p386 = scmp.lt.s32.totalorder %s20, 1
      %s387 = scalar_select %p386, %s20, 1
      %p388 = scmp.lt.s32.totalorder %s385, 7
      %s389 = scalar_select %p388, %s385, 7
      %s390 = smul.addr %s387, 8
      %s391 = sadd.s32 %s389, %s390
      %s392 = smul.addr %s391, 4
      %s393 = scalar_lea.vmem %s5, %s392
      %s394 = smul.u32 8, %s21
      %v396 = vld [vmem:[%s350] sm:$0xf]
      %v397 = vld [vmem:[%s350 + $0x4] sm:$0xf]
      %v398 = vld [vmem:[%s350 + $0x8] sm:$0x1]
      %v399 = vld [vmem:[%s350 + $0xc] sm:$0xf]
      %v400 = vld [vmem:[%s350 + $0x10] sm:$0xf]
      %v401 = vld [vmem:[%s350 + $0x14] sm:$0x1]
      %v402 = vld [vmem:[%s350 + $0x18] sm:$0xf]
      %v403 = vld [vmem:[%s350 + $0x1c] sm:$0xf]
      %v404 = vld [vmem:[%s350 + $0x20] sm:$0x1]
      %v405 = vld [vmem:[%s350 + $0x24] sm:$0xf]
      %v406 = vld [vmem:[%s350 + $0x28] sm:$0xf]
      %v407 = vld [vmem:[%s350 + $0x2c] sm:$0x1]
      %v408 = vld [vmem:[%s350 + $0x30] sm:$0xf]
      %v409 = vld [vmem:[%s350 + $0x34] sm:$0xf]
      %v410 = vld [vmem:[%s350 + $0x38] sm:$0x1]
      %v411 = vld [vmem:[%s350 + $0x3c] sm:$0xf]
      %v412 = vld [vmem:[%s350 + $0x40] sm:$0xf]
      %v413 = vld [vmem:[%s350 + $0x44] sm:$0x1]
      %v414 = vld [vmem:[%s350 + $0x48] sm:$0xf]
      %v415 = vld [vmem:[%s350 + $0x4c] sm:$0xf]
      %v416 = vld [vmem:[%s350 + $0x50] sm:$0x1]
      %v417 = vld [vmem:[%s350 + $0x54] sm:$0xf]
      %v418 = vld [vmem:[%s350 + $0x58] sm:$0xf]
      %v419 = vld [vmem:[%s350 + $0x5c] sm:$0x1]
      %v420 = vld [vmem:[%s350 + $0x60] sm:$0xf]
      %v421 = vld [vmem:[%s350 + $0x64] sm:$0xf]
      %v422 = vld [vmem:[%s350 + $0x68] sm:$0x1]
      %v423 = vld [vmem:[%s350 + $0x6c] sm:$0xf]
      %v424 = vld [vmem:[%s350 + $0x70] sm:$0xf]
      %v425 = vld [vmem:[%s350 + $0x74] sm:$0x1]
      %v426 = vld [vmem:[%s350 + $0x78] sm:$0xf]
      %v427 = vld [vmem:[%s350 + $0x7c] sm:$0xf]
      %v428 = vld [vmem:[%s350 + $0x80] sm:$0x1]
      %v429 = vld [vmem:[%s350 + $0x84] sm:$0xf]
      %v430 = vld [vmem:[%s350 + $0x88] sm:$0xf]
      %v431 = vld [vmem:[%s350 + $0x8c] sm:$0x1]
      %v432 = vld [vmem:[%s350 + $0x90] sm:$0xf]
      %v433 = vld [vmem:[%s350 + $0x94] sm:$0xf]
      %v434 = vld [vmem:[%s350 + $0x98] sm:$0x1]
      %v435 = vld [vmem:[%s350 + $0x9c] sm:$0xf]
      %v436 = vld [vmem:[%s350 + $0xa0] sm:$0xf]
      %v437 = vld [vmem:[%s350 + $0xa4] sm:$0x1]
      %v438 = vld [vmem:[%s350 + $0xa8] sm:$0xf]
      %v439 = vld [vmem:[%s350 + $0xac] sm:$0xf]
      %v440 = vld [vmem:[%s350 + $0xb0] sm:$0x1]
      %v441 = vld [vmem:[%s350 + $0xb4] sm:$0xf]
      %v442 = vld [vmem:[%s350 + $0xb8] sm:$0xf]
      %v443 = vld [vmem:[%s350 + $0xbc] sm:$0x1]
      %v444 = vld [vmem:[%s367] sm:$0xf]
      %v445 = vld [vmem:[%s367 + $0x4] sm:$0xf]
      %v446 = vld [vmem:[%s367 + $0x8] sm:$0x1]
      %v463 = vunpack.c.l.b16 %v397
      %v464 = vunpack.c.l.b16 %v398
      %v465 = vunpack.c.l.b16 %v403
      %v466 = vunpack.c.l.b16 %v404
      %v467 = vunpack.c.l.b16 %v409
      %v468 = vunpack.c.l.b16 %v410
      %v469 = vunpack.c.l.b16 %v415
      %v470 = vunpack.c.l.b16 %v416
      %v471 = vunpack.c.l.b16 %v421
      %v472 = vunpack.c.l.b16 %v422
      %v473 = vunpack.c.l.b16 %v427
      %v474 = vunpack.c.l.b16 %v428
      %v475 = vunpack.c.l.b16 %v433
      %v476 = vunpack.c.l.b16 %v434
      %v477 = vunpack.c.l.b16 %v439
      %v478 = vunpack.c.l.b16 %v440
      %v479 = vpack.c.b16 %v464, %v463
      %v480 = vpack.c.b16 %v466, %v465
      %v481 = vpack.c.b16 %v468, %v467
      %v482 = vpack.c.b16 %v470, %v469
      %v483 = vpack.c.b16 %v472, %v471
      %v484 = vpack.c.b16 %v474, %v473
      %v485 = vpack.c.b16 %v476, %v475
      %v486 = vpack.c.b16 %v478, %v477
      %v488 = vshrl.u32 %v479, 16
      %v490 = vshll.u32 %v479, 16
      %v492 = vrot.slane %v490, 1
      %v493 = vor.u32 %v488, %v492
      %v495 = vshrl.u32 %v480, 16
      %v497 = vshll.u32 %v480, 16
      %v499 = vrot.slane %v497, 1
      %v500 = vor.u32 %v495, %v499
      %v502 = vshrl.u32 %v481, 16
      %v504 = vshll.u32 %v481, 16
      %v506 = vrot.slane %v504, 1
      %v507 = vor.u32 %v502, %v506
      %v509 = vshrl.u32 %v482, 16
      %v511 = vshll.u32 %v482, 16
      %v513 = vrot.slane %v511, 1
      %v514 = vor.u32 %v509, %v513
      %v516 = vshrl.u32 %v483, 16
      %v518 = vshll.u32 %v483, 16
      %v520 = vrot.slane %v518, 1
      %v521 = vor.u32 %v516, %v520
      %v523 = vshrl.u32 %v484, 16
      %v525 = vshll.u32 %v484, 16
      %v527 = vrot.slane %v525, 1
      %v528 = vor.u32 %v523, %v527
      %v530 = vshrl.u32 %v485, 16
      %v532 = vshll.u32 %v485, 16
      %v534 = vrot.slane %v532, 1
      %v535 = vor.u32 %v530, %v534
      %v537 = vshrl.u32 %v486, 16
      %v539 = vshll.u32 %v486, 16
      %v541 = vrot.slane %v539, 1
      %v542 = vor.u32 %v537, %v541
      %543 = vrot.lane.b32.xlu0 %v493, 8
      %v544 = vpop.permute.xlu0 %543
      %545 = vrot.lane.b32.xlu0 %v500, 8
      %v546 = vpop.permute.xlu0 %545
      %547 = vrot.lane.b32.xlu0 %v507, 8
      %v548 = vpop.permute.xlu0 %547
      %549 = vrot.lane.b32.xlu0 %v514, 8
      %v550 = vpop.permute.xlu0 %549
      %551 = vrot.lane.b32.xlu0 %v521, 8
      %v552 = vpop.permute.xlu0 %551
      %553 = vrot.lane.b32.xlu0 %v528, 8
      %v554 = vpop.permute.xlu0 %553
      %555 = vrot.lane.b32.xlu0 %v535, 8
      %v556 = vpop.permute.xlu0 %555
      %557 = vrot.lane.b32.xlu0 %v542, 8
      %v558 = vpop.permute.xlu0 %557
      %v567 = vunpack.c.l.b16 %v396
      %v568 = vunpack.c.l.b16 %v402
      %v569 = vunpack.c.l.b16 %v408
      %v570 = vunpack.c.l.b16 %v414
      %v571 = vunpack.c.l.b16 %v420
      %v572 = vunpack.c.l.b16 %v426
      %v573 = vunpack.c.l.b16 %v432
      %v574 = vunpack.c.l.b16 %v438
      %v575 = vpack.c.b16 %v463, %v567
      %v576 = vpack.c.b16 %v465, %v568
      %v577 = vpack.c.b16 %v467, %v569
      %v578 = vpack.c.b16 %v469, %v570
      %v579 = vpack.c.b16 %v471, %v571
      %v580 = vpack.c.b16 %v473, %v572
      %v581 = vpack.c.b16 %v475, %v573
      %v582 = vpack.c.b16 %v477, %v574
      %v584 = vshrl.u32 %v575, 16
      %v586 = vshll.u32 %v575, 16
      %v588 = vrot.slane %v586, 1
      %v589 = vor.u32 %v584, %v588
      %v591 = vshrl.u32 %v576, 16
      %v593 = vshll.u32 %v576, 16
      %v595 = vrot.slane %v593, 1
      %v596 = vor.u32 %v591, %v595
      %v598 = vshrl.u32 %v577, 16
      %v600 = vshll.u32 %v577, 16
      %v602 = vrot.slane %v600, 1
      %v603 = vor.u32 %v598, %v602
      %v605 = vshrl.u32 %v578, 16
      %v607 = vshll.u32 %v578, 16
      %v609 = vrot.slane %v607, 1
      %v610 = vor.u32 %v605, %v609
      %v612 = vshrl.u32 %v579, 16
      %v614 = vshll.u32 %v579, 16
      %v616 = vrot.slane %v614, 1
      %v617 = vor.u32 %v612, %v616
      %v619 = vshrl.u32 %v580, 16
      %v621 = vshll.u32 %v580, 16
      %v623 = vrot.slane %v621, 1
      %v624 = vor.u32 %v619, %v623
      %v626 = vshrl.u32 %v581, 16
      %v628 = vshll.u32 %v581, 16
      %v630 = vrot.slane %v628, 1
      %v631 = vor.u32 %v626, %v630
      %v633 = vshrl.u32 %v582, 16
      %v635 = vshll.u32 %v582, 16
      %v637 = vrot.slane %v635, 1
      %v638 = vor.u32 %v633, %v637
      %639 = vrot.lane.b32.xlu0 %v589, 16
      %v640 = vpop.permute.xlu0 %639
      %641 = vrot.lane.b32.xlu0 %v596, 16
      %v642 = vpop.permute.xlu0 %641
      %643 = vrot.lane.b32.xlu0 %v603, 16
      %v644 = vpop.permute.xlu0 %643
      %645 = vrot.lane.b32.xlu0 %v610, 16
      %v646 = vpop.permute.xlu0 %645
      %647 = vrot.lane.b32.xlu0 %v617, 16
      %v648 = vpop.permute.xlu0 %647
      %649 = vrot.lane.b32.xlu0 %v624, 16
      %v650 = vpop.permute.xlu0 %649
      %651 = vrot.lane.b32.xlu0 %v631, 16
      %v652 = vpop.permute.xlu0 %651
      %653 = vrot.lane.b32.xlu0 %v638, 16
      %v654 = vpop.permute.xlu0 %653
      %v663 = vunpack.c.l.b16 %v399
      %v664 = vunpack.c.l.b16 %v405
      %v665 = vunpack.c.l.b16 %v411
      %v666 = vunpack.c.l.b16 %v417
      %v667 = vunpack.c.l.b16 %v423
      %v668 = vunpack.c.l.b16 %v429
      %v669 = vunpack.c.l.b16 %v435
      %v670 = vunpack.c.l.b16 %v441
      %v671 = vpack.c.b16 %v663, %v663
      %v672 = vpack.c.b16 %v664, %v664
      %v673 = vpack.c.b16 %v665, %v665
      %v674 = vpack.c.b16 %v666, %v666
      %v675 = vpack.c.b16 %v667, %v667
      %v676 = vpack.c.b16 %v668, %v668
      %v677 = vpack.c.b16 %v669, %v669
      %v678 = vpack.c.b16 %v670, %v670
      %679 = vrot.lane.b32.xlu0 %v671, 24
      %v680 = vpop.permute.xlu0 %679
      %681 = vrot.lane.b32.xlu0 %v672, 24
      %v682 = vpop.permute.xlu0 %681
      %683 = vrot.lane.b32.xlu0 %v673, 24
      %v684 = vpop.permute.xlu0 %683
      %685 = vrot.lane.b32.xlu0 %v674, 24
      %v686 = vpop.permute.xlu0 %685
      %687 = vrot.lane.b32.xlu0 %v675, 24
      %v688 = vpop.permute.xlu0 %687
      %689 = vrot.lane.b32.xlu0 %v676, 24
      %v690 = vpop.permute.xlu0 %689
      %691 = vrot.lane.b32.xlu0 %v677, 24
      %v692 = vpop.permute.xlu0 %691
      %693 = vrot.lane.b32.xlu0 %v678, 24
      %v694 = vpop.permute.xlu0 %693
      %v711 = vunpack.c.l.b16 %v400
      %v712 = vunpack.c.l.b16 %v401
      %v713 = vunpack.c.l.b16 %v406
      %v714 = vunpack.c.l.b16 %v407
      %v715 = vunpack.c.l.b16 %v412
      %v716 = vunpack.c.l.b16 %v413
      %v717 = vunpack.c.l.b16 %v418
      %v718 = vunpack.c.l.b16 %v419
      %v719 = vunpack.c.l.b16 %v424
      %v720 = vunpack.c.l.b16 %v425
      %v721 = vunpack.c.l.b16 %v430
      %v722 = vunpack.c.l.b16 %v431
      %v723 = vunpack.c.l.b16 %v436
      %v724 = vunpack.c.l.b16 %v437
      %v725 = vunpack.c.l.b16 %v442
      %v726 = vunpack.c.l.b16 %v443
      %v727 = vpack.c.b16 %v712, %v711
      %v728 = vpack.c.b16 %v714, %v713
      %v729 = vpack.c.b16 %v716, %v715
      %v730 = vpack.c.b16 %v718, %v717
      %v731 = vpack.c.b16 %v720, %v719
      %v732 = vpack.c.b16 %v722, %v721
      %v733 = vpack.c.b16 %v724, %v723
      %v734 = vpack.c.b16 %v726, %v725
      %v736 = vshrl.u32 %v727, 16
      %v738 = vshll.u32 %v727, 16
      %v740 = vrot.slane %v738, 1
      %v741 = vor.u32 %v736, %v740
      %v743 = vshrl.u32 %v728, 16
      %v745 = vshll.u32 %v728, 16
      %v747 = vrot.slane %v745, 1
      %v748 = vor.u32 %v743, %v747
      %v750 = vshrl.u32 %v729, 16
      %v752 = vshll.u32 %v729, 16
      %v754 = vrot.slane %v752, 1
      %v755 = vor.u32 %v750, %v754
      %v757 = vshrl.u32 %v730, 16
      %v759 = vshll.u32 %v730, 16
      %v761 = vrot.slane %v759, 1
      %v762 = vor.u32 %v757, %v761
      %v764 = vshrl.u32 %v731, 16
      %v766 = vshll.u32 %v731, 16
      %v768 = vrot.slane %v766, 1
      %v769 = vor.u32 %v764, %v768
      %v771 = vshrl.u32 %v732, 16
      %v773 = vshll.u32 %v732, 16
      %v775 = vrot.slane %v773, 1
      %v776 = vor.u32 %v771, %v775
      %v778 = vshrl.u32 %v733, 16
      %v780 = vshll.u32 %v733, 16
      %v782 = vrot.slane %v780, 1
      %v783 = vor.u32 %v778, %v782
      %v785 = vshrl.u32 %v734, 16
      %v787 = vshll.u32 %v734, 16
      %v789 = vrot.slane %v787, 1
      %v790 = vor.u32 %v785, %v789
      %791 = vrot.lane.b32.xlu0 %v741, 32
      %v792 = vpop.permute.xlu0 %791
      %793 = vrot.lane.b32.xlu0 %v748, 32
      %v794 = vpop.permute.xlu0 %793
      %795 = vrot.lane.b32.xlu0 %v755, 32
      %v796 = vpop.permute.xlu0 %795
      %797 = vrot.lane.b32.xlu0 %v762, 32
      %v798 = vpop.permute.xlu0 %797
      %799 = vrot.lane.b32.xlu0 %v769, 32
      %v800 = vpop.permute.xlu0 %799
      %801 = vrot.lane.b32.xlu0 %v776, 32
      %v802 = vpop.permute.xlu0 %801
      %803 = vrot.lane.b32.xlu0 %v783, 32
      %v804 = vpop.permute.xlu0 %803
      %805 = vrot.lane.b32.xlu0 %v790, 32
      %v806 = vpop.permute.xlu0 %805
      %v807 = vpack.c.b16 %v711, %v663
      %v808 = vpack.c.b16 %v713, %v664
      %v809 = vpack.c.b16 %v715, %v665
      %v810 = vpack.c.b16 %v717, %v666
      %v811 = vpack.c.b16 %v719, %v667
      %v812 = vpack.c.b16 %v721, %v668
      %v813 = vpack.c.b16 %v723, %v669
      %v814 = vpack.c.b16 %v725, %v670
      %v816 = vshrl.u32 %v807, 16
      %v818 = vshll.u32 %v807, 16
      %v820 = vrot.slane %v818, 1
      %v821 = vor.u32 %v816, %v820
      %v823 = vshrl.u32 %v808, 16
      %v825 = vshll.u32 %v808, 16
      %v827 = vrot.slane %v825, 1
      %v828 = vor.u32 %v823, %v827
      %v830 = vshrl.u32 %v809, 16
      %v832 = vshll.u32 %v809, 16
      %v834 = vrot.slane %v832, 1
      %v835 = vor.u32 %v830, %v834
      %v837 = vshrl.u32 %v810, 16
      %v839 = vshll.u32 %v810, 16
      %v841 = vrot.slane %v839, 1
      %v842 = vor.u32 %v837, %v841
      %v844 = vshrl.u32 %v811, 16
      %v846 = vshll.u32 %v811, 16
      %v848 = vrot.slane %v846, 1
      %v849 = vor.u32 %v844, %v848
      %v851 = vshrl.u32 %v812, 16
      %v853 = vshll.u32 %v812, 16
      %v855 = vrot.slane %v853, 1
      %v856 = vor.u32 %v851, %v855
      %v858 = vshrl.u32 %v813, 16
      %v860 = vshll.u32 %v813, 16
      %v862 = vrot.slane %v860, 1
      %v863 = vor.u32 %v858, %v862
      %v865 = vshrl.u32 %v814, 16
      %v867 = vshll.u32 %v814, 16
      %v869 = vrot.slane %v867, 1
      %v870 = vor.u32 %v865, %v869
      %871 = vrot.lane.b32.xlu0 %v821, 40
      %v872 = vpop.permute.xlu0 %871
      %873 = vrot.lane.b32.xlu0 %v828, 40
      %v874 = vpop.permute.xlu0 %873
      %875 = vrot.lane.b32.xlu0 %v835, 40
      %v876 = vpop.permute.xlu0 %875
      %877 = vrot.lane.b32.xlu0 %v842, 40
      %v878 = vpop.permute.xlu0 %877
      %879 = vrot.lane.b32.xlu0 %v849, 40
      %v880 = vpop.permute.xlu0 %879
      %881 = vrot.lane.b32.xlu0 %v856, 40
      %v882 = vpop.permute.xlu0 %881
      %883 = vrot.lane.b32.xlu0 %v863, 40
      %v884 = vpop.permute.xlu0 %883
      %885 = vrot.lane.b32.xlu0 %v870, 40
      %v886 = vpop.permute.xlu0 %885
      %v888 = vunpack.c.l.b16 %v444
      %v889 = vpack.c.b16 %v568, %v568
      %v890 = vpack.c.b16 %v569, %v569
      %v891 = vpack.c.b16 %v570, %v570
      %v892 = vpack.c.b16 %v571, %v571
      %v893 = vpack.c.b16 %v572, %v572
      %v894 = vpack.c.b16 %v573, %v573
      %v895 = vpack.c.b16 %v574, %v574
      %v896 = vpack.c.b16 %v888, %v888
      %897 = vrot.lane.b32.xlu0 %v889, 48
      %v898 = vpop.permute.xlu0 %897
      %899 = vrot.lane.b32.xlu0 %v890, 48
      %v900 = vpop.permute.xlu0 %899
      %901 = vrot.lane.b32.xlu0 %v891, 48
      %v902 = vpop.permute.xlu0 %901
      %903 = vrot.lane.b32.xlu0 %v892, 48
      %v904 = vpop.permute.xlu0 %903
      %905 = vrot.lane.b32.xlu0 %v893, 48
      %v906 = vpop.permute.xlu0 %905
      %907 = vrot.lane.b32.xlu0 %v894, 48
      %v908 = vpop.permute.xlu0 %907
      %909 = vrot.lane.b32.xlu0 %v895, 48
      %v910 = vpop.permute.xlu0 %909
      %911 = vrot.lane.b32.xlu0 %v896, 48
      %v912 = vpop.permute.xlu0 %911
      %v915 = vunpack.c.l.b16 %v445
      %v916 = vunpack.c.l.b16 %v446
      %v917 = vpack.c.b16 %v916, %v915
      %v919 = vshrl.u32 %v917, 16
      %v921 = vshll.u32 %v917, 16
      %v923 = vrot.slane %v921, 1
      %v924 = vor.u32 %v919, %v923
      %925 = vrot.lane.b32.xlu0 %v500, 56
      %v926 = vpop.permute.xlu0 %925
      %927 = vrot.lane.b32.xlu0 %v507, 56
      %v928 = vpop.permute.xlu0 %927
      %929 = vrot.lane.b32.xlu0 %v514, 56
      %v930 = vpop.permute.xlu0 %929
      %931 = vrot.lane.b32.xlu0 %v521, 56
      %v932 = vpop.permute.xlu0 %931
      %933 = vrot.lane.b32.xlu0 %v528, 56
      %v934 = vpop.permute.xlu0 %933
      %935 = vrot.lane.b32.xlu0 %v535, 56
      %v936 = vpop.permute.xlu0 %935
      %937 = vrot.lane.b32.xlu0 %v542, 56
      %v938 = vpop.permute.xlu0 %937
      %939 = vrot.lane.b32.xlu0 %v924, 56
      %v940 = vpop.permute.xlu0 %939
      %v941 = vpack.c.b16 %v915, %v888
      %v943 = vshrl.u32 %v941, 16
      %v945 = vshll.u32 %v941, 16
      %v947 = vrot.slane %v945, 1
      %v948 = vor.u32 %v943, %v947
      %949 = vrot.lane.b32.xlu0 %v596, 64
      %v950 = vpop.permute.xlu0 %949
      %951 = vrot.lane.b32.xlu0 %v603, 64
      %v952 = vpop.permute.xlu0 %951
      %953 = vrot.lane.b32.xlu0 %v610, 64
      %v954 = vpop.permute.xlu0 %953
      %955 = vrot.lane.b32.xlu0 %v617, 64
      %v956 = vpop.permute.xlu0 %955
      %957 = vrot.lane.b32.xlu0 %v624, 64
      %v958 = vpop.permute.xlu0 %957
      %959 = vrot.lane.b32.xlu0 %v631, 64
      %v960 = vpop.permute.xlu0 %959
      %961 = vrot.lane.b32.xlu0 %v638, 64
      %v962 = vpop.permute.xlu0 %961
      %963 = vrot.lane.b32.xlu0 %v948, 64
      %v964 = vpop.permute.xlu0 %963
      %vm965 = vcmask 64512
      %v968 = vsel %vm965, %v396, %v544
      %v971 = vsel %vm965, %v402, %v546
      %v974 = vsel %vm965, %v408, %v548
      %v977 = vsel %vm965, %v414, %v550
      %v980 = vsel %vm965, %v420, %v552
      %v983 = vsel %vm965, %v426, %v554
      %v986 = vsel %vm965, %v432, %v556
      %v989 = vsel %vm965, %v438, %v558
      %vm990 = vcmask 130048
      %v992 = vsel %vm990, %v968, %v640
      %v994 = vsel %vm990, %v971, %v642
      %v996 = vsel %vm990, %v974, %v644
      %v998 = vsel %vm990, %v977, %v646
      %v1000 = vsel %vm990, %v980, %v648
      %v1002 = vsel %vm990, %v983, %v650
      %v1004 = vsel %vm990, %v986, %v652
      %v1006 = vsel %vm990, %v989, %v654
      %vm1007 = vcmask 195584
      %v1009 = vsel %vm1007, %v992, %v680
      %v1011 = vsel %vm1007, %v994, %v682
      %v1013 = vsel %vm1007, %v996, %v684
      %v1015 = vsel %vm1007, %v998, %v686
      %v1017 = vsel %vm1007, %v1000, %v688
      %v1019 = vsel %vm1007, %v1002, %v690
      %v1021 = vsel %vm1007, %v1004, %v692
      %v1023 = vsel %vm1007, %v1006, %v694
      %vm1024 = vcmask 261120
      %v1026 = vsel %vm1024, %v1009, %v792
      %v1028 = vsel %vm1024, %v1011, %v794
      %v1030 = vsel %vm1024, %v1013, %v796
      %v1032 = vsel %vm1024, %v1015, %v798
      %v1034 = vsel %vm1024, %v1017, %v800
      %v1036 = vsel %vm1024, %v1019, %v802
      %v1038 = vsel %vm1024, %v1021, %v804
      %v1040 = vsel %vm1024, %v1023, %v806
      %vm1041 = vcmask 326656
      %v1043 = vsel %vm1041, %v1026, %v872
      %v1045 = vsel %vm1041, %v1028, %v874
      %v1047 = vsel %vm1041, %v1030, %v876
      %v1049 = vsel %vm1041, %v1032, %v878
      %v1051 = vsel %vm1041, %v1034, %v880
      %v1053 = vsel %vm1041, %v1036, %v882
      %v1055 = vsel %vm1041, %v1038, %v884
      %v1057 = vsel %vm1041, %v1040, %v886
      %vm1058 = vcmask 392192
      %v1060 = vsel %vm1058, %v1043, %v898
      %v1062 = vsel %vm1058, %v1045, %v900
      %v1064 = vsel %vm1058, %v1047, %v902
      %v1066 = vsel %vm1058, %v1049, %v904
      %v1068 = vsel %vm1058, %v1051, %v906
      %v1070 = vsel %vm1058, %v1053, %v908
      %v1072 = vsel %vm1058, %v1055, %v910
      %v1074 = vsel %vm1058, %v1057, %v912
      %vm1075 = vcmask 457728
      %v1077 = vsel %vm1075, %v1060, %v926
      %v1079 = vsel %vm1075, %v1062, %v928
      %v1081 = vsel %vm1075, %v1064, %v930
      %v1083 = vsel %vm1075, %v1066, %v932
      %v1085 = vsel %vm1075, %v1068, %v934
      %v1087 = vsel %vm1075, %v1070, %v936
      %v1089 = vsel %vm1075, %v1072, %v938
      %v1091 = vsel %vm1075, %v1074, %v940
      %vm1092 = vcmask 523264
      %v1094 = vsel %vm1092, %v1077, %v950
      %v1096 = vsel %vm1092, %v1079, %v952
      %v1098 = vsel %vm1092, %v1081, %v954
      %v1100 = vsel %vm1092, %v1083, %v956
      %v1102 = vsel %vm1092, %v1085, %v958
      %v1104 = vsel %vm1092, %v1087, %v960
      %v1106 = vsel %vm1092, %v1089, %v962
      %v1108 = vsel %vm1092, %v1091, %v964
      %v1109 = vld [vmem:[%s3] sm:$0xf]
      %v1110 = vld [vmem:[%s3 + $0x4] sm:$0xf]
      %v1111 = vld [vmem:[%s3 + $0x8] sm:$0xf]
      %v1112 = vld [vmem:[%s3 + $0xc] sm:$0xf]
      %v1113 = vld [vmem:[%s3 + $0x10] sm:$0xf]
      %v1114 = vld [vmem:[%s3 + $0x14] sm:$0xf]
      %v1115 = vld [vmem:[%s3 + $0x18] sm:$0xf]
      %v1116 = vld [vmem:[%s3 + $0x1c] sm:$0xf]
      %v1117 = vld [vmem:[%s3 + $0x20] sm:$0xf]
      %v1118 = vld [vmem:[%s4] sm:$0x1]
      %v1120 = vlaneseq
      %v1121 = vshrl.u32 %v1120, 7
      %v1122 = vsub.s32 0, %v1121
      %v1123 = vrot.slane %v1118, %v1122
      %v1133 = vunpack.c.l.b16 %v1094
      %v1134 = vunpack.c.l.b16 %v1096
      %v1135 = vunpack.c.l.b16 %v1098
      %v1136 = vunpack.c.l.b16 %v1100
      %v1137 = vunpack.c.l.b16 %v1102
      %v1138 = vunpack.c.l.b16 %v1104
      %v1139 = vunpack.c.l.b16 %v1106
      %v1140 = vunpack.c.l.b16 %v1108
      %v1141 = vpack.c.b16 %v1134, %v1133
      %v1142 = vpack.c.b16 %v1136, %v1135
      %v1143 = vpack.c.b16 %v1138, %v1137
      %v1144 = vpack.c.b16 %v1140, %v1139
      %v1154 = vunpack.c.l.b16 %v1109
      %v1155 = vunpack.c.l.b16 %v1110
      %v1156 = vunpack.c.l.b16 %v1111
      %v1157 = vunpack.c.l.b16 %v1112
      %v1158 = vunpack.c.l.b16 %v1113
      %v1159 = vunpack.c.l.b16 %v1114
      %v1160 = vunpack.c.l.b16 %v1115
      %v1161 = vunpack.c.l.b16 %v1116
      %v1162 = vunpack.c.l.b16 %v1117
      %v1163 = vpack.c.b16 %v1155, %v1154
      %v1164 = vpack.c.b16 %v1157, %v1156
      %v1165 = vpack.c.b16 %v1159, %v1158
      %v1166 = vpack.c.b16 %v1161, %v1160
      %v1167 = vpack.c.b16 %v1162, %v1162
      %vm1172 = vcmask 588800
      %v1174 = vsel %vm1172, %v1141, 0
      %v1177 = vsel %vm1172, %v1142, 0
      %v1180 = vsel %vm1172, %v1143, 0
      %v1183 = vsel %vm1172, %v1144, 0
      %vm1185 = vcmask 1043456
      %v1187 = vsel %vm1185, %v1167, 0
      %1189 = vmatprep.subr.bf16.mxu0 0
      %1190 = vmatpush1.bf16.msra.mxu0 %v1163
      %1191 = vmatprep.subr.bf16.mxu0 0
      %1192 = vmatpush1.bf16.msra.mxu0 %v1164
      %1193 = vmatprep.subr.bf16.mxu0 0
      %1194 = vmatpush1.bf16.msra.mxu0 %v1165
      %1195 = vmatprep.subr.bf16.mxu0 0
      %1196 = vmatpush1.bf16.msra.mxu0 %v1166
      %1197 = vmatprep.subr.bf16.mxu0 0
      %1198 = vmatpush1.bf16.msra.mxu0 %v1187
      %1199 = vmatprep.subr.bf16.mxu0 0
      %1200 = vmatpush1.bf16.msra.mxu0 0
      %1201 = vmatprep.subr.bf16.mxu0 0
      %1202 = vmatpush1.bf16.msra.mxu0 0
      %1203 = vmatprep.subr.bf16.mxu0 0
      %1204 = vmatpush1.bf16.msra.mxu0 0
      %1205 = vmatprep.subr.bf16.mxu0 0
      %1206 = vmatpush1.bf16.msra.mxu0 0
      %1207 = vmatprep.subr.bf16.mxu0 0
      %1208 = vmatpush1.bf16.msra.mxu0 0
      %1209 = vmatprep.subr.bf16.mxu0 0
      %1210 = vmatpush1.bf16.msra.mxu0 0
      %1211 = vmatprep.subr.bf16.mxu0 0
      %1212 = vmatpush1.bf16.msra.mxu0 0
      %1213 = vmatprep.subr.bf16.mxu0 0
      %1214 = vmatpush1.bf16.msra.mxu0 0
      %1215 = vmatprep.subr.bf16.mxu0 0
      %1216 = vmatpush1.bf16.msra.mxu0 0
      %1217 = vmatprep.subr.bf16.mxu0 0
      %1218 = vmatpush1.bf16.msra.mxu0 0
      %1219 = vmatprep.subr.bf16.mxu0 0
      %1220 = vmatpush1.bf16.msra.mxu0 0
      %1221 = vmatprep.mubr.bf16.mxu0 0
      %1222 = vmatmul.mubr.bf16.gmra.mrb[0].mxu0 %v1174
      %v1223 = vpop.f32.mrb[0].mxu0
      %v1224 = vadd.f32 %v1123, %v1223
      %v1225 = vpop.f32.mrb[0].mxu0
      %v1226 = vpop.f32.mrb[0].mxu0
      %v1227 = vadd.f32 %v1123, %v1226
      %v1228 = vpop.f32.mrb[0].mxu0
      %1229 = vmatprep.mubr.bf16.mxu0 0
      %1230 = vmatmul.mubr.bf16.gmra.mrb[0].mxu0 %v1177
      %v1231 = vpop.f32.mrb[0].mxu0
      %v1232 = vadd.f32 %v1123, %v1231
      %v1233 = vpop.f32.mrb[0].mxu0
      %v1234 = vpop.f32.mrb[0].mxu0
      %v1235 = vadd.f32 %v1123, %v1234
      %v1236 = vpop.f32.mrb[0].mxu0
      %1237 = vmatprep.mubr.bf16.mxu0 0
      %1238 = vmatmul.mubr.bf16.gmra.mrb[0].mxu0 %v1180
      %v1239 = vpop.f32.mrb[0].mxu0
      %v1240 = vadd.f32 %v1123, %v1239
      %v1241 = vpop.f32.mrb[0].mxu0
      %v1242 = vpop.f32.mrb[0].mxu0
      %v1243 = vadd.f32 %v1123, %v1242
      %v1244 = vpop.f32.mrb[0].mxu0
      %1245 = vmatprep.mubr.bf16.mxu0 0
      %1246 = vmatmul.mubr.bf16.gmra.mrb[0].mxu0 %v1183
      %v1247 = vpop.f32.mrb[0].mxu0
      %v1248 = vadd.f32 %v1123, %v1247
      %v1249 = vpop.f32.mrb[0].mxu0
      %v1250 = vpop.f32.mrb[0].mxu0
      %v1251 = vadd.f32 %v1123, %v1250
      %v1252 = vpop.f32.mrb[0].mxu0
      %1253 = vdwg.mxu0
      %v1254 = vmax.f32 %v1224, 0.0
      %v1255 = vmax.f32 %v1227, 0.0
      %v1256 = vmax.f32 %v1232, 0.0
      %v1257 = vmax.f32 %v1235, 0.0
      %v1258 = vmax.f32 %v1240, 0.0
      %v1259 = vmax.f32 %v1243, 0.0
      %v1260 = vmax.f32 %v1248, 0.0
      %v1261 = vmax.f32 %v1251, 0.0
      %v1262 = vpack.c.bf16 %v1254, %v1254
      %v1263 = vpack.c.bf16 %v1255, %v1255
      %v1264 = vpack.c.bf16 %v1256, %v1256
      %v1265 = vpack.c.bf16 %v1257, %v1257
      %v1266 = vpack.c.bf16 %v1258, %v1258
      %v1267 = vpack.c.bf16 %v1259, %v1259
      %v1268 = vpack.c.bf16 %v1260, %v1260
      %v1269 = vpack.c.bf16 %v1261, %v1261
      %vm1270 = vcmask 125952
      %1271 = vst.msk [vmem:[%s393] sm:$0xf] %vm1270, %v1262
      %1272 = vst.msk [vmem:[%s393 + $0x4] sm:$0xf] %vm1270, %v1263
      %1273 = vst.msk [vmem:[%s393 + $0x8] sm:$0xf] %vm1270, %v1264
      %1274 = vst.msk [vmem:[%s393 + $0xc] sm:$0xf] %vm1270, %v1265
      %1275 = vst.msk [vmem:[%s393 + $0x10] sm:$0xf] %vm1270, %v1266
      %1276 = vst.msk [vmem:[%s393 + $0x14] sm:$0xf] %vm1270, %v1267
      %1277 = vst.msk [vmem:[%s393 + $0x18] sm:$0xf] %vm1270, %v1268
      %1278 = vst.msk [vmem:[%s393 + $0x1c] sm:$0xf] %vm1270, %v1269
      %s1279 = smul.u32 8, %s21
      %p1280 = scmp.lt.s32.totalorder %s20, 1
      %s1281 = scalar_select %p1280, %s20, 1
      %p1282 = scmp.lt.s32.totalorder %s1279, 7
      %s1283 = scalar_select %p1282, %s1279, 7
      %s1284 = smul.addr %s1281, 8
      %s1285 = sadd.s32 %s1283, %s1284
      %s1286 = smul.addr %s1285, 4
      %s1287 = scalar_lea.vmem %s5, %s1286
      // Predicated region
      $region41: #{_lambda_.10} parent=39 // pred_check
        %p1288 = pneg %p184
      $region42: #{_lambda_.10} parent=39 // pred_check_branch
        %1290 = sbr.rel (%p1288) target = $region44
      $region43: #{_lambda_.10} parent=39 // pred_region
        %s1291 = smul.u32 8, %s21
      $region44: #{_lambda_.10} parent=39 // pred_fallthru
        _
    $region40: #{_lambda_.10} parent=5 // pred_fallthru
      _
    %p1292 = scmp.le.s32.totalorder 2, %s11
    // Predicated region
    $region45: #{_lambda_.10} parent=5 // pred_check
      %p1293 = pneg %p1292
    $region46: #{_lambda_.10} parent=5 // pred_check_branch
      %1295 = sbr.rel (%p1293) target = $region48
    $region47: #{_lambda_.10} parent=5 // pred_region
      %s1296 = ssub.s32 %s11, 2
      // Predicated region
      $region49: #{_lambda_.10} parent=47 // pred_check
        %p1297 = pneg %p190
      $region50: #{_lambda_.10} parent=47 // pred_check_branch
        %1299 = sbr.rel (%p1297) target = $region52
      $region51: #{_lambda_.10} parent=47 // pred_region
        %s1300 = smul.u32 8, %s23
        %p1301 = scmp.lt.s32.totalorder %s22, 1
        %s1302 = scalar_select %p1301, %s22, 1
        %p1303 = scmp.lt.s32.totalorder %s1300, 7
        %s1304 = scalar_select %p1303, %s1300, 7
        %s1305 = smul.addr %s1302, 8
        %s1306 = sadd.s32 %s1304, %s1305
        %s1307 = smul.addr %s1306, 4
        %s1308 = scalar_lea.vmem %s5, %s1307
      $region52: #{_lambda_.10} parent=47 // pred_fallthru
        _
    $region48: #{_lambda_.10} parent=5 // pred_fallthru
      _
  $region6: #{_lambda_.10} parent=0 // loop_footer
    %s15 = sadd.s32 1, %s11
  $region7: #{_lambda_.10} parent=0 // loop_footer_branch
    %10 = sbr.rel target = $region3
  $region8: #{_lambda_.10} parent=0 // loop_exit
    _

// kernel: _lambda_.12
$region0: #{_lambda_.12}
  #allocation0 [shape = 'u32[]', space=smem, size = 0x4, offset = 0x4, fixed_abs, tag = 'smem constant byte address 0x4 - core index']
  #allocation1 [shape = 'u32[144,128]{1,0:T(1,128)}', space=vmem, size = 0x12000, scoped, tag = 'internal scratch']
  %s0 = inlined_call_operand.vmem [shape: bf16[2,8,8,16], index: 0, kind: input, shape index: {}]
  %s1 = inlined_call_operand.vmem [shape: bf16[2,16,16], index: 1, kind: input, shape index: {}]
  %s2 = inlined_call_operand.vmem [shape: f32[1,16], index: 2, kind: input, shape index: {}]
  %s3 = inlined_call_operand.vmem [shape: bf16[2,8,2,8,16], index: 3, kind: output, shape index: {}]
  %s4 = sld [smem:[#allocation0]]
  $region45: #{_lambda_.12} parent=0
    _
  %s6 = ssub.s32 1, %s4
  %s7 = scalar_select 0, %s6, %s4
  loop: start=0, step=1, limit=4
  $region2: #{_lambda_.12} parent=0 // loop_pre_header
    _
  $region3: #{_lambda_.12} parent=0 // loop_header
    %s9 = sphi 0, %s13
    %p10 = scmp.ge.s32.totalorder %s9, 4
    %s16 = sphi 0, %s28
    %s17 = sphi 0, %s24
    %s18 = sphi 0, %s16
    %s19 = sphi 0, %s17
    %s20 = sphi 0, %s18
    %s21 = sphi 0, %s19
    %s33 = sphi 0, %s35
    %s36 = sphi 0, %s33
    %s37 = sphi 0, %s36
    %s53 = sphi 0, %s37
    %s57 = sphi 0, %s57
    %s59 = sphi 0, %s57
    %s60 = sphi 0, %s59
    %s74 = sphi 0, %s60
    %s78 = sphi 0, %s78
    %s80 = sphi 0, %s78
    %s81 = sphi 0, %s80
    %s95 = sphi 0, %s81
    %s103 = sphi 0, %s105
    %s106 = sphi 0, %s103
    %s107 = sphi 0, %s106
    %s123 = sphi 0, %s107
  $region4: #{_lambda_.12} parent=0 // loop_header_branch
    %12 = sbr.rel (%p10) target = $region8
  $region5: #{_lambda_.12} parent=0 // loop_body
    %s14 = ssub.s32 %s9, 1
    %s15 = ssub.s32 %s9, 2
    %s22 = sadd.s32 1, %s17
    %p23 = scmp.ge.s32.totalorder %s22, 1
    %s24 = scalar_select %p23, 0, %s22
    %s25 = sadd.s32 1, %s16
    %s26 = scalar_select %p23, %s25, %s16
    %p27 = scmp.ge.s32.totalorder %s26, 2
    %s28 = scalar_select %p27, 0, %s26
    %s29 = ssub.s32 %s16, %s28
    %s30 = ssub.s32 %s17, %s24
    %s31 = sor.u32 %s29, %s30
    %p32 = scmp.eq.s32.totalorder %s31, 0
    %s34 = sadd.s32 %s33, 1
    %s35 = scalar_select %p32, %s33, %s34
    %p38 = pneg %p32
    %p39 = scmp.eq.s32.totalorder %s9, 1
    %p40 = por %p38, %p39
    %p41 = scmp.ne.s32.totalorder %s33, %s36
    %p42 = scmp.eq.s32.totalorder %s9, 0
    %p43 = por %p41, %p42
    %p44 = scmp.ne.s32.totalorder %s33, %s36
    %p45 = scmp.eq.s32.totalorder %s14, 1
    %p46 = por %p44, %p45
    %p47 = scmp.ne.s32.totalorder %s36, %s37
    %p48 = scmp.eq.s32.totalorder %s14, 0
    %p49 = por %p47, %p48
    %p50 = scmp.ne.s32.totalorder %s36, %s37
    %p51 = scmp.eq.s32.totalorder %s15, 1
    %p52 = por %p50, %p51
    %p54 = scmp.ne.s32.totalorder %s37, %s53
    %p55 = scmp.eq.s32.totalorder %s15, 0
    %p56 = por %p54, %p55
    %s58 = sadd.s32 %s57, 1
    %p61 = scmp.eq.s32.totalorder %s9, 1
    %p62 = scmp.ne.s32.totalorder %s57, %s59
    %p63 = scmp.eq.s32.totalorder %s9, 0
    %p64 = por %p62, %p63
    %p65 = scmp.ne.s32.totalorder %s57, %s59
    %p66 = scmp.eq.s32.totalorder %s14, 1
    %p67 = por %p65, %p66
    %p68 = scmp.ne.s32.totalorder %s59, %s60
    %p69 = scmp.eq.s32.totalorder %s14, 0
    %p70 = por %p68, %p69
    %p71 = scmp.ne.s32.totalorder %s59, %s60
    %p72 = scmp.eq.s32.totalorder %s15, 1
    %p73 = por %p71, %p72
    %p75 = scmp.ne.s32.totalorder %s60, %s74
    %p76 = scmp.eq.s32.totalorder %s15, 0
    %p77 = por %p75, %p76
    %s79 = sadd.s32 %s78, 1
    %p82 = scmp.eq.s32.totalorder %s9, 1
    %p83 = scmp.ne.s32.totalorder %s78, %s80
    %p84 = scmp.eq.s32.totalorder %s9, 0
    %p85 = por %p83, %p84
    %p86 = scmp.ne.s32.totalorder %s78, %s80
    %p87 = scmp.eq.s32.totalorder %s14, 1
    %p88 = por %p86, %p87
    %p89 = scmp.ne.s32.totalorder %s80, %s81
    %p90 = scmp.eq.s32.totalorder %s14, 0
    %p91 = por %p89, %p90
    %p92 = scmp.ne.s32.totalorder %s80, %s81
    %p93 = scmp.eq.s32.totalorder %s15, 1
    %p94 = por %p92, %p93
    %p96 = scmp.ne.s32.totalorder %s81, %s95
    %p97 = scmp.eq.s32.totalorder %s15, 0
    %p98 = por %p96, %p97
    %s99 = ssub.s32 %s16, %s28
    %s100 = ssub.s32 %s17, %s24
    %s101 = sor.u32 %s99, %s100
    %p102 = scmp.eq.s32.totalorder %s101, 0
    %s104 = sadd.s32 %s103, 1
    %s105 = scalar_select %p102, %s103, %s104
    %p108 = pneg %p102
    %p109 = scmp.eq.s32.totalorder %s9, 1
    %p110 = por %p108, %p109
    %p111 = scmp.ne.s32.totalorder %s103, %s106
    %p112 = scmp.eq.s32.totalorder %s9, 0
    %p113 = por %p111, %p112
    %p114 = scmp.ne.s32.totalorder %s103, %s106
    %p115 = scmp.eq.s32.totalorder %s14, 1
    %p116 = por %p114, %p115
    %p117 = scmp.ne.s32.totalorder %s106, %s107
    %p118 = scmp.eq.s32.totalorder %s14, 0
    %p119 = por %p117, %p118
    %p120 = scmp.ne.s32.totalorder %s106, %s107
    %p121 = scmp.eq.s32.totalorder %s15, 1
    %p122 = por %p120, %p121
    %p124 = scmp.ne.s32.totalorder %s107, %s123
    %p125 = scmp.eq.s32.totalorder %s15, 0
    %p126 = por %p124, %p125
    %p127 = scmp.le.s32.totalorder 1, %s9
    %p128 = scmp.lt.s32.totalorder %s9, 3
    %p129 = pnand %p127, %p128
    %p130 = pneg %p129
    // Predicated region
    $region9: #{_lambda_.12} parent=5 // pred_check
      _
    $region10: #{_lambda_.12} parent=5 // pred_check_branch
      %132 = sbr.rel (%p129) target = $region12
    $region11: #{_lambda_.12} parent=5 // pred_region
      %s133 = ssub.s32 %s9, 1
      // Predicated region
      $region13: #{_lambda_.12} parent=11 // pred_check
        %p134 = pneg %p70
      $region14: #{_lambda_.12} parent=11 // pred_check_branch
        %136 = sbr.rel (%p134) target = $region16
      $region15: #{_lambda_.12} parent=11 // pred_region
        _
      $region16: #{_lambda_.12} parent=11 // pred_fallthru
        _
      // Predicated region
      $region17: #{_lambda_.12} parent=11 // pred_check
        %p137 = pneg %p91
      $region18: #{_lambda_.12} parent=11 // pred_check_branch
        %139 = sbr.rel (%p137) target = $region20
      $region19: #{_lambda_.12} parent=11 // pred_region
        _
      $region20: #{_lambda_.12} parent=11 // pred_fallthru
        _
    $region12: #{_lambda_.12} parent=5 // pred_fallthru
      _
    %p140 = scmp.lt.s32.totalorder %s9, 2
    // Predicated region
    $region21: #{_lambda_.12} parent=5 // pred_check
      %p141 = pneg %p140
    $region22: #{_lambda_.12} parent=5 // pred_check_branch
      %143 = sbr.rel (%p141) target = $region24
    $region23: #{_lambda_.12} parent=5 // pred_region
      // Predicated region
      $region25: #{_lambda_.12} parent=23 // pred_check
        %p144 = pneg %p43
      $region26: #{_lambda_.12} parent=23 // pred_check_branch
        %146 = sbr.rel (%p144) target = $region28
      $region27: #{_lambda_.12} parent=23 // pred_region
        %s147 = smul.u32 8, %s17
        %p148 = scmp.lt.s32.totalorder %s16, 1
        %s149 = scalar_select %p148, %s16, 1
        %p150 = scmp.lt.s32.totalorder %s147, 7
        %s151 = scalar_select %p150, %s147, 7
        %s152 = smul.addr %s149, 8
        %s153 = sadd.s32 %s151, %s152
        %s154 = smul.addr %s153, 4
        %s155 = scalar_lea.vmem %s0, %s154
        %s156 = smul.u32 8, %s17
      $region28: #{_lambda_.12} parent=23 // pred_fallthru
        _
    $region24: #{_lambda_.12} parent=5 // pred_fallthru
      _
    %p157 = scmp.le.s32.totalorder 1, %s9
    %p158 = scmp.lt.s32.totalorder %s9, 3
    %p159 = pnand %p157, %p158
    %p160 = pneg %p159
    // Predicated region
    $region29: #{_lambda_.12} parent=5 // pred_check
      _
    $region30: #{_lambda_.12} parent=5 // pred_check_branch
      %162 = sbr.rel (%p159) target = $region32
    $region31: #{_lambda_.12} parent=5 // pred_region
      %s163 = ssub.s32 %s9, 1
      %s164 = smul.u32 8, %s19
      %p165 = scmp.lt.s32.totalorder %s18, 1
      %s166 = scalar_select %p165, %s18, 1
      %p167 = scmp.lt.s32.totalorder %s164, 7
      %s168 = scalar_select %p167, %s164, 7
      %s169 = smul.addr %s166, 8
      %s170 = sadd.s32 %s168, %s169
      %s171 = smul.addr %s170, 4
      %s172 = scalar_lea.vmem %s0, %s171
      %p173 = pneg %p49
      %p174 = pneg %p46
      %p175 = pneg %p70
      %p176 = pneg %p67
      %p177 = pneg %p91
      %p178 = pneg %p88
      %p179 = pneg %p119
      %p180 = pneg %p116
      %s181 = smul.u32 8, %s19
      %p182 = scmp.lt.s32.totalorder %s18, 1
      %s183 = scalar_select %p182, %s18, 1
      %p184 = scmp.lt.s32.totalorder %s181, 7
      %s185 = scalar_select %p184, %s181, 7
      %s186 = smul.addr %s185, 2
      %s187 = smul.addr %s183, 16
      %s188 = sadd.s32 %s186, %s187
      %s189 = smul.addr %s188, 4
      %s190 = scalar_lea.vmem %s3, %s189
      %s191 = smul.u32 8, %s19
      %p192 = scmp.lt.s32.totalorder %s18, 1
      %s193 = scalar_select %p192, %s18, 1
      %p194 = scmp.lt.s32.totalorder %s191, 7
      %s195 = scalar_select %p194, %s191, 7
      %s196 = smul.addr %s193, 8
      %s197 = sadd.s32 %s195, %s196
      %s198 = smul.addr %s197, 4
      %s199 = scalar_lea.vmem %s0, %s198
      %s200 = smul.u32 8, %s19
      %s201 = smul.u32 8, %s19
      %p202 = scmp.lt.s32.totalorder %s18, 1
      %s203 = scalar_select %p202, %s18, 1
      %p204 = scmp.lt.s32.totalorder %s201, 7
      %s205 = scalar_select %p204, %s201, 7
      %s206 = smul.addr %s205, 2
      %s207 = smul.addr %s203, 16
      %s208 = sadd.s32 %s206, %s207
      %s209 = smul.addr %s208, 4
      %s210 = scalar_lea.vmem %s3, %s209
      %s211 = smul.u32 8, %s19
      %v213 = vld [vmem:[%s199] sm:$0xf]
      %v214 = vld [vmem:[%s199 + $0x4] sm:$0xf]
      %v215 = vld [vmem:[%s199 + $0x8] sm:$0xf]
      %v216 = vld [vmem:[%s199 + $0xc] sm:$0xf]
      %v217 = vld [vmem:[%s199 + $0x10] sm:$0xf]
      %v218 = vld [vmem:[%s199 + $0x14] sm:$0xf]
      %v219 = vld [vmem:[%s199 + $0x18] sm:$0xf]
      %v220 = vld [vmem:[%s199 + $0x1c] sm:$0xf]
      %v221 = vld [vmem:[%s1] sm:$0xf]
      %v222 = vld [vmem:[%s1 + $0x4] sm:$0xf]
      %v223 = vld [vmem:[%s1 + $0x8] sm:$0xf]
      %v224 = vld [vmem:[%s1 + $0xc] sm:$0xf]
      %v225 = vld [vmem:[%s2] sm:$0x1]
      %v227 = vlaneseq
      %v228 = vshrl.u32 %v227, 7
      %v229 = vsub.s32 0, %v228
      %v230 = vrot.slane %v225, %v229
      %v240 = vunpack.c.l.b16 %v213
      %v241 = vunpack.c.l.b16 %v214
      %v242 = vunpack.c.l.b16 %v215
      %v243 = vunpack.c.l.b16 %v216
      %v244 = vunpack.c.l.b16 %v217
      %v245 = vunpack.c.l.b16 %v218
      %v246 = vunpack.c.l.b16 %v219
      %v247 = vunpack.c.l.b16 %v220
      %v248 = vpack.c.b16 %v241, %v240
      %v249 = vpack.c.b16 %v243, %v242
      %v250 = vpack.c.b16 %v245, %v244
      %v251 = vpack.c.b16 %v247, %v246
      %v254 = vunpack.c.l.b16 %v221
      %v255 = vunpack.c.l.b16 %v222
      %v256 = vpack.c.b16 %v255, %v254
      %vm258 = vcmask 130048
      %v260 = vsel %vm258, %v248, 0
      %v263 = vsel %vm258, %v249, 0
      %v266 = vsel %vm258, %v250, 0
      %v269 = vsel %vm258, %v251, 0
      %271 = vmatprep.subr.bf16.mxu0 0
      %272 = vmatpush1.bf16.msra.mxu0 %v256
      %273 = vmatprep.subr.bf16.mxu0 0
      %274 = vmatpush1.bf16.msra.mxu0 0
      %275 = vmatprep.subr.bf16.mxu0 0
      %276 = vmatpush1.bf16.msra.mxu0 0
      %277 = vmatprep.subr.bf16.mxu0 0
      %278 = vmatpush1.bf16.msra.mxu0 0
      %279 = vmatprep.subr.bf16.mxu0 0
      %280 = vmatpush1.bf16.msra.mxu0 0
      %281 = vmatprep.subr.bf16.mxu0 0
      %282 = vmatpush1.bf16.msra.mxu0 0
      %283 = vmatprep.subr.bf16.mxu0 0
      %284 = vmatpush1.bf16.msra.mxu0 0
      %285 = vmatprep.subr.bf16.mxu0 0
      %286 = vmatpush1.bf16.msra.mxu0 0
      %287 = vmatprep.subr.bf16.mxu0 0
      %288 = vmatpush1.bf16.msra.mxu0 0
      %289 = vmatprep.subr.bf16.mxu0 0
      %290 = vmatpush1.bf16.msra.mxu0 0
      %291 = vmatprep.subr.bf16.mxu0 0
      %292 = vmatpush1.bf16.msra.mxu0 0
      %293 = vmatprep.subr.bf16.mxu0 0
      %294 = vmatpush1.bf16.msra.mxu0 0
      %295 = vmatprep.subr.bf16.mxu0 0
      %296 = vmatpush1.bf16.msra.mxu0 0
      %297 = vmatprep.subr.bf16.mxu0 0
      %298 = vmatpush1.bf16.msra.mxu0 0
      %299 = vmatprep.subr.bf16.mxu0 0
      %300 = vmatpush1.bf16.msra.mxu0 0
      %301 = vmatprep.subr.bf16.mxu0 0
      %302 = vmatpush1.bf16.msra.mxu0 0
      %303 = vmatprep.mubr.bf16.mxu0 0
      %304 = vmatmul.mubr.bf16.gmra.mrb[0].mxu0 %v260
      %v305 = vpop.f32.mrb[0].mxu0
      %v306 = vadd.f32 %v230, %v305
      %v307 = vpop.f32.mrb[0].mxu0
      %v308 = vpop.f32.mrb[0].mxu0
      %v309 = vadd.f32 %v230, %v308
      %v310 = vpop.f32.mrb[0].mxu0
      %311 = vmatprep.mubr.bf16.mxu0 0
      %312 = vmatmul.mubr.bf16.gmra.mrb[0].mxu0 %v263
      %v313 = vpop.f32.mrb[0].mxu0
      %v314 = vadd.f32 %v230, %v313
      %v315 = vpop.f32.mrb[0].mxu0
      %v316 = vpop.f32.mrb[0].mxu0
      %v317 = vadd.f32 %v230, %v316
      %v318 = vpop.f32.mrb[0].mxu0
      %319 = vmatprep.mubr.bf16.mxu0 0
      %320 = vmatmul.mubr.bf16.gmra.mrb[0].mxu0 %v266
      %v321 = vpop.f32.mrb[0].mxu0
      %v322 = vadd.f32 %v230, %v321
      %v323 = vpop.f32.mrb[0].mxu0
      %v324 = vpop.f32.mrb[0].mxu0
      %v325 = vadd.f32 %v230, %v324
      %v326 = vpop.f32.mrb[0].mxu0
      %327 = vmatprep.mubr.bf16.mxu0 0
      %328 = vmatmul.mubr.bf16.gmra.mrb[0].mxu0 %v269
      %v329 = vpop.f32.mrb[0].mxu0
      %v330 = vadd.f32 %v230, %v329
      %v331 = vpop.f32.mrb[0].mxu0
      %v332 = vpop.f32.mrb[0].mxu0
      %v333 = vadd.f32 %v230, %v332
      %v334 = vpop.f32.mrb[0].mxu0
      %335 = vdwg.mxu0
      %v336 = vmax.f32 %v306, 0.0
      %v337 = vmax.f32 %v309, 0.0
      %v338 = vmax.f32 %v314, 0.0
      %v339 = vmax.f32 %v317, 0.0
      %v340 = vmax.f32 %v322, 0.0
      %v341 = vmax.f32 %v325, 0.0
      %v342 = vmax.f32 %v330, 0.0
      %v343 = vmax.f32 %v333, 0.0
      %v346 = vunpack.c.l.b16 %v223
      %v347 = vunpack.c.l.b16 %v224
      %v348 = vpack.c.b16 %v347, %v346
      %350 = vmatprep.subr.bf16.mxu0 0
      %351 = vmatpush1.bf16.msra.mxu0 %v348
      %352 = vmatprep.subr.bf16.mxu0 0
      %353 = vmatpush1.bf16.msra.mxu0 0
      %354 = vmatprep.subr.bf16.mxu0 0
      %355 = vmatpush1.bf16.msra.mxu0 0
      %356 = vmatprep.subr.bf16.mxu0 0
      %357 = vmatpush1.bf16.msra.mxu0 0
      %358 = vmatprep.subr.bf16.mxu0 0
      %359 = vmatpush1.bf16.msra.mxu0 0
      %360 = vmatprep.subr.bf16.mxu0 0
      %361 = vmatpush1.bf16.msra.mxu0 0
      %362 = vmatprep.subr.bf16.mxu0 0
      %363 = vmatpush1.bf16.msra.mxu0 0
      %364 = vmatprep.subr.bf16.mxu0 0
      %365 = vmatpush1.bf16.msra.mxu0 0
      %366 = vmatprep.subr.bf16.mxu0 0
      %367 = vmatpush1.bf16.msra.mxu0 0
      %368 = vmatprep.subr.bf16.mxu0 0
      %369 = vmatpush1.bf16.msra.mxu0 0
      %370 = vmatprep.subr.bf16.mxu0 0
      %371 = vmatpush1.bf16.msra.mxu0 0
      %372 = vmatprep.subr.bf16.mxu0 0
      %373 = vmatpush1.bf16.msra.mxu0 0
      %374 = vmatprep.subr.bf16.mxu0 0
      %375 = vmatpush1.bf16.msra.mxu0 0
      %376 = vmatprep.subr.bf16.mxu0 0
      %377 = vmatpush1.bf16.msra.mxu0 0
      %378 = vmatprep.subr.bf16.mxu0 0
      %379 = vmatpush1.bf16.msra.mxu0 0
      %380 = vmatprep.subr.bf16.mxu0 0
      %381 = vmatpush1.bf16.msra.mxu0 0
      %382 = vmatprep.mubr.bf16.mxu0 0
      %383 = vmatmul.mubr.bf16.gmra.mrb[0].mxu0 %v260
      %v384 = vpop.f32.mrb[0].mxu0
      %v385 = vadd.f32 %v230, %v384
      %v386 = vpop.f32.mrb[0].mxu0
      %v387 = vpop.f32.mrb[0].mxu0
      %v388 = vadd.f32 %v230, %v387
      %v389 = vpop.f32.mrb[0].mxu0
      %390 = vmatprep.mubr.bf16.mxu0 0
      %391 = vmatmul.mubr.bf16.gmra.mrb[0].mxu0 %v263
      %v392 = vpop.f32.mrb[0].mxu0
      %v393 = vadd.f32 %v230, %v392
      %v394 = vpop.f32.mrb[0].mxu0
      %v395 = vpop.f32.mrb[0].mxu0
      %v396 = vadd.f32 %v230, %v395
      %v397 = vpop.f32.mrb[0].mxu0
      %398 = vmatprep.mubr.bf16.mxu0 0
      %399 = vmatmul.mubr.bf16.gmra.mrb[0].mxu0 %v266
      %v400 = vpop.f32.mrb[0].mxu0
      %v401 = vadd.f32 %v230, %v400
      %v402 = vpop.f32.mrb[0].mxu0
      %v403 = vpop.f32.mrb[0].mxu0
      %v404 = vadd.f32 %v230, %v403
      %v405 = vpop.f32.mrb[0].mxu0
      %406 = vmatprep.mubr.bf16.mxu0 0
      %407 = vmatmul.mubr.bf16.gmra.mrb[0].mxu0 %v269
      %v408 = vpop.f32.mrb[0].mxu0
      %v409 = vadd.f32 %v230, %v408
      %v410 = vpop.f32.mrb[0].mxu0
      %v411 = vpop.f32.mrb[0].mxu0
      %v412 = vadd.f32 %v230, %v411
      %v413 = vpop.f32.mrb[0].mxu0
      %414 = vdwg.mxu0
      %v415 = vmax.f32 %v385, 0.0
      %v416 = vmax.f32 %v388, 0.0
      %v417 = vmax.f32 %v393, 0.0
      %v418 = vmax.f32 %v396, 0.0
      %v419 = vmax.f32 %v401, 0.0
      %v420 = vmax.f32 %v404, 0.0
      %v421 = vmax.f32 %v409, 0.0
      %v422 = vmax.f32 %v412, 0.0
      %v423 = vpack.c.bf16 %v336, %v336
      %v424 = vpack.c.bf16 %v415, %v415
      %v425 = vpack.c.bf16 %v337, %v337
      %v426 = vpack.c.bf16 %v416, %v416
      %v427 = vpack.c.bf16 %v338, %v338
      %v428 = vpack.c.bf16 %v417, %v417
      %v429 = vpack.c.bf16 %v339, %v339
      %v430 = vpack.c.bf16 %v418, %v418
      %v431 = vpack.c.bf16 %v340, %v340
      %v432 = vpack.c.bf16 %v419, %v419
      %v433 = vpack.c.bf16 %v341, %v341
      %v434 = vpack.c.bf16 %v420, %v420
      %v435 = vpack.c.bf16 %v342, %v342
      %v436 = vpack.c.bf16 %v421, %v421
      %v437 = vpack.c.bf16 %v343, %v343
      %v438 = vpack.c.bf16 %v422, %v422
      %vm439 = vcmask 125952
      %440 = vst.msk [vmem:[%s210] sm:$0xf] %vm439, %v423
      %441 = vst.msk [vmem:[%s210 + $0x4] sm:$0xf] %vm439, %v424
      %442 = vst.msk [vmem:[%s210 + $0x8] sm:$0xf] %vm439, %v425
      %443 = vst.msk [vmem:[%s210 + $0xc] sm:$0xf] %vm439, %v426
      %444 = vst.msk [vmem:[%s210 + $0x10] sm:$0xf] %vm439, %v427
      %445 = vst.msk [vmem:[%s210 + $0x14] sm:$0xf] %vm439, %v428
      %446 = vst.msk [vmem:[%s210 + $0x18] sm:$0xf] %vm439, %v429
      %447 = vst.msk [vmem:[%s210 + $0x1c] sm:$0xf] %vm439, %v430
      %448 = vst.msk [vmem:[%s210 + $0x20] sm:$0xf] %vm439, %v431
      %449 = vst.msk [vmem:[%s210 + $0x24] sm:$0xf] %vm439, %v432
      %450 = vst.msk [vmem:[%s210 + $0x28] sm:$0xf] %vm439, %v433
      %451 = vst.msk [vmem:[%s210 + $0x2c] sm:$0xf] %vm439, %v434
      %452 = vst.msk [vmem:[%s210 + $0x30] sm:$0xf] %vm439, %v435
      %453 = vst.msk [vmem:[%s210 + $0x34] sm:$0xf] %vm439, %v436
      %454 = vst.msk [vmem:[%s210 + $0x38] sm:$0xf] %vm439, %v437
      %455 = vst.msk [vmem:[%s210 + $0x3c] sm:$0xf] %vm439, %v438
      %s456 = smul.u32 8, %s19
      %p457 = scmp.lt.s32.totalorder %s18, 1
      %s458 = scalar_select %p457, %s18, 1
      %p459 = scmp.lt.s32.totalorder %s456, 7
      %s460 = scalar_select %p459, %s456, 7
      %s461 = smul.addr %s460, 2
      %s462 = smul.addr %s458, 16
      %s463 = sadd.s32 %s461, %s462
      %s464 = smul.addr %s463, 4
      %s465 = scalar_lea.vmem %s3, %s464
      // Predicated region
      $region33: #{_lambda_.12} parent=31 // pred_check
        %p466 = pneg %p116
      $region34: #{_lambda_.12} parent=31 // pred_check_branch
        %468 = sbr.rel (%p466) target = $region36
      $region35: #{_lambda_.12} parent=31 // pred_region
        %s469 = smul.u32 8, %s19
      $region36: #{_lambda_.12} parent=31 // pred_fallthru
        _
    $region32: #{_lambda_.12} parent=5 // pred_fallthru
      _
    %p470 = scmp.le.s32.totalorder 2, %s9
    // Predicated region
    $region37: #{_lambda_.12} parent=5 // pred_check
      %p471 = pneg %p470
    $region38: #{_lambda_.12} parent=5 // pred_check_branch
      %473 = sbr.rel (%p471) target = $region40
    $region39: #{_lambda_.12} parent=5 // pred_region
      %s474 = ssub.s32 %s9, 2
      // Predicated region
      $region41: #{_lambda_.12} parent=39 // pred_check
        %p475 = pneg %p122
      $region42: #{_lambda_.12} parent=39 // pred_check_branch
        %477 = sbr.rel (%p475) target = $region44
      $region43: #{_lambda_.12} parent=39 // pred_region
        %s478 = smul.u32 8, %s21
        %p479 = scmp.lt.s32.totalorder %s20, 1
        %s480 = scalar_select %p479, %s20, 1
        %p481 = scmp.lt.s32.totalorder %s478, 7
        %s482 = scalar_select %p481, %s478, 7
        %s483 = smul.addr %s482, 2
        %s484 = smul.addr %s480, 16
        %s485 = sadd.s32 %s483, %s484
        %s486 = smul.addr %s485, 4
        %s487 = scalar_lea.vmem %s3, %s486
      $region44: #{_lambda_.12} parent=39 // pred_fallthru
        _
    $region40: #{_lambda_.12} parent=5 // pred_fallthru
      _
  $region6: #{_lambda_.12} parent=0 // loop_footer
    %s13 = sadd.s32 1, %s9
  $region7: #{_lambda_.12} parent=0 // loop_footer_branch
    %8 = sbr.rel target = $region3
  $region8: #{_lambda_.12} parent=0 // loop_exit
    _

// kernel: _lambda_.11
$region0: #{_lambda_.11}
  #allocation0 [shape = 'u32[]', space=smem, size = 0x4, offset = 0x4, fixed_abs, tag = 'smem constant byte address 0x4 - core index']
  #allocation1 [shape = 'u32[144,128]{1,0:T(1,128)}', space=vmem, size = 0x12000, scoped, tag = 'internal scratch']
  %s0 = inlined_call_operand.vmem [shape: bf16[2,10,10,16], index: 0, kind: input, shape index: {}, may-alias: {0,1,2}]
  %s1 = inlined_call_operand.vmem [shape: bf16[2,10,10,16], index: 1, kind: input, shape index: {}, may-alias: {0,1,2}]
  %s2 = inlined_call_operand.vmem [shape: bf16[2,10,10,16], index: 2, kind: input, shape index: {}, may-alias: {0,1,2}]
  %s3 = inlined_call_operand.vmem [shape: bf16[144,16], index: 3, kind: input, shape index: {}]
  %s4 = inlined_call_operand.vmem [shape: f32[1,16], index: 4, kind: input, shape index: {}]
  %s5 = inlined_call_operand.vmem [shape: bf16[2,8,8,16], index: 5, kind: output, shape index: {}]
  %s6 = sld [smem:[#allocation0]]
  $region53: #{_lambda_.11} parent=0
    _
  %s8 = ssub.s32 1, %s6
  %s9 = scalar_select 0, %s8, %s6
  loop: start=0, step=1, limit=4
  $region2: #{_lambda_.11} parent=0 // loop_pre_header
    _
  $region3: #{_lambda_.11} parent=0 // loop_header
    %s11 = sphi 0, %s15
    %p12 = scmp.ge.s32.totalorder %s11, 4
    %s18 = sphi 0, %s30
    %s19 = sphi 0, %s26
    %s20 = sphi 0, %s18
    %s21 = sphi 0, %s19
    %s22 = sphi 0, %s20
    %s23 = sphi 0, %s21
    %s35 = sphi 0, %s37
    %s38 = sphi 0, %s35
    %s39 = sphi 0, %s38
    %s55 = sphi 0, %s39
    %s67 = sphi 0, %s69
    %s70 = sphi 0, %s67
    %s71 = sphi 0, %s70
    %s87 = sphi 0, %s71
    %s101 = sphi 0, %s103
    %s104 = sphi 0, %s101
    %s105 = sphi 0, %s104
    %s121 = sphi 0, %s105
    %s125 = sphi 0, %s125
    %s127 = sphi 0, %s125
    %s128 = sphi 0, %s127
    %s142 = sphi 0, %s128
    %s146 = sphi 0, %s146
    %s148 = sphi 0, %s146
    %s149 = sphi 0, %s148
    %s163 = sphi 0, %s149
    %s171 = sphi 0, %s173
    %s174 = sphi 0, %s171
    %s175 = sphi 0, %s174
    %s191 = sphi 0, %s175
  $region4: #{_lambda_.11} parent=0 // loop_header_branch
    %14 = sbr.rel (%p12) target = $region8
  $region5: #{_lambda_.11} parent=0 // loop_body
    %s16 = ssub.s32 %s11, 1
    %s17 = ssub.s32 %s11, 2
    %s24 = sadd.s32 1, %s19
    %p25 = scmp.ge.s32.totalorder %s24, 1
    %s26 = scalar_select %p25, 0, %s24
    %s27 = sadd.s32 1, %s18
    %s28 = scalar_select %p25, %s27, %s18
    %p29 = scmp.ge.s32.totalorder %s28, 2
    %s30 = scalar_select %p29, 0, %s28
    %s31 = ssub.s32 %s18, %s30
    %s32 = ssub.s32 %s19, %s26
    %s33 = sor.u32 %s31, %s32
    %p34 = scmp.eq.s32.totalorder %s33, 0
    %s36 = sadd.s32 %s35, 1
    %s37 = scalar_select %p34, %s35, %s36
    %p40 = pneg %p34
    %p41 = scmp.eq.s32.totalorder %s11, 1
    %p42 = por %p40, %p41
    %p43 = scmp.ne.s32.totalorder %s35, %s38
    %p44 = scmp.eq.s32.totalorder %s11, 0
    %p45 = por %p43, %p44
    %p46 = scmp.ne.s32.totalorder %s35, %s38
    %p47 = scmp.eq.s32.totalorder %s16, 1
    %p48 = por %p46, %p47
    %p49 = scmp.ne.s32.totalorder %s38, %s39
    %p50 = scmp.eq.s32.totalorder %s16, 0
    %p51 = por %p49, %p50
    %p52 = scmp.ne.s32.totalorder %s38, %s39
    %p53 = scmp.eq.s32.totalorder %s17, 1
    %p54 = por %p52, %p53
    %p56 = scmp.ne.s32.totalorder %s39, %s55
    %p57 = scmp.eq.s32.totalorder %s17, 0
    %p58 = por %p56, %p57
    %s59 = sadd.s32 %s19, 1
    %s60 = smul.u32 %s59, 8
    %s61 = sadd.s32 %s26, 1
    %s62 = smul.u32 %s61, 8
    %s63 = ssub.s32 %s18, %s30
    %s64 = ssub.s32 %s60, %s62
    %s65 = sor.u32 %s63, %s64
    %p66 = scmp.eq.s32.totalorder %s65, 0
    %s68 = sadd.s32 %s67, 1
    %s69 = scalar_select %p66, %s67, %s68
    %p72 = pneg %p66
    %p73 = scmp.eq.s32.totalorder %s11, 1
    %p74 = por %p72, %p73
    %p75 = scmp.ne.s32.totalorder %s67, %s70
    %p76 = scmp.eq.s32.totalorder %s11, 0
    %p77 = por %p75, %p76
    %p78 = scmp.ne.s32.totalorder %s67, %s70
    %p79 = scmp.eq.s32.totalorder %s16, 1
    %p80 = por %p78, %p79
    %p81 = scmp.ne.s32.totalorder %s70, %s71
    %p82 = scmp.eq.s32.totalorder %s16, 0
    %p83 = por %p81, %p82
    %p84 = scmp.ne.s32.totalorder %s70, %s71
    %p85 = scmp.eq.s32.totalorder %s17, 1
    %p86 = por %p84, %p85
    %p88 = scmp.ne.s32.totalorder %s71, %s87
    %p89 = scmp.eq.s32.totalorder %s17, 0
    %p90 = por %p88, %p89
    %s91 = sadd.s32 %s19, 1
    %s92 = smul.u32 %s91, 8
    %s93 = sadd.s32 %s92, 1
    %s94 = sadd.s32 %s26, 1
    %s95 = smul.u32 %s94, 8
    %s96 = sadd.s32 %s95, 1
    %s97 = ssub.s32 %s18, %s30
    %s98 = ssub.s32 %s93, %s96
    %s99 = sor.u32 %s97, %s98
    %p100 = scmp.eq.s32.totalorder %s99, 0
    %s102 = sadd.s32 %s101, 1
    %s103 = scalar_select %p100, %s101, %s102
    %p106 = pneg %p100
    %p107 = scmp.eq.s32.totalorder %s11, 1
    %p108 = por %p106, %p107
    %p109 = scmp.ne.s32.totalorder %s101, %s104
    %p110 = scmp.eq.s32.totalorder %s11, 0
    %p111 = por %p109, %p110
    %p112 = scmp.ne.s32.totalorder %s101, %s104
    %p113 = scmp.eq.s32.totalorder %s16, 1
    %p114 = por %p112, %p113
    %p115 = scmp.ne.s32.totalorder %s104, %s105
    %p116 = scmp.eq.s32.totalorder %s16, 0
    %p117 = por %p115, %p116
    %p118 = scmp.ne.s32.totalorder %s104, %s105
    %p119 = scmp.eq.s32.totalorder %s17, 1
    %p120 = por %p118, %p119
    %p122 = scmp.ne.s32.totalorder %s105, %s121
    %p123 = scmp.eq.s32.totalorder %s17, 0
    %p124 = por %p122, %p123
    %s126 = sadd.s32 %s125, 1
    %p129 = scmp.eq.s32.totalorder %s11, 1
    %p130 = scmp.ne.s32.totalorder %s125, %s127
    %p131 = scmp.eq.s32.totalorder %s11, 0
    %p132 = por %p130, %p131
    %p133 = scmp.ne.s32.totalorder %s125, %s127
    %p134 = scmp.eq.s32.totalorder %s16, 1
    %p135 = por %p133, %p134
    %p136 = scmp.ne.s32.totalorder %s127, %s128
    %p137 = scmp.eq.s32.totalorder %s16, 0
    %p138 = por %p136, %p137
    %p139 = scmp.ne.s32.totalorder %s127, %s128
    %p140 = scmp.eq.s32.totalorder %s17, 1
    %p141 = por %p139, %p140
    %p143 = scmp.ne.s32.totalorder %s128, %s142
    %p144 = scmp.eq.s32.totalorder %s17, 0
    %p145 = por %p143, %p144
    %s147 = sadd.s32 %s146, 1
    %p150 = scmp.eq.s32.totalorder %s11, 1
    %p151 = scmp.ne.s32.totalorder %s146, %s148
    %p152 = scmp.eq.s32.totalorder %s11, 0
    %p153 = por %p151, %p152
    %p154 = scmp.ne.s32.totalorder %s146, %s148
    %p155 = scmp.eq.s32.totalorder %s16, 1
    %p156 = por %p154, %p155
    %p157 = scmp.ne.s32.totalorder %s148, %s149
    %p158 = scmp.eq.s32.totalorder %s16, 0
    %p159 = por %p157, %p158
    %p160 = scmp.ne.s32.totalorder %s148, %s149
    %p161 = scmp.eq.s32.totalorder %s17, 1
    %p162 = por %p160, %p161
    %p164 = scmp.ne.s32.totalorder %s149, %s163
    %p165 = scmp.eq.s32.totalorder %s17, 0
    %p166 = por %p164, %p165
    %s167 = ssub.s32 %s18, %s30
    %s168 = ssub.s32 %s19, %s26
    %s169 = sor.u32 %s167, %s168
    %p170 = scmp.eq.s32.totalorder %s169, 0
    %s172 = sadd.s32 %s171, 1
    %s173 = scalar_select %p170, %s171, %s172
    %p176 = pneg %p170
    %p177 = scmp.eq.s32.totalorder %s11, 1
    %p178 = por %p176, %p177
    %p179 = scmp.ne.s32.totalorder %s171, %s174
    %p180 = scmp.eq.s32.totalorder %s11, 0
    %p181 = por %p179, %p180
    %p182 = scmp.ne.s32.totalorder %s171, %s174
    %p183 = scmp.eq.s32.totalorder %s16, 1
    %p184 = por %p182, %p183
    %p185 = scmp.ne.s32.totalorder %s174, %s175
    %p186 = scmp.eq.s32.totalorder %s16, 0
    %p187 = por %p185, %p186
    %p188 = scmp.ne.s32.totalorder %s174, %s175
    %p189 = scmp.eq.s32.totalorder %s17, 1
    %p190 = por %p188, %p189
    %p192 = scmp.ne.s32.totalorder %s175, %s191
    %p193 = scmp.eq.s32.totalorder %s17, 0
    %p194 = por %p192, %p193
    %p195 = scmp.le.s32.totalorder 1, %s11
    %p196 = scmp.lt.s32.totalorder %s11, 3
    %p197 = pnand %p195, %p196
    %p198 = pneg %p197
    // Predicated region
    $region9: #{_lambda_.11} parent=5 // pred_check
      _
    $region10: #{_lambda_.11} parent=5 // pred_check_branch
      %200 = sbr.rel (%p197) target = $region12
    $region11: #{_lambda_.11} parent=5 // pred_region
      %s201 = ssub.s32 %s11, 1
      // Predicated region
      $region13: #{_lambda_.11} parent=11 // pred_check
        %p202 = pneg %p138
      $region14: #{_lambda_.11} parent=11 // pred_check_branch
        %204 = sbr.rel (%p202) target = $region16
      $region15: #{_lambda_.11} parent=11 // pred_region
        _
      $region16: #{_lambda_.11} parent=11 // pred_fallthru
        _
      // Predicated region
      $region17: #{_lambda_.11} parent=11 // pred_check
        %p205 = pneg %p159
      $region18: #{_lambda_.11} parent=11 // pred_check_branch
        %207 = sbr.rel (%p205) target = $region20
      $region19: #{_lambda_.11} parent=11 // pred_region
        _
      $region20: #{_lambda_.11} parent=11 // pred_fallthru
        _
    $region12: #{_lambda_.11} parent=5 // pred_fallthru
      _
    %p208 = scmp.lt.s32.totalorder %s11, 2
    // Predicated region
    $region21: #{_lambda_.11} parent=5 // pred_check
      %p209 = pneg %p208
    $region22: #{_lambda_.11} parent=5 // pred_check_branch
      %211 = sbr.rel (%p209) target = $region24
    $region23: #{_lambda_.11} parent=5 // pred_region
      // Predicated region
      $region25: #{_lambda_.11} parent=23 // pred_check
        %p212 = pneg %p45
      $region26: #{_lambda_.11} parent=23 // pred_check_branch
        %214 = sbr.rel (%p212) target = $region28
      $region27: #{_lambda_.11} parent=23 // pred_region
        %s215 = smul.u32 8, %s19
        %s216 = ssub.s32 10, %s215
        %p217 = scmp.lt.s32.totalorder %s216, 8
        %s218 = scalar_select %p217, %s216, 8
        %s219 = smul.u32 64, %s218
        %s220 = smul.u32 %s219, 2
        %p221 = scmp.lt.s32.totalorder %s18, 1
        %s222 = scalar_select %p221, %s18, 1
        %p223 = scmp.lt.s32.totalorder %s215, 9
        %s224 = scalar_select %p223, %s215, 9
        %s225 = smul.addr %s224, 2
        %s226 = smul.addr %s222, 20
        %s227 = sadd.s32 %s225, %s226
        %s228 = smul.addr %s227, 4
        %s229 = scalar_lea.vmem %s0, %s228
        %s230 = smul.u32 8, %s19
        %s231 = ssub.s32 10, %s230
        %p232 = scmp.lt.s32.totalorder %s231, 8
        %s233 = scalar_select %p232, %s231, 8
        %s234 = smul.u32 64, %s233
        %s235 = smul.u32 %s234, 2
      $region28: #{_lambda_.11} parent=23 // pred_fallthru
        _
      // Predicated region
      $region29: #{_lambda_.11} parent=23 // pred_check
        %p236 = pneg %p77
      $region30: #{_lambda_.11} parent=23 // pred_check_branch
        %238 = sbr.rel (%p236) target = $region32
      $region31: #{_lambda_.11} parent=23 // pred_region
        %s239 = sadd.s32 %s19, 1
        %s240 = smul.u32 %s239, 8
        %p241 = scmp.lt.s32.totalorder %s18, 1
        %s242 = scalar_select %p241, %s18, 1
        %p243 = scmp.lt.s32.totalorder %s240, 9
        %s244 = scalar_select %p243, %s240, 9
        %s245 = smul.addr %s244, 2
        %s246 = smul.addr %s242, 20
        %s247 = sadd.s32 %s245, %s246
        %s248 = smul.addr %s247, 4
        %s249 = scalar_lea.vmem %s1, %s248
        %s250 = sadd.s32 %s19, 1
        %s251 = smul.u32 %s250, 8
      $region32: #{_lambda_.11} parent=23 // pred_fallthru
        _
      // Predicated region
      $region33: #{_lambda_.11} parent=23 // pred_check
        %p252 = pneg %p111
      $region34: #{_lambda_.11} parent=23 // pred_check_branch
        %254 = sbr.rel (%p252) target = $region36
      $region35: #{_lambda_.11} parent=23 // pred_region
        %s255 = sadd.s32 %s19, 1
        %s256 = smul.u32 %s255, 8
        %s257 = sadd.s32 %s256, 1
        %p258 = scmp.lt.s32.totalorder %s18, 1
        %s259 = scalar_select %p258, %s18, 1
        %p260 = scmp.lt.s32.totalorder %s257, 9
        %s261 = scalar_select %p260, %s257, 9
        %s262 = smul.addr %s261, 2
        %s263 = smul.addr %s259, 20
        %s264 = sadd.s32 %s262, %s263
        %s265 = smul.addr %s264, 4
        %s266 = scalar_lea.vmem %s2, %s265
        %s267 = sadd.s32 %s19, 1
        %s268 = smul.u32 %s267, 8
        %s269 = sadd.s32 %s268, 1
      $region36: #{_lambda_.11} parent=23 // pred_fallthru
        _
    $region24: #{_lambda_.11} parent=5 // pred_fallthru
      _
    %p270 = scmp.le.s32.totalorder 1, %s11
    %p271 = scmp.lt.s32.totalorder %s11, 3
    %p272 = pnand %p270, %p271
    %p273 = pneg %p272
    // Predicated region
    $region37: #{_lambda_.11} parent=5 // pred_check
      _
    $region38: #{_lambda_.11} parent=5 // pred_check_branch
      %275 = sbr.rel (%p272) target = $region40
    $region39: #{_lambda_.11} parent=5 // pred_region
      %s276 = ssub.s32 %s11, 1
      %s277 = smul.u32 8, %s21
      %s278 = ssub.s32 10, %s277
      %p279 = scmp.lt.s32.totalorder %s278, 8
      %s280 = scalar_select %p279, %s278, 8
      %s281 = smul.u32 64, %s280
      %s282 = smul.u32 %s281, 2
      %p283 = scmp.lt.s32.totalorder %s20, 1
      %s284 = scalar_select %p283, %s20, 1
      %p285 = scmp.lt.s32.totalorder %s277, 9
      %s286 = scalar_select %p285, %s277, 9
      %s287 = smul.addr %s286, 2
      %s288 = smul.addr %s284, 20
      %s289 = sadd.s32 %s287, %s288
      %s290 = smul.addr %s289, 4
      %s291 = scalar_lea.vmem %s0, %s290
      %p292 = pneg %p51
      %p293 = pneg %p48
      %s294 = sadd.s32 %s21, 1
      %s295 = smul.u32 %s294, 8
      %p296 = scmp.lt.s32.totalorder %s20, 1
      %s297 = scalar_select %p296, %s20, 1
      %p298 = scmp.lt.s32.totalorder %s295, 9
      %s299 = scalar_select %p298, %s295, 9
      %s300 = smul.addr %s299, 2
      %s301 = smul.addr %s297, 20
      %s302 = sadd.s32 %s300, %s301
      %s303 = smul.addr %s302, 4
      %s304 = scalar_lea.vmem %s1, %s303
      %p305 = pneg %p83
      %p306 = pneg %p80
      %s307 = sadd.s32 %s21, 1
      %s308 = smul.u32 %s307, 8
      %s309 = sadd.s32 %s308, 1
      %p310 = scmp.lt.s32.totalorder %s20, 1
      %s311 = scalar_select %p310, %s20, 1
      %p312 = scmp.lt.s32.totalorder %s309, 9
      %s313 = scalar_select %p312, %s309, 9
      %s314 = smul.addr %s313, 2
      %s315 = smul.addr %s311, 20
      %s316 = sadd.s32 %s314, %s315
      %s317 = smul.addr %s316, 4
      %s318 = scalar_lea.vmem %s2, %s317
      %p319 = pneg %p117
      %p320 = pneg %p114
      %p321 = pneg %p138
      %p322 = pneg %p135
      %p323 = pneg %p159
      %p324 = pneg %p156
      %p325 = pneg %p187
      %p326 = pneg %p184
      %s327 = smul.u32 8, %s21
      %p328 = scmp.lt.s32.totalorder %s20, 1
      %s329 = scalar_select %p328, %s20, 1
      %p330 = scmp.lt.s32.totalorder %s327, 7
      %s331 = scalar_select %p330, %s327, 7
      %s332 = smul.addr %s329, 8
      %s333 = sadd.s32 %s331, %s332
      %s334 = smul.addr %s333, 4
      %s335 = scalar_lea.vmem %s5, %s334
      %s336 = smul.u32 8, %s21
      %s337 = ssub.s32 10, %s336
      %p338 = scmp.lt.s32.totalorder %s337, 8
      %s339 = scalar_select %p338, %s337, 8
      %s340 = smul.u32 64, %s339
      %s341 = smul.u32 %s340, 2
      %p342 = scmp.lt.s32.totalorder %s20, 1
      %s343 = scalar_select %p342, %s20, 1
      %p344 = scmp.lt.s32.totalorder %s336, 9
      %s345 = scalar_select %p344, %s336, 9
      %s346 = smul.addr %s345, 2
      %s347 = smul.addr %s343, 20
      %s348 = sadd.s32 %s346, %s347
      %s349 = smul.addr %s348, 4
      %s350 = scalar_lea.vmem %s0, %s349
      %s351 = smul.u32 8, %s21
      %s352 = ssub.s32 10, %s351
      %p353 = scmp.lt.s32.totalorder %s352, 8
      %s354 = scalar_select %p353, %s352, 8
      %s355 = smul.u32 64, %s354
      %s356 = smul.u32 %s355, 2
      %s357 = sadd.s32 %s21, 1
      %s358 = smul.u32 %s357, 8
      %p359 = scmp.lt.s32.totalorder %s20, 1
      %s360 = scalar_select %p359, %s20, 1
      %p361 = scmp.lt.s32.totalorder %s358, 9
      %s362 = scalar_select %p361, %s358, 9
      %s363 = smul.addr %s362, 2
      %s364 = smul.addr %s360, 20
      %s365 = sadd.s32 %s363, %s364
      %s366 = smul.addr %s365, 4
      %s367 = scalar_lea.vmem %s1, %s366
      %s368 = sadd.s32 %s21, 1
      %s369 = smul.u32 %s368, 8
      %s370 = sadd.s32 %s21, 1
      %s371 = smul.u32 %s370, 8
      %s372 = sadd.s32 %s371, 1
      %p373 = scmp.lt.s32.totalorder %s20, 1
      %s374 = scalar_select %p373, %s20, 1
      %p375 = scmp.lt.s32.totalorder %s372, 9
      %s376 = scalar_select %p375, %s372, 9
      %s377 = smul.addr %s376, 2
      %s378 = smul.addr %s374, 20
      %s379 = sadd.s32 %s377, %s378
      %s380 = smul.addr %s379, 4
      %s381 = scalar_lea.vmem %s2, %s380
      %s382 = sadd.s32 %s21, 1
      %s383 = smul.u32 %s382, 8
      %s384 = sadd.s32 %s383, 1
      %s385 = smul.u32 8, %s21
      %p386 = scmp.lt.s32.totalorder %s20, 1
      %s387 = scalar_select %p386, %s20, 1
      %p388 = scmp.lt.s32.totalorder %s385, 7
      %s389 = scalar_select %p388, %s385, 7
      %s390 = smul.addr %s387, 8
      %s391 = sadd.s32 %s389, %s390
      %s392 = smul.addr %s391, 4
      %s393 = scalar_lea.vmem %s5, %s392
      %s394 = smul.u32 8, %s21
      %v396 = vld [vmem:[%s350] sm:$0xf]
      %v397 = vld [vmem:[%s350 + $0x4] sm:$0x1]
      %v398 = vld [vmem:[%s350 + $0x8] sm:$0xf]
      %v399 = vld [vmem:[%s350 + $0xc] sm:$0x1]
      %v400 = vld [vmem:[%s350 + $0x10] sm:$0xf]
      %v401 = vld [vmem:[%s350 + $0x14] sm:$0x1]
      %v402 = vld [vmem:[%s350 + $0x18] sm:$0xf]
      %v403 = vld [vmem:[%s350 + $0x1c] sm:$0x1]
      %v404 = vld [vmem:[%s350 + $0x20] sm:$0xf]
      %v405 = vld [vmem:[%s350 + $0x24] sm:$0x1]
      %v406 = vld [vmem:[%s350 + $0x28] sm:$0xf]
      %v407 = vld [vmem:[%s350 + $0x2c] sm:$0x1]
      %v408 = vld [vmem:[%s350 + $0x30] sm:$0xf]
      %v409 = vld [vmem:[%s350 + $0x34] sm:$0x1]
      %v410 = vld [vmem:[%s350 + $0x38] sm:$0xf]
      %v411 = vld [vmem:[%s350 + $0x3c] sm:$0x1]
      %v412 = vld [vmem:[%s367] sm:$0xf]
      %v413 = vld [vmem:[%s367 + $0x4] sm:$0x1]
      %v414 = vld [vmem:[%s381] sm:$0xf]
      %v415 = vld [vmem:[%s381 + $0x4] sm:$0x1]
      %v432 = vunpack.c.l.b16 %v396
      %v433 = vunpack.c.l.b16 %v397
      %v434 = vunpack.c.l.b16 %v398
      %v435 = vunpack.c.l.b16 %v399
      %v436 = vunpack.c.l.b16 %v400
      %v437 = vunpack.c.l.b16 %v401
      %v438 = vunpack.c.l.b16 %v402
      %v439 = vunpack.c.l.b16 %v403
      %v440 = vunpack.c.l.b16 %v404
      %v441 = vunpack.c.l.b16 %v405
      %v442 = vunpack.c.l.b16 %v406
      %v443 = vunpack.c.l.b16 %v407
      %v444 = vunpack.c.l.b16 %v408
      %v445 = vunpack.c.l.b16 %v409
      %v446 = vunpack.c.l.b16 %v410
      %v447 = vunpack.c.l.b16 %v411
      %v448 = vpack.c.b16 %v433, %v432
      %v449 = vpack.c.b16 %v435, %v434
      %v450 = vpack.c.b16 %v437, %v436
      %v451 = vpack.c.b16 %v439, %v438
      %v452 = vpack.c.b16 %v441, %v440
      %v453 = vpack.c.b16 %v443, %v442
      %v454 = vpack.c.b16 %v445, %v444
      %v455 = vpack.c.b16 %v447, %v446
      %v457 = vshrl.u32 %v448, 16
      %v459 = vshll.u32 %v448, 16
      %v461 = vrot.slane %v459, 1
      %v462 = vor.u32 %v457, %v461
      %v464 = vshrl.u32 %v449, 16
      %v466 = vshll.u32 %v449, 16
      %v468 = vrot.slane %v466, 1
      %v469 = vor.u32 %v464, %v468
      %v471 = vshrl.u32 %v450, 16
      %v473 = vshll.u32 %v450, 16
      %v475 = vrot.slane %v473, 1
      %v476 = vor.u32 %v471, %v475
      %v478 = vshrl.u32 %v451, 16
      %v480 = vshll.u32 %v451, 16
      %v482 = vrot.slane %v480, 1
      %v483 = vor.u32 %v478, %v482
      %v485 = vshrl.u32 %v452, 16
      %v487 = vshll.u32 %v452, 16
      %v489 = vrot.slane %v487, 1
      %v490 = vor.u32 %v485, %v489
      %v492 = vshrl.u32 %v453, 16
      %v494 = vshll.u32 %v453, 16
      %v496 = vrot.slane %v494, 1
      %v497 = vor.u32 %v492, %v496
      %v499 = vshrl.u32 %v454, 16
      %v501 = vshll.u32 %v454, 16
      %v503 = vrot.slane %v501, 1
      %v504 = vor.u32 %v499, %v503
      %v506 = vshrl.u32 %v455, 16
      %v508 = vshll.u32 %v455, 16
      %v510 = vrot.slane %v508, 1
      %v511 = vor.u32 %v506, %v510
      %512 = vrot.lane.b32.xlu0 %v462, 16
      %v513 = vpop.permute.xlu0 %512
      %514 = vrot.lane.b32.xlu0 %v469, 16
      %v515 = vpop.permute.xlu0 %514
      %516 = vrot.lane.b32.xlu0 %v476, 16
      %v517 = vpop.permute.xlu0 %516
      %518 = vrot.lane.b32.xlu0 %v483, 16
      %v519 = vpop.permute.xlu0 %518
      %520 = vrot.lane.b32.xlu0 %v490, 16
      %v521 = vpop.permute.xlu0 %520
      %522 = vrot.lane.b32.xlu0 %v497, 16
      %v523 = vpop.permute.xlu0 %522
      %524 = vrot.lane.b32.xlu0 %v504, 16
      %v525 = vpop.permute.xlu0 %524
      %526 = vrot.lane.b32.xlu0 %v511, 16
      %v527 = vpop.permute.xlu0 %526
      %v528 = vrot.slane %v448, 1
      %v529 = vrot.slane %v449, 1
      %v530 = vrot.slane %v450, 1
      %v531 = vrot.slane %v451, 1
      %v532 = vrot.slane %v452, 1
      %v533 = vrot.slane %v453, 1
      %v534 = vrot.slane %v454, 1
      %v535 = vrot.slane %v455, 1
      %536 = vrot.lane.b32.xlu0 %v528, 32
      %v537 = vpop.permute.xlu0 %536
      %538 = vrot.lane.b32.xlu0 %v529, 32
      %v539 = vpop.permute.xlu0 %538
      %540 = vrot.lane.b32.xlu0 %v530, 32
      %v541 = vpop.permute.xlu0 %540
      %542 = vrot.lane.b32.xlu0 %v531, 32
      %v543 = vpop.permute.xlu0 %542
      %544 = vrot.lane.b32.xlu0 %v532, 32
      %v545 = vpop.permute.xlu0 %544
      %546 = vrot.lane.b32.xlu0 %v533, 32
      %v547 = vpop.permute.xlu0 %546
      %548 = vrot.lane.b32.xlu0 %v534, 32
      %v549 = vpop.permute.xlu0 %548
      %550 = vrot.lane.b32.xlu0 %v535, 32
      %v551 = vpop.permute.xlu0 %550
      %v553 = vunpack.c.l.b16 %v412
      %v554 = vpack.c.b16 %v434, %v434
      %v555 = vpack.c.b16 %v436, %v436
      %v556 = vpack.c.b16 %v438, %v438
      %v557 = vpack.c.b16 %v440, %v440
      %v558 = vpack.c.b16 %v442, %v442
      %v559 = vpack.c.b16 %v444, %v444
      %v560 = vpack.c.b16 %v446, %v446
      %v561 = vpack.c.b16 %v553, %v553
      %562 = vrot.lane.b32.xlu0 %v554, 48
      %v563 = vpop.permute.xlu0 %562
      %564 = vrot.lane.b32.xlu0 %v555, 48
      %v565 = vpop.permute.xlu0 %564
      %566 = vrot.lane.b32.xlu0 %v556, 48
      %v567 = vpop.permute.xlu0 %566
      %568 = vrot.lane.b32.xlu0 %v557, 48
      %v569 = vpop.permute.xlu0 %568
      %570 = vrot.lane.b32.xlu0 %v558, 48
      %v571 = vpop.permute.xlu0 %570
      %572 = vrot.lane.b32.xlu0 %v559, 48
      %v573 = vpop.permute.xlu0 %572
      %574 = vrot.lane.b32.xlu0 %v560, 48
      %v575 = vpop.permute.xlu0 %574
      %576 = vrot.lane.b32.xlu0 %v561, 48
      %v577 = vpop.permute.xlu0 %576
      %v579 = vunpack.c.l.b16 %v413
      %v580 = vpack.c.b16 %v579, %v553
      %v582 = vshrl.u32 %v580, 16
      %v584 = vshll.u32 %v580, 16
      %v586 = vrot.slane %v584, 1
      %v587 = vor.u32 %v582, %v586
      %588 = vrot.lane.b32.xlu0 %v469, 64
      %v589 = vpop.permute.xlu0 %588
      %590 = vrot.lane.b32.xlu0 %v476, 64
      %v591 = vpop.permute.xlu0 %590
      %592 = vrot.lane.b32.xlu0 %v483, 64
      %v593 = vpop.permute.xlu0 %592
      %594 = vrot.lane.b32.xlu0 %v490, 64
      %v595 = vpop.permute.xlu0 %594
      %596 = vrot.lane.b32.xlu0 %v497, 64
      %v597 = vpop.permute.xlu0 %596
      %598 = vrot.lane.b32.xlu0 %v504, 64
      %v599 = vpop.permute.xlu0 %598
      %600 = vrot.lane.b32.xlu0 %v511, 64
      %v601 = vpop.permute.xlu0 %600
      %602 = vrot.lane.b32.xlu0 %v587, 64
      %v603 = vpop.permute.xlu0 %602
      %v604 = vrot.slane %v580, 1
      %605 = vrot.lane.b32.xlu0 %v529, 80
      %v606 = vpop.permute.xlu0 %605
      %607 = vrot.lane.b32.xlu0 %v530, 80
      %v608 = vpop.permute.xlu0 %607
      %609 = vrot.lane.b32.xlu0 %v531, 80
      %v610 = vpop.permute.xlu0 %609
      %611 = vrot.lane.b32.xlu0 %v532, 80
      %v612 = vpop.permute.xlu0 %611
      %613 = vrot.lane.b32.xlu0 %v533, 80
      %v614 = vpop.permute.xlu0 %613
      %615 = vrot.lane.b32.xlu0 %v534, 80
      %v616 = vpop.permute.xlu0 %615
      %617 = vrot.lane.b32.xlu0 %v535, 80
      %v618 = vpop.permute.xlu0 %617
      %619 = vrot.lane.b32.xlu0 %v604, 80
      %v620 = vpop.permute.xlu0 %619
      %v622 = vunpack.c.l.b16 %v414
      %v623 = vpack.c.b16 %v622, %v622
      %624 = vrot.lane.b32.xlu0 %v555, 96
      %v625 = vpop.permute.xlu0 %624
      %626 = vrot.lane.b32.xlu0 %v556, 96
      %v627 = vpop.permute.xlu0 %626
      %628 = vrot.lane.b32.xlu0 %v557, 96
      %v629 = vpop.permute.xlu0 %628
      %630 = vrot.lane.b32.xlu0 %v558, 96
      %v631 = vpop.permute.xlu0 %630
      %632 = vrot.lane.b32.xlu0 %v559, 96
      %v633 = vpop.permute.xlu0 %632
      %634 = vrot.lane.b32.xlu0 %v560, 96
      %v635 = vpop.permute.xlu0 %634
      %636 = vrot.lane.b32.xlu0 %v561, 96
      %v637 = vpop.permute.xlu0 %636
      %638 = vrot.lane.b32.xlu0 %v623, 96
      %v639 = vpop.permute.xlu0 %638
      %v641 = vunpack.c.l.b16 %v415
      %v642 = vpack.c.b16 %v641, %v622
      %v644 = vshrl.u32 %v642, 16
      %v646 = vshll.u32 %v642, 16
      %v648 = vrot.slane %v646, 1
      %v649 = vor.u32 %v644, %v648
      %650 = vrot.lane.b32.xlu0 %v476, 112
      %v651 = vpop.permute.xlu0 %650
      %652 = vrot.lane.b32.xlu0 %v483, 112
      %v653 = vpop.permute.xlu0 %652
      %654 = vrot.lane.b32.xlu0 %v490, 112
      %v655 = vpop.permute.xlu0 %654
      %656 = vrot.lane.b32.xlu0 %v497, 112
      %v657 = vpop.permute.xlu0 %656
      %658 = vrot.lane.b32.xlu0 %v504, 112
      %v659 = vpop.permute.xlu0 %658
      %660 = vrot.lane.b32.xlu0 %v511, 112
      %v661 = vpop.permute.xlu0 %660
      %662 = vrot.lane.b32.xlu0 %v587, 112
      %v663 = vpop.permute.xlu0 %662
      %664 = vrot.lane.b32.xlu0 %v649, 112
      %v665 = vpop.permute.xlu0 %664
      %v666 = vrot.slane %v642, 1
      %vm667 = vcmask 130048
      %v670 = vsel %vm667, %v396, %v513
      %v673 = vsel %vm667, %v398, %v515
      %v676 = vsel %vm667, %v400, %v517
      %v679 = vsel %vm667, %v402, %v519
      %v682 = vsel %vm667, %v404, %v521
      %v685 = vsel %vm667, %v406, %v523
      %v688 = vsel %vm667, %v408, %v525
      %v691 = vsel %vm667, %v410, %v527
      %vm692 = vcmask 261120
      %v694 = vsel %vm692, %v670, %v537
      %v696 = vsel %vm692, %v673, %v539
      %v698 = vsel %vm692, %v676, %v541
      %v700 = vsel %vm692, %v679, %v543
      %v702 = vsel %vm692, %v682, %v545
      %v704 = vsel %vm692, %v685, %v547
      %v706 = vsel %vm692, %v688, %v549
      %v708 = vsel %vm692, %v691, %v551
      %vm709 = vcmask 392192
      %v711 = vsel %vm709, %v694, %v563
      %v713 = vsel %vm709, %v696, %v565
      %v715 = vsel %vm709, %v698, %v567
      %v717 = vsel %vm709, %v700, %v569
      %v719 = vsel %vm709, %v702, %v571
      %v721 = vsel %vm709, %v704, %v573
      %v723 = vsel %vm709, %v706, %v575
      %v725 = vsel %vm709, %v708, %v577
      %vm726 = vcmask 523264
      %v728 = vsel %vm726, %v711, %v589
      %v730 = vsel %vm726, %v713, %v591
      %v732 = vsel %vm726, %v715, %v593
      %v734 = vsel %vm726, %v717, %v595
      %v736 = vsel %vm726, %v719, %v597
      %v738 = vsel %vm726, %v721, %v599
      %v740 = vsel %vm726, %v723, %v601
      %v742 = vsel %vm726, %v725, %v603
      %vm743 = vcmask 654336
      %v745 = vsel %vm743, %v728, %v606
      %v747 = vsel %vm743, %v730, %v608
      %v749 = vsel %vm743, %v732, %v610
      %v751 = vsel %vm743, %v734, %v612
      %v753 = vsel %vm743, %v736, %v614
      %v755 = vsel %vm743, %v738, %v616
      %v757 = vsel %vm743, %v740, %v618
      %v759 = vsel %vm743, %v742, %v620
      %vm760 = vcmask 785408
      %v762 = vsel %vm760, %v745, %v625
      %v764 = vsel %vm760, %v747, %v627
      %v766 = vsel %vm760, %v749, %v629
      %v768 = vsel %vm760, %v751, %v631
      %v770 = vsel %vm760, %v753, %v633
      %v772 = vsel %vm760, %v755, %v635
      %v774 = vsel %vm760, %v757, %v637
      %v776 = vsel %vm760, %v759, %v639
      %vm777 = vcmask 916480
      %v779 = vsel %vm777, %v762, %v651
      %v781 = vsel %vm777, %v764, %v653
      %v783 = vsel %vm777, %v766, %v655
      %v785 = vsel %vm777, %v768, %v657
      %v787 = vsel %vm777, %v770, %v659
      %v789 = vsel %vm777, %v772, %v661
      %v791 = vsel %vm777, %v774, %v663
      %v793 = vsel %vm777, %v776, %v665
      %v802 = vunpack.c.l.b16 %v779
      %v803 = vunpack.c.l.b16 %v530
      %v804 = vunpack.c.l.b16 %v781
      %v805 = vunpack.c.l.b16 %v531
      %v806 = vunpack.c.l.b16 %v783
      %v807 = vunpack.c.l.b16 %v532
      %v808 = vunpack.c.l.b16 %v785
      %v809 = vunpack.c.l.b16 %v533
      %v810 = vunpack.c.l.b16 %v787
      %v811 = vunpack.c.l.b16 %v534
      %v812 = vunpack.c.l.b16 %v789
      %v813 = vunpack.c.l.b16 %v535
      %v814 = vunpack.c.l.b16 %v791
      %v815 = vunpack.c.l.b16 %v604
      %v816 = vunpack.c.l.b16 %v793
      %v817 = vunpack.c.l.b16 %v666
      %v818 = vld [vmem:[%s3] sm:$0xf]
      %v819 = vld [vmem:[%s3 + $0x4] sm:$0xf]
      %v820 = vld [vmem:[%s3 + $0x8] sm:$0xf]
      %v821 = vld [vmem:[%s3 + $0xc] sm:$0xf]
      %v822 = vld [vmem:[%s3 + $0x10] sm:$0xf]
      %v823 = vld [vmem:[%s3 + $0x14] sm:$0xf]
      %v824 = vld [vmem:[%s3 + $0x18] sm:$0xf]
      %v825 = vld [vmem:[%s3 + $0x1c] sm:$0xf]
      %v826 = vld [vmem:[%s3 + $0x20] sm:$0xf]
      %v827 = vld [vmem:[%s3 + $0x24] sm:$0xf]
      %v828 = vld [vmem:[%s3 + $0x28] sm:$0xf]
      %v829 = vld [vmem:[%s3 + $0x2c] sm:$0xf]
      %v830 = vld [vmem:[%s3 + $0x30] sm:$0xf]
      %v831 = vld [vmem:[%s3 + $0x34] sm:$0xf]
      %v832 = vld [vmem:[%s3 + $0x38] sm:$0xf]
      %v833 = vld [vmem:[%s3 + $0x3c] sm:$0xf]
      %v834 = vld [vmem:[%s3 + $0x40] sm:$0xf]
      %v835 = vld [vmem:[%s3 + $0x44] sm:$0xf]
      %v836 = vld [vmem:[%s4] sm:$0x1]
      %v838 = vlaneseq
      %v839 = vshrl.u32 %v838, 7
      %v840 = vsub.s32 0, %v839
      %v841 = vrot.slane %v836, %v840
      %v843 = vpack.c.b16 %v804, %v802
      %v844 = vpack.c.b16 %v805, %v803
      %v845 = vpack.c.b16 %v808, %v806
      %v846 = vpack.c.b16 %v809, %v807
      %v847 = vpack.c.b16 %v812, %v810
      %v848 = vpack.c.b16 %v813, %v811
      %v849 = vpack.c.b16 %v816, %v814
      %v850 = vpack.c.b16 %v817, %v815
      %v873 = vunpack.c.l.b16 %v818
      %v874 = vunpack.c.l.b16 %v819
      %v875 = vunpack.c.l.b16 %v820
      %v876 = vunpack.c.l.b16 %v821
      %v877 = vunpack.c.l.b16 %v822
      %v878 = vunpack.c.l.b16 %v823
      %v879 = vunpack.c.l.b16 %v824
      %v880 = vunpack.c.l.b16 %v825
      %v881 = vunpack.c.l.b16 %v826
      %v882 = vunpack.c.l.b16 %v827
      %v883 = vunpack.c.l.b16 %v828
      %v884 = vunpack.c.l.b16 %v829
      %v885 = vunpack.c.l.b16 %v830
      %v886 = vunpack.c.l.b16 %v831
      %v887 = vunpack.c.l.b16 %v832
      %v888 = vunpack.c.l.b16 %v833
      %v889 = vunpack.c.l.b16 %v834
      %v890 = vunpack.c.l.b16 %v835
      %v891 = vpack.c.b16 %v874, %v873
      %v892 = vpack.c.b16 %v876, %v875
      %v893 = vpack.c.b16 %v878, %v877
      %v894 = vpack.c.b16 %v880, %v879
      %v895 = vpack.c.b16 %v882, %v881
      %v896 = vpack.c.b16 %v884, %v883
      %v897 = vpack.c.b16 %v886, %v885
      %v898 = vpack.c.b16 %v888, %v887
      %v899 = vpack.c.b16 %v890, %v889
      %v910 = vsel %vm667, %v844, 0
      %v913 = vsel %vm667, %v846, 0
      %v916 = vsel %vm667, %v848, 0
      %v919 = vsel %vm667, %v850, 0
      %921 = vmatprep.subr.bf16.mxu0 0
      %922 = vmatpush1.bf16.msra.mxu0 %v891
      %923 = vmatprep.subr.bf16.mxu0 0
      %924 = vmatpush1.bf16.msra.mxu0 %v892
      %925 = vmatprep.subr.bf16.mxu0 0
      %926 = vmatpush1.bf16.msra.mxu0 %v893
      %927 = vmatprep.subr.bf16.mxu0 0
      %928 = vmatpush1.bf16.msra.mxu0 %v894
      %929 = vmatprep.subr.bf16.mxu0 0
      %930 = vmatpush1.bf16.msra.mxu0 %v895
      %931 = vmatprep.subr.bf16.mxu0 0
      %932 = vmatpush1.bf16.msra.mxu0 %v896
      %933 = vmatprep.subr.bf16.mxu0 0
      %934 = vmatpush1.bf16.msra.mxu0 %v897
      %935 = vmatprep.subr.bf16.mxu0 0
      %936 = vmatpush1.bf16.msra.mxu0 %v898
      %937 = vmatprep.subr.bf16.mxu0 0
      %938 = vmatpush1.bf16.msra.mxu0 %v899
      %939 = vmatprep.subr.bf16.mxu0 0
      %940 = vmatpush1.bf16.msra.mxu0 0
      %941 = vmatprep.subr.bf16.mxu0 0
      %942 = vmatpush1.bf16.msra.mxu0 0
      %943 = vmatprep.subr.bf16.mxu0 0
      %944 = vmatpush1.bf16.msra.mxu0 0
      %945 = vmatprep.subr.bf16.mxu0 0
      %946 = vmatpush1.bf16.msra.mxu0 0
      %947 = vmatprep.subr.bf16.mxu0 0
      %948 = vmatpush1.bf16.msra.mxu0 0
      %949 = vmatprep.subr.bf16.mxu0 0
      %950 = vmatpush1.bf16.msra.mxu0 0
      %951 = vmatprep.subr.bf16.mxu0 0
      %952 = vmatpush1.bf16.msra.mxu0 0
      %953 = vmatprep.mubr.bf16.mxu0 %v910
      %954 = vmatmul.mubr.bf16.gmra.mrb[0].mxu0 %v843
      %v955 = vpop.f32.mrb[0].mxu0
      %v956 = vadd.f32 %v841, %v955
      %v957 = vpop.f32.mrb[0].mxu0
      %v958 = vpop.f32.mrb[0].mxu0
      %v959 = vadd.f32 %v841, %v958
      %v960 = vpop.f32.mrb[0].mxu0
      %961 = vmatprep.mubr.bf16.mxu0 %v913
      %962 = vmatmul.mubr.bf16.gmra.mrb[0].mxu0 %v845
      %v963 = vpop.f32.mrb[0].mxu0
      %v964 = vadd.f32 %v841, %v963
      %v965 = vpop.f32.mrb[0].mxu0
      %v966 = vpop.f32.mrb[0].mxu0
      %v967 = vadd.f32 %v841, %v966
      %v968 = vpop.f32.mrb[0].mxu0
      %969 = vmatprep.mubr.bf16.mxu0 %v916
      %970 = vmatmul.mubr.bf16.gmra.mrb[0].mxu0 %v847
      %v971 = vpop.f32.mrb[0].mxu0
      %v972 = vadd.f32 %v841, %v971
      %v973 = vpop.f32.mrb[0].mxu0
      %v974 = vpop.f32.mrb[0].mxu0
      %v975 = vadd.f32 %v841, %v974
      %v976 = vpop.f32.mrb[0].mxu0
      %977 = vmatprep.mubr.bf16.mxu0 %v919
      %978 = vmatmul.mubr.bf16.gmra.mrb[0].mxu0 %v849
      %v979 = vpop.f32.mrb[0].mxu0
      %v980 = vadd.f32 %v841, %v979
      %v981 = vpop.f32.mrb[0].mxu0
      %v982 = vpop.f32.mrb[0].mxu0
      %v983 = vadd.f32 %v841, %v982
      %v984 = vpop.f32.mrb[0].mxu0
      %985 = vdwg.mxu0
      %v986 = vmax.f32 %v956, 0.0
      %v987 = vmax.f32 %v959, 0.0
      %v988 = vmax.f32 %v964, 0.0
      %v989 = vmax.f32 %v967, 0.0
      %v990 = vmax.f32 %v972, 0.0
      %v991 = vmax.f32 %v975, 0.0
      %v992 = vmax.f32 %v980, 0.0
      %v993 = vmax.f32 %v983, 0.0
      %v994 = vpack.c.bf16 %v986, %v986
      %v995 = vpack.c.bf16 %v987, %v987
      %v996 = vpack.c.bf16 %v988, %v988
      %v997 = vpack.c.bf16 %v989, %v989
      %v998 = vpack.c.bf16 %v990, %v990
      %v999 = vpack.c.bf16 %v991, %v991
      %v1000 = vpack.c.bf16 %v992, %v992
      %v1001 = vpack.c.bf16 %v993, %v993
      %vm1002 = vcmask 125952
      %1003 = vst.msk [vmem:[%s393] sm:$0xf] %vm1002, %v994
      %1004 = vst.msk [vmem:[%s393 + $0x4] sm:$0xf] %vm1002, %v995
      %1005 = vst.msk [vmem:[%s393 + $0x8] sm:$0xf] %vm1002, %v996
      %1006 = vst.msk [vmem:[%s393 + $0xc] sm:$0xf] %vm1002, %v997
      %1007 = vst.msk [vmem:[%s393 + $0x10] sm:$0xf] %vm1002, %v998
      %1008 = vst.msk [vmem:[%s393 + $0x14] sm:$0xf] %vm1002, %v999
      %1009 = vst.msk [vmem:[%s393 + $0x18] sm:$0xf] %vm1002, %v1000
      %1010 = vst.msk [vmem:[%s393 + $0x1c] sm:$0xf] %vm1002, %v1001
      %s1011 = smul.u32 8, %s21
      %p1012 = scmp.lt.s32.totalorder %s20, 1
      %s1013 = scalar_select %p1012, %s20, 1
      %p1014 = scmp.lt.s32.totalorder %s1011, 7
      %s1015 = scalar_select %p1014, %s1011, 7
      %s1016 = smul.addr %s1013, 8
      %s1017 = sadd.s32 %s1015, %s1016
      %s1018 = smul.addr %s1017, 4
      %s1019 = scalar_lea.vmem %s5, %s1018
      // Predicated region
      $region41: #{_lambda_.11} parent=39 // pred_check
        %p1020 = pneg %p184
      $region42: #{_lambda_.11} parent=39 // pred_check_branch
        %1022 = sbr.rel (%p1020) target = $region44
      $region43: #{_lambda_.11} parent=39 // pred_region
        %s1023 = smul.u32 8, %s21
      $region44: #{_lambda_.11} parent=39 // pred_fallthru
        _
    $region40: #{_lambda_.11} parent=5 // pred_fallthru
      _
    %p1024 = scmp.le.s32.totalorder 2, %s11
    // Predicated region
    $region45: #{_lambda_.11} parent=5 // pred_check
      %p1025 = pneg %p1024
    $region46: #{_lambda_.11} parent=5 // pred_check_branch
      %1027 = sbr.rel (%p1025) target = $region48
    $region47: #{_lambda_.11} parent=5 // pred_region
      %s1028 = ssub.s32 %s11, 2
      // Predicated region
      $region49: #{_lambda_.11} parent=47 // pred_check
        %p1029 = pneg %p190
      $region50: #{_lambda_.11} parent=47 // pred_check_branch
        %1031 = sbr.rel (%p1029) target = $region52
      $region51: #{_lambda_.11} parent=47 // pred_region
        %s1032 = smul.u32 8, %s23
        %p1033 = scmp.lt.s32.totalorder %s22, 1
        %s1034 = scalar_select %p1033, %s22, 1
        %p1035 = scmp.lt.s32.totalorder %s1032, 7
        %s1036 = scalar_select %p1035, %s1032, 7
        %s1037 = smul.addr %s1034, 8
        %s1038 = sadd.s32 %s1036, %s1037
        %s1039 = smul.addr %s1038, 4
        %s1040 = scalar_lea.vmem %s5, %s1039
      $region52: #{_lambda_.11} parent=47 // pred_fallthru
        _
    $region48: #{_lambda_.11} parent=5 // pred_fallthru
      _
  $region6: #{_lambda_.11} parent=0 // loop_footer
    %s15 = sadd.s32 1, %s11
  $region7: #{_lambda_.11} parent=0 // loop_footer_branch
    %10 = sbr.rel target = $region3
  $region8: #{_lambda_.11} parent=0 // loop_exit
    _

// kernel: _lambda_.13
$region0: #{_lambda_.13}
  #allocation0 [shape = 'u32[]', space=smem, size = 0x4, offset = 0x4, fixed_abs, tag = 'smem constant byte address 0x4 - core index']
  #allocation1 [shape = 'u32[144,128]{1,0:T(1,128)}', space=vmem, size = 0x12000, scoped, tag = 'internal scratch']
  %s0 = inlined_call_operand.vmem [shape: bf16[512,8], index: 0, kind: input, shape index: {}]
  %s1 = inlined_call_operand.vmem [shape: bf16[512,8], index: 1, kind: input, shape index: {}]
  %s2 = inlined_call_operand.vmem [shape: bf16[8,24], index: 2, kind: input, shape index: {}]
  %s3 = inlined_call_operand.vmem [shape: bf16[8,24], index: 3, kind: input, shape index: {}]
  %s4 = inlined_call_operand.vmem [shape: f32[1,24], index: 4, kind: input, shape index: {}]
  %s5 = inlined_call_operand.vmem [shape: f32[512,6], index: 5, kind: output, shape index: {0}]
  %s6 = inlined_call_operand.vmem [shape: f32[512,14], index: 6, kind: output, shape index: {1}]
  %s7 = inlined_call_operand.vmem [shape: f32[512,4], index: 7, kind: output, shape index: {2}]
  %8 = xla_tuple %s5, %s6, %s7
  %s9 = sld [smem:[#allocation0]]
  $region69: #{_lambda_.13} parent=0
    _
  %s11 = ssub.s32 1, %s9
  %s12 = scalar_select 0, %s11, %s9
  loop: start=0, step=1, limit=4
  $region2: #{_lambda_.13} parent=0 // loop_pre_header
    _
  $region3: #{_lambda_.13} parent=0 // loop_header
    %s14 = sphi 0, %s18
    %p15 = scmp.ge.s32.totalorder %s14, 4
    %s24 = sphi 0, %s26
    %s27 = sphi 0, %s24
    %s28 = sphi 0, %s27
    %s44 = sphi 0, %s28
    %s50 = sphi 0, %s52
    %s53 = sphi 0, %s50
    %s54 = sphi 0, %s53
    %s70 = sphi 0, %s54
    %s74 = sphi 0, %s74
    %s76 = sphi 0, %s74
    %s77 = sphi 0, %s76
    %s91 = sphi 0, %s77
    %s95 = sphi 0, %s95
    %s97 = sphi 0, %s95
    %s98 = sphi 0, %s97
    %s112 = sphi 0, %s98
    %s116 = sphi 0, %s116
    %s118 = sphi 0, %s116
    %s119 = sphi 0, %s118
    %s133 = sphi 0, %s119
    %s139 = sphi 0, %s141
    %s142 = sphi 0, %s139
    %s143 = sphi 0, %s142
    %s159 = sphi 0, %s143
    %s165 = sphi 0, %s167
    %s168 = sphi 0, %s165
    %s169 = sphi 0, %s168
    %s185 = sphi 0, %s169
    %s191 = sphi 0, %s193
    %s194 = sphi 0, %s191
    %s195 = sphi 0, %s194
    %s211 = sphi 0, %s195
  $region4: #{_lambda_.13} parent=0 // loop_header_branch
    %17 = sbr.rel (%p15) target = $region8
  $region5: #{_lambda_.13} parent=0 // loop_body
    %s19 = ssub.s32 %s14, 1
    %s20 = ssub.s32 %s14, 2
    %s21 = sadd.s32 %s14, 1
    %s22 = ssub.s32 %s14, %s21
    %p23 = scmp.eq.s32.totalorder %s22, 0
    %s25 = sadd.s32 %s24, 1
    %s26 = scalar_select %p23, %s24, %s25
    %p29 = pneg %p23
    %p30 = scmp.eq.s32.totalorder %s14, 1
    %p31 = por %p29, %p30
    %p32 = scmp.ne.s32.totalorder %s24, %s27
    %p33 = scmp.eq.s32.totalorder %s14, 0
    %p34 = por %p32, %p33
    %p35 = scmp.ne.s32.totalorder %s24, %s27
    %p36 = scmp.eq.s32.totalorder %s19, 1
    %p37 = por %p35, %p36
    %p38 = scmp.ne.s32.totalorder %s27, %s28
    %p39 = scmp.eq.s32.totalorder %s19, 0
    %p40 = por %p38, %p39
    %p41 = scmp.ne.s32.totalorder %s27, %s28
    %p42 = scmp.eq.s32.totalorder %s20, 1
    %p43 = por %p41, %p42
    %p45 = scmp.ne.s32.totalorder %s28, %s44
    %p46 = scmp.eq.s32.totalorder %s20, 0
    %p47 = por %p45, %p46
    %s48 = ssub.s32 %s14, %s21
    %p49 = scmp.eq.s32.totalorder %s48, 0
    %s51 = sadd.s32 %s50, 1
    %s52 = scalar_select %p49, %s50, %s51
    %p55 = pneg %p49
    %p56 = scmp.eq.s32.totalorder %s14, 1
    %p57 = por %p55, %p56
    %p58 = scmp.ne.s32.totalorder %s50, %s53
    %p59 = scmp.eq.s32.totalorder %s14, 0
    %p60 = por %p58, %p59
    %p61 = scmp.ne.s32.totalorder %s50, %s53
    %p62 = scmp.eq.s32.totalorder %s19, 1
    %p63 = por %p61, %p62
    %p64 = scmp.ne.s32.totalorder %s53, %s54
    %p65 = scmp.eq.s32.totalorder %s19, 0
    %p66 = por %p64, %p65
    %p67 = scmp.ne.s32.totalorder %s53, %s54
    %p68 = scmp.eq.s32.totalorder %s20, 1
    %p69 = por %p67, %p68
    %p71 = scmp.ne.s32.totalorder %s54, %s70
    %p72 = scmp.eq.s32.totalorder %s20, 0
    %p73 = por %p71, %p72
    %s75 = sadd.s32 %s74, 1
    %p78 = scmp.eq.s32.totalorder %s14, 1
    %p79 = scmp.ne.s32.totalorder %s74, %s76
    %p80 = scmp.eq.s32.totalorder %s14, 0
    %p81 = por %p79, %p80
    %p82 = scmp.ne.s32.totalorder %s74, %s76
    %p83 = scmp.eq.s32.totalorder %s19, 1
    %p84 = por %p82, %p83
    %p85 = scmp.ne.s32.totalorder %s76, %s77
    %p86 = scmp.eq.s32.totalorder %s19, 0
    %p87 = por %p85, %p86
    %p88 = scmp.ne.s32.totalorder %s76, %s77
    %p89 = scmp.eq.s32.totalorder %s20, 1
    %p90 = por %p88, %p89
    %p92 = scmp.ne.s32.totalorder %s77, %s91
    %p93 = scmp.eq.s32.totalorder %s20, 0
    %p94 = por %p92, %p93
    %s96 = sadd.s32 %s95, 1
    %p99 = scmp.eq.s32.totalorder %s14, 1
    %p100 = scmp.ne.s32.totalorder %s95, %s97
    %p101 = scmp.eq.s32.totalorder %s14, 0
    %p102 = por %p100, %p101
    %p103 = scmp.ne.s32.totalorder %s95, %s97
    %p104 = scmp.eq.s32.totalorder %s19, 1
    %p105 = por %p103, %p104
    %p106 = scmp.ne.s32.totalorder %s97, %s98
    %p107 = scmp.eq.s32.totalorder %s19, 0
    %p108 = por %p106, %p107
    %p109 = scmp.ne.s32.totalorder %s97, %s98
    %p110 = scmp.eq.s32.totalorder %s20, 1
    %p111 = por %p109, %p110
    %p113 = scmp.ne.s32.totalorder %s98, %s112
    %p114 = scmp.eq.s32.totalorder %s20, 0
    %p115 = por %p113, %p114
    %s117 = sadd.s32 %s116, 1
    %p120 = scmp.eq.s32.totalorder %s14, 1
    %p121 = scmp.ne.s32.totalorder %s116, %s118
    %p122 = scmp.eq.s32.totalorder %s14, 0
    %p123 = por %p121, %p122
    %p124 = scmp.ne.s32.totalorder %s116, %s118
    %p125 = scmp.eq.s32.totalorder %s19, 1
    %p126 = por %p124, %p125
    %p127 = scmp.ne.s32.totalorder %s118, %s119
    %p128 = scmp.eq.s32.totalorder %s19, 0
    %p129 = por %p127, %p128
    %p130 = scmp.ne.s32.totalorder %s118, %s119
    %p131 = scmp.eq.s32.totalorder %s20, 1
    %p132 = por %p130, %p131
    %p134 = scmp.ne.s32.totalorder %s119, %s133
    %p135 = scmp.eq.s32.totalorder %s20, 0
    %p136 = por %p134, %p135
    %s137 = ssub.s32 %s14, %s21
    %p138 = scmp.eq.s32.totalorder %s137, 0
    %s140 = sadd.s32 %s139, 1
    %s141 = scalar_select %p138, %s139, %s140
    %p144 = pneg %p138
    %p145 = scmp.eq.s32.totalorder %s14, 1
    %p146 = por %p144, %p145
    %p147 = scmp.ne.s32.totalorder %s139, %s142
    %p148 = scmp.eq.s32.totalorder %s14, 0
    %p149 = por %p147, %p148
    %p150 = scmp.ne.s32.totalorder %s139, %s142
    %p151 = scmp.eq.s32.totalorder %s19, 1
    %p152 = por %p150, %p151
    %p153 = scmp.ne.s32.totalorder %s142, %s143
    %p154 = scmp.eq.s32.totalorder %s19, 0
    %p155 = por %p153, %p154
    %p156 = scmp.ne.s32.totalorder %s142, %s143
    %p157 = scmp.eq.s32.totalorder %s20, 1
    %p158 = por %p156, %p157
    %p160 = scmp.ne.s32.totalorder %s143, %s159
    %p161 = scmp.eq.s32.totalorder %s20, 0
    %p162 = por %p160, %p161
    %s163 = ssub.s32 %s14, %s21
    %p164 = scmp.eq.s32.totalorder %s163, 0
    %s166 = sadd.s32 %s165, 1
    %s167 = scalar_select %p164, %s165, %s166
    %p170 = pneg %p164
    %p171 = scmp.eq.s32.totalorder %s14, 1
    %p172 = por %p170, %p171
    %p173 = scmp.ne.s32.totalorder %s165, %s168
    %p174 = scmp.eq.s32.totalorder %s14, 0
    %p175 = por %p173, %p174
    %p176 = scmp.ne.s32.totalorder %s165, %s168
    %p177 = scmp.eq.s32.totalorder %s19, 1
    %p178 = por %p176, %p177
    %p179 = scmp.ne.s32.totalorder %s168, %s169
    %p180 = scmp.eq.s32.totalorder %s19, 0
    %p181 = por %p179, %p180
    %p182 = scmp.ne.s32.totalorder %s168, %s169
    %p183 = scmp.eq.s32.totalorder %s20, 1
    %p184 = por %p182, %p183
    %p186 = scmp.ne.s32.totalorder %s169, %s185
    %p187 = scmp.eq.s32.totalorder %s20, 0
    %p188 = por %p186, %p187
    %s189 = ssub.s32 %s14, %s21
    %p190 = scmp.eq.s32.totalorder %s189, 0
    %s192 = sadd.s32 %s191, 1
    %s193 = scalar_select %p190, %s191, %s192
    %p196 = pneg %p190
    %p197 = scmp.eq.s32.totalorder %s14, 1
    %p198 = por %p196, %p197
    %p199 = scmp.ne.s32.totalorder %s191, %s194
    %p200 = scmp.eq.s32.totalorder %s14, 0
    %p201 = por %p199, %p200
    %p202 = scmp.ne.s32.totalorder %s191, %s194
    %p203 = scmp.eq.s32.totalorder %s19, 1
    %p204 = por %p202, %p203
    %p205 = scmp.ne.s32.totalorder %s194, %s195
    %p206 = scmp.eq.s32.totalorder %s19, 0
    %p207 = por %p205, %p206
    %p208 = scmp.ne.s32.totalorder %s194, %s195
    %p209 = scmp.eq.s32.totalorder %s20, 1
    %p210 = por %p208, %p209
    %p212 = scmp.ne.s32.totalorder %s195, %s211
    %p213 = scmp.eq.s32.totalorder %s20, 0
    %p214 = por %p212, %p213
    %p215 = scmp.le.s32.totalorder 1, %s14
    %p216 = scmp.lt.s32.totalorder %s14, 3
    %p217 = pnand %p215, %p216
    %p218 = pneg %p217
    // Predicated region
    $region9: #{_lambda_.13} parent=5 // pred_check
      _
    $region10: #{_lambda_.13} parent=5 // pred_check_branch
      %220 = sbr.rel (%p217) target = $region12
    $region11: #{_lambda_.13} parent=5 // pred_region
      %s221 = ssub.s32 %s14, 1
      // Predicated region
      $region13: #{_lambda_.13} parent=11 // pred_check
        %p222 = pneg %p87
      $region14: #{_lambda_.13} parent=11 // pred_check_branch
        %224 = sbr.rel (%p222) target = $region16
      $region15: #{_lambda_.13} parent=11 // pred_region
        _
      $region16: #{_lambda_.13} parent=11 // pred_fallthru
        _
      // Predicated region
      $region17: #{_lambda_.13} parent=11 // pred_check
        %p225 = pneg %p108
      $region18: #{_lambda_.13} parent=11 // pred_check_branch
        %227 = sbr.rel (%p225) target = $region20
      $region19: #{_lambda_.13} parent=11 // pred_region
        _
      $region20: #{_lambda_.13} parent=11 // pred_fallthru
        _
      // Predicated region
      $region21: #{_lambda_.13} parent=11 // pred_check
        %p228 = pneg %p129
      $region22: #{_lambda_.13} parent=11 // pred_check_branch
        %230 = sbr.rel (%p228) target = $region24
      $region23: #{_lambda_.13} parent=11 // pred_region
        _
      $region24: #{_lambda_.13} parent=11 // pred_fallthru
        _
    $region12: #{_lambda_.13} parent=5 // pred_fallthru
      _
    %p231 = scmp.lt.s32.totalorder %s14, 2
    // Predicated region
    $region25: #{_lambda_.13} parent=5 // pred_check
      %p232 = pneg %p231
    $region26: #{_lambda_.13} parent=5 // pred_check_branch
      %234 = sbr.rel (%p232) target = $region28
    $region27: #{_lambda_.13} parent=5 // pred_region
      // Predicated region
      $region29: #{_lambda_.13} parent=27 // pred_check
        %p235 = pneg %p34
      $region30: #{_lambda_.13} parent=27 // pred_check_branch
        %237 = sbr.rel (%p235) target = $region32
      $region31: #{_lambda_.13} parent=27 // pred_region
        %s238 = smul.u32 32, %s14
        %p239 = scmp.lt.s32.totalorder %s238, 63
        %s240 = scalar_select %p239, %s238, 63
        %s241 = smul.addr %s240, 4
        %s242 = scalar_lea.vmem %s0, %s241
        %s243 = smul.u32 32, %s14
      $region32: #{_lambda_.13} parent=27 // pred_fallthru
        _
      // Predicated region
      $region33: #{_lambda_.13} parent=27 // pred_check
        %p244 = pneg %p60
      $region34: #{_lambda_.13} parent=27 // pred_check_branch
        %246 = sbr.rel (%p244) target = $region36
      $region35: #{_lambda_.13} parent=27 // pred_region
        %s247 = smul.u32 32, %s14
        %p248 = scmp.lt.s32.totalorder %s247, 63
        %s249 = scalar_select %p248, %s247, 63
        %s250 = smul.addr %s249, 4
        %s251 = scalar_lea.vmem %s1, %s250
        %s252 = smul.u32 32, %s14
      $region36: #{_lambda_.13} parent=27 // pred_fallthru
        _
    $region28: #{_lambda_.13} parent=5 // pred_fallthru
      _
    %p253 = scmp.le.s32.totalorder 1, %s14
    %p254 = scmp.lt.s32.totalorder %s14, 3
    %p255 = pnand %p253, %p254
    %p256 = pneg %p255
    // Predicated region
    $region37: #{_lambda_.13} parent=5 // pred_check
      _
    $region38: #{_lambda_.13} parent=5 // pred_check_branch
      %258 = sbr.rel (%p255) target = $region40
    $region39: #{_lambda_.13} parent=5 // pred_region
      %s259 = ssub.s32 %s14, 1
      %s260 = smul.u32 32, %s19
      %p261 = scmp.lt.s32.totalorder %s260, 63
      %s262 = scalar_select %p261, %s260, 63
      %s263 = smul.addr %s262, 4
      %s264 = scalar_lea.vmem %s0, %s263
      %p265 = pneg %p40
      %p266 = pneg %p37
      %s267 = smul.u32 32, %s19
      %p268 = scmp.lt.s32.totalorder %s267, 63
      %s269 = scalar_select %p268, %s267, 63
      %s270 = smul.addr %s269, 4
      %s271 = scalar_lea.vmem %s1, %s270
      %p272 = pneg %p66
      %p273 = pneg %p63
      %p274 = pneg %p87
      %p275 = pneg %p84
      %p276 = pneg %p108
      %p277 = pneg %p105
      %p278 = pneg %p129
      %p279 = pneg %p126
      %p280 = pneg %p155
      %p281 = pneg %p152
      %s282 = smul.u32 32, %s19
      %p283 = scmp.lt.s32.totalorder %s282, 63
      %s284 = scalar_select %p283, %s282, 63
      %s285 = smul.addr %s284, 8
      %s286 = scalar_lea.vmem %s5, %s285
      %p287 = pneg %p181
      %p288 = pneg %p178
      %s289 = smul.u32 32, %s19
      %p290 = scmp.lt.s32.totalorder %s289, 63
      %s291 = scalar_select %p290, %s289, 63
      %s292 = smul.addr %s291, 8
      %s293 = scalar_lea.vmem %s6, %s292
      %p294 = pneg %p207
      %p295 = pneg %p204
      %s296 = smul.u32 32, %s19
      %p297 = scmp.lt.s32.totalorder %s296, 63
      %s298 = scalar_select %p297, %s296, 63
      %s299 = smul.addr %s298, 8
      %s300 = scalar_lea.vmem %s7, %s299
      %s301 = smul.u32 32, %s19
      %p302 = scmp.lt.s32.totalorder %s301, 63
      %s303 = scalar_select %p302, %s301, 63
      %s304 = smul.addr %s303, 4
      %s305 = scalar_lea.vmem %s0, %s304
      %s306 = smul.u32 32, %s19
      %s307 = smul.u32 32, %s19
      %p308 = scmp.lt.s32.totalorder %s307, 63
      %s309 = scalar_select %p308, %s307, 63
      %s310 = smul.addr %s309, 4
      %s311 = scalar_lea.vmem %s1, %s310
      %s312 = smul.u32 32, %s19
      %s313 = smul.u32 32, %s19
      %p314 = scmp.lt.s32.totalorder %s313, 63
      %s315 = scalar_select %p314, %s313, 63
      %s316 = smul.addr %s315, 8
      %s317 = scalar_lea.vmem %s5, %s316
      %s318 = smul.u32 32, %s19
      %s319 = smul.u32 32, %s19
      %p320 = scmp.lt.s32.totalorder %s319, 63
      %s321 = scalar_select %p320, %s319, 63
      %s322 = smul.addr %s321, 8
      %s323 = scalar_lea.vmem %s6, %s322
      %s324 = smul.u32 32, %s19
      %s325 = smul.u32 32, %s19
      %p326 = scmp.lt.s32.totalorder %s325, 63
      %s327 = scalar_select %p326, %s325, 63
      %s328 = smul.addr %s327, 8
      %s329 = scalar_lea.vmem %s7, %s328
      %s330 = smul.u32 32, %s19
      %v332 = vld [vmem:[%s305] sm:$0xf]
      %v333 = vld [vmem:[%s305 + $0x4] sm:$0xf]
      %v334 = vld [vmem:[%s305 + $0x8] sm:$0xf]
      %v335 = vld [vmem:[%s305 + $0xc] sm:$0xf]
      %v336 = vld [vmem:[%s305 + $0x10] sm:$0xf]
      %v337 = vld [vmem:[%s305 + $0x14] sm:$0xf]
      %v338 = vld [vmem:[%s305 + $0x18] sm:$0xf]
      %v339 = vld [vmem:[%s305 + $0x1c] sm:$0xf]
      %v340 = vld [vmem:[%s305 + $0x20] sm:$0xf]
      %v341 = vld [vmem:[%s305 + $0x24] sm:$0xf]
      %v342 = vld [vmem:[%s305 + $0x28] sm:$0xf]
      %v343 = vld [vmem:[%s305 + $0x2c] sm:$0xf]
      %v344 = vld [vmem:[%s305 + $0x30] sm:$0xf]
      %v345 = vld [vmem:[%s305 + $0x34] sm:$0xf]
      %v346 = vld [vmem:[%s305 + $0x38] sm:$0xf]
      %v347 = vld [vmem:[%s305 + $0x3c] sm:$0xf]
      %v348 = vld [vmem:[%s305 + $0x40] sm:$0xf]
      %v349 = vld [vmem:[%s305 + $0x44] sm:$0xf]
      %v350 = vld [vmem:[%s305 + $0x48] sm:$0xf]
      %v351 = vld [vmem:[%s305 + $0x4c] sm:$0xf]
      %v352 = vld [vmem:[%s305 + $0x50] sm:$0xf]
      %v353 = vld [vmem:[%s305 + $0x54] sm:$0xf]
      %v354 = vld [vmem:[%s305 + $0x58] sm:$0xf]
      %v355 = vld [vmem:[%s305 + $0x5c] sm:$0xf]
      %v356 = vld [vmem:[%s305 + $0x60] sm:$0xf]
      %v357 = vld [vmem:[%s305 + $0x64] sm:$0xf]
      %v358 = vld [vmem:[%s305 + $0x68] sm:$0xf]
      %v359 = vld [vmem:[%s305 + $0x6c] sm:$0xf]
      %v360 = vld [vmem:[%s305 + $0x70] sm:$0xf]
      %v361 = vld [vmem:[%s305 + $0x74] sm:$0xf]
      %v362 = vld [vmem:[%s305 + $0x78] sm:$0xf]
      %v363 = vld [vmem:[%s305 + $0x7c] sm:$0xf]
      %v364 = vld [vmem:[%s2] sm:$0xf]
      %v365 = vld [vmem:[%s311] sm:$0xf]
      %v366 = vld [vmem:[%s311 + $0x4] sm:$0xf]
      %v367 = vld [vmem:[%s311 + $0x8] sm:$0xf]
      %v368 = vld [vmem:[%s311 + $0xc] sm:$0xf]
      %v369 = vld [vmem:[%s311 + $0x10] sm:$0xf]
      %v370 = vld [vmem:[%s311 + $0x14] sm:$0xf]
      %v371 = vld [vmem:[%s311 + $0x18] sm:$0xf]
      %v372 = vld [vmem:[%s311 + $0x1c] sm:$0xf]
      %v373 = vld [vmem:[%s311 + $0x20] sm:$0xf]
      %v374 = vld [vmem:[%s311 + $0x24] sm:$0xf]
      %v375 = vld [vmem:[%s311 + $0x28] sm:$0xf]
      %v376 = vld [vmem:[%s311 + $0x2c] sm:$0xf]
      %v377 = vld [vmem:[%s311 + $0x30] sm:$0xf]
      %v378 = vld [vmem:[%s311 + $0x34] sm:$0xf]
      %v379 = vld [vmem:[%s311 + $0x38] sm:$0xf]
      %v380 = vld [vmem:[%s311 + $0x3c] sm:$0xf]
      %v381 = vld [vmem:[%s311 + $0x40] sm:$0xf]
      %v382 = vld [vmem:[%s311 + $0x44] sm:$0xf]
      %v383 = vld [vmem:[%s311 + $0x48] sm:$0xf]
      %v384 = vld [vmem:[%s311 + $0x4c] sm:$0xf]
      %v385 = vld [vmem:[%s311 + $0x50] sm:$0xf]
      %v386 = vld [vmem:[%s311 + $0x54] sm:$0xf]
      %v387 = vld [vmem:[%s311 + $0x58] sm:$0xf]
      %v388 = vld [vmem:[%s311 + $0x5c] sm:$0xf]
      %v389 = vld [vmem:[%s311 + $0x60] sm:$0xf]
      %v390 = vld [vmem:[%s311 + $0x64] sm:$0xf]
      %v391 = vld [vmem:[%s311 + $0x68] sm:$0xf]
      %v392 = vld [vmem:[%s311 + $0x6c] sm:$0xf]
      %v393 = vld [vmem:[%s311 + $0x70] sm:$0xf]
      %v394 = vld [vmem:[%s311 + $0x74] sm:$0xf]
      %v395 = vld [vmem:[%s311 + $0x78] sm:$0xf]
      %v396 = vld [vmem:[%s311 + $0x7c] sm:$0xf]
      %v397 = vld [vmem:[%s3] sm:$0xf]
      %v430 = vunpack.c.l.b16 %v365
      %v431 = vunpack.c.l.b16 %v366
      %v432 = vunpack.c.l.b16 %v367
      %v433 = vunpack.c.l.b16 %v368
      %v434 = vunpack.c.l.b16 %v369
      %v435 = vunpack.c.l.b16 %v370
      %v436 = vunpack.c.l.b16 %v371
      %v437 = vunpack.c.l.b16 %v372
      %v438 = vunpack.c.l.b16 %v373
      %v439 = vunpack.c.l.b16 %v374
      %v440 = vunpack.c.l.b16 %v375
      %v441 = vunpack.c.l.b16 %v376
      %v442 = vunpack.c.l.b16 %v377
      %v443 = vunpack.c.l.b16 %v378
      %v444 = vunpack.c.l.b16 %v379
      %v445 = vunpack.c.l.b16 %v380
      %v446 = vunpack.c.l.b16 %v381
      %v447 = vunpack.c.l.b16 %v382
      %v448 = vunpack.c.l.b16 %v383
      %v449 = vunpack.c.l.b16 %v384
      %v450 = vunpack.c.l.b16 %v385
      %v451 = vunpack.c.l.b16 %v386
      %v452 = vunpack.c.l.b16 %v387
      %v453 = vunpack.c.l.b16 %v388
      %v454 = vunpack.c.l.b16 %v389
      %v455 = vunpack.c.l.b16 %v390
      %v456 = vunpack.c.l.b16 %v391
      %v457 = vunpack.c.l.b16 %v392
      %v458 = vunpack.c.l.b16 %v393
      %v459 = vunpack.c.l.b16 %v394
      %v460 = vunpack.c.l.b16 %v395
      %v461 = vunpack.c.l.b16 %v396
      %v462 = vpack.c.b16 %v431, %v430
      %v463 = vpack.c.b16 %v433, %v432
      %v464 = vpack.c.b16 %v435, %v434
      %v465 = vpack.c.b16 %v437, %v436
      %v466 = vpack.c.b16 %v439, %v438
      %v467 = vpack.c.b16 %v441, %v440
      %v468 = vpack.c.b16 %v443, %v442
      %v469 = vpack.c.b16 %v445, %v444
      %v470 = vpack.c.b16 %v447, %v446
      %v471 = vpack.c.b16 %v449, %v448
      %v472 = vpack.c.b16 %v451, %v450
      %v473 = vpack.c.b16 %v453, %v452
      %v474 = vpack.c.b16 %v455, %v454
      %v475 = vpack.c.b16 %v457, %v456
      %v476 = vpack.c.b16 %v459, %v458
      %v477 = vpack.c.b16 %v461, %v460
      %vm478 = vcmask 64512
      %v480 = vsel %vm478, %v462, 0
      %v483 = vsel %vm478, %v463, 0
      %v486 = vsel %vm478, %v464, 0
      %v489 = vsel %vm478, %v465, 0
      %v492 = vsel %vm478, %v466, 0
      %v495 = vsel %vm478, %v467, 0
      %v498 = vsel %vm478, %v468, 0
      %v501 = vsel %vm478, %v469, 0
      %v504 = vsel %vm478, %v470, 0
      %v507 = vsel %vm478, %v471, 0
      %v510 = vsel %vm478, %v472, 0
      %v513 = vsel %vm478, %v473, 0
      %v516 = vsel %vm478, %v474, 0
      %v519 = vsel %vm478, %v475, 0
      %v522 = vsel %vm478, %v476, 0
      %v525 = vsel %vm478, %v477, 0
      %vm527 = vcmask 1043456
      %v529 = vsel %vm527, %v397, 0
      %531 = vmatprep.subr.bf16.mxu0 0
      %532 = vmatpush1.bf16.msra.mxu0 %v529
      %533 = vmatprep.subr.bf16.mxu0 0
      %534 = vmatpush1.bf16.msra.mxu0 0
      %535 = vmatprep.subr.bf16.mxu0 0
      %536 = vmatpush1.bf16.msra.mxu0 0
      %537 = vmatprep.subr.bf16.mxu0 0
      %538 = vmatpush1.bf16.msra.mxu0 0
      %539 = vmatprep.subr.bf16.mxu0 0
      %540 = vmatpush1.bf16.msra.mxu0 0
      %541 = vmatprep.subr.bf16.mxu0 0
      %542 = vmatpush1.bf16.msra.mxu0 0
      %543 = vmatprep.subr.bf16.mxu0 0
      %544 = vmatpush1.bf16.msra.mxu0 0
      %545 = vmatprep.subr.bf16.mxu0 0
      %546 = vmatpush1.bf16.msra.mxu0 0
      %547 = vmatprep.subr.bf16.mxu0 0
      %548 = vmatpush1.bf16.msra.mxu0 0
      %549 = vmatprep.subr.bf16.mxu0 0
      %550 = vmatpush1.bf16.msra.mxu0 0
      %551 = vmatprep.subr.bf16.mxu0 0
      %552 = vmatpush1.bf16.msra.mxu0 0
      %553 = vmatprep.subr.bf16.mxu0 0
      %554 = vmatpush1.bf16.msra.mxu0 0
      %555 = vmatprep.subr.bf16.mxu0 0
      %556 = vmatpush1.bf16.msra.mxu0 0
      %557 = vmatprep.subr.bf16.mxu0 0
      %558 = vmatpush1.bf16.msra.mxu0 0
      %559 = vmatprep.subr.bf16.mxu0 0
      %560 = vmatpush1.bf16.msra.mxu0 0
      %561 = vmatprep.subr.bf16.mxu0 0
      %562 = vmatpush1.bf16.msra.mxu0 0
      %563 = vmatprep.mubr.bf16.mxu0 0
      %564 = vmatmul.mubr.bf16.gmra.mrb[0].mxu0 %v480
      %v565 = vpop.f32.mrb[0].mxu0
      %v566 = vadd.f32 0.0, %v565
      %v567 = vpop.f32.mrb[0].mxu0
      %v568 = vpop.f32.mrb[0].mxu0
      %v569 = vadd.f32 0.0, %v568
      %v570 = vpop.f32.mrb[0].mxu0
      %571 = vmatprep.mubr.bf16.mxu0 0
      %572 = vmatmul.mubr.bf16.gmra.mrb[0].mxu0 %v483
      %v573 = vpop.f32.mrb[0].mxu0
      %v574 = vadd.f32 0.0, %v573
      %v575 = vpop.f32.mrb[0].mxu0
      %v576 = vpop.f32.mrb[0].mxu0
      %v577 = vadd.f32 0.0, %v576
      %v578 = vpop.f32.mrb[0].mxu0
      %579 = vmatprep.mubr.bf16.mxu0 0
      %580 = vmatmul.mubr.bf16.gmra.mrb[0].mxu0 %v486
      %v581 = vpop.f32.mrb[0].mxu0
      %v582 = vadd.f32 0.0, %v581
      %v583 = vpop.f32.mrb[0].mxu0
      %v584 = vpop.f32.mrb[0].mxu0
      %v585 = vadd.f32 0.0, %v584
      %v586 = vpop.f32.mrb[0].mxu0
      %587 = vmatprep.mubr.bf16.mxu0 0
      %588 = vmatmul.mubr.bf16.gmra.mrb[0].mxu0 %v489
      %v589 = vpop.f32.mrb[0].mxu0
      %v590 = vadd.f32 0.0, %v589
      %v591 = vpop.f32.mrb[0].mxu0
      %v592 = vpop.f32.mrb[0].mxu0
      %v593 = vadd.f32 0.0, %v592
      %v594 = vpop.f32.mrb[0].mxu0
      %595 = vmatprep.mubr.bf16.mxu0 0
      %596 = vmatmul.mubr.bf16.gmra.mrb[0].mxu0 %v492
      %v597 = vpop.f32.mrb[0].mxu0
      %v598 = vadd.f32 0.0, %v597
      %v599 = vpop.f32.mrb[0].mxu0
      %v600 = vpop.f32.mrb[0].mxu0
      %v601 = vadd.f32 0.0, %v600
      %v602 = vpop.f32.mrb[0].mxu0
      %603 = vmatprep.mubr.bf16.mxu0 0
      %604 = vmatmul.mubr.bf16.gmra.mrb[0].mxu0 %v495
      %v605 = vpop.f32.mrb[0].mxu0
      %v606 = vadd.f32 0.0, %v605
      %v607 = vpop.f32.mrb[0].mxu0
      %v608 = vpop.f32.mrb[0].mxu0
      %v609 = vadd.f32 0.0, %v608
      %v610 = vpop.f32.mrb[0].mxu0
      %611 = vmatprep.mubr.bf16.mxu0 0
      %612 = vmatmul.mubr.bf16.gmra.mrb[0].mxu0 %v498
      %v613 = vpop.f32.mrb[0].mxu0
      %v614 = vadd.f32 0.0, %v613
      %v615 = vpop.f32.mrb[0].mxu0
      %v616 = vpop.f32.mrb[0].mxu0
      %v617 = vadd.f32 0.0, %v616
      %v618 = vpop.f32.mrb[0].mxu0
      %619 = vmatprep.mubr.bf16.mxu0 0
      %620 = vmatmul.mubr.bf16.gmra.mrb[0].mxu0 %v501
      %v621 = vpop.f32.mrb[0].mxu0
      %v622 = vadd.f32 0.0, %v621
      %v623 = vpop.f32.mrb[0].mxu0
      %v624 = vpop.f32.mrb[0].mxu0
      %v625 = vadd.f32 0.0, %v624
      %v626 = vpop.f32.mrb[0].mxu0
      %627 = vmatprep.mubr.bf16.mxu0 0
      %628 = vmatmul.mubr.bf16.gmra.mrb[0].mxu0 %v504
      %v629 = vpop.f32.mrb[0].mxu0
      %v630 = vadd.f32 0.0, %v629
      %v631 = vpop.f32.mrb[0].mxu0
      %v632 = vpop.f32.mrb[0].mxu0
      %v633 = vadd.f32 0.0, %v632
      %v634 = vpop.f32.mrb[0].mxu0
      %635 = vmatprep.mubr.bf16.mxu0 0
      %636 = vmatmul.mubr.bf16.gmra.mrb[0].mxu0 %v507
      %v637 = vpop.f32.mrb[0].mxu0
      %v638 = vadd.f32 0.0, %v637
      %v639 = vpop.f32.mrb[0].mxu0
      %v640 = vpop.f32.mrb[0].mxu0
      %v641 = vadd.f32 0.0, %v640
      %v642 = vpop.f32.mrb[0].mxu0
      %643 = vmatprep.mubr.bf16.mxu0 0
      %644 = vmatmul.mubr.bf16.gmra.mrb[0].mxu0 %v510
      %v645 = vpop.f32.mrb[0].mxu0
      %v646 = vadd.f32 0.0, %v645
      %v647 = vpop.f32.mrb[0].mxu0
      %v648 = vpop.f32.mrb[0].mxu0
      %v649 = vadd.f32 0.0, %v648
      %v650 = vpop.f32.mrb[0].mxu0
      %651 = vmatprep.mubr.bf16.mxu0 0
      %652 = vmatmul.mubr.bf16.gmra.mrb[0].mxu0 %v513
      %v653 = vpop.f32.mrb[0].mxu0
      %v654 = vadd.f32 0.0, %v653
      %v655 = vpop.f32.mrb[0].mxu0
      %v656 = vpop.f32.mrb[0].mxu0
      %v657 = vadd.f32 0.0, %v656
      %v658 = vpop.f32.mrb[0].mxu0
      %659 = vmatprep.mubr.bf16.mxu0 0
      %660 = vmatmul.mubr.bf16.gmra.mrb[0].mxu0 %v516
      %v661 = vpop.f32.mrb[0].mxu0
      %v662 = vadd.f32 0.0, %v661
      %v663 = vpop.f32.mrb[0].mxu0
      %v664 = vpop.f32.mrb[0].mxu0
      %v665 = vadd.f32 0.0, %v664
      %v666 = vpop.f32.mrb[0].mxu0
      %667 = vmatprep.mubr.bf16.mxu0 0
      %668 = vmatmul.mubr.bf16.gmra.mrb[0].mxu0 %v519
      %v669 = vpop.f32.mrb[0].mxu0
      %v670 = vadd.f32 0.0, %v669
      %v671 = vpop.f32.mrb[0].mxu0
      %v672 = vpop.f32.mrb[0].mxu0
      %v673 = vadd.f32 0.0, %v672
      %v674 = vpop.f32.mrb[0].mxu0
      %675 = vmatprep.mubr.bf16.mxu0 0
      %676 = vmatmul.mubr.bf16.gmra.mrb[0].mxu0 %v522
      %v677 = vpop.f32.mrb[0].mxu0
      %v678 = vadd.f32 0.0, %v677
      %v679 = vpop.f32.mrb[0].mxu0
      %v680 = vpop.f32.mrb[0].mxu0
      %v681 = vadd.f32 0.0, %v680
      %v682 = vpop.f32.mrb[0].mxu0
      %683 = vmatprep.mubr.bf16.mxu0 0
      %684 = vmatmul.mubr.bf16.gmra.mrb[0].mxu0 %v525
      %v685 = vpop.f32.mrb[0].mxu0
      %v686 = vadd.f32 0.0, %v685
      %v687 = vpop.f32.mrb[0].mxu0
      %v688 = vpop.f32.mrb[0].mxu0
      %v689 = vadd.f32 0.0, %v688
      %v690 = vpop.f32.mrb[0].mxu0
      %691 = vdwg.mxu0
      %v724 = vunpack.c.l.b16 %v332
      %v725 = vunpack.c.l.b16 %v333
      %v726 = vunpack.c.l.b16 %v334
      %v727 = vunpack.c.l.b16 %v335
      %v728 = vunpack.c.l.b16 %v336
      %v729 = vunpack.c.l.b16 %v337
      %v730 = vunpack.c.l.b16 %v338
      %v731 = vunpack.c.l.b16 %v339
      %v732 = vunpack.c.l.b16 %v340
      %v733 = vunpack.c.l.b16 %v341
      %v734 = vunpack.c.l.b16 %v342
      %v735 = vunpack.c.l.b16 %v343
      %v736 = vunpack.c.l.b16 %v344
      %v737 = vunpack.c.l.b16 %v345
      %v738 = vunpack.c.l.b16 %v346
      %v739 = vunpack.c.l.b16 %v347
      %v740 = vunpack.c.l.b16 %v348
      %v741 = vunpack.c.l.b16 %v349
      %v742 = vunpack.c.l.b16 %v350
      %v743 = vunpack.c.l.b16 %v351
      %v744 = vunpack.c.l.b16 %v352
      %v745 = vunpack.c.l.b16 %v353
      %v746 = vunpack.c.l.b16 %v354
      %v747 = vunpack.c.l.b16 %v355
      %v748 = vunpack.c.l.b16 %v356
      %v749 = vunpack.c.l.b16 %v357
      %v750 = vunpack.c.l.b16 %v358
      %v751 = vunpack.c.l.b16 %v359
      %v752 = vunpack.c.l.b16 %v360
      %v753 = vunpack.c.l.b16 %v361
      %v754 = vunpack.c.l.b16 %v362
      %v755 = vunpack.c.l.b16 %v363
      %v756 = vpack.c.b16 %v725, %v724
      %v757 = vpack.c.b16 %v727, %v726
      %v758 = vpack.c.b16 %v729, %v728
      %v759 = vpack.c.b16 %v731, %v730
      %v760 = vpack.c.b16 %v733, %v732
      %v761 = vpack.c.b16 %v735, %v734
      %v762 = vpack.c.b16 %v737, %v736
      %v763 = vpack.c.b16 %v739, %v738
      %v764 = vpack.c.b16 %v741, %v740
      %v765 = vpack.c.b16 %v743, %v742
      %v766 = vpack.c.b16 %v745, %v744
      %v767 = vpack.c.b16 %v747, %v746
      %v768 = vpack.c.b16 %v749, %v748
      %v769 = vpack.c.b16 %v751, %v750
      %v770 = vpack.c.b16 %v753, %v752
      %v771 = vpack.c.b16 %v755, %v754
      %v773 = vsel %vm478, %v756, 0
      %v776 = vsel %vm478, %v757, 0
      %v779 = vsel %vm478, %v758, 0
      %v782 = vsel %vm478, %v759, 0
      %v785 = vsel %vm478, %v760, 0
      %v788 = vsel %vm478, %v761, 0
      %v791 = vsel %vm478, %v762, 0
      %v794 = vsel %vm478, %v763, 0
      %v797 = vsel %vm478, %v764, 0
      %v800 = vsel %vm478, %v765, 0
      %v803 = vsel %vm478, %v766, 0
      %v806 = vsel %vm478, %v767, 0
      %v809 = vsel %vm478, %v768, 0
      %v812 = vsel %vm478, %v769, 0
      %v815 = vsel %vm478, %v770, 0
      %v818 = vsel %vm478, %v771, 0
      %v821 = vsel %vm527, %v364, 0
      %823 = vmatprep.subr.bf16.mxu0 0
      %824 = vmatpush1.bf16.msra.mxu0 %v821
      %825 = vmatprep.subr.bf16.mxu0 0
      %826 = vmatpush1.bf16.msra.mxu0 0
      %827 = vmatprep.subr.bf16.mxu0 0
      %828 = vmatpush1.bf16.msra.mxu0 0
      %829 = vmatprep.subr.bf16.mxu0 0
      %830 = vmatpush1.bf16.msra.mxu0 0
      %831 = vmatprep.subr.bf16.mxu0 0
      %832 = vmatpush1.bf16.msra.mxu0 0
      %833 = vmatprep.subr.bf16.mxu0 0
      %834 = vmatpush1.bf16.msra.mxu0 0
      %835 = vmatprep.subr.bf16.mxu0 0
      %836 = vmatpush1.bf16.msra.mxu0 0
      %837 = vmatprep.subr.bf16.mxu0 0
      %838 = vmatpush1.bf16.msra.mxu0 0
      %839 = vmatprep.subr.bf16.mxu0 0
      %840 = vmatpush1.bf16.msra.mxu0 0
      %841 = vmatprep.subr.bf16.mxu0 0
      %842 = vmatpush1.bf16.msra.mxu0 0
      %843 = vmatprep.subr.bf16.mxu0 0
      %844 = vmatpush1.bf16.msra.mxu0 0
      %845 = vmatprep.subr.bf16.mxu0 0
      %846 = vmatpush1.bf16.msra.mxu0 0
      %847 = vmatprep.subr.bf16.mxu0 0
      %848 = vmatpush1.bf16.msra.mxu0 0
      %849 = vmatprep.subr.bf16.mxu0 0
      %850 = vmatpush1.bf16.msra.mxu0 0
      %851 = vmatprep.subr.bf16.mxu0 0
      %852 = vmatpush1.bf16.msra.mxu0 0
      %853 = vmatprep.subr.bf16.mxu0 0
      %854 = vmatpush1.bf16.msra.mxu0 0
      %855 = vmatprep.mubr.bf16.mxu0 0
      %856 = vmatmul.mubr.bf16.gmra.mrb[0].mxu0 %v773
      %v857 = vpop.f32.mrb[0].mxu0
      %v858 = vadd.f32 %v566, %v857
      %v859 = vpop.f32.mrb[0].mxu0
      %v860 = vpop.f32.mrb[0].mxu0
      %v861 = vadd.f32 %v569, %v860
      %v862 = vpop.f32.mrb[0].mxu0
      %863 = vmatprep.mubr.bf16.mxu0 0
      %864 = vmatmul.mubr.bf16.gmra.mrb[0].mxu0 %v776
      %v865 = vpop.f32.mrb[0].mxu0
      %v866 = vadd.f32 %v574, %v865
      %v867 = vpop.f32.mrb[0].mxu0
      %v868 = vpop.f32.mrb[0].mxu0
      %v869 = vadd.f32 %v577, %v868
      %v870 = vpop.f32.mrb[0].mxu0
      %871 = vmatprep.mubr.bf16.mxu0 0
      %872 = vmatmul.mubr.bf16.gmra.mrb[0].mxu0 %v779
      %v873 = vpop.f32.mrb[0].mxu0
      %v874 = vadd.f32 %v582, %v873
      %v875 = vpop.f32.mrb[0].mxu0
      %v876 = vpop.f32.mrb[0].mxu0
      %v877 = vadd.f32 %v585, %v876
      %v878 = vpop.f32.mrb[0].mxu0
      %879 = vmatprep.mubr.bf16.mxu0 0
      %880 = vmatmul.mubr.bf16.gmra.mrb[0].mxu0 %v782
      %v881 = vpop.f32.mrb[0].mxu0
      %v882 = vadd.f32 %v590, %v881
      %v883 = vpop.f32.mrb[0].mxu0
      %v884 = vpop.f32.mrb[0].mxu0
      %v885 = vadd.f32 %v593, %v884
      %v886 = vpop.f32.mrb[0].mxu0
      %887 = vmatprep.mubr.bf16.mxu0 0
      %888 = vmatmul.mubr.bf16.gmra.mrb[0].mxu0 %v785
      %v889 = vpop.f32.mrb[0].mxu0
      %v890 = vadd.f32 %v598, %v889
      %v891 = vpop.f32.mrb[0].mxu0
      %v892 = vpop.f32.mrb[0].mxu0
      %v893 = vadd.f32 %v601, %v892
      %v894 = vpop.f32.mrb[0].mxu0
      %895 = vmatprep.mubr.bf16.mxu0 0
      %896 = vmatmul.mubr.bf16.gmra.mrb[0].mxu0 %v788
      %v897 = vpop.f32.mrb[0].mxu0
      %v898 = vadd.f32 %v606, %v897
      %v899 = vpop.f32.mrb[0].mxu0
      %v900 = vpop.f32.mrb[0].mxu0
      %v901 = vadd.f32 %v609, %v900
      %v902 = vpop.f32.mrb[0].mxu0
      %903 = vmatprep.mubr.bf16.mxu0 0
      %904 = vmatmul.mubr.bf16.gmra.mrb[0].mxu0 %v791
      %v905 = vpop.f32.mrb[0].mxu0
      %v906 = vadd.f32 %v614, %v905
      %v907 = vpop.f32.mrb[0].mxu0
      %v908 = vpop.f32.mrb[0].mxu0
      %v909 = vadd.f32 %v617, %v908
      %v910 = vpop.f32.mrb[0].mxu0
      %911 = vmatprep.mubr.bf16.mxu0 0
      %912 = vmatmul.mubr.bf16.gmra.mrb[0].mxu0 %v794
      %v913 = vpop.f32.mrb[0].mxu0
      %v914 = vadd.f32 %v622, %v913
      %v915 = vpop.f32.mrb[0].mxu0
      %v916 = vpop.f32.mrb[0].mxu0
      %v917 = vadd.f32 %v625, %v916
      %v918 = vpop.f32.mrb[0].mxu0
      %919 = vmatprep.mubr.bf16.mxu0 0
      %920 = vmatmul.mubr.bf16.gmra.mrb[0].mxu0 %v797
      %v921 = vpop.f32.mrb[0].mxu0
      %v922 = vadd.f32 %v630, %v921
      %v923 = vpop.f32.mrb[0].mxu0
      %v924 = vpop.f32.mrb[0].mxu0
      %v925 = vadd.f32 %v633, %v924
      %v926 = vpop.f32.mrb[0].mxu0
      %927 = vmatprep.mubr.bf16.mxu0 0
      %928 = vmatmul.mubr.bf16.gmra.mrb[0].mxu0 %v800
      %v929 = vpop.f32.mrb[0].mxu0
      %v930 = vadd.f32 %v638, %v929
      %v931 = vpop.f32.mrb[0].mxu0
      %v932 = vpop.f32.mrb[0].mxu0
      %v933 = vadd.f32 %v641, %v932
      %v934 = vpop.f32.mrb[0].mxu0
      %935 = vmatprep.mubr.bf16.mxu0 0
      %936 = vmatmul.mubr.bf16.gmra.mrb[0].mxu0 %v803
      %v937 = vpop.f32.mrb[0].mxu0
      %v938 = vadd.f32 %v646, %v937
      %v939 = vpop.f32.mrb[0].mxu0
      %v940 = vpop.f32.mrb[0].mxu0
      %v941 = vadd.f32 %v649, %v940
      %v942 = vpop.f32.mrb[0].mxu0
      %943 = vmatprep.mubr.bf16.mxu0 0
      %944 = vmatmul.mubr.bf16.gmra.mrb[0].mxu0 %v806
      %v945 = vpop.f32.mrb[0].mxu0
      %v946 = vadd.f32 %v654, %v945
      %v947 = vpop.f32.mrb[0].mxu0
      %v948 = vpop.f32.mrb[0].mxu0
      %v949 = vadd.f32 %v657, %v948
      %v950 = vpop.f32.mrb[0].mxu0
      %951 = vmatprep.mubr.bf16.mxu0 0
      %952 = vmatmul.mubr.bf16.gmra.mrb[0].mxu0 %v809
      %v953 = vpop.f32.mrb[0].mxu0
      %v954 = vadd.f32 %v662, %v953
      %v955 = vpop.f32.mrb[0].mxu0
      %v956 = vpop.f32.mrb[0].mxu0
      %v957 = vadd.f32 %v665, %v956
      %v958 = vpop.f32.mrb[0].mxu0
      %959 = vmatprep.mubr.bf16.mxu0 0
      %960 = vmatmul.mubr.bf16.gmra.mrb[0].mxu0 %v812
      %v961 = vpop.f32.mrb[0].mxu0
      %v962 = vadd.f32 %v670, %v961
      %v963 = vpop.f32.mrb[0].mxu0
      %v964 = vpop.f32.mrb[0].mxu0
      %v965 = vadd.f32 %v673, %v964
      %v966 = vpop.f32.mrb[0].mxu0
      %967 = vmatprep.mubr.bf16.mxu0 0
      %968 = vmatmul.mubr.bf16.gmra.mrb[0].mxu0 %v815
      %v969 = vpop.f32.mrb[0].mxu0
      %v970 = vadd.f32 %v678, %v969
      %v971 = vpop.f32.mrb[0].mxu0
      %v972 = vpop.f32.mrb[0].mxu0
      %v973 = vadd.f32 %v681, %v972
      %v974 = vpop.f32.mrb[0].mxu0
      %975 = vmatprep.mubr.bf16.mxu0 0
      %976 = vmatmul.mubr.bf16.gmra.mrb[0].mxu0 %v818
      %v977 = vpop.f32.mrb[0].mxu0
      %v978 = vadd.f32 %v686, %v977
      %v979 = vpop.f32.mrb[0].mxu0
      %v980 = vpop.f32.mrb[0].mxu0
      %v981 = vadd.f32 %v689, %v980
      %v982 = vpop.f32.mrb[0].mxu0
      %983 = vdwg.mxu0
      %v984 = vld [vmem:[%s4] sm:$0x1]
      %v986 = vlaneseq
      %v987 = vshrl.u32 %v986, 7
      %v988 = vsub.s32 0, %v987
      %v989 = vrot.slane %v984, %v988
      %v991 = vadd.f32 %v858, %v989
      %v992 = vadd.f32 %v861, %v989
      %v993 = vadd.f32 %v866, %v989
      %v994 = vadd.f32 %v869, %v989
      %v995 = vadd.f32 %v874, %v989
      %v996 = vadd.f32 %v877, %v989
      %v997 = vadd.f32 %v882, %v989
      %v998 = vadd.f32 %v885, %v989
      %v999 = vadd.f32 %v890, %v989
      %v1000 = vadd.f32 %v893, %v989
      %v1001 = vadd.f32 %v898, %v989
      %v1002 = vadd.f32 %v901, %v989
      %v1003 = vadd.f32 %v906, %v989
      %v1004 = vadd.f32 %v909, %v989
      %v1005 = vadd.f32 %v914, %v989
      %v1006 = vadd.f32 %v917, %v989
      %v1007 = vadd.f32 %v922, %v989
      %v1008 = vadd.f32 %v925, %v989
      %v1009 = vadd.f32 %v930, %v989
      %v1010 = vadd.f32 %v933, %v989
      %v1011 = vadd.f32 %v938, %v989
      %v1012 = vadd.f32 %v941, %v989
      %v1013 = vadd.f32 %v946, %v989
      %v1014 = vadd.f32 %v949, %v989
      %v1015 = vadd.f32 %v954, %v989
      %v1016 = vadd.f32 %v957, %v989
      %v1017 = vadd.f32 %v962, %v989
      %v1018 = vadd.f32 %v965, %v989
      %v1019 = vadd.f32 %v970, %v989
      %v1020 = vadd.f32 %v973, %v989
      %v1021 = vadd.f32 %v978, %v989
      %v1022 = vadd.f32 %v981, %v989
      %vm1023 = vcmask 48128
      %1024 = vst.msk [vmem:[%s317] sm:$0xff] %vm1023, %v991
      %1025 = vst.msk [vmem:[%s317 + $0x8] sm:$0xff] %vm1023, %v992
      %1026 = vst.msk [vmem:[%s317 + $0x10] sm:$0xff] %vm1023, %v993
      %1027 = vst.msk [vmem:[%s317 + $0x18] sm:$0xff] %vm1023, %v994
      %1028 = vst.msk [vmem:[%s317 + $0x20] sm:$0xff] %vm1023, %v995
      %1029 = vst.msk [vmem:[%s317 + $0x28] sm:$0xff] %vm1023, %v996
      %1030 = vst.msk [vmem:[%s317 + $0x30] sm:$0xff] %vm1023, %v997
      %1031 = vst.msk [vmem:[%s317 + $0x38] sm:$0xff] %vm1023, %v998
      %1032 = vst.msk [vmem:[%s317 + $0x40] sm:$0xff] %vm1023, %v999
      %1033 = vst.msk [vmem:[%s317 + $0x48] sm:$0xff] %vm1023, %v1000
      %1034 = vst.msk [vmem:[%s317 + $0x50] sm:$0xff] %vm1023, %v1001
      %1035 = vst.msk [vmem:[%s317 + $0x58] sm:$0xff] %vm1023, %v1002
      %1036 = vst.msk [vmem:[%s317 + $0x60] sm:$0xff] %vm1023, %v1003
      %1037 = vst.msk [vmem:[%s317 + $0x68] sm:$0xff] %vm1023, %v1004
      %1038 = vst.msk [vmem:[%s317 + $0x70] sm:$0xff] %vm1023, %v1005
      %1039 = vst.msk [vmem:[%s317 + $0x78] sm:$0xff] %vm1023, %v1006
      %1040 = vst.msk [vmem:[%s317 + $0x80] sm:$0xff] %vm1023, %v1007
      %1041 = vst.msk [vmem:[%s317 + $0x88] sm:$0xff] %vm1023, %v1008
      %1042 = vst.msk [vmem:[%s317 + $0x90] sm:$0xff] %vm1023, %v1009
      %1043 = vst.msk [vmem:[%s317 + $0x98] sm:$0xff] %vm1023, %v1010
      %1044 = vst.msk [vmem:[%s317 + $0xa0] sm:$0xff] %vm1023, %v1011
      %1045 = vst.msk [vmem:[%s317 + $0xa8] sm:$0xff] %vm1023, %v1012
      %1046 = vst.msk [vmem:[%s317 + $0xb0] sm:$0xff] %vm1023, %v1013
      %1047 = vst.msk [vmem:[%s317 + $0xb8] sm:$0xff] %vm1023, %v1014
      %1048 = vst.msk [vmem:[%s317 + $0xc0] sm:$0xff] %vm1023, %v1015
      %1049 = vst.msk [vmem:[%s317 + $0xc8] sm:$0xff] %vm1023, %v1016
      %1050 = vst.msk [vmem:[%s317 + $0xd0] sm:$0xff] %vm1023, %v1017
      %1051 = vst.msk [vmem:[%s317 + $0xd8] sm:$0xff] %vm1023, %v1018
      %1052 = vst.msk [vmem:[%s317 + $0xe0] sm:$0xff] %vm1023, %v1019
      %1053 = vst.msk [vmem:[%s317 + $0xe8] sm:$0xff] %vm1023, %v1020
      %1054 = vst.msk [vmem:[%s317 + $0xf0] sm:$0xff] %vm1023, %v1021
      %1055 = vst.msk [vmem:[%s317 + $0xf8] sm:$0xff] %vm1023, %v1022
      %1088 = vrot.lane.b32.xlu0 %v991, 122
      %v1089 = vpop.permute.xlu0 %1088
      %1090 = vrot.lane.b32.xlu0 %v992, 122
      %v1091 = vpop.permute.xlu0 %1090
      %1092 = vrot.lane.b32.xlu0 %v993, 122
      %v1093 = vpop.permute.xlu0 %1092
      %1094 = vrot.lane.b32.xlu0 %v994, 122
      %v1095 = vpop.permute.xlu0 %1094
      %1096 = vrot.lane.b32.xlu0 %v995, 122
      %v1097 = vpop.permute.xlu0 %1096
      %1098 = vrot.lane.b32.xlu0 %v996, 122
      %v1099 = vpop.permute.xlu0 %1098
      %1100 = vrot.lane.b32.xlu0 %v997, 122
      %v1101 = vpop.permute.xlu0 %1100
      %1102 = vrot.lane.b32.xlu0 %v998, 122
      %v1103 = vpop.permute.xlu0 %1102
      %1104 = vrot.lane.b32.xlu0 %v999, 122
      %v1105 = vpop.permute.xlu0 %1104
      %1106 = vrot.lane.b32.xlu0 %v1000, 122
      %v1107 = vpop.permute.xlu0 %1106
      %1108 = vrot.lane.b32.xlu0 %v1001, 122
      %v1109 = vpop.permute.xlu0 %1108
      %1110 = vrot.lane.b32.xlu0 %v1002, 122
      %v1111 = vpop.permute.xlu0 %1110
      %1112 = vrot.lane.b32.xlu0 %v1003, 122
      %v1113 = vpop.permute.xlu0 %1112
      %1114 = vrot.lane.b32.xlu0 %v1004, 122
      %v1115 = vpop.permute.xlu0 %1114
      %1116 = vrot.lane.b32.xlu0 %v1005, 122
      %v1117 = vpop.permute.xlu0 %1116
      %1118 = vrot.lane.b32.xlu0 %v1006, 122
      %v1119 = vpop.permute.xlu0 %1118
      %1120 = vrot.lane.b32.xlu0 %v1007, 122
      %v1121 = vpop.permute.xlu0 %1120
      %1122 = vrot.lane.b32.xlu0 %v1008, 122
      %v1123 = vpop.permute.xlu0 %1122
      %1124 = vrot.lane.b32.xlu0 %v1009, 122
      %v1125 = vpop.permute.xlu0 %1124
      %1126 = vrot.lane.b32.xlu0 %v1010, 122
      %v1127 = vpop.permute.xlu0 %1126
      %1128 = vrot.lane.b32.xlu0 %v1011, 122
      %v1129 = vpop.permute.xlu0 %1128
      %1130 = vrot.lane.b32.xlu0 %v1012, 122
      %v1131 = vpop.permute.xlu0 %1130
      %1132 = vrot.lane.b32.xlu0 %v1013, 122
      %v1133 = vpop.permute.xlu0 %1132
      %1134 = vrot.lane.b32.xlu0 %v1014, 122
      %v1135 = vpop.permute.xlu0 %1134
      %1136 = vrot.lane.b32.xlu0 %v1015, 122
      %v1137 = vpop.permute.xlu0 %1136
      %1138 = vrot.lane.b32.xlu0 %v1016, 122
      %v1139 = vpop.permute.xlu0 %1138
      %1140 = vrot.lane.b32.xlu0 %v1017, 122
      %v1141 = vpop.permute.xlu0 %1140
      %1142 = vrot.lane.b32.xlu0 %v1018, 122
      %v1143 = vpop.permute.xlu0 %1142
      %1144 = vrot.lane.b32.xlu0 %v1019, 122
      %v1145 = vpop.permute.xlu0 %1144
      %1146 = vrot.lane.b32.xlu0 %v1020, 122
      %v1147 = vpop.permute.xlu0 %1146
      %1148 = vrot.lane.b32.xlu0 %v1021, 122
      %v1149 = vpop.permute.xlu0 %1148
      %1150 = vrot.lane.b32.xlu0 %v1022, 122
      %v1151 = vpop.permute.xlu0 %1150
      %vm1184 = vcmask 113664
      %1185 = vst.msk [vmem:[%s323] sm:$0xff] %vm1184, %v1089
      %1186 = vst.msk [vmem:[%s323 + $0x8] sm:$0xff] %vm1184, %v1091
      %1187 = vst.msk [vmem:[%s323 + $0x10] sm:$0xff] %vm1184, %v1093
      %1188 = vst.msk [vmem:[%s323 + $0x18] sm:$0xff] %vm1184, %v1095
      %1189 = vst.msk [vmem:[%s323 + $0x20] sm:$0xff] %vm1184, %v1097
      %1190 = vst.msk [vmem:[%s323 + $0x28] sm:$0xff] %vm1184, %v1099
      %1191 = vst.msk [vmem:[%s323 + $0x30] sm:$0xff] %vm1184, %v1101
      %1192 = vst.msk [vmem:[%s323 + $0x38] sm:$0xff] %vm1184, %v1103
      %1193 = vst.msk [vmem:[%s323 + $0x40] sm:$0xff] %vm1184, %v1105
      %1194 = vst.msk [vmem:[%s323 + $0x48] sm:$0xff] %vm1184, %v1107
      %1195 = vst.msk [vmem:[%s323 + $0x50] sm:$0xff] %vm1184, %v1109
      %1196 = vst.msk [vmem:[%s323 + $0x58] sm:$0xff] %vm1184, %v1111
      %1197 = vst.msk [vmem:[%s323 + $0x60] sm:$0xff] %vm1184, %v1113
      %1198 = vst.msk [vmem:[%s323 + $0x68] sm:$0xff] %vm1184, %v1115
      %1199 = vst.msk [vmem:[%s323 + $0x70] sm:$0xff] %vm1184, %v1117
      %1200 = vst.msk [vmem:[%s323 + $0x78] sm:$0xff] %vm1184, %v1119
      %1201 = vst.msk [vmem:[%s323 + $0x80] sm:$0xff] %vm1184, %v1121
      %1202 = vst.msk [vmem:[%s323 + $0x88] sm:$0xff] %vm1184, %v1123
      %1203 = vst.msk [vmem:[%s323 + $0x90] sm:$0xff] %vm1184, %v1125
      %1204 = vst.msk [vmem:[%s323 + $0x98] sm:$0xff] %vm1184, %v1127
      %1205 = vst.msk [vmem:[%s323 + $0xa0] sm:$0xff] %vm1184, %v1129
      %1206 = vst.msk [vmem:[%s323 + $0xa8] sm:$0xff] %vm1184, %v1131
      %1207 = vst.msk [vmem:[%s323 + $0xb0] sm:$0xff] %vm1184, %v1133
      %1208 = vst.msk [vmem:[%s323 + $0xb8] sm:$0xff] %vm1184, %v1135
      %1209 = vst.msk [vmem:[%s323 + $0xc0] sm:$0xff] %vm1184, %v1137
      %1210 = vst.msk [vmem:[%s323 + $0xc8] sm:$0xff] %vm1184, %v1139
      %1211 = vst.msk [vmem:[%s323 + $0xd0] sm:$0xff] %vm1184, %v1141
      %1212 = vst.msk [vmem:[%s323 + $0xd8] sm:$0xff] %vm1184, %v1143
      %1213 = vst.msk [vmem:[%s323 + $0xe0] sm:$0xff] %vm1184, %v1145
      %1214 = vst.msk [vmem:[%s323 + $0xe8] sm:$0xff] %vm1184, %v1147
      %1215 = vst.msk [vmem:[%s323 + $0xf0] sm:$0xff] %vm1184, %v1149
      %1216 = vst.msk [vmem:[%s323 + $0xf8] sm:$0xff] %vm1184, %v1151
      %1217 = vrot.lane.b32.xlu0 %v991, 108
      %v1218 = vpop.permute.xlu0 %1217
      %1219 = vrot.lane.b32.xlu0 %v992, 108
      %v1220 = vpop.permute.xlu0 %1219
      %1221 = vrot.lane.b32.xlu0 %v993, 108
      %v1222 = vpop.permute.xlu0 %1221
      %1223 = vrot.lane.b32.xlu0 %v994, 108
      %v1224 = vpop.permute.xlu0 %1223
      %1225 = vrot.lane.b32.xlu0 %v995, 108
      %v1226 = vpop.permute.xlu0 %1225
      %1227 = vrot.lane.b32.xlu0 %v996, 108
      %v1228 = vpop.permute.xlu0 %1227
      %1229 = vrot.lane.b32.xlu0 %v997, 108
      %v1230 = vpop.permute.xlu0 %1229
      %1231 = vrot.lane.b32.xlu0 %v998, 108
      %v1232 = vpop.permute.xlu0 %1231
      %1233 = vrot.lane.b32.xlu0 %v999, 108
      %v1234 = vpop.permute.xlu0 %1233
      %1235 = vrot.lane.b32.xlu0 %v1000, 108
      %v1236 = vpop.permute.xlu0 %1235
      %1237 = vrot.lane.b32.xlu0 %v1001, 108
      %v1238 = vpop.permute.xlu0 %1237
      %1239 = vrot.lane.b32.xlu0 %v1002, 108
      %v1240 = vpop.permute.xlu0 %1239
      %1241 = vrot.lane.b32.xlu0 %v1003, 108
      %v1242 = vpop.permute.xlu0 %1241
      %1243 = vrot.lane.b32.xlu0 %v1004, 108
      %v1244 = vpop.permute.xlu0 %1243
      %1245 = vrot.lane.b32.xlu0 %v1005, 108
      %v1246 = vpop.permute.xlu0 %1245
      %1247 = vrot.lane.b32.xlu0 %v1006, 108
      %v1248 = vpop.permute.xlu0 %1247
      %1249 = vrot.lane.b32.xlu0 %v1007, 108
      %v1250 = vpop.permute.xlu0 %1249
      %1251 = vrot.lane.b32.xlu0 %v1008, 108
      %v1252 = vpop.permute.xlu0 %1251
      %1253 = vrot.lane.b32.xlu0 %v1009, 108
      %v1254 = vpop.permute.xlu0 %1253
      %1255 = vrot.lane.b32.xlu0 %v1010, 108
      %v1256 = vpop.permute.xlu0 %1255
      %1257 = vrot.lane.b32.xlu0 %v1011, 108
      %v1258 = vpop.permute.xlu0 %1257
      %1259 = vrot.lane.b32.xlu0 %v1012, 108
      %v1260 = vpop.permute.xlu0 %1259
      %1261 = vrot.lane.b32.xlu0 %v1013, 108
      %v1262 = vpop.permute.xlu0 %1261
      %1263 = vrot.lane.b32.xlu0 %v1014, 108
      %v1264 = vpop.permute.xlu0 %1263
      %1265 = vrot.lane.b32.xlu0 %v1015, 108
      %v1266 = vpop.permute.xlu0 %1265
      %1267 = vrot.lane.b32.xlu0 %v1016, 108
      %v1268 = vpop.permute.xlu0 %1267
      %1269 = vrot.lane.b32.xlu0 %v1017, 108
      %v1270 = vpop.permute.xlu0 %1269
      %1271 = vrot.lane.b32.xlu0 %v1018, 108
      %v1272 = vpop.permute.xlu0 %1271
      %1273 = vrot.lane.b32.xlu0 %v1019, 108
      %v1274 = vpop.permute.xlu0 %1273
      %1275 = vrot.lane.b32.xlu0 %v1020, 108
      %v1276 = vpop.permute.xlu0 %1275
      %1277 = vrot.lane.b32.xlu0 %v1021, 108
      %v1278 = vpop.permute.xlu0 %1277
      %1279 = vrot.lane.b32.xlu0 %v1022, 108
      %v1280 = vpop.permute.xlu0 %1279
      %vm1313 = vcmask 31744
      %1314 = vst.msk [vmem:[%s329] sm:$0xff] %vm1313, %v1218
      %1315 = vst.msk [vmem:[%s329 + $0x8] sm:$0xff] %vm1313, %v1220
      %1316 = vst.msk [vmem:[%s329 + $0x10] sm:$0xff] %vm1313, %v1222
      %1317 = vst.msk [vmem:[%s329 + $0x18] sm:$0xff] %vm1313, %v1224
      %1318 = vst.msk [vmem:[%s329 + $0x20] sm:$0xff] %vm1313, %v1226
      %1319 = vst.msk [vmem:[%s329 + $0x28] sm:$0xff] %vm1313, %v1228
      %1320 = vst.msk [vmem:[%s329 + $0x30] sm:$0xff] %vm1313, %v1230
      %1321 = vst.msk [vmem:[%s329 + $0x38] sm:$0xff] %vm1313, %v1232
      %1322 = vst.msk [vmem:[%s329 + $0x40] sm:$0xff] %vm1313, %v1234
      %1323 = vst.msk [vmem:[%s329 + $0x48] sm:$0xff] %vm1313, %v1236
      %1324 = vst.msk [vmem:[%s329 + $0x50] sm:$0xff] %vm1313, %v1238
      %1325 = vst.msk [vmem:[%s329 + $0x58] sm:$0xff] %vm1313, %v1240
      %1326 = vst.msk [vmem:[%s329 + $0x60] sm:$0xff] %vm1313, %v1242
      %1327 = vst.msk [vmem:[%s329 + $0x68] sm:$0xff] %vm1313, %v1244
      %1328 = vst.msk [vmem:[%s329 + $0x70] sm:$0xff] %vm1313, %v1246
      %1329 = vst.msk [vmem:[%s329 + $0x78] sm:$0xff] %vm1313, %v1248
      %1330 = vst.msk [vmem:[%s329 + $0x80] sm:$0xff] %vm1313, %v1250
      %1331 = vst.msk [vmem:[%s329 + $0x88] sm:$0xff] %vm1313, %v1252
      %1332 = vst.msk [vmem:[%s329 + $0x90] sm:$0xff] %vm1313, %v1254
      %1333 = vst.msk [vmem:[%s329 + $0x98] sm:$0xff] %vm1313, %v1256
      %1334 = vst.msk [vmem:[%s329 + $0xa0] sm:$0xff] %vm1313, %v1258
      %1335 = vst.msk [vmem:[%s329 + $0xa8] sm:$0xff] %vm1313, %v1260
      %1336 = vst.msk [vmem:[%s329 + $0xb0] sm:$0xff] %vm1313, %v1262
      %1337 = vst.msk [vmem:[%s329 + $0xb8] sm:$0xff] %vm1313, %v1264
      %1338 = vst.msk [vmem:[%s329 + $0xc0] sm:$0xff] %vm1313, %v1266
      %1339 = vst.msk [vmem:[%s329 + $0xc8] sm:$0xff] %vm1313, %v1268
      %1340 = vst.msk [vmem:[%s329 + $0xd0] sm:$0xff] %vm1313, %v1270
      %1341 = vst.msk [vmem:[%s329 + $0xd8] sm:$0xff] %vm1313, %v1272
      %1342 = vst.msk [vmem:[%s329 + $0xe0] sm:$0xff] %vm1313, %v1274
      %1343 = vst.msk [vmem:[%s329 + $0xe8] sm:$0xff] %vm1313, %v1276
      %1344 = vst.msk [vmem:[%s329 + $0xf0] sm:$0xff] %vm1313, %v1278
      %1345 = vst.msk [vmem:[%s329 + $0xf8] sm:$0xff] %vm1313, %v1280
      %s1346 = smul.u32 32, %s19
      %p1347 = scmp.lt.s32.totalorder %s1346, 63
      %s1348 = scalar_select %p1347, %s1346, 63
      %s1349 = smul.addr %s1348, 8
      %s1350 = scalar_lea.vmem %s5, %s1349
      %s1351 = smul.u32 32, %s19
      %p1352 = scmp.lt.s32.totalorder %s1351, 63
      %s1353 = scalar_select %p1352, %s1351, 63
      %s1354 = smul.addr %s1353, 8
      %s1355 = scalar_lea.vmem %s6, %s1354
      %s1356 = smul.u32 32, %s19
      %p1357 = scmp.lt.s32.totalorder %s1356, 63
      %s1358 = scalar_select %p1357, %s1356, 63
      %s1359 = smul.addr %s1358, 8
      %s1360 = scalar_lea.vmem %s7, %s1359
      // Predicated region
      $region41: #{_lambda_.13} parent=39 // pred_check
        %p1361 = pneg %p152
      $region42: #{_lambda_.13} parent=39 // pred_check_branch
        %1363 = sbr.rel (%p1361) target = $region44
      $region43: #{_lambda_.13} parent=39 // pred_region
        %s1364 = smul.u32 32, %s19
      $region44: #{_lambda_.13} parent=39 // pred_fallthru
        _
      // Predicated region
      $region45: #{_lambda_.13} parent=39 // pred_check
        %p1365 = pneg %p178
      $region46: #{_lambda_.13} parent=39 // pred_check_branch
        %1367 = sbr.rel (%p1365) target = $region48
      $region47: #{_lambda_.13} parent=39 // pred_region
        %s1368 = smul.u32 32, %s19
      $region48: #{_lambda_.13} parent=39 // pred_fallthru
        _
      // Predicated region
      $region49: #{_lambda_.13} parent=39 // pred_check
        %p1369 = pneg %p204
      $region50: #{_lambda_.13} parent=39 // pred_check_branch
        %1371 = sbr.rel (%p1369) target = $region52
      $region51: #{_lambda_.13} parent=39 // pred_region
        %s1372 = smul.u32 32, %s19
      $region52: #{_lambda_.13} parent=39 // pred_fallthru
        _
    $region40: #{_lambda_.13} parent=5 // pred_fallthru
      _
    %p1373 = scmp.le.s32.totalorder 2, %s14
    // Predicated region
    $region53: #{_lambda_.13} parent=5 // pred_check
      %p1374 = pneg %p1373
    $region54: #{_lambda_.13} parent=5 // pred_check_branch
      %1376 = sbr.rel (%p1374) target = $region56
    $region55: #{_lambda_.13} parent=5 // pred_region
      %s1377 = ssub.s32 %s14, 2
      // Predicated region
      $region57: #{_lambda_.13} parent=55 // pred_check
        %p1378 = pneg %p158
      $region58: #{_lambda_.13} parent=55 // pred_check_branch
        %1380 = sbr.rel (%p1378) target = $region60
      $region59: #{_lambda_.13} parent=55 // pred_region
        %s1381 = smul.u32 32, %s20
        %p1382 = scmp.lt.s32.totalorder %s1381, 63
        %s1383 = scalar_select %p1382, %s1381, 63
        %s1384 = smul.addr %s1383, 8
        %s1385 = scalar_lea.vmem %s5, %s1384
      $region60: #{_lambda_.13} parent=55 // pred_fallthru
        _
      // Predicated region
      $region61: #{_lambda_.13} parent=55 // pred_check
        %p1386 = pneg %p184
      $region62: #{_lambda_.13} parent=55 // pred_check_branch
        %1388 = sbr.rel (%p1386) target = $region64
      $region63: #{_lambda_.13} parent=55 // pred_region
        %s1389 = smul.u32 32, %s20
        %p1390 = scmp.lt.s32.totalorder %s1389, 63
        %s1391 = scalar_select %p1390, %s1389, 63
        %s1392 = smul.addr %s1391, 8
        %s1393 = scalar_lea.vmem %s6, %s1392
      $region64: #{_lambda_.13} parent=55 // pred_fallthru
        _
      // Predicated region
      $region65: #{_lambda_.13} parent=55 // pred_check
        %p1394 = pneg %p210
      $region66: #{_lambda_.13} parent=55 // pred_check_branch
        %1396 = sbr.rel (%p1394) target = $region68
      $region67: #{_lambda_.13} parent=55 // pred_region
        %s1397 = smul.u32 32, %s20
        %p1398 = scmp.lt.s32.totalorder %s1397, 63
        %s1399 = scalar_select %p1398, %s1397, 63
        %s1400 = smul.addr %s1399, 8
        %s1401 = scalar_lea.vmem %s7, %s1400
      $region68: #{_lambda_.13} parent=55 // pred_fallthru
        _
    $region56: #{_lambda_.13} parent=5 // pred_fallthru
      _
  $region6: #{_lambda_.13} parent=0 // loop_footer
    %s18 = sadd.s32 1, %s14
  $region7: #{_lambda_.13} parent=0 // loop_footer_branch
    %13 = sbr.rel target = $region3
  $region8: #{_lambda_.13} parent=0 // loop_exit
    _

</llo_original>
